<compile_context>
chip_gen: v7x
topology: tpu7x:2x2x1
jax: 0.10.0
libtpu: 0.0.40
codegen_flags: <defaults>
</compile_context>

<pallas_src>
import functools
import math

import jax
import jax.numpy as jnp
from jax.experimental import pallas as pl
from jax.experimental.pallas import tpu as pltpu


# --------------------------------------------------------------------------
# JAX glue: data rearrangement / constant matrices only
# --------------------------------------------------------------------------
def im2col(x, k=7, s=4, p=3):
    """x: (B, C, H, W) -> patches (B*H'*W', C*k*k) in PyTorch conv-weight order."""
    B, C, H, W = x.shape
    Hp = (H + 2 * p - k) // s + 1
    Wp = (W + 2 * p - k) // s + 1
    xp = jnp.pad(x, ((0, 0), (0, 0), (p, p), (p, p)))
    cols = []
    for ki in range(k):
        for kj in range(k):
            cols.append(xp[:, :, ki:ki + s * (Hp - 1) + 1:s, kj:kj + s * (Wp - 1) + 1:s])
    patches = jnp.stack(cols, axis=0).reshape(k, k, B, C, Hp, Wp)
    patches = patches.transpose(2, 4, 5, 3, 0, 1).reshape(B * Hp * Wp, C * k * k)
    return patches, (Hp, Wp)


def interp_matrix(out_size, in_size):
    """Bilinear (align_corners=False) 1-D interpolation matrix (out, in)."""
    d = jnp.arange(out_size, dtype=jnp.float32)
    src = (d + 0.5) * (in_size / out_size) - 0.5
    src = jnp.maximum(src, 0.0)
    i0 = jnp.minimum(jnp.floor(src).astype(jnp.int32), in_size - 1)
    i1 = jnp.minimum(i0 + 1, in_size - 1)
    frac = src - i0.astype(jnp.float32)
    return (jax.nn.one_hot(i0, in_size, dtype=jnp.float32) * (1.0 - frac)[:, None]
            + jax.nn.one_hot(i1, in_size, dtype=jnp.float32) * frac[:, None])


# --------------------------------------------------------------------------
# the fused, block-pipelined Pallas kernel
# --------------------------------------------------------------------------
def _fused_kernel(patches_ref, proj_w_ref, const_ref, bred_ref, kron_ref,
                  vecs_ref, fc1b_ref, in_w_ref, out_w_ref, fc1_w_ref, fc2_w_ref,
                  out_ref, x_ref, *, batch, ntok, edim, nblocks):
    blk = pl.program_id(0)

    def layernorm(xv, g, b):
        mu = jnp.mean(xv, axis=-1, keepdims=True)
        xc = xv - mu
        var = jnp.mean(xc * xc, axis=-1, keepdims=True)
        return xc * jax.lax.rsqrt(var + 1e-5) * g + b

    def erf(xv):
        # Abramowitz & Stegun 7.1.26 (exp + approx reciprocal run on the EUP).
        pp = 0.3275911
        a1, a2, a3, a4, a5 = (0.254829592, -0.284496736, 1.421413741,
                              -1.453152027, 1.061405429)
        sgn = jnp.where(xv >= 0.0, 1.0, -1.0)
        ax = jnp.abs(xv)
        t = pl.reciprocal(1.0 + pp * ax, approx=True)
        poly = t * (a1 + t * (a2 + t * (a3 + t * (a4 + t * a5))))
        return sgn * (1.0 - poly * jnp.exp(-ax * ax))

    def gelu(xv):
        return 0.5 * xv * (1.0 + erf(xv * (1.0 / math.sqrt(2.0))))

    def mm(xv, w):
        # bf16 MXU matmul with f32 accumulation.
        return jnp.dot(xv.astype(jnp.bfloat16), w, preferred_element_type=jnp.float32)

    # ---- grid step 0: patch embedding (conv7x7/s4/p3 as padded im2col matmul + LN)
    @pl.when(blk == 0)
    def _():
        cv = const_ref[...]
        y = jnp.dot(patches_ref[...], proj_w_ref[...],
                    preferred_element_type=jnp.float32) + cv[0:1, :]
        x_ref[...] = layernorm(y, cv[1:2, :], cv[2:3, :])

    # ---- encoder block `blk` (per-block weights streamed by the pipeline) ----
    vecs = vecs_ref[0]        # (16, E) packed small per-block params (f32)
    bred = bred_ref[...]      # (E, E) bf16 head-segment sum + broadcast matrix

    def attention(q, k, v):
        # nn.MultiheadAttention defaults to batch_first=False and the reference
        # feeds (B, N, C): the attention sequence axis is the BATCH index.
        # Roll-based batching: B full-width lane-dense bf16 matmuls.
        ss, vv = [], []
        for r in range(batch):
            kr = k if r == 0 else pltpu.roll(k, shift=r * ntok, axis=0)
            vr = v if r == 0 else pltpu.roll(v, shift=r * ntok, axis=0)
            ss.append(jnp.dot((q * kr).astype(jnp.bfloat16), bred,
                              preferred_element_type=jnp.float32))
            vv.append(vr)
        m = ss[0]
        for r in range(1, batch):
            m = jnp.maximum(m, ss[r])
        es = [jnp.exp(s - m) for s in ss]
        den = es[0]
        for r in range(1, batch):
            den = den + es[r]
        inv = pl.reciprocal(den, approx=True)
        o = (es[0] * inv) * vv[0]
        for r in range(1, batch):
            o = o + (es[r] * inv) * vv[r]
        return o                                           # (B*N, E)

    x = x_ref[...]
    xn = layernorm(x, vecs[0:1, :], vecs[1:2, :])
    qkv = mm(xn, in_w_ref[0])                              # (B*N, 3E)
    q = qkv[:, :edim] + vecs[2:3, :]                       # 1/sqrt(hd) folded in
    k = qkv[:, edim:2 * edim] + vecs[3:4, :]
    v = qkv[:, 2 * edim:] + vecs[4:5, :]
    x = x + (mm(attention(q, k, v), out_w_ref[0]) + vecs[5:6, :])
    xn = layernorm(x, vecs[6:7, :], vecs[7:8, :])
    h = gelu(mm(xn, fc1_w_ref[0]) + fc1b_ref[0])           # (B*N, 4E)
    x = x + (mm(h, fc2_w_ref[0]) + vecs[8:9, :])
    x_ref[...] = x

    # ---- last grid step: MLP decoder + bilinear 64x64 resize + global min-max
    @pl.when(blk == nblocks - 1)
    def _():
        cv = const_ref[...]
        dec_w = cv[3:4, :]                                 # (1, E)
        dec_b = cv[4:5, 0:1]                               # (1, 1)
        kron_t = kron_ref[...]                             # (N, 4096)
        imgs = []
        for b in range(batch):
            x_b = x[b * ntok:(b + 1) * ntok, :]            # (N, E)
            tok_b = jax.lax.dot_general(                   # (1, N) = dec_w . x_b^T
                dec_w, x_b, (((1,), (1,)), ((), ())),
                preferred_element_type=jnp.float32)
            imgs.append(jnp.dot(tok_b, kron_t,
                                preferred_element_type=jnp.float32) + dec_b)
        mn = jnp.min(imgs[0], axis=1, keepdims=True)
        mx = jnp.max(imgs[0], axis=1, keepdims=True)
        for b in range(1, batch):
            mn = jnp.minimum(mn, jnp.min(imgs[b], axis=1, keepdims=True))
            mx = jnp.maximum(mx, jnp.max(imgs[b], axis=1, keepdims=True))
        inv = 1.0 / (mx - mn + 1e-5)                       # exact scalar reciprocal
        for b in range(batch):
            out_ref[b:b + 1, :] = (imgs[b] - mn) * inv


# --------------------------------------------------------------------------
# wrapper
# --------------------------------------------------------------------------
def segformer_temporal_forward(x, params, num_heads=8):
    B, F, C, H, W = x.shape
    x = x.reshape(B, F * C, H, W)
    patches, (Hp, Wp) = im2col(x, k=7, s=4, p=3)

    E = params["proj_w"].shape[1]
    nc = params["dec_w"].shape[1]
    assert nc == 1   # TODO(synk): generalize fused decoder+resize to num_classes > 1
    N = Hp * Wp
    nb = len(params["blocks"])
    hd = E // num_heads
    assert E % num_heads == 0 and (B * N) % 8 == 0
    scale = 1.0 / math.sqrt(hd)
    Hh = params["blocks"][0]["fc1_w"].shape[1]

    # lane-aligned (K padded to a multiple of 128) bf16 patch-embed operands
    Kp = patches.shape[1]
    Kpad = ((Kp + 127) // 128) * 128
    patches_p = jnp.pad(patches, ((0, 0), (0, Kpad - Kp))).astype(jnp.bfloat16)
    proj_w_p = jnp.pad(params["proj_w"], ((0, Kpad - Kp), (0, 0))).astype(jnp.bfloat16)

    # packed constant rows: proj_b / patch-embed LN / decoder linear
    const_vecs = jnp.zeros((8, E), jnp.float32)
    const_vecs = const_vecs.at[0].set(params["proj_b"])
    const_vecs = const_vecs.at[1].set(params["pe_ln_g"])
    const_vecs = const_vecs.at[2].set(params["pe_ln_b"])
    const_vecs = const_vecs.at[3].set(params["dec_w"][:, 0])
    const_vecs = const_vecs.at[4, 0].set(params["dec_b"][0])

    # head-segment sum+broadcast matrix (0/1 -> exact in bf16)
    lane = jnp.arange(E)
    bred = (lane[:, None] // hd == lane[None, :] // hd).astype(jnp.bfloat16)   # (E, E)

    # bilinear 64x64 resize folded into a single (N, 4096) matrix
    kron_t = jnp.kron(interp_matrix(64, Hp), interp_matrix(64, Wp)).T          # (N, 4096)

    # per-block weights stacked on a leading axis (pipelined by the grid)
    vecs_all, fc1b_all = [], []
    in_w_all, out_w_all, fc1_w_all, fc2_w_all = [], [], [], []
    for blk in params["blocks"]:
        in_w = blk["in_w"].at[:, :E].multiply(scale)        # fold 1/sqrt(hd) into W_q
        rows = jnp.zeros((16, E), jnp.float32)
        rows = rows.at[0].set(blk["ln1_g"]).at[1].set(blk["ln1_b"])
        rows = rows.at[2].set(blk["in_b"][:E] * scale)      # b_q (scaled)
        rows = rows.at[3].set(blk["in_b"][E:2 * E])         # b_k
        rows = rows.at[4].set(blk["in_b"][2 * E:])          # b_v
        rows = rows.at[5].set(blk["out_b"])
        rows = rows.at[6].set(blk["ln2_g"]).at[7].set(blk["ln2_b"])
        rows = rows.at[8].set(blk["fc2_b"])
        vecs_all.append(rows)
        fc1b_all.append(blk["fc1_b"].reshape(1, Hh))
        in_w_all.append(in_w.astype(jnp.bfloat16))
        out_w_all.append(blk["out_w"].astype(jnp.bfloat16))
        fc1_w_all.append(blk["fc1_w"].astype(jnp.bfloat16))
        fc2_w_all.append(blk["fc2_w"].astype(jnp.bfloat16))
    vecs_all = jnp.stack(vecs_all)        # (nb, 16, E)  f32
    fc1b_all = jnp.stack(fc1b_all)        # (nb, 1, 4E)  f32
    in_w_all = jnp.stack(in_w_all)        # (nb, E, 3E)  bf16
    out_w_all = jnp.stack(out_w_all)      # (nb, E, E)   bf16
    fc1_w_all = jnp.stack(fc1_w_all)      # (nb, E, 4E)  bf16
    fc2_w_all = jnp.stack(fc2_w_all)      # (nb, 4E, E)  bf16

    kernel = functools.partial(_fused_kernel, batch=B, ntok=N, edim=E, nblocks=nb)

    img = pl.pallas_call(
        kernel,
        grid=(nb,),
        in_specs=[
            pl.BlockSpec((B * N, Kpad), lambda i: (0, 0)),      # patches (bf16)
            pl.BlockSpec((Kpad, E), lambda i: (0, 0)),          # proj_w  (bf16)
            pl.BlockSpec((8, E), lambda i: (0, 0)),             # const rows (f32)
            pl.BlockSpec((E, E), lambda i: (0, 0)),             # bred (bf16)
            pl.BlockSpec((N, 64 * 64), lambda i: (0, 0)),       # kron_t (f32)
            pl.BlockSpec((1, 16, E), lambda i: (i, 0, 0)),      # per-block vectors
            pl.BlockSpec((1, 1, Hh), lambda i: (i, 0, 0)),      # fc1 bias
            pl.BlockSpec((1, E, 3 * E), lambda i: (i, 0, 0)),   # in_proj weight
            pl.BlockSpec((1, E, E), lambda i: (i, 0, 0)),       # out_proj weight
            pl.BlockSpec((1, E, Hh), lambda i: (i, 0, 0)),      # fc1 weight
            pl.BlockSpec((1, Hh, E), lambda i: (i, 0, 0)),      # fc2 weight
        ],
        out_specs=pl.BlockSpec((B, 64 * 64), lambda i: (0, 0)),
        out_shape=jax.ShapeDtypeStruct((B, 64 * 64), jnp.float32),
        scratch_shapes=[pltpu.VMEM((B * N, E), jnp.float32)],    # persistent x
        compiler_params=pltpu.CompilerParams(
            dimension_semantics=("arbitrary",),
            vmem_limit_bytes=24 * 1024 * 1024),
    )(patches_p, proj_w_p, const_vecs, bred, kron_t,
      vecs_all, fc1b_all, in_w_all, out_w_all, fc1_w_all, fc2_w_all)

    return img.reshape(B, nc, 64, 64)


# --------------------------------------------------------------------------
# parameter initialization (f32 master weights; bf16 cast happens in wrapper)
# --------------------------------------------------------------------------
def init_params(key, in_channels, embed_dim, num_heads, num_classes, num_layers, mlp_ratio):
    def split():
        nonlocal key
        key, sub = jax.random.split(key)
        return sub

    def w(shape, scale=0.02):
        return scale * jax.random.normal(split(), shape, jnp.float32)

    E = embed_dim
    Hh = E * mlp_ratio
    params = {
        "proj_w": w((in_channels * 49, E)),            # Conv2d(k=7) as matmul
        "proj_b": w((E,)),
        "pe_ln_g": jnp.ones((E,), jnp.float32),
        "pe_ln_b": jnp.zeros((E,), jnp.float32),
        "dec_w": w((E, num_classes)),
        "dec_b": w((num_classes,)),
        "blocks": [],
    }
    for _ in range(num_layers):
        params["blocks"].append({
            "ln1_g": jnp.ones((E,), jnp.float32),
            "ln1_b": jnp.zeros((E,), jnp.float32),
            "in_w": w((E, 3 * E)),                     # in_proj_weight (transposed)
            "in_b": w((3 * E,)),
            "out_w": w((E, E)),
            "out_b": w((E,)),
            "ln2_g": jnp.ones((E,), jnp.float32),
            "ln2_b": jnp.zeros((E,), jnp.float32),
            "fc1_w": w((E, Hh)),
            "fc1_b": w((Hh,)),
            "fc2_w": w((Hh, E)),
            "fc2_b": w((E,)),
        })
    return params


if __name__ == "__main__":
    # small shapes consistent with the module: num_frames=3, channels=4 -> in_channels=12
    B, FRAMES, CH, H, W = 2, 3, 4, 16, 16
    EMBED_DIM, NUM_HEADS, NUM_CLASSES, NUM_LAYERS, MLP_RATIO = 256, 8, 1, 4, 4

    key = jax.random.PRNGKey(0)
    kx, kp = jax.random.split(key)
    x = jax.random.normal(kx, (B, FRAMES, CH, H, W), jnp.float32)
    params = init_params(kp, in_channels=FRAMES * CH, embed_dim=EMBED_DIM,
                         num_heads=NUM_HEADS, num_classes=NUM_CLASSES,
                         num_layers=NUM_LAYERS, mlp_ratio=MLP_RATIO)

    fwd = jax.jit(lambda inp: segformer_temporal_forward(inp, params, num_heads=NUM_HEADS))
    out = fwd(x)
    jax.block_until_ready(out)

    assert out.shape == (B, NUM_CLASSES, 64, 64), out.shape
    assert out.dtype == jnp.float32
    assert bool(jnp.isfinite(out).all())
    assert float(out.min()) >= -1e-5 and float(out.max()) <= 1.0 + 1e-5
    print("KERNEL_OK")
</pallas_src>

<mosaic_0001>
module attributes {stable_mosaic.version = 11 : i64} {
  func.func @_fused_kernel(%arg0: i32, %arg1: memref<32x640xbf16, #tpu.memory_space<vmem>>, %arg2: memref<640x256xbf16, #tpu.memory_space<vmem>>, %arg3: memref<8x256xf32, #tpu.memory_space<vmem>>, %arg4: memref<256x256xbf16, #tpu.memory_space<vmem>>, %arg5: memref<16x4096xf32, #tpu.memory_space<vmem>>, %arg6: memref<1x16x256xf32, #tpu.memory_space<vmem>>, %arg7: memref<1x1x1024xf32, #tpu.memory_space<vmem>>, %arg8: memref<1x256x768xbf16, #tpu.memory_space<vmem>>, %arg9: memref<1x256x256xbf16, #tpu.memory_space<vmem>>, %arg10: memref<1x256x1024xbf16, #tpu.memory_space<vmem>>, %arg11: memref<1x1024x256xbf16, #tpu.memory_space<vmem>>, %arg12: memref<2x4096xf32, #tpu.memory_space<vmem>>, %arg13: memref<32x256xf32, #tpu.memory_space<vmem>>) attributes {dimension_semantics = [#tpu.dimension_semantics<arbitrary>], iteration_bounds = array<i64: 4>, scalar_prefetch = 0 : i64, scratch_operands = 1 : i64, tpu.core_type = #tpu.core_type<tc>, window_params = [{pipeline_mode = #tpu.pipeline_mode<synchronous>, transform_indices = @transform_0, window_bounds = array<i64: 32, 640>}, {pipeline_mode = #tpu.pipeline_mode<synchronous>, transform_indices = @transform_1, window_bounds = array<i64: 640, 256>}, {pipeline_mode = #tpu.pipeline_mode<synchronous>, transform_indices = @transform_2, window_bounds = array<i64: 8, 256>}, {pipeline_mode = #tpu.pipeline_mode<synchronous>, transform_indices = @transform_3, window_bounds = array<i64: 256, 256>}, {pipeline_mode = #tpu.pipeline_mode<synchronous>, transform_indices = @transform_4, window_bounds = array<i64: 16, 4096>}, {transform_indices = @transform_5, window_bounds = array<i64: 1, 16, 256>}, {transform_indices = @transform_6, window_bounds = array<i64: 1, 1, 1024>}, {transform_indices = @transform_7, window_bounds = array<i64: 1, 256, 768>}, {transform_indices = @transform_8, window_bounds = array<i64: 1, 256, 256>}, {transform_indices = @transform_9, window_bounds = array<i64: 1, 256, 1024>}, {transform_indices = @transform_10, window_bounds = array<i64: 1, 1024, 256>}, {pipeline_mode = #tpu.pipeline_mode<synchronous>, transform_indices = @transform_11, window_bounds = array<i64: 2, 4096>}]} {
    %c0_i32 = arith.constant 0 : i32
    %0 = arith.cmpi eq, %arg0, %c0_i32 : i32
    %1 = arith.extui %0 : i1 to i32
    %c0_i32_0 = arith.constant 0 : i32
    %2 = arith.cmpi ne, %1, %c0_i32_0 : i32
    scf.if %2 {
      %c0_56 = arith.constant 0 : index
      %c0_57 = arith.constant 0 : index
      %155 = vector.load %arg3[%c0_56, %c0_57] : memref<8x256xf32, #tpu.memory_space<vmem>>, vector<8x256xf32>
      %c0_58 = arith.constant 0 : index
      %c0_59 = arith.constant 0 : index
      %156 = vector.load %arg1[%c0_58, %c0_59] : memref<32x640xbf16, #tpu.memory_space<vmem>>, vector<32x640xbf16>
      %c0_60 = arith.constant 0 : index
      %c0_61 = arith.constant 0 : index
      %157 = vector.load %arg2[%c0_60, %c0_61] : memref<640x256xbf16, #tpu.memory_space<vmem>>, vector<640x256xbf16>
      %cst_62 = arith.constant dense<0.000000e+00> : vector<32x256xf32>
      %158 = tpu.matmul %156, %157, %cst_62 {dimension_numbers = #tpu.dot_dimension_numbers<[1], [0], [0], [1], [0, 0, 1, 1], [], []>} : vector<32x640xbf16>, vector<640x256xbf16>, vector<32x256xf32> -> vector<32x256xf32>
      %159 = vector.extract_strided_slice %155 {offsets = [0, 0], sizes = [1, 256], strides = [1, 1]} : vector<8x256xf32> to vector<1x256xf32>
      %160 = vector.broadcast %159 : vector<1x256xf32> to vector<32x256xf32>
      %161 = arith.addf %158, %160 : vector<32x256xf32>
      %162 = vector.extract_strided_slice %155 {offsets = [1, 0], sizes = [1, 256], strides = [1, 1]} : vector<8x256xf32> to vector<1x256xf32>
      %163 = vector.extract_strided_slice %155 {offsets = [2, 0], sizes = [1, 256], strides = [1, 1]} : vector<8x256xf32> to vector<1x256xf32>
      %cst_63 = arith.constant dense<0.000000e+00> : vector<32xf32>
      %164 = vector.multi_reduction <add>, %161, %cst_63 [1] : vector<32x256xf32> to vector<32xf32>
      %165 = vector.shape_cast %164 : vector<32xf32> to vector<32x1xf32>
      %cst_64 = arith.constant 2.560000e+02 : f32
      %166 = vector.broadcast %cst_64 : f32 to vector<32x1xf32>
      %167 = arith.divf %165, %166 : vector<32x1xf32>
      %168 = vector.broadcast %167 : vector<32x1xf32> to vector<32x256xf32>
      %169 = arith.subf %161, %168 : vector<32x256xf32>
      %170 = arith.mulf %169, %169 : vector<32x256xf32>
      %cst_65 = arith.constant dense<0.000000e+00> : vector<32xf32>
      %171 = vector.multi_reduction <add>, %170, %cst_65 [1] : vector<32x256xf32> to vector<32xf32>
      %172 = vector.shape_cast %171 : vector<32xf32> to vector<32x1xf32>
      %cst_66 = arith.constant 2.560000e+02 : f32
      %173 = vector.broadcast %cst_66 : f32 to vector<32x1xf32>
      %174 = arith.divf %172, %173 : vector<32x1xf32>
      %cst_67 = arith.constant 9.99999974E-6 : f32
      %175 = vector.broadcast %cst_67 : f32 to vector<32x1xf32>
      %176 = arith.addf %174, %175 : vector<32x1xf32>
      %177 = math.rsqrt %176 : vector<32x1xf32>
      %178 = vector.broadcast %177 : vector<32x1xf32> to vector<32x256xf32>
      %179 = arith.mulf %169, %178 : vector<32x256xf32>
      %180 = vector.broadcast %162 : vector<1x256xf32> to vector<32x256xf32>
      %181 = arith.mulf %179, %180 : vector<32x256xf32>
      %182 = vector.broadcast %163 : vector<1x256xf32> to vector<32x256xf32>
      %183 = arith.addf %181, %182 : vector<32x256xf32>
      %c0_68 = arith.constant 0 : index
      %c0_69 = arith.constant 0 : index
      %184 = vector.load %arg13[%c0_68, %c0_69] : memref<32x256xf32, #tpu.memory_space<vmem>>, vector<32x256xf32>
      tpu.vector_store %arg13[%c0_68, %c0_69], %183 {strides = array<i32>} : memref<32x256xf32, #tpu.memory_space<vmem>>, vector<32x256xf32>,
    } else {
    }
    %c0 = arith.constant 0 : index
    %c0_1 = arith.constant 0 : index
    %c0_2 = arith.constant 0 : index
    %3 = vector.load %arg6[%c0, %c0_1, %c0_2] : memref<1x16x256xf32, #tpu.memory_space<vmem>>, vector<1x16x256xf32>
    %4 = vector.shape_cast %3 : vector<1x16x256xf32> to vector<16x256xf32>
    %c0_3 = arith.constant 0 : index
    %c0_4 = arith.constant 0 : index
    %5 = vector.load %arg4[%c0_3, %c0_4] : memref<256x256xbf16, #tpu.memory_space<vmem>>, vector<256x256xbf16>
    %c0_5 = arith.constant 0 : index
    %c0_6 = arith.constant 0 : index
    %6 = vector.load %arg13[%c0_5, %c0_6] : memref<32x256xf32, #tpu.memory_space<vmem>>, vector<32x256xf32>
    %7 = vector.extract_strided_slice %4 {offsets = [0, 0], sizes = [1, 256], strides = [1, 1]} : vector<16x256xf32> to vector<1x256xf32>
    %8 = vector.extract_strided_slice %4 {offsets = [1, 0], sizes = [1, 256], strides = [1, 1]} : vector<16x256xf32> to vector<1x256xf32>
    %cst = arith.constant dense<0.000000e+00> : vector<32xf32>
    %9 = vector.multi_reduction <add>, %6, %cst [1] : vector<32x256xf32> to vector<32xf32>
    %10 = vector.shape_cast %9 : vector<32xf32> to vector<32x1xf32>
    %cst_7 = arith.constant 2.560000e+02 : f32
    %11 = vector.broadcast %cst_7 : f32 to vector<32x1xf32>
    %12 = arith.divf %10, %11 : vector<32x1xf32>
    %13 = vector.broadcast %12 : vector<32x1xf32> to vector<32x256xf32>
    %14 = arith.subf %6, %13 : vector<32x256xf32>
    %15 = arith.mulf %14, %14 : vector<32x256xf32>
    %cst_8 = arith.constant dense<0.000000e+00> : vector<32xf32>
    %16 = vector.multi_reduction <add>, %15, %cst_8 [1] : vector<32x256xf32> to vector<32xf32>
    %17 = vector.shape_cast %16 : vector<32xf32> to vector<32x1xf32>
    %cst_9 = arith.constant 2.560000e+02 : f32
    %18 = vector.broadcast %cst_9 : f32 to vector<32x1xf32>
    %19 = arith.divf %17, %18 : vector<32x1xf32>
    %cst_10 = arith.constant 9.99999974E-6 : f32
    %20 = vector.broadcast %cst_10 : f32 to vector<32x1xf32>
    %21 = arith.addf %19, %20 : vector<32x1xf32>
    %22 = math.rsqrt %21 : vector<32x1xf32>
    %23 = vector.broadcast %22 : vector<32x1xf32> to vector<32x256xf32>
    %24 = arith.mulf %14, %23 : vector<32x256xf32>
    %25 = vector.broadcast %7 : vector<1x256xf32> to vector<32x256xf32>
    %26 = arith.mulf %24, %25 : vector<32x256xf32>
    %27 = vector.broadcast %8 : vector<1x256xf32> to vector<32x256xf32>
    %28 = arith.addf %26, %27 : vector<32x256xf32>
    %c0_11 = arith.constant 0 : index
    %c0_12 = arith.constant 0 : index
    %c0_13 = arith.constant 0 : index
    %29 = vector.load %arg8[%c0_11, %c0_12, %c0_13] : memref<1x256x768xbf16, #tpu.memory_space<vmem>>, vector<1x256x768xbf16>
    %30 = vector.shape_cast %29 : vector<1x256x768xbf16> to vector<256x768xbf16>
    %31 = arith.truncf %28 : vector<32x256xf32> to vector<32x256xbf16>
    %cst_14 = arith.constant dense<0.000000e+00> : vector<32x768xf32>
    %32 = tpu.matmul %31, %30, %cst_14 {dimension_numbers = #tpu.dot_dimension_numbers<[1], [0], [0], [1], [0, 0, 1, 1], [], []>} : vector<32x256xbf16>, vector<256x768xbf16>, vector<32x768xf32> -> vector<32x768xf32>
    %33 = vector.extract_strided_slice %32 {offsets = [0, 0], sizes = [32, 256], strides = [1, 1]} : vector<32x768xf32> to vector<32x256xf32>
    %34 = vector.extract_strided_slice %4 {offsets = [2, 0], sizes = [1, 256], strides = [1, 1]} : vector<16x256xf32> to vector<1x256xf32>
    %35 = vector.broadcast %34 : vector<1x256xf32> to vector<32x256xf32>
    %36 = arith.addf %33, %35 : vector<32x256xf32>
    %37 = vector.extract_strided_slice %32 {offsets = [0, 256], sizes = [32, 256], strides = [1, 1]} : vector<32x768xf32> to vector<32x256xf32>
    %38 = vector.extract_strided_slice %4 {offsets = [3, 0], sizes = [1, 256], strides = [1, 1]} : vector<16x256xf32> to vector<1x256xf32>
    %39 = vector.broadcast %38 : vector<1x256xf32> to vector<32x256xf32>
    %40 = arith.addf %37, %39 : vector<32x256xf32>
    %41 = vector.extract_strided_slice %32 {offsets = [0, 512], sizes = [32, 256], strides = [1, 1]} : vector<32x768xf32> to vector<32x256xf32>
    %42 = vector.extract_strided_slice %4 {offsets = [4, 0], sizes = [1, 256], strides = [1, 1]} : vector<16x256xf32> to vector<1x256xf32>
    %43 = vector.broadcast %42 : vector<1x256xf32> to vector<32x256xf32>
    %44 = arith.addf %41, %43 : vector<32x256xf32>
    %45 = arith.mulf %36, %40 : vector<32x256xf32>
    %46 = arith.truncf %45 : vector<32x256xf32> to vector<32x256xbf16>
    %cst_15 = arith.constant dense<0.000000e+00> : vector<32x256xf32>
    %47 = tpu.matmul %46, %5, %cst_15 {dimension_numbers = #tpu.dot_dimension_numbers<[1], [0], [0], [1], [0, 0, 1, 1], [], []>} : vector<32x256xbf16>, vector<256x256xbf16>, vector<32x256xf32> -> vector<32x256xf32>
    %c16_i32 = arith.constant 16 : i32
    %48 = tpu.dynamic_rotate %40 by %c16_i32 dim 0 : vector<32x256xf32>, i32 -> vector<32x256xf32>
    %c16_i32_16 = arith.constant 16 : i32
    %49 = tpu.dynamic_rotate %44 by %c16_i32_16 dim 0 : vector<32x256xf32>, i32 -> vector<32x256xf32>
    %50 = arith.mulf %36, %48 : vector<32x256xf32>
    %51 = arith.truncf %50 : vector<32x256xf32> to vector<32x256xbf16>
    %cst_17 = arith.constant dense<0.000000e+00> : vector<32x256xf32>
    %52 = tpu.matmul %51, %5, %cst_17 {dimension_numbers = #tpu.dot_dimension_numbers<[1], [0], [0], [1], [0, 0, 1, 1], [], []>} : vector<32x256xbf16>, vector<256x256xbf16>, vector<32x256xf32> -> vector<32x256xf32>
    %53 = arith.maximumf %47, %52 : vector<32x256xf32>
    %54 = arith.subf %47, %53 : vector<32x256xf32>
    %55 = math.exp %54 : vector<32x256xf32>
    %56 = arith.subf %52, %53 : vector<32x256xf32>
    %57 = math.exp %56 : vector<32x256xf32>
    %58 = arith.addf %55, %57 : vector<32x256xf32>
    %59 = tpu.reciprocal %58 {approx = true} : vector<32x256xf32> -> vector<32x256xf32>
    %60 = arith.mulf %55, %59 : vector<32x256xf32>
    %61 = arith.mulf %60, %44 : vector<32x256xf32>
    %62 = arith.mulf %57, %59 : vector<32x256xf32>
    %63 = arith.mulf %62, %49 : vector<32x256xf32>
    %64 = arith.addf %61, %63 : vector<32x256xf32>
    %c0_18 = arith.constant 0 : index
    %c0_19 = arith.constant 0 : index
    %c0_20 = arith.constant 0 : index
    %65 = vector.load %arg9[%c0_18, %c0_19, %c0_20] : memref<1x256x256xbf16, #tpu.memory_space<vmem>>, vector<1x256x256xbf16>
    %66 = vector.shape_cast %65 : vector<1x256x256xbf16> to vector<256x256xbf16>
    %67 = arith.truncf %64 : vector<32x256xf32> to vector<32x256xbf16>
    %cst_21 = arith.constant dense<0.000000e+00> : vector<32x256xf32>
    %68 = tpu.matmul %67, %66, %cst_21 {dimension_numbers = #tpu.dot_dimension_numbers<[1], [0], [0], [1], [0, 0, 1, 1], [], []>} : vector<32x256xbf16>, vector<256x256xbf16>, vector<32x256xf32> -> vector<32x256xf32>
    %69 = vector.extract_strided_slice %4 {offsets = [5, 0], sizes = [1, 256], strides = [1, 1]} : vector<16x256xf32> to vector<1x256xf32>
    %70 = vector.broadcast %69 : vector<1x256xf32> to vector<32x256xf32>
    %71 = arith.addf %68, %70 : vector<32x256xf32>
    %72 = arith.addf %6, %71 : vector<32x256xf32>
    %73 = vector.extract_strided_slice %4 {offsets = [6, 0], sizes = [1, 256], strides = [1, 1]} : vector<16x256xf32> to vector<1x256xf32>
    %74 = vector.extract_strided_slice %4 {offsets = [7, 0], sizes = [1, 256], strides = [1, 1]} : vector<16x256xf32> to vector<1x256xf32>
    %cst_22 = arith.constant dense<0.000000e+00> : vector<32xf32>
    %75 = vector.multi_reduction <add>, %72, %cst_22 [1] : vector<32x256xf32> to vector<32xf32>
    %76 = vector.shape_cast %75 : vector<32xf32> to vector<32x1xf32>
    %cst_23 = arith.constant 2.560000e+02 : f32
    %77 = vector.broadcast %cst_23 : f32 to vector<32x1xf32>
    %78 = arith.divf %76, %77 : vector<32x1xf32>
    %79 = vector.broadcast %78 : vector<32x1xf32> to vector<32x256xf32>
    %80 = arith.subf %72, %79 : vector<32x256xf32>
    %81 = arith.mulf %80, %80 : vector<32x256xf32>
    %cst_24 = arith.constant dense<0.000000e+00> : vector<32xf32>
    %82 = vector.multi_reduction <add>, %81, %cst_24 [1] : vector<32x256xf32> to vector<32xf32>
    %83 = vector.shape_cast %82 : vector<32xf32> to vector<32x1xf32>
    %cst_25 = arith.constant 2.560000e+02 : f32
    %84 = vector.broadcast %cst_25 : f32 to vector<32x1xf32>
    %85 = arith.divf %83, %84 : vector<32x1xf32>
    %cst_26 = arith.constant 9.99999974E-6 : f32
    %86 = vector.broadcast %cst_26 : f32 to vector<32x1xf32>
    %87 = arith.addf %85, %86 : vector<32x1xf32>
    %88 = math.rsqrt %87 : vector<32x1xf32>
    %89 = vector.broadcast %88 : vector<32x1xf32> to vector<32x256xf32>
    %90 = arith.mulf %80, %89 : vector<32x256xf32>
    %91 = vector.broadcast %73 : vector<1x256xf32> to vector<32x256xf32>
    %92 = arith.mulf %90, %91 : vector<32x256xf32>
    %93 = vector.broadcast %74 : vector<1x256xf32> to vector<32x256xf32>
    %94 = arith.addf %92, %93 : vector<32x256xf32>
    %c0_27 = arith.constant 0 : index
    %c0_28 = arith.constant 0 : index
    %c0_29 = arith.constant 0 : index
    %95 = vector.load %arg10[%c0_27, %c0_28, %c0_29] : memref<1x256x1024xbf16, #tpu.memory_space<vmem>>, vector<1x256x1024xbf16>
    %96 = vector.shape_cast %95 : vector<1x256x1024xbf16> to vector<256x1024xbf16>
    %97 = arith.truncf %94 : vector<32x256xf32> to vector<32x256xbf16>
    %cst_30 = arith.constant dense<0.000000e+00> : vector<32x1024xf32>
    %98 = tpu.matmul %97, %96, %cst_30 {dimension_numbers = #tpu.dot_dimension_numbers<[1], [0], [0], [1], [0, 0, 1, 1], [], []>} : vector<32x256xbf16>, vector<256x1024xbf16>, vector<32x1024xf32> -> vector<32x1024xf32>
    %c0_31 = arith.constant 0 : index
    %c0_32 = arith.constant 0 : index
    %c0_33 = arith.constant 0 : index
    %99 = vector.load %arg7[%c0_31, %c0_32, %c0_33] : memref<1x1x1024xf32, #tpu.memory_space<vmem>>, vector<1x1x1024xf32>
    %100 = vector.shape_cast %99 : vector<1x1x1024xf32> to vector<1x1024xf32>
    %101 = vector.broadcast %100 : vector<1x1024xf32> to vector<32x1024xf32>
    %102 = arith.addf %98, %101 : vector<32x1024xf32>
    %cst_34 = arith.constant 5.000000e-01 : f32
    %103 = vector.broadcast %cst_34 : f32 to vector<32x1024xf32>
    %104 = arith.mulf %103, %102 : vector<32x1024xf32>
    %cst_35 = arith.constant 0.707106769 : f32
    %105 = vector.broadcast %cst_35 : f32 to vector<32x1024xf32>
    %106 = arith.mulf %102, %105 : vector<32x1024xf32>
    %cst_36 = arith.constant 0.000000e+00 : f32
    %107 = vector.broadcast %cst_36 : f32 to vector<32x1024xf32>
    %108 = arith.cmpf oge, %106, %107 : vector<32x1024xf32>
    %cst_37 = arith.constant 1.000000e+00 : f32
    %cst_38 = arith.constant -1.000000e+00 : f32
    %109 = vector.broadcast %cst_37 : f32 to vector<32x1024xf32>
    %110 = vector.broadcast %cst_38 : f32 to vector<32x1024xf32>
    %111 = arith.select %108, %109, %110 : vector<32x1024xi1>, vector<32x1024xf32>
    %112 = math.absf %106 : vector<32x1024xf32>
    %cst_39 = arith.constant 0.327591091 : f32
    %113 = vector.broadcast %cst_39 : f32 to vector<32x1024xf32>
    %114 = arith.mulf %113, %112 : vector<32x1024xf32>
    %cst_40 = arith.constant 1.000000e+00 : f32
    %115 = vector.broadcast %cst_40 : f32 to vector<32x1024xf32>
    %116 = arith.addf %115, %114 : vector<32x1024xf32>
    %117 = tpu.reciprocal %116 {approx = true} : vector<32x1024xf32> -> vector<32x1024xf32>
    %cst_41 = arith.constant 1.06140542 : f32
    %118 = vector.broadcast %cst_41 : f32 to vector<32x1024xf32>
    %119 = arith.mulf %117, %118 : vector<32x1024xf32>
    %cst_42 = arith.constant -1.45315206 : f32
    %120 = vector.broadcast %cst_42 : f32 to vector<32x1024xf32>
    %121 = arith.addf %120, %119 : vector<32x1024xf32>
    %122 = arith.mulf %117, %121 : vector<32x1024xf32>
    %cst_43 = arith.constant 1.42141378 : f32
    %123 = vector.broadcast %cst_43 : f32 to vector<32x1024xf32>
    %124 = arith.addf %123, %122 : vector<32x1024xf32>
    %125 = arith.mulf %117, %124 : vector<32x1024xf32>
    %cst_44 = arith.constant -0.284496725 : f32
    %126 = vector.broadcast %cst_44 : f32 to vector<32x1024xf32>
    %127 = arith.addf %126, %125 : vector<32x1024xf32>
    %128 = arith.mulf %117, %127 : vector<32x1024xf32>
    %cst_45 = arith.constant 0.254829586 : f32
    %129 = vector.broadcast %cst_45 : f32 to vector<32x1024xf32>
    %130 = arith.addf %129, %128 : vector<32x1024xf32>
    %131 = arith.mulf %117, %130 : vector<32x1024xf32>
    %cst_46 = arith.constant 0.000000e+00 : f32
    %132 = vector.broadcast %cst_46 : f32 to vector<32x1024xf32>
    %133 = arith.subf %132, %112 : vector<32x1024xf32>
    %134 = arith.mulf %133, %112 : vector<32x1024xf32>
    %135 = math.exp %134 : vector<32x1024xf32>
    %136 = arith.mulf %131, %135 : vector<32x1024xf32>
    %cst_47 = arith.constant 1.000000e+00 : f32
    %137 = vector.broadcast %cst_47 : f32 to vector<32x1024xf32>
    %138 = arith.subf %137, %136 : vector<32x1024xf32>
    %139 = arith.mulf %111, %138 : vector<32x1024xf32>
    %cst_48 = arith.constant 1.000000e+00 : f32
    %140 = vector.broadcast %cst_48 : f32 to vector<32x1024xf32>
    %141 = arith.addf %140, %139 : vector<32x1024xf32>
    %142 = arith.mulf %104, %141 : vector<32x1024xf32>
    %c0_49 = arith.constant 0 : index
    %c0_50 = arith.constant 0 : index
    %c0_51 = arith.constant 0 : index
    %143 = vector.load %arg11[%c0_49, %c0_50, %c0_51] : memref<1x1024x256xbf16, #tpu.memory_space<vmem>>, vector<1x1024x256xbf16>
    %144 = vector.shape_cast %143 : vector<1x1024x256xbf16> to vector<1024x256xbf16>
    %145 = arith.truncf %142 : vector<32x1024xf32> to vector<32x1024xbf16>
    %cst_52 = arith.constant dense<0.000000e+00> : vector<32x256xf32>
    %146 = tpu.matmul %145, %144, %cst_52 {dimension_numbers = #tpu.dot_dimension_numbers<[1], [0], [0], [1], [0, 0, 1, 1], [], []>} : vector<32x1024xbf16>, vector<1024x256xbf16>, vector<32x256xf32> -> vector<32x256xf32>
    %147 = vector.extract_strided_slice %4 {offsets = [8, 0], sizes = [1, 256], strides = [1, 1]} : vector<16x256xf32> to vector<1x256xf32>
    %148 = vector.broadcast %147 : vector<1x256xf32> to vector<32x256xf32>
    %149 = arith.addf %146, %148 : vector<32x256xf32>
    %150 = arith.addf %72, %149 : vector<32x256xf32>
    %c0_53 = arith.constant 0 : index
    %c0_54 = arith.constant 0 : index
    %151 = vector.load %arg13[%c0_53, %c0_54] : memref<32x256xf32, #tpu.memory_space<vmem>>, vector<32x256xf32>
    tpu.vector_store %arg13[%c0_53, %c0_54], %150 {strides = array<i32>} : memref<32x256xf32, #tpu.memory_space<vmem>>, vector<32x256xf32>,
    %c3_i32 = arith.constant 3 : i32
    %152 = arith.cmpi eq, %arg0, %c3_i32 : i32
    %153 = arith.extui %152 : i1 to i32
    %c0_i32_55 = arith.constant 0 : i32
    %154 = arith.cmpi ne, %153, %c0_i32_55 : i32
    scf.if %154 {
      %c0_56 = arith.constant 0 : index
      %c0_57 = arith.constant 0 : index
      %155 = vector.load %arg3[%c0_56, %c0_57] : memref<8x256xf32, #tpu.memory_space<vmem>>, vector<8x256xf32>
      %156 = vector.extract_strided_slice %155 {offsets = [3, 0], sizes = [1, 256], strides = [1, 1]} : vector<8x256xf32> to vector<1x256xf32>
      %157 = vector.extract_strided_slice %155 {offsets = [4, 0], sizes = [1, 1], strides = [1, 1]} : vector<8x256xf32> to vector<1x1xf32>
      %c0_58 = arith.constant 0 : index
      %c0_59 = arith.constant 0 : index
      %158 = vector.load %arg5[%c0_58, %c0_59] : memref<16x4096xf32, #tpu.memory_space<vmem>>, vector<16x4096xf32>
      %159 = vector.extract_strided_slice %150 {offsets = [0, 0], sizes = [16, 256], strides = [1, 1]} : vector<32x256xf32> to vector<16x256xf32>
      %cst_60 = arith.constant dense<0.000000e+00> : vector<1x16xf32>
      %160 = tpu.matmul %156, %159, %cst_60 {dimension_numbers = #tpu.dot_dimension_numbers<[1], [1], [0], [0], [0, 0, 1, 0], [], []>} : vector<1x256xf32>, vector<16x256xf32>, vector<1x16xf32> -> vector<1x16xf32>
      %cst_61 = arith.constant dense<0.000000e+00> : vector<1x4096xf32>
      %161 = tpu.matmul %160, %158, %cst_61 {dimension_numbers = #tpu.dot_dimension_numbers<[1], [0], [0], [1], [0, 0, 1, 1], [], []>} : vector<1x16xf32>, vector<16x4096xf32>, vector<1x4096xf32> -> vector<1x4096xf32>
      %162 = vector.broadcast %157 : vector<1x1xf32> to vector<1x4096xf32>
      %163 = arith.addf %161, %162 : vector<1x4096xf32>
      %164 = vector.extract_strided_slice %150 {offsets = [16, 0], sizes = [16, 256], strides = [1, 1]} : vector<32x256xf32> to vector<16x256xf32>
      %cst_62 = arith.constant dense<0.000000e+00> : vector<1x16xf32>
      %165 = tpu.matmul %156, %164, %cst_62 {dimension_numbers = #tpu.dot_dimension_numbers<[1], [1], [0], [0], [0, 0, 1, 0], [], []>} : vector<1x256xf32>, vector<16x256xf32>, vector<1x16xf32> -> vector<1x16xf32>
      %cst_63 = arith.constant dense<0.000000e+00> : vector<1x4096xf32>
      %166 = tpu.matmul %165, %158, %cst_63 {dimension_numbers = #tpu.dot_dimension_numbers<[1], [0], [0], [1], [0, 0, 1, 1], [], []>} : vector<1x16xf32>, vector<16x4096xf32>, vector<1x4096xf32> -> vector<1x4096xf32>
      %167 = vector.broadcast %157 : vector<1x1xf32> to vector<1x4096xf32>
      %168 = arith.addf %166, %167 : vector<1x4096xf32>
      %cst_64 = arith.constant dense<0x7F800000> : vector<1xf32>
      %169 = vector.multi_reduction <minimumf>, %163, %cst_64 [1] : vector<1x4096xf32> to vector<1xf32>
      %170 = vector.shape_cast %169 : vector<1xf32> to vector<1x1xf32>
      %cst_65 = arith.constant dense<0xFF800000> : vector<1xf32>
      %171 = vector.multi_reduction <maximumf>, %163, %cst_65 [1] : vector<1x4096xf32> to vector<1xf32>
      %172 = vector.shape_cast %171 : vector<1xf32> to vector<1x1xf32>
      %cst_66 = arith.constant dense<0x7F800000> : vector<1xf32>
      %173 = vector.multi_reduction <minimumf>, %168, %cst_66 [1] : vector<1x4096xf32> to vector<1xf32>
      %174 = vector.shape_cast %173 : vector<1xf32> to vector<1x1xf32>
      %175 = arith.minimumf %170, %174 : vector<1x1xf32>
      %cst_67 = arith.constant dense<0xFF800000> : vector<1xf32>
      %176 = vector.multi_reduction <maximumf>, %168, %cst_67 [1] : vector<1x4096xf32> to vector<1xf32>
      %177 = vector.shape_cast %176 : vector<1xf32> to vector<1x1xf32>
      %178 = arith.maximumf %172, %177 : vector<1x1xf32>
      %179 = arith.subf %178, %175 : vector<1x1xf32>
      %cst_68 = arith.constant 9.99999974E-6 : f32
      %180 = vector.broadcast %cst_68 : f32 to vector<1x1xf32>
      %181 = arith.addf %179, %180 : vector<1x1xf32>
      %cst_69 = arith.constant 1.000000e+00 : f32
      %182 = vector.broadcast %cst_69 : f32 to vector<1x1xf32>
      %183 = arith.divf %182, %181 : vector<1x1xf32>
      %184 = vector.broadcast %175 : vector<1x1xf32> to vector<1x4096xf32>
      %185 = arith.subf %163, %184 : vector<1x4096xf32>
      %186 = vector.broadcast %183 : vector<1x1xf32> to vector<1x4096xf32>
      %187 = arith.mulf %185, %186 : vector<1x4096xf32>
      %c0_70 = arith.constant 0 : index
      %c0_71 = arith.constant 0 : index
      %188 = vector.load %arg12[%c0_70, %c0_71] : memref<2x4096xf32, #tpu.memory_space<vmem>>, vector<1x4096xf32>
      tpu.vector_store %arg12[%c0_70, %c0_71], %187 {strides = array<i32>} : memref<2x4096xf32, #tpu.memory_space<vmem>>, vector<1x4096xf32>,
      %189 = vector.broadcast %175 : vector<1x1xf32> to vector<1x4096xf32>
      %190 = arith.subf %168, %189 : vector<1x4096xf32>
      %191 = vector.broadcast %183 : vector<1x1xf32> to vector<1x4096xf32>
      %192 = arith.mulf %190, %191 : vector<1x4096xf32>
      %c1 = arith.constant 1 : index
      %c0_72 = arith.constant 0 : index
      %193 = vector.load %arg12[%c1, %c0_72] : memref<2x4096xf32, #tpu.memory_space<vmem>>, vector<1x4096xf32>
      tpu.vector_store %arg12[%c1, %c0_72], %192 {strides = array<i32>} : memref<2x4096xf32, #tpu.memory_space<vmem>>, vector<1x4096xf32>,
    } else {
    }
    return
  }
  func.func @transform_0(%arg0: i32) -> (i32, i32) {
    %c0_i32 = arith.constant 0 : i32
    %c0_i32_0 = arith.constant 0 : i32
    %c0_i32_1 = arith.constant 0 : i32
    return %c0_i32, %c0_i32_0 : i32, i32
  }
  func.func @transform_1(%arg0: i32) -> (i32, i32) {
    %c0_i32 = arith.constant 0 : i32
    %c0_i32_0 = arith.constant 0 : i32
    %c0_i32_1 = arith.constant 0 : i32
    return %c0_i32, %c0_i32_0 : i32, i32
  }
  func.func @transform_2(%arg0: i32) -> (i32, i32) {
    %c0_i32 = arith.constant 0 : i32
    %c0_i32_0 = arith.constant 0 : i32
    %c0_i32_1 = arith.constant 0 : i32
    return %c0_i32, %c0_i32_0 : i32, i32
  }
  func.func @transform_3(%arg0: i32) -> (i32, i32) {
    %c0_i32 = arith.constant 0 : i32
    %c0_i32_0 = arith.constant 0 : i32
    %c0_i32_1 = arith.constant 0 : i32
    return %c0_i32, %c0_i32_0 : i32, i32
  }
  func.func @transform_4(%arg0: i32) -> (i32, i32) {
    %c0_i32 = arith.constant 0 : i32
    %c0_i32_0 = arith.constant 0 : i32
    %c0_i32_1 = arith.constant 0 : i32
    return %c0_i32, %c0_i32_0 : i32, i32
  }
  func.func @transform_5(%arg0: i32) -> (i32, i32, i32) {
    %c0_i32 = arith.constant 0 : i32
    %c0_i32_0 = arith.constant 0 : i32
    %c0_i32_1 = arith.constant 0 : i32
    return %arg0, %c0_i32, %c0_i32_0 : i32, i32, i32
  }
  func.func @transform_6(%arg0: i32) -> (i32, i32, i32) {
    %c0_i32 = arith.constant 0 : i32
    %c0_i32_0 = arith.constant 0 : i32
    %c0_i32_1 = arith.constant 0 : i32
    return %arg0, %c0_i32, %c0_i32_0 : i32, i32, i32
  }
  func.func @transform_7(%arg0: i32) -> (i32, i32, i32) {
    %c0_i32 = arith.constant 0 : i32
    %c0_i32_0 = arith.constant 0 : i32
    %c0_i32_1 = arith.constant 0 : i32
    return %arg0, %c0_i32, %c0_i32_0 : i32, i32, i32
  }
  func.func @transform_8(%arg0: i32) -> (i32, i32, i32) {
    %c0_i32 = arith.constant 0 : i32
    %c0_i32_0 = arith.constant 0 : i32
    %c0_i32_1 = arith.constant 0 : i32
    return %arg0, %c0_i32, %c0_i32_0 : i32, i32, i32
  }
  func.func @transform_9(%arg0: i32) -> (i32, i32, i32) {
    %c0_i32 = arith.constant 0 : i32
    %c0_i32_0 = arith.constant 0 : i32
    %c0_i32_1 = arith.constant 0 : i32
    return %arg0, %c0_i32, %c0_i32_0 : i32, i32, i32
  }
  func.func @transform_10(%arg0: i32) -> (i32, i32, i32) {
    %c0_i32 = arith.constant 0 : i32
    %c0_i32_0 = arith.constant 0 : i32
    %c0_i32_1 = arith.constant 0 : i32
    return %arg0, %c0_i32, %c0_i32_0 : i32, i32, i32
  }
  func.func @transform_11(%arg0: i32) -> (i32, i32) {
    %c0_i32 = arith.constant 0 : i32
    %c0_i32_0 = arith.constant 0 : i32
    %c0_i32_1 = arith.constant 0 : i32
    return %c0_i32, %c0_i32_0 : i32, i32
  }
}

</mosaic_0001>

<llo_original>
// kernel: _lambda_.1
$region0: #{_lambda_.1}
  #allocation0 [shape = 'u32[]', space=smem, size = 0x4, offset = 0x4, fixed_abs, tag = 'smem constant byte address 0x4 - core index']
  #allocation1 [shape = 'u32[144,128]{1,0:T(1,128)}', space=vmem, size = 0x12000, scoped, tag = 'internal scratch']
  #allocation2 [shape = 'f32[32,256]{1,0:T(8,128)}', space=vmem, size = 0x8000, scoped, tag = 'scratch operand']
  %s0 = inlined_call_operand.vmem [shape: bf16[32,640], index: 0, kind: input, shape index: {}]
  %s1 = inlined_call_operand.vmem [shape: bf16[640,256], index: 1, kind: input, shape index: {}]
  %s2 = inlined_call_operand.vmem [shape: f32[8,256], index: 2, kind: input, shape index: {}]
  %s3 = inlined_call_operand.vmem [shape: bf16[256,256], index: 3, kind: input, shape index: {}]
  %s4 = inlined_call_operand.vmem [shape: f32[16,4096], index: 4, kind: input, shape index: {}]
  %s5 = inlined_call_operand.vmem [shape: f32[4,16,256], index: 5, kind: input, shape index: {}]
  %s6 = inlined_call_operand.vmem [shape: f32[4,1,1024], index: 6, kind: input, shape index: {}]
  %s7 = inlined_call_operand.vmem [shape: bf16[4,256,768], index: 7, kind: input, shape index: {}]
  %s8 = inlined_call_operand.vmem [shape: bf16[4,256,256], index: 8, kind: input, shape index: {}]
  %s9 = inlined_call_operand.vmem [shape: bf16[4,256,1024], index: 9, kind: input, shape index: {}]
  %s10 = inlined_call_operand.vmem [shape: bf16[4,1024,256], index: 10, kind: input, shape index: {}]
  %s11 = inlined_call_operand.vmem [shape: f32[2,4096], index: 11, kind: output, shape index: {}]
  %s12 = sld [smem:[#allocation0]]
  $region85: #{_lambda_.1} parent=0
    _
  %s14 = ssub.s32 1, %s12
  %s15 = scalar_select 0, %s14, %s12
  loop: start=0, step=1, limit=6
  $region2: #{_lambda_.1} parent=0 // loop_pre_header
    _
  $region3: #{_lambda_.1} parent=0 // loop_header
    %s17 = sphi 0, %s21
    %p18 = scmp.ge.s32.totalorder %s17, 6
    %s25 = sphi 0, %s25
    %s27 = sphi 0, %s25
    %s28 = sphi 0, %s27
    %s42 = sphi 0, %s28
    %s46 = sphi 0, %s46
    %s48 = sphi 0, %s46
    %s49 = sphi 0, %s48
    %s63 = sphi 0, %s49
    %s67 = sphi 0, %s67
    %s69 = sphi 0, %s67
    %s70 = sphi 0, %s69
    %s84 = sphi 0, %s70
    %s88 = sphi 0, %s88
    %s90 = sphi 0, %s88
    %s91 = sphi 0, %s90
    %s105 = sphi 0, %s91
    %s109 = sphi 0, %s109
    %s111 = sphi 0, %s109
    %s112 = sphi 0, %s111
    %s126 = sphi 0, %s112
    %s132 = sphi 0, %s134
    %s135 = sphi 0, %s132
    %s136 = sphi 0, %s135
    %s152 = sphi 0, %s136
    %s158 = sphi 0, %s160
    %s161 = sphi 0, %s158
    %s162 = sphi 0, %s161
    %s178 = sphi 0, %s162
    %s184 = sphi 0, %s186
    %s187 = sphi 0, %s184
    %s188 = sphi 0, %s187
    %s204 = sphi 0, %s188
    %s210 = sphi 0, %s212
    %s213 = sphi 0, %s210
    %s214 = sphi 0, %s213
    %s230 = sphi 0, %s214
    %s236 = sphi 0, %s238
    %s239 = sphi 0, %s236
    %s240 = sphi 0, %s239
    %s256 = sphi 0, %s240
    %s262 = sphi 0, %s264
    %s265 = sphi 0, %s262
    %s266 = sphi 0, %s265
    %s282 = sphi 0, %s266
    %s286 = sphi 0, %s286
    %s288 = sphi 0, %s286
    %s289 = sphi 0, %s288
    %s303 = sphi 0, %s289
  $region4: #{_lambda_.1} parent=0 // loop_header_branch
    %20 = sbr.rel (%p18) target = $region8
  $region5: #{_lambda_.1} parent=0 // loop_body
    %s22 = ssub.s32 %s17, 1
    %s23 = ssub.s32 %s17, 2
    %s24 = sadd.s32 %s17, 1
    %s26 = sadd.s32 %s25, 1
    %p29 = scmp.eq.s32.totalorder %s17, 3
    %p30 = scmp.ne.s32.totalorder %s25, %s27
    %p31 = scmp.eq.s32.totalorder %s17, 0
    %p32 = por %p30, %p31
    %p33 = scmp.ne.s32.totalorder %s25, %s27
    %p34 = scmp.eq.s32.totalorder %s22, 3
    %p35 = por %p33, %p34
    %p36 = scmp.ne.s32.totalorder %s27, %s28
    %p37 = scmp.eq.s32.totalorder %s22, 0
    %p38 = por %p36, %p37
    %p39 = scmp.ne.s32.totalorder %s27, %s28
    %p40 = scmp.eq.s32.totalorder %s23, 3
    %p41 = por %p39, %p40
    %p43 = scmp.ne.s32.totalorder %s28, %s42
    %p44 = scmp.eq.s32.totalorder %s23, 0
    %p45 = por %p43, %p44
    %s47 = sadd.s32 %s46, 1
    %p50 = scmp.eq.s32.totalorder %s17, 3
    %p51 = scmp.ne.s32.totalorder %s46, %s48
    %p52 = scmp.eq.s32.totalorder %s17, 0
    %p53 = por %p51, %p52
    %p54 = scmp.ne.s32.totalorder %s46, %s48
    %p55 = scmp.eq.s32.totalorder %s22, 3
    %p56 = por %p54, %p55
    %p57 = scmp.ne.s32.totalorder %s48, %s49
    %p58 = scmp.eq.s32.totalorder %s22, 0
    %p59 = por %p57, %p58
    %p60 = scmp.ne.s32.totalorder %s48, %s49
    %p61 = scmp.eq.s32.totalorder %s23, 3
    %p62 = por %p60, %p61
    %p64 = scmp.ne.s32.totalorder %s49, %s63
    %p65 = scmp.eq.s32.totalorder %s23, 0
    %p66 = por %p64, %p65
    %s68 = sadd.s32 %s67, 1
    %p71 = scmp.eq.s32.totalorder %s17, 3
    %p72 = scmp.ne.s32.totalorder %s67, %s69
    %p73 = scmp.eq.s32.totalorder %s17, 0
    %p74 = por %p72, %p73
    %p75 = scmp.ne.s32.totalorder %s67, %s69
    %p76 = scmp.eq.s32.totalorder %s22, 3
    %p77 = por %p75, %p76
    %p78 = scmp.ne.s32.totalorder %s69, %s70
    %p79 = scmp.eq.s32.totalorder %s22, 0
    %p80 = por %p78, %p79
    %p81 = scmp.ne.s32.totalorder %s69, %s70
    %p82 = scmp.eq.s32.totalorder %s23, 3
    %p83 = por %p81, %p82
    %p85 = scmp.ne.s32.totalorder %s70, %s84
    %p86 = scmp.eq.s32.totalorder %s23, 0
    %p87 = por %p85, %p86
    %s89 = sadd.s32 %s88, 1
    %p92 = scmp.eq.s32.totalorder %s17, 3
    %p93 = scmp.ne.s32.totalorder %s88, %s90
    %p94 = scmp.eq.s32.totalorder %s17, 0
    %p95 = por %p93, %p94
    %p96 = scmp.ne.s32.totalorder %s88, %s90
    %p97 = scmp.eq.s32.totalorder %s22, 3
    %p98 = por %p96, %p97
    %p99 = scmp.ne.s32.totalorder %s90, %s91
    %p100 = scmp.eq.s32.totalorder %s22, 0
    %p101 = por %p99, %p100
    %p102 = scmp.ne.s32.totalorder %s90, %s91
    %p103 = scmp.eq.s32.totalorder %s23, 3
    %p104 = por %p102, %p103
    %p106 = scmp.ne.s32.totalorder %s91, %s105
    %p107 = scmp.eq.s32.totalorder %s23, 0
    %p108 = por %p106, %p107
    %s110 = sadd.s32 %s109, 1
    %p113 = scmp.eq.s32.totalorder %s17, 3
    %p114 = scmp.ne.s32.totalorder %s109, %s111
    %p115 = scmp.eq.s32.totalorder %s17, 0
    %p116 = por %p114, %p115
    %p117 = scmp.ne.s32.totalorder %s109, %s111
    %p118 = scmp.eq.s32.totalorder %s22, 3
    %p119 = por %p117, %p118
    %p120 = scmp.ne.s32.totalorder %s111, %s112
    %p121 = scmp.eq.s32.totalorder %s22, 0
    %p122 = por %p120, %p121
    %p123 = scmp.ne.s32.totalorder %s111, %s112
    %p124 = scmp.eq.s32.totalorder %s23, 3
    %p125 = por %p123, %p124
    %p127 = scmp.ne.s32.totalorder %s112, %s126
    %p128 = scmp.eq.s32.totalorder %s23, 0
    %p129 = por %p127, %p128
    %s130 = ssub.s32 %s17, %s24
    %p131 = scmp.eq.s32.totalorder %s130, 0
    %s133 = sadd.s32 %s132, 1
    %s134 = scalar_select %p131, %s132, %s133
    %p137 = pneg %p131
    %p138 = scmp.eq.s32.totalorder %s17, 3
    %p139 = por %p137, %p138
    %p140 = scmp.ne.s32.totalorder %s132, %s135
    %p141 = scmp.eq.s32.totalorder %s17, 0
    %p142 = por %p140, %p141
    %p143 = scmp.ne.s32.totalorder %s132, %s135
    %p144 = scmp.eq.s32.totalorder %s22, 3
    %p145 = por %p143, %p144
    %p146 = scmp.ne.s32.totalorder %s135, %s136
    %p147 = scmp.eq.s32.totalorder %s22, 0
    %p148 = por %p146, %p147
    %p149 = scmp.ne.s32.totalorder %s135, %s136
    %p150 = scmp.eq.s32.totalorder %s23, 3
    %p151 = por %p149, %p150
    %p153 = scmp.ne.s32.totalorder %s136, %s152
    %p154 = scmp.eq.s32.totalorder %s23, 0
    %p155 = por %p153, %p154
    %s156 = ssub.s32 %s17, %s24
    %p157 = scmp.eq.s32.totalorder %s156, 0
    %s159 = sadd.s32 %s158, 1
    %s160 = scalar_select %p157, %s158, %s159
    %p163 = pneg %p157
    %p164 = scmp.eq.s32.totalorder %s17, 3
    %p165 = por %p163, %p164
    %p166 = scmp.ne.s32.totalorder %s158, %s161
    %p167 = scmp.eq.s32.totalorder %s17, 0
    %p168 = por %p166, %p167
    %p169 = scmp.ne.s32.totalorder %s158, %s161
    %p170 = scmp.eq.s32.totalorder %s22, 3
    %p171 = por %p169, %p170
    %p172 = scmp.ne.s32.totalorder %s161, %s162
    %p173 = scmp.eq.s32.totalorder %s22, 0
    %p174 = por %p172, %p173
    %p175 = scmp.ne.s32.totalorder %s161, %s162
    %p176 = scmp.eq.s32.totalorder %s23, 3
    %p177 = por %p175, %p176
    %p179 = scmp.ne.s32.totalorder %s162, %s178
    %p180 = scmp.eq.s32.totalorder %s23, 0
    %p181 = por %p179, %p180
    %s182 = ssub.s32 %s17, %s24
    %p183 = scmp.eq.s32.totalorder %s182, 0
    %s185 = sadd.s32 %s184, 1
    %s186 = scalar_select %p183, %s184, %s185
    %p189 = pneg %p183
    %p190 = scmp.eq.s32.totalorder %s17, 3
    %p191 = por %p189, %p190
    %p192 = scmp.ne.s32.totalorder %s184, %s187
    %p193 = scmp.eq.s32.totalorder %s17, 0
    %p194 = por %p192, %p193
    %p195 = scmp.ne.s32.totalorder %s184, %s187
    %p196 = scmp.eq.s32.totalorder %s22, 3
    %p197 = por %p195, %p196
    %p198 = scmp.ne.s32.totalorder %s187, %s188
    %p199 = scmp.eq.s32.totalorder %s22, 0
    %p200 = por %p198, %p199
    %p201 = scmp.ne.s32.totalorder %s187, %s188
    %p202 = scmp.eq.s32.totalorder %s23, 3
    %p203 = por %p201, %p202
    %p205 = scmp.ne.s32.totalorder %s188, %s204
    %p206 = scmp.eq.s32.totalorder %s23, 0
    %p207 = por %p205, %p206
    %s208 = ssub.s32 %s17, %s24
    %p209 = scmp.eq.s32.totalorder %s208, 0
    %s211 = sadd.s32 %s210, 1
    %s212 = scalar_select %p209, %s210, %s211
    %p215 = pneg %p209
    %p216 = scmp.eq.s32.totalorder %s17, 3
    %p217 = por %p215, %p216
    %p218 = scmp.ne.s32.totalorder %s210, %s213
    %p219 = scmp.eq.s32.totalorder %s17, 0
    %p220 = por %p218, %p219
    %p221 = scmp.ne.s32.totalorder %s210, %s213
    %p222 = scmp.eq.s32.totalorder %s22, 3
    %p223 = por %p221, %p222
    %p224 = scmp.ne.s32.totalorder %s213, %s214
    %p225 = scmp.eq.s32.totalorder %s22, 0
    %p226 = por %p224, %p225
    %p227 = scmp.ne.s32.totalorder %s213, %s214
    %p228 = scmp.eq.s32.totalorder %s23, 3
    %p229 = por %p227, %p228
    %p231 = scmp.ne.s32.totalorder %s214, %s230
    %p232 = scmp.eq.s32.totalorder %s23, 0
    %p233 = por %p231, %p232
    %s234 = ssub.s32 %s17, %s24
    %p235 = scmp.eq.s32.totalorder %s234, 0
    %s237 = sadd.s32 %s236, 1
    %s238 = scalar_select %p235, %s236, %s237
    %p241 = pneg %p235
    %p242 = scmp.eq.s32.totalorder %s17, 3
    %p243 = por %p241, %p242
    %p244 = scmp.ne.s32.totalorder %s236, %s239
    %p245 = scmp.eq.s32.totalorder %s17, 0
    %p246 = por %p244, %p245
    %p247 = scmp.ne.s32.totalorder %s236, %s239
    %p248 = scmp.eq.s32.totalorder %s22, 3
    %p249 = por %p247, %p248
    %p250 = scmp.ne.s32.totalorder %s239, %s240
    %p251 = scmp.eq.s32.totalorder %s22, 0
    %p252 = por %p250, %p251
    %p253 = scmp.ne.s32.totalorder %s239, %s240
    %p254 = scmp.eq.s32.totalorder %s23, 3
    %p255 = por %p253, %p254
    %p257 = scmp.ne.s32.totalorder %s240, %s256
    %p258 = scmp.eq.s32.totalorder %s23, 0
    %p259 = por %p257, %p258
    %s260 = ssub.s32 %s17, %s24
    %p261 = scmp.eq.s32.totalorder %s260, 0
    %s263 = sadd.s32 %s262, 1
    %s264 = scalar_select %p261, %s262, %s263
    %p267 = pneg %p261
    %p268 = scmp.eq.s32.totalorder %s17, 3
    %p269 = por %p267, %p268
    %p270 = scmp.ne.s32.totalorder %s262, %s265
    %p271 = scmp.eq.s32.totalorder %s17, 0
    %p272 = por %p270, %p271
    %p273 = scmp.ne.s32.totalorder %s262, %s265
    %p274 = scmp.eq.s32.totalorder %s22, 3
    %p275 = por %p273, %p274
    %p276 = scmp.ne.s32.totalorder %s265, %s266
    %p277 = scmp.eq.s32.totalorder %s22, 0
    %p278 = por %p276, %p277
    %p279 = scmp.ne.s32.totalorder %s265, %s266
    %p280 = scmp.eq.s32.totalorder %s23, 3
    %p281 = por %p279, %p280
    %p283 = scmp.ne.s32.totalorder %s266, %s282
    %p284 = scmp.eq.s32.totalorder %s23, 0
    %p285 = por %p283, %p284
    %s287 = sadd.s32 %s286, 1
    %p290 = scmp.eq.s32.totalorder %s17, 3
    %p291 = scmp.ne.s32.totalorder %s286, %s288
    %p292 = scmp.eq.s32.totalorder %s17, 0
    %p293 = por %p291, %p292
    %p294 = scmp.ne.s32.totalorder %s286, %s288
    %p295 = scmp.eq.s32.totalorder %s22, 3
    %p296 = por %p294, %p295
    %p297 = scmp.ne.s32.totalorder %s288, %s289
    %p298 = scmp.eq.s32.totalorder %s22, 0
    %p299 = por %p297, %p298
    %p300 = scmp.ne.s32.totalorder %s288, %s289
    %p301 = scmp.eq.s32.totalorder %s23, 3
    %p302 = por %p300, %p301
    %p304 = scmp.ne.s32.totalorder %s289, %s303
    %p305 = scmp.eq.s32.totalorder %s23, 0
    %p306 = por %p304, %p305
    %p307 = scmp.le.s32.totalorder 1, %s17
    %p308 = scmp.lt.s32.totalorder %s17, 5
    %p309 = pnand %p307, %p308
    %p310 = pneg %p309
    // Predicated region
    $region9: #{_lambda_.1} parent=5 // pred_check
      _
    $region10: #{_lambda_.1} parent=5 // pred_check_branch
      %312 = sbr.rel (%p309) target = $region12
    $region11: #{_lambda_.1} parent=5 // pred_region
      %s313 = ssub.s32 %s17, 1
      // Predicated region
      $region13: #{_lambda_.1} parent=11 // pred_check
        %p314 = pneg %p38
      $region14: #{_lambda_.1} parent=11 // pred_check_branch
        %316 = sbr.rel (%p314) target = $region16
      $region15: #{_lambda_.1} parent=11 // pred_region
        _
      $region16: #{_lambda_.1} parent=11 // pred_fallthru
        _
      // Predicated region
      $region17: #{_lambda_.1} parent=11 // pred_check
        %p317 = pneg %p59
      $region18: #{_lambda_.1} parent=11 // pred_check_branch
        %319 = sbr.rel (%p317) target = $region20
      $region19: #{_lambda_.1} parent=11 // pred_region
        _
      $region20: #{_lambda_.1} parent=11 // pred_fallthru
        _
      // Predicated region
      $region21: #{_lambda_.1} parent=11 // pred_check
        %p320 = pneg %p80
      $region22: #{_lambda_.1} parent=11 // pred_check_branch
        %322 = sbr.rel (%p320) target = $region24
      $region23: #{_lambda_.1} parent=11 // pred_region
        _
      $region24: #{_lambda_.1} parent=11 // pred_fallthru
        _
      // Predicated region
      $region25: #{_lambda_.1} parent=11 // pred_check
        %p323 = pneg %p101
      $region26: #{_lambda_.1} parent=11 // pred_check_branch
        %325 = sbr.rel (%p323) target = $region28
      $region27: #{_lambda_.1} parent=11 // pred_region
        _
      $region28: #{_lambda_.1} parent=11 // pred_fallthru
        _
      // Predicated region
      $region29: #{_lambda_.1} parent=11 // pred_check
        %p326 = pneg %p122
      $region30: #{_lambda_.1} parent=11 // pred_check_branch
        %328 = sbr.rel (%p326) target = $region32
      $region31: #{_lambda_.1} parent=11 // pred_region
        _
      $region32: #{_lambda_.1} parent=11 // pred_fallthru
        _
    $region12: #{_lambda_.1} parent=5 // pred_fallthru
      _
    %p329 = scmp.lt.s32.totalorder %s17, 4
    // Predicated region
    $region33: #{_lambda_.1} parent=5 // pred_check
      %p330 = pneg %p329
    $region34: #{_lambda_.1} parent=5 // pred_check_branch
      %332 = sbr.rel (%p330) target = $region36
    $region35: #{_lambda_.1} parent=5 // pred_region
      // Predicated region
      $region37: #{_lambda_.1} parent=35 // pred_check
        %p333 = pneg %p142
      $region38: #{_lambda_.1} parent=35 // pred_check_branch
        %335 = sbr.rel (%p333) target = $region40
      $region39: #{_lambda_.1} parent=35 // pred_region
        %p336 = scmp.lt.s32.totalorder %s17, 3
        %s337 = scalar_select %p336, %s17, 3
        %s338 = smul.addr %s337, 4
        %s339 = smul.addr %s338, 8
        %s340 = scalar_lea.vmem %s5, %s339
      $region40: #{_lambda_.1} parent=35 // pred_fallthru
        _
      // Predicated region
      $region41: #{_lambda_.1} parent=35 // pred_check
        %p341 = pneg %p168
      $region42: #{_lambda_.1} parent=35 // pred_check_branch
        %343 = sbr.rel (%p341) target = $region44
      $region43: #{_lambda_.1} parent=35 // pred_region
        %p344 = scmp.lt.s32.totalorder %s17, 3
        %s345 = scalar_select %p344, %s17, 3
        %s346 = smul.addr %s345, 8
        %s347 = scalar_lea.vmem %s6, %s346
      $region44: #{_lambda_.1} parent=35 // pred_fallthru
        _
      // Predicated region
      $region45: #{_lambda_.1} parent=35 // pred_check
        %p348 = pneg %p194
      $region46: #{_lambda_.1} parent=35 // pred_check_branch
        %350 = sbr.rel (%p348) target = $region48
      $region47: #{_lambda_.1} parent=35 // pred_region
        %p351 = scmp.lt.s32.totalorder %s17, 3
        %s352 = scalar_select %p351, %s17, 3
        %s353 = smul.addr %s352, 192
        %s354 = smul.addr %s353, 4
        %s355 = scalar_lea.vmem %s7, %s354
      $region48: #{_lambda_.1} parent=35 // pred_fallthru
        _
      // Predicated region
      $region49: #{_lambda_.1} parent=35 // pred_check
        %p356 = pneg %p220
      $region50: #{_lambda_.1} parent=35 // pred_check_branch
        %358 = sbr.rel (%p356) target = $region52
      $region51: #{_lambda_.1} parent=35 // pred_region
        %p359 = scmp.lt.s32.totalorder %s17, 3
        %s360 = scalar_select %p359, %s17, 3
        %s361 = smul.addr %s360, 64
        %s362 = smul.addr %s361, 4
        %s363 = scalar_lea.vmem %s8, %s362
      $region52: #{_lambda_.1} parent=35 // pred_fallthru
        _
      // Predicated region
      $region53: #{_lambda_.1} parent=35 // pred_check
        %p364 = pneg %p246
      $region54: #{_lambda_.1} parent=35 // pred_check_branch
        %366 = sbr.rel (%p364) target = $region56
      $region55: #{_lambda_.1} parent=35 // pred_region
        %p367 = scmp.lt.s32.totalorder %s17, 3
        %s368 = scalar_select %p367, %s17, 3
        %s369 = smul.addr %s368, 256
        %s370 = smul.addr %s369, 4
        %s371 = scalar_lea.vmem %s9, %s370
      $region56: #{_lambda_.1} parent=35 // pred_fallthru
        _
      // Predicated region
      $region57: #{_lambda_.1} parent=35 // pred_check
        %p372 = pneg %p272
      $region58: #{_lambda_.1} parent=35 // pred_check_branch
        %374 = sbr.rel (%p372) target = $region60
      $region59: #{_lambda_.1} parent=35 // pred_region
        %p375 = scmp.lt.s32.totalorder %s17, 3
        %s376 = scalar_select %p375, %s17, 3
        %s377 = smul.addr %s376, 256
        %s378 = smul.addr %s377, 4
        %s379 = scalar_lea.vmem %s10, %s378
      $region60: #{_lambda_.1} parent=35 // pred_fallthru
        _
    $region36: #{_lambda_.1} parent=5 // pred_fallthru
      _
    %p380 = scmp.le.s32.totalorder 1, %s17
    %p381 = scmp.lt.s32.totalorder %s17, 5
    %p382 = pnand %p380, %p381
    %p383 = pneg %p382
    // Predicated region
    $region61: #{_lambda_.1} parent=5 // pred_check
      _
    $region62: #{_lambda_.1} parent=5 // pred_check_branch
      %385 = sbr.rel (%p382) target = $region64
    $region63: #{_lambda_.1} parent=5 // pred_region
      %s386 = ssub.s32 %s17, 1
      %p387 = pneg %p38
      %p388 = pneg %p35
      %p389 = pneg %p59
      %p390 = pneg %p56
      %p391 = pneg %p80
      %p392 = pneg %p77
      %p393 = pneg %p101
      %p394 = pneg %p98
      %p395 = pneg %p122
      %p396 = pneg %p119
      %p397 = scmp.lt.s32.totalorder %s22, 3
      %s398 = scalar_select %p397, %s22, 3
      %s399 = smul.addr %s398, 4
      %s400 = smul.addr %s399, 8
      %s401 = scalar_lea.vmem %s5, %s400
      %p402 = pneg %p148
      %p403 = pneg %p145
      %p404 = scmp.lt.s32.totalorder %s22, 3
      %s405 = scalar_select %p404, %s22, 3
      %s406 = smul.addr %s405, 8
      %s407 = scalar_lea.vmem %s6, %s406
      %p408 = pneg %p174
      %p409 = pneg %p171
      %p410 = scmp.lt.s32.totalorder %s22, 3
      %s411 = scalar_select %p410, %s22, 3
      %s412 = smul.addr %s411, 192
      %s413 = smul.addr %s412, 4
      %s414 = scalar_lea.vmem %s7, %s413
      %p415 = pneg %p200
      %p416 = pneg %p197
      %p417 = scmp.lt.s32.totalorder %s22, 3
      %s418 = scalar_select %p417, %s22, 3
      %s419 = smul.addr %s418, 64
      %s420 = smul.addr %s419, 4
      %s421 = scalar_lea.vmem %s8, %s420
      %p422 = pneg %p226
      %p423 = pneg %p223
      %p424 = scmp.lt.s32.totalorder %s22, 3
      %s425 = scalar_select %p424, %s22, 3
      %s426 = smul.addr %s425, 256
      %s427 = smul.addr %s426, 4
      %s428 = scalar_lea.vmem %s9, %s427
      %p429 = pneg %p252
      %p430 = pneg %p249
      %p431 = scmp.lt.s32.totalorder %s22, 3
      %s432 = scalar_select %p431, %s22, 3
      %s433 = smul.addr %s432, 256
      %s434 = smul.addr %s433, 4
      %s435 = scalar_lea.vmem %s10, %s434
      %p436 = pneg %p278
      %p437 = pneg %p275
      %p438 = pneg %p299
      %p439 = pneg %p296
      %p440 = scmp.lt.s32.totalorder %s22, 3
      %s441 = scalar_select %p440, %s22, 3
      %s442 = smul.addr %s441, 4
      %s443 = smul.addr %s442, 8
      %s444 = scalar_lea.vmem %s5, %s443
      %p445 = scmp.lt.s32.totalorder %s22, 3
      %s446 = scalar_select %p445, %s22, 3
      %s447 = smul.addr %s446, 8
      %s448 = scalar_lea.vmem %s6, %s447
      %p449 = scmp.lt.s32.totalorder %s22, 3
      %s450 = scalar_select %p449, %s22, 3
      %s451 = smul.addr %s450, 192
      %s452 = smul.addr %s451, 4
      %s453 = scalar_lea.vmem %s7, %s452
      %p454 = scmp.lt.s32.totalorder %s22, 3
      %s455 = scalar_select %p454, %s22, 3
      %s456 = smul.addr %s455, 64
      %s457 = smul.addr %s456, 4
      %s458 = scalar_lea.vmem %s8, %s457
      %p459 = scmp.lt.s32.totalorder %s22, 3
      %s460 = scalar_select %p459, %s22, 3
      %s461 = smul.addr %s460, 256
      %s462 = smul.addr %s461, 4
      %s463 = scalar_lea.vmem %s9, %s462
      %p464 = scmp.lt.s32.totalorder %s22, 3
      %s465 = scalar_select %p464, %s22, 3
      %s466 = smul.addr %s465, 256
      %s467 = smul.addr %s466, 4
      %s468 = scalar_lea.vmem %s10, %s467
      %p470 = scmp.eq.s32.totalorder %s22, 0
      // Predicated region
      $region65: #{_lambda_.1} parent=63 // pred_check
        %p471 = pneg %p470
      $region66: #{_lambda_.1} parent=63 // pred_check_branch
        %473 = sbr.rel (%p471) target = $region68
      $region67: #{_lambda_.1} parent=63 // pred_region
        %v474 = vld [vmem:[%s2] sm:$0xff]
        %v475 = vld [vmem:[%s2 + $0x8] sm:$0xff]
        %v476 = vld [vmem:[%s0] sm:$0xff]
        %v477 = vld [vmem:[%s0 + $0x8] sm:$0xff]
        %v478 = vld [vmem:[%s0 + $0x10] sm:$0xf]
        %v479 = vld [vmem:[%s0 + $0x14] sm:$0xff]
        %v480 = vld [vmem:[%s0 + $0x1c] sm:$0xff]
        %v481 = vld [vmem:[%s0 + $0x24] sm:$0xf]
        %v482 = vld [vmem:[%s0 + $0x28] sm:$0xff]
        %v483 = vld [vmem:[%s0 + $0x30] sm:$0xff]
        %v484 = vld [vmem:[%s0 + $0x38] sm:$0xf]
        %v485 = vld [vmem:[%s0 + $0x3c] sm:$0xff]
        %v486 = vld [vmem:[%s0 + $0x44] sm:$0xff]
        %v487 = vld [vmem:[%s0 + $0x4c] sm:$0xf]
        %v488 = vld [vmem:[%s1] sm:$0xff]
        %v489 = vld [vmem:[%s1 + $0x8] sm:$0xff]
        %v490 = vld [vmem:[%s1 + $0x10] sm:$0xff]
        %v491 = vld [vmem:[%s1 + $0x18] sm:$0xff]
        %v492 = vld [vmem:[%s1 + $0x20] sm:$0xff]
        %v493 = vld [vmem:[%s1 + $0x28] sm:$0xff]
        %v494 = vld [vmem:[%s1 + $0x30] sm:$0xff]
        %v495 = vld [vmem:[%s1 + $0x38] sm:$0xff]
        %v496 = vld [vmem:[%s1 + $0x40] sm:$0xff]
        %v497 = vld [vmem:[%s1 + $0x48] sm:$0xff]
        %v498 = vld [vmem:[%s1 + $0x50] sm:$0xff]
        %v499 = vld [vmem:[%s1 + $0x58] sm:$0xff]
        %v500 = vld [vmem:[%s1 + $0x60] sm:$0xff]
        %v501 = vld [vmem:[%s1 + $0x68] sm:$0xff]
        %v502 = vld [vmem:[%s1 + $0x70] sm:$0xff]
        %v503 = vld [vmem:[%s1 + $0x78] sm:$0xff]
        %v504 = vld [vmem:[%s1 + $0x80] sm:$0xff]
        %v505 = vld [vmem:[%s1 + $0x88] sm:$0xff]
        %v506 = vld [vmem:[%s1 + $0x90] sm:$0xff]
        %v507 = vld [vmem:[%s1 + $0x98] sm:$0xff]
        %v508 = vld [vmem:[%s1 + $0xa0] sm:$0xff]
        %v509 = vld [vmem:[%s1 + $0xa8] sm:$0xff]
        %v510 = vld [vmem:[%s1 + $0xb0] sm:$0xff]
        %v511 = vld [vmem:[%s1 + $0xb8] sm:$0xff]
        %v512 = vld [vmem:[%s1 + $0xc0] sm:$0xff]
        %v513 = vld [vmem:[%s1 + $0xc8] sm:$0xff]
        %v514 = vld [vmem:[%s1 + $0xd0] sm:$0xff]
        %v515 = vld [vmem:[%s1 + $0xd8] sm:$0xff]
        %v516 = vld [vmem:[%s1 + $0xe0] sm:$0xff]
        %v517 = vld [vmem:[%s1 + $0xe8] sm:$0xff]
        %v518 = vld [vmem:[%s1 + $0xf0] sm:$0xff]
        %v519 = vld [vmem:[%s1 + $0xf8] sm:$0xff]
        %v520 = vld [vmem:[%s1 + $0x100] sm:$0xff]
        %v521 = vld [vmem:[%s1 + $0x108] sm:$0xff]
        %v522 = vld [vmem:[%s1 + $0x110] sm:$0xff]
        %v523 = vld [vmem:[%s1 + $0x118] sm:$0xff]
        %v524 = vld [vmem:[%s1 + $0x120] sm:$0xff]
        %v525 = vld [vmem:[%s1 + $0x128] sm:$0xff]
        %v526 = vld [vmem:[%s1 + $0x130] sm:$0xff]
        %v527 = vld [vmem:[%s1 + $0x138] sm:$0xff]
        %v528 = vld [vmem:[%s1 + $0x140] sm:$0xff]
        %v529 = vld [vmem:[%s1 + $0x148] sm:$0xff]
        %v530 = vld [vmem:[%s1 + $0x150] sm:$0xff]
        %v531 = vld [vmem:[%s1 + $0x158] sm:$0xff]
        %v532 = vld [vmem:[%s1 + $0x160] sm:$0xff]
        %v533 = vld [vmem:[%s1 + $0x168] sm:$0xff]
        %v534 = vld [vmem:[%s1 + $0x170] sm:$0xff]
        %v535 = vld [vmem:[%s1 + $0x178] sm:$0xff]
        %v536 = vld [vmem:[%s1 + $0x180] sm:$0xff]
        %v537 = vld [vmem:[%s1 + $0x188] sm:$0xff]
        %v538 = vld [vmem:[%s1 + $0x190] sm:$0xff]
        %v539 = vld [vmem:[%s1 + $0x198] sm:$0xff]
        %v540 = vld [vmem:[%s1 + $0x1a0] sm:$0xff]
        %v541 = vld [vmem:[%s1 + $0x1a8] sm:$0xff]
        %v542 = vld [vmem:[%s1 + $0x1b0] sm:$0xff]
        %v543 = vld [vmem:[%s1 + $0x1b8] sm:$0xff]
        %v544 = vld [vmem:[%s1 + $0x1c0] sm:$0xff]
        %v545 = vld [vmem:[%s1 + $0x1c8] sm:$0xff]
        %v546 = vld [vmem:[%s1 + $0x1d0] sm:$0xff]
        %v547 = vld [vmem:[%s1 + $0x1d8] sm:$0xff]
        %v548 = vld [vmem:[%s1 + $0x1e0] sm:$0xff]
        %v549 = vld [vmem:[%s1 + $0x1e8] sm:$0xff]
        %v550 = vld [vmem:[%s1 + $0x1f0] sm:$0xff]
        %v551 = vld [vmem:[%s1 + $0x1f8] sm:$0xff]
        %v552 = vld [vmem:[%s1 + $0x200] sm:$0xff]
        %v553 = vld [vmem:[%s1 + $0x208] sm:$0xff]
        %v554 = vld [vmem:[%s1 + $0x210] sm:$0xff]
        %v555 = vld [vmem:[%s1 + $0x218] sm:$0xff]
        %v556 = vld [vmem:[%s1 + $0x220] sm:$0xff]
        %v557 = vld [vmem:[%s1 + $0x228] sm:$0xff]
        %v558 = vld [vmem:[%s1 + $0x230] sm:$0xff]
        %v559 = vld [vmem:[%s1 + $0x238] sm:$0xff]
        %v560 = vld [vmem:[%s1 + $0x240] sm:$0xff]
        %v561 = vld [vmem:[%s1 + $0x248] sm:$0xff]
        %v562 = vld [vmem:[%s1 + $0x250] sm:$0xff]
        %v563 = vld [vmem:[%s1 + $0x258] sm:$0xff]
        %v564 = vld [vmem:[%s1 + $0x260] sm:$0xff]
        %v565 = vld [vmem:[%s1 + $0x268] sm:$0xff]
        %v566 = vld [vmem:[%s1 + $0x270] sm:$0xff]
        %v567 = vld [vmem:[%s1 + $0x278] sm:$0xff]
        %v568 = vlaneseq
        %v569 = vshrl.u32 %v568, 7
        %v570 = vsub.s32 0, %v569
        %v571 = vrot.slane %v474, %v570
        %v572 = vlaneseq
        %v573 = vshrl.u32 %v572, 7
        %v574 = vsub.s32 0, %v573
        %v575 = vrot.slane %v475, %v574
        %v588 = vunpack.c.l.b16 %v476
        %v589 = vunpack.c.h.b16 %v476
        %v590 = vunpack.c.l.b16 %v477
        %v591 = vunpack.c.h.b16 %v477
        %v592 = vunpack.c.l.b16 %v478
        %v593 = vunpack.c.l.b16 %v479
        %v594 = vunpack.c.h.b16 %v479
        %v595 = vunpack.c.l.b16 %v480
        %v596 = vunpack.c.h.b16 %v480
        %v597 = vunpack.c.l.b16 %v481
        %v598 = vunpack.c.l.b16 %v482
        %v599 = vunpack.c.h.b16 %v482
        %v600 = vunpack.c.l.b16 %v483
        %v601 = vunpack.c.h.b16 %v483
        %v602 = vunpack.c.l.b16 %v484
        %v603 = vunpack.c.l.b16 %v485
        %v604 = vunpack.c.h.b16 %v485
        %v605 = vunpack.c.l.b16 %v486
        %v606 = vunpack.c.h.b16 %v486
        %v607 = vunpack.c.l.b16 %v487
        %v608 = vpack.c.b16 %v593, %v588
        %v609 = vpack.c.b16 %v594, %v589
        %v610 = vpack.c.b16 %v595, %v590
        %v611 = vpack.c.b16 %v596, %v591
        %v612 = vpack.c.b16 %v597, %v592
        %v613 = vpack.c.b16 %v603, %v598
        %v614 = vpack.c.b16 %v604, %v599
        %v615 = vpack.c.b16 %v605, %v600
        %v616 = vpack.c.b16 %v606, %v601
        %v617 = vpack.c.b16 %v607, %v602
        %v708 = vunpack.c.l.b16 %v488
        %v709 = vunpack.c.h.b16 %v488
        %v710 = vunpack.c.l.b16 %v489
        %v711 = vunpack.c.h.b16 %v489
        %v712 = vunpack.c.l.b16 %v490
        %v713 = vunpack.c.h.b16 %v490
        %v714 = vunpack.c.l.b16 %v491
        %v715 = vunpack.c.h.b16 %v491
        %v716 = vunpack.c.l.b16 %v492
        %v717 = vunpack.c.h.b16 %v492
        %v718 = vunpack.c.l.b16 %v493
        %v719 = vunpack.c.h.b16 %v493
        %v720 = vunpack.c.l.b16 %v494
        %v721 = vunpack.c.h.b16 %v494
        %v722 = vunpack.c.l.b16 %v495
        %v723 = vunpack.c.h.b16 %v495
        %v724 = vunpack.c.l.b16 %v496
        %v725 = vunpack.c.h.b16 %v496
        %v726 = vunpack.c.l.b16 %v497
        %v727 = vunpack.c.h.b16 %v497
        %v728 = vunpack.c.l.b16 %v498
        %v729 = vunpack.c.h.b16 %v498
        %v730 = vunpack.c.l.b16 %v499
        %v731 = vunpack.c.h.b16 %v499
        %v732 = vunpack.c.l.b16 %v500
        %v733 = vunpack.c.h.b16 %v500
        %v734 = vunpack.c.l.b16 %v501
        %v735 = vunpack.c.h.b16 %v501
        %v736 = vunpack.c.l.b16 %v502
        %v737 = vunpack.c.h.b16 %v502
        %v738 = vunpack.c.l.b16 %v503
        %v739 = vunpack.c.h.b16 %v503
        %v740 = vunpack.c.l.b16 %v504
        %v741 = vunpack.c.h.b16 %v504
        %v742 = vunpack.c.l.b16 %v505
        %v743 = vunpack.c.h.b16 %v505
        %v744 = vunpack.c.l.b16 %v506
        %v745 = vunpack.c.h.b16 %v506
        %v746 = vunpack.c.l.b16 %v507
        %v747 = vunpack.c.h.b16 %v507
        %v748 = vunpack.c.l.b16 %v508
        %v749 = vunpack.c.h.b16 %v508
        %v750 = vunpack.c.l.b16 %v509
        %v751 = vunpack.c.h.b16 %v509
        %v752 = vunpack.c.l.b16 %v510
        %v753 = vunpack.c.h.b16 %v510
        %v754 = vunpack.c.l.b16 %v511
        %v755 = vunpack.c.h.b16 %v511
        %v756 = vunpack.c.l.b16 %v512
        %v757 = vunpack.c.h.b16 %v512
        %v758 = vunpack.c.l.b16 %v513
        %v759 = vunpack.c.h.b16 %v513
        %v760 = vunpack.c.l.b16 %v514
        %v761 = vunpack.c.h.b16 %v514
        %v762 = vunpack.c.l.b16 %v515
        %v763 = vunpack.c.h.b16 %v515
        %v764 = vunpack.c.l.b16 %v516
        %v765 = vunpack.c.h.b16 %v516
        %v766 = vunpack.c.l.b16 %v517
        %v767 = vunpack.c.h.b16 %v517
        %v768 = vunpack.c.l.b16 %v518
        %v769 = vunpack.c.h.b16 %v518
        %v770 = vunpack.c.l.b16 %v519
        %v771 = vunpack.c.h.b16 %v519
        %v772 = vunpack.c.l.b16 %v520
        %v773 = vunpack.c.h.b16 %v520
        %v774 = vunpack.c.l.b16 %v521
        %v775 = vunpack.c.h.b16 %v521
        %v776 = vunpack.c.l.b16 %v522
        %v777 = vunpack.c.h.b16 %v522
        %v778 = vunpack.c.l.b16 %v523
        %v779 = vunpack.c.h.b16 %v523
        %v780 = vunpack.c.l.b16 %v524
        %v781 = vunpack.c.h.b16 %v524
        %v782 = vunpack.c.l.b16 %v525
        %v783 = vunpack.c.h.b16 %v525
        %v784 = vunpack.c.l.b16 %v526
        %v785 = vunpack.c.h.b16 %v526
        %v786 = vunpack.c.l.b16 %v527
        %v787 = vunpack.c.h.b16 %v527
        %v788 = vunpack.c.l.b16 %v528
        %v789 = vunpack.c.h.b16 %v528
        %v790 = vunpack.c.l.b16 %v529
        %v791 = vunpack.c.h.b16 %v529
        %v792 = vunpack.c.l.b16 %v530
        %v793 = vunpack.c.h.b16 %v530
        %v794 = vunpack.c.l.b16 %v531
        %v795 = vunpack.c.h.b16 %v531
        %v796 = vunpack.c.l.b16 %v532
        %v797 = vunpack.c.h.b16 %v532
        %v798 = vunpack.c.l.b16 %v533
        %v799 = vunpack.c.h.b16 %v533
        %v800 = vunpack.c.l.b16 %v534
        %v801 = vunpack.c.h.b16 %v534
        %v802 = vunpack.c.l.b16 %v535
        %v803 = vunpack.c.h.b16 %v535
        %v804 = vunpack.c.l.b16 %v536
        %v805 = vunpack.c.h.b16 %v536
        %v806 = vunpack.c.l.b16 %v537
        %v807 = vunpack.c.h.b16 %v537
        %v808 = vunpack.c.l.b16 %v538
        %v809 = vunpack.c.h.b16 %v538
        %v810 = vunpack.c.l.b16 %v539
        %v811 = vunpack.c.h.b16 %v539
        %v812 = vunpack.c.l.b16 %v540
        %v813 = vunpack.c.h.b16 %v540
        %v814 = vunpack.c.l.b16 %v541
        %v815 = vunpack.c.h.b16 %v541
        %v816 = vunpack.c.l.b16 %v542
        %v817 = vunpack.c.h.b16 %v542
        %v818 = vunpack.c.l.b16 %v543
        %v819 = vunpack.c.h.b16 %v543
        %v820 = vunpack.c.l.b16 %v544
        %v821 = vunpack.c.h.b16 %v544
        %v822 = vunpack.c.l.b16 %v545
        %v823 = vunpack.c.h.b16 %v545
        %v824 = vunpack.c.l.b16 %v546
        %v825 = vunpack.c.h.b16 %v546
        %v826 = vunpack.c.l.b16 %v547
        %v827 = vunpack.c.h.b16 %v547
        %v828 = vunpack.c.l.b16 %v548
        %v829 = vunpack.c.h.b16 %v548
        %v830 = vunpack.c.l.b16 %v549
        %v831 = vunpack.c.h.b16 %v549
        %v832 = vunpack.c.l.b16 %v550
        %v833 = vunpack.c.h.b16 %v550
        %v834 = vunpack.c.l.b16 %v551
        %v835 = vunpack.c.h.b16 %v551
        %v836 = vunpack.c.l.b16 %v552
        %v837 = vunpack.c.h.b16 %v552
        %v838 = vunpack.c.l.b16 %v553
        %v839 = vunpack.c.h.b16 %v553
        %v840 = vunpack.c.l.b16 %v554
        %v841 = vunpack.c.h.b16 %v554
        %v842 = vunpack.c.l.b16 %v555
        %v843 = vunpack.c.h.b16 %v555
        %v844 = vunpack.c.l.b16 %v556
        %v845 = vunpack.c.h.b16 %v556
        %v846 = vunpack.c.l.b16 %v557
        %v847 = vunpack.c.h.b16 %v557
        %v848 = vunpack.c.l.b16 %v558
        %v849 = vunpack.c.h.b16 %v558
        %v850 = vunpack.c.l.b16 %v559
        %v851 = vunpack.c.h.b16 %v559
        %v852 = vunpack.c.l.b16 %v560
        %v853 = vunpack.c.h.b16 %v560
        %v854 = vunpack.c.l.b16 %v561
        %v855 = vunpack.c.h.b16 %v561
        %v856 = vunpack.c.l.b16 %v562
        %v857 = vunpack.c.h.b16 %v562
        %v858 = vunpack.c.l.b16 %v563
        %v859 = vunpack.c.h.b16 %v563
        %v860 = vunpack.c.l.b16 %v564
        %v861 = vunpack.c.h.b16 %v564
        %v862 = vunpack.c.l.b16 %v565
        %v863 = vunpack.c.h.b16 %v565
        %v864 = vunpack.c.l.b16 %v566
        %v865 = vunpack.c.h.b16 %v566
        %v866 = vunpack.c.l.b16 %v567
        %v867 = vunpack.c.h.b16 %v567
        %v868 = vpack.c.b16 %v710, %v708
        %v869 = vpack.c.b16 %v711, %v709
        %v870 = vpack.c.b16 %v714, %v712
        %v871 = vpack.c.b16 %v715, %v713
        %v872 = vpack.c.b16 %v718, %v716
        %v873 = vpack.c.b16 %v719, %v717
        %v874 = vpack.c.b16 %v722, %v720
        %v875 = vpack.c.b16 %v723, %v721
        %v876 = vpack.c.b16 %v726, %v724
        %v877 = vpack.c.b16 %v727, %v725
        %v878 = vpack.c.b16 %v730, %v728
        %v879 = vpack.c.b16 %v731, %v729
        %v880 = vpack.c.b16 %v734, %v732
        %v881 = vpack.c.b16 %v735, %v733
        %v882 = vpack.c.b16 %v738, %v736
        %v883 = vpack.c.b16 %v739, %v737
        %v884 = vpack.c.b16 %v742, %v740
        %v885 = vpack.c.b16 %v743, %v741
        %v886 = vpack.c.b16 %v746, %v744
        %v887 = vpack.c.b16 %v747, %v745
        %v888 = vpack.c.b16 %v750, %v748
        %v889 = vpack.c.b16 %v751, %v749
        %v890 = vpack.c.b16 %v754, %v752
        %v891 = vpack.c.b16 %v755, %v753
        %v892 = vpack.c.b16 %v758, %v756
        %v893 = vpack.c.b16 %v759, %v757
        %v894 = vpack.c.b16 %v762, %v760
        %v895 = vpack.c.b16 %v763, %v761
        %v896 = vpack.c.b16 %v766, %v764
        %v897 = vpack.c.b16 %v767, %v765
        %v898 = vpack.c.b16 %v770, %v768
        %v899 = vpack.c.b16 %v771, %v769
        %v900 = vpack.c.b16 %v774, %v772
        %v901 = vpack.c.b16 %v775, %v773
        %v902 = vpack.c.b16 %v778, %v776
        %v903 = vpack.c.b16 %v779, %v777
        %v904 = vpack.c.b16 %v782, %v780
        %v905 = vpack.c.b16 %v783, %v781
        %v906 = vpack.c.b16 %v786, %v784
        %v907 = vpack.c.b16 %v787, %v785
        %v908 = vpack.c.b16 %v790, %v788
        %v909 = vpack.c.b16 %v791, %v789
        %v910 = vpack.c.b16 %v794, %v792
        %v911 = vpack.c.b16 %v795, %v793
        %v912 = vpack.c.b16 %v798, %v796
        %v913 = vpack.c.b16 %v799, %v797
        %v914 = vpack.c.b16 %v802, %v800
        %v915 = vpack.c.b16 %v803, %v801
        %v916 = vpack.c.b16 %v806, %v804
        %v917 = vpack.c.b16 %v807, %v805
        %v918 = vpack.c.b16 %v810, %v808
        %v919 = vpack.c.b16 %v811, %v809
        %v920 = vpack.c.b16 %v814, %v812
        %v921 = vpack.c.b16 %v815, %v813
        %v922 = vpack.c.b16 %v818, %v816
        %v923 = vpack.c.b16 %v819, %v817
        %v924 = vpack.c.b16 %v822, %v820
        %v925 = vpack.c.b16 %v823, %v821
        %v926 = vpack.c.b16 %v826, %v824
        %v927 = vpack.c.b16 %v827, %v825
        %v928 = vpack.c.b16 %v830, %v828
        %v929 = vpack.c.b16 %v831, %v829
        %v930 = vpack.c.b16 %v834, %v832
        %v931 = vpack.c.b16 %v835, %v833
        %v932 = vpack.c.b16 %v838, %v836
        %v933 = vpack.c.b16 %v839, %v837
        %v934 = vpack.c.b16 %v842, %v840
        %v935 = vpack.c.b16 %v843, %v841
        %v936 = vpack.c.b16 %v846, %v844
        %v937 = vpack.c.b16 %v847, %v845
        %v938 = vpack.c.b16 %v850, %v848
        %v939 = vpack.c.b16 %v851, %v849
        %v940 = vpack.c.b16 %v854, %v852
        %v941 = vpack.c.b16 %v855, %v853
        %v942 = vpack.c.b16 %v858, %v856
        %v943 = vpack.c.b16 %v859, %v857
        %v944 = vpack.c.b16 %v862, %v860
        %v945 = vpack.c.b16 %v863, %v861
        %v946 = vpack.c.b16 %v866, %v864
        %v947 = vpack.c.b16 %v867, %v865
        %1028 = vmatprep.subr.bf16.mxu0 %v869
        %1029 = vmatpush1.bf16.msra.mxu0 %v868
        %1030 = vmatprep.subr.bf16.mxu0 %v871
        %1031 = vmatpush1.bf16.msra.mxu0 %v870
        %1032 = vmatprep.subr.bf16.mxu0 %v873
        %1033 = vmatpush1.bf16.msra.mxu0 %v872
        %1034 = vmatprep.subr.bf16.mxu0 %v875
        %1035 = vmatpush1.bf16.msra.mxu0 %v874
        %1036 = vmatprep.subr.bf16.mxu0 %v877
        %1037 = vmatpush1.bf16.msra.mxu0 %v876
        %1038 = vmatprep.subr.bf16.mxu0 %v879
        %1039 = vmatpush1.bf16.msra.mxu0 %v878
        %1040 = vmatprep.subr.bf16.mxu0 %v881
        %1041 = vmatpush1.bf16.msra.mxu0 %v880
        %1042 = vmatprep.subr.bf16.mxu0 %v883
        %1043 = vmatpush1.bf16.msra.mxu0 %v882
        %1044 = vmatprep.subr.bf16.mxu0 %v885
        %1045 = vmatpush1.bf16.msra.mxu0 %v884
        %1046 = vmatprep.subr.bf16.mxu0 %v887
        %1047 = vmatpush1.bf16.msra.mxu0 %v886
        %1048 = vmatprep.subr.bf16.mxu0 %v889
        %1049 = vmatpush1.bf16.msra.mxu0 %v888
        %1050 = vmatprep.subr.bf16.mxu0 %v891
        %1051 = vmatpush1.bf16.msra.mxu0 %v890
        %1052 = vmatprep.subr.bf16.mxu0 %v893
        %1053 = vmatpush1.bf16.msra.mxu0 %v892
        %1054 = vmatprep.subr.bf16.mxu0 %v895
        %1055 = vmatpush1.bf16.msra.mxu0 %v894
        %1056 = vmatprep.subr.bf16.mxu0 %v897
        %1057 = vmatpush1.bf16.msra.mxu0 %v896
        %1058 = vmatprep.subr.bf16.mxu0 %v899
        %1059 = vmatpush1.bf16.msra.mxu0 %v898
        %1060 = vmatprep.mubr.bf16.mxu0 %v609
        %1061 = vmatmul.mubr.bf16.gmra.mrb[0].mxu0 %v608
        %v1062 = vpop.f32.mrb[0].mxu0
        %v1063 = vadd.f32 %v571, %v1062
        %v1064 = vpop.f32.mrb[0].mxu0
        %v1065 = vadd.f32 %v575, %v1064
        %v1066 = vpop.f32.mrb[0].mxu0
        %v1067 = vadd.f32 %v571, %v1066
        %v1068 = vpop.f32.mrb[0].mxu0
        %v1069 = vadd.f32 %v575, %v1068
        %1070 = vmatprep.mubr.bf16.mxu0 %v614
        %1071 = vmatmul.mubr.bf16.gmra.mrb[0].mxu0 %v613
        %v1072 = vpop.f32.mrb[0].mxu0
        %v1073 = vadd.f32 %v571, %v1072
        %v1074 = vpop.f32.mrb[0].mxu0
        %v1075 = vadd.f32 %v575, %v1074
        %v1076 = vpop.f32.mrb[0].mxu0
        %v1077 = vadd.f32 %v571, %v1076
        %v1078 = vpop.f32.mrb[0].mxu0
        %v1079 = vadd.f32 %v575, %v1078
        %1080 = vdwg.mxu0
        %1081 = vmatprep.subr.bf16.mxu0 %v901
        %1082 = vmatpush1.bf16.msra.mxu0 %v900
        %1083 = vmatprep.subr.bf16.mxu0 %v903
        %1084 = vmatpush1.bf16.msra.mxu0 %v902
        %1085 = vmatprep.subr.bf16.mxu0 %v905
        %1086 = vmatpush1.bf16.msra.mxu0 %v904
        %1087 = vmatprep.subr.bf16.mxu0 %v907
        %1088 = vmatpush1.bf16.msra.mxu0 %v906
        %1089 = vmatprep.subr.bf16.mxu0 %v909
        %1090 = vmatpush1.bf16.msra.mxu0 %v908
        %1091 = vmatprep.subr.bf16.mxu0 %v911
        %1092 = vmatpush1.bf16.msra.mxu0 %v910
        %1093 = vmatprep.subr.bf16.mxu0 %v913
        %1094 = vmatpush1.bf16.msra.mxu0 %v912
        %1095 = vmatprep.subr.bf16.mxu0 %v915
        %1096 = vmatpush1.bf16.msra.mxu0 %v914
        %1097 = vmatprep.subr.bf16.mxu0 %v917
        %1098 = vmatpush1.bf16.msra.mxu0 %v916
        %1099 = vmatprep.subr.bf16.mxu0 %v919
        %1100 = vmatpush1.bf16.msra.mxu0 %v918
        %1101 = vmatprep.subr.bf16.mxu0 %v921
        %1102 = vmatpush1.bf16.msra.mxu0 %v920
        %1103 = vmatprep.subr.bf16.mxu0 %v923
        %1104 = vmatpush1.bf16.msra.mxu0 %v922
        %1105 = vmatprep.subr.bf16.mxu0 %v925
        %1106 = vmatpush1.bf16.msra.mxu0 %v924
        %1107 = vmatprep.subr.bf16.mxu0 %v927
        %1108 = vmatpush1.bf16.msra.mxu0 %v926
        %1109 = vmatprep.subr.bf16.mxu0 %v929
        %1110 = vmatpush1.bf16.msra.mxu0 %v928
        %1111 = vmatprep.subr.bf16.mxu0 %v931
        %1112 = vmatpush1.bf16.msra.mxu0 %v930
        %1113 = vmatprep.mubr.bf16.mxu0 %v611
        %1114 = vmatmul.mubr.bf16.gmra.mrb[0].mxu0 %v610
        %v1115 = vpop.f32.mrb[0].mxu0
        %v1116 = vadd.f32 %v1063, %v1115
        %v1117 = vpop.f32.mrb[0].mxu0
        %v1118 = vadd.f32 %v1065, %v1117
        %v1119 = vpop.f32.mrb[0].mxu0
        %v1120 = vadd.f32 %v1067, %v1119
        %v1121 = vpop.f32.mrb[0].mxu0
        %v1122 = vadd.f32 %v1069, %v1121
        %1123 = vmatprep.mubr.bf16.mxu0 %v616
        %1124 = vmatmul.mubr.bf16.gmra.mrb[0].mxu0 %v615
        %v1125 = vpop.f32.mrb[0].mxu0
        %v1126 = vadd.f32 %v1073, %v1125
        %v1127 = vpop.f32.mrb[0].mxu0
        %v1128 = vadd.f32 %v1075, %v1127
        %v1129 = vpop.f32.mrb[0].mxu0
        %v1130 = vadd.f32 %v1077, %v1129
        %v1131 = vpop.f32.mrb[0].mxu0
        %v1132 = vadd.f32 %v1079, %v1131
        %1133 = vdwg.mxu0
        %1134 = vmatprep.subr.bf16.mxu0 %v933
        %1135 = vmatpush1.bf16.msra.mxu0 %v932
        %1136 = vmatprep.subr.bf16.mxu0 %v935
        %1137 = vmatpush1.bf16.msra.mxu0 %v934
        %1138 = vmatprep.subr.bf16.mxu0 %v937
        %1139 = vmatpush1.bf16.msra.mxu0 %v936
        %1140 = vmatprep.subr.bf16.mxu0 %v939
        %1141 = vmatpush1.bf16.msra.mxu0 %v938
        %1142 = vmatprep.subr.bf16.mxu0 %v941
        %1143 = vmatpush1.bf16.msra.mxu0 %v940
        %1144 = vmatprep.subr.bf16.mxu0 %v943
        %1145 = vmatpush1.bf16.msra.mxu0 %v942
        %1146 = vmatprep.subr.bf16.mxu0 %v945
        %1147 = vmatpush1.bf16.msra.mxu0 %v944
        %1148 = vmatprep.subr.bf16.mxu0 %v947
        %1149 = vmatpush1.bf16.msra.mxu0 %v946
        %1150 = vmatprep.subr.bf16.mxu0 0
        %1151 = vmatpush1.bf16.msra.mxu0 0
        %1152 = vmatprep.subr.bf16.mxu0 0
        %1153 = vmatpush1.bf16.msra.mxu0 0
        %1154 = vmatprep.subr.bf16.mxu0 0
        %1155 = vmatpush1.bf16.msra.mxu0 0
        %1156 = vmatprep.subr.bf16.mxu0 0
        %1157 = vmatpush1.bf16.msra.mxu0 0
        %1158 = vmatprep.subr.bf16.mxu0 0
        %1159 = vmatpush1.bf16.msra.mxu0 0
        %1160 = vmatprep.subr.bf16.mxu0 0
        %1161 = vmatpush1.bf16.msra.mxu0 0
        %1162 = vmatprep.subr.bf16.mxu0 0
        %1163 = vmatpush1.bf16.msra.mxu0 0
        %1164 = vmatprep.subr.bf16.mxu0 0
        %1165 = vmatpush1.bf16.msra.mxu0 0
        %1166 = vmatprep.mubr.bf16.mxu0 0
        %1167 = vmatmul.mubr.bf16.gmra.mrb[0].mxu0 %v612
        %v1168 = vpop.f32.mrb[0].mxu0
        %v1169 = vadd.f32 %v1116, %v1168
        %v1170 = vpop.f32.mrb[0].mxu0
        %v1171 = vadd.f32 %v1118, %v1170
        %v1172 = vpop.f32.mrb[0].mxu0
        %v1173 = vadd.f32 %v1120, %v1172
        %v1174 = vpop.f32.mrb[0].mxu0
        %v1175 = vadd.f32 %v1122, %v1174
        %1176 = vmatprep.mubr.bf16.mxu0 0
        %1177 = vmatmul.mubr.bf16.gmra.mrb[0].mxu0 %v617
        %v1178 = vpop.f32.mrb[0].mxu0
        %v1179 = vadd.f32 %v1126, %v1178
        %v1180 = vpop.f32.mrb[0].mxu0
        %v1181 = vadd.f32 %v1128, %v1180
        %v1182 = vpop.f32.mrb[0].mxu0
        %v1183 = vadd.f32 %v1130, %v1182
        %v1184 = vpop.f32.mrb[0].mxu0
        %v1185 = vadd.f32 %v1132, %v1184
        %1186 = vdwg.mxu0
        %v1187 = vadd.f32 %v1169, %v1171
        %1188 = vadd.xlane.f32.xlu0 %v1187
        %v1189 = vpop.xlane.xlu0 %1188
        %v1190 = vadd.f32 %v1173, %v1175
        %1191 = vadd.xlane.f32.xlu0 %v1190
        %v1192 = vpop.xlane.xlu0 %1191
        %v1193 = vadd.f32 %v1179, %v1181
        %1194 = vadd.xlane.f32.xlu0 %v1193
        %v1195 = vpop.xlane.xlu0 %1194
        %v1196 = vadd.f32 %v1183, %v1185
        %1197 = vadd.xlane.f32.xlu0 %v1196
        %v1198 = vpop.xlane.xlu0 %1197
        %v1199 = vrcp.pop 256.0
        %v1200 = vmul.f32 %v1189, %v1199
        %v1201 = vmul.f32 %v1192, %v1199
        %v1202 = vmul.f32 %v1195, %v1199
        %v1203 = vmul.f32 %v1198, %v1199
        %v1204 = vsub.f32 %v1169, %v1200
        %v1205 = vsub.f32 %v1171, %v1200
        %v1206 = vsub.f32 %v1173, %v1201
        %v1207 = vsub.f32 %v1175, %v1201
        %v1208 = vsub.f32 %v1179, %v1202
        %v1209 = vsub.f32 %v1181, %v1202
        %v1210 = vsub.f32 %v1183, %v1203
        %v1211 = vsub.f32 %v1185, %v1203
        %v1212 = vmul.f32 %v1204, %v1204
        %v1213 = vmul.f32 %v1205, %v1205
        %v1214 = vmul.f32 %v1206, %v1206
        %v1215 = vmul.f32 %v1207, %v1207
        %v1216 = vmul.f32 %v1208, %v1208
        %v1217 = vmul.f32 %v1209, %v1209
        %v1218 = vmul.f32 %v1210, %v1210
        %v1219 = vmul.f32 %v1211, %v1211
        %v1220 = vadd.f32 %v1212, %v1213
        %1221 = vadd.xlane.f32.xlu0 %v1220
        %v1222 = vpop.xlane.xlu0 %1221
        %v1223 = vadd.f32 %v1214, %v1215
        %1224 = vadd.xlane.f32.xlu0 %v1223
        %v1225 = vpop.xlane.xlu0 %1224
        %v1226 = vadd.f32 %v1216, %v1217
        %1227 = vadd.xlane.f32.xlu0 %v1226
        %v1228 = vpop.xlane.xlu0 %1227
        %v1229 = vadd.f32 %v1218, %v1219
        %1230 = vadd.xlane.f32.xlu0 %v1229
        %v1231 = vpop.xlane.xlu0 %1230
        %v1232 = vmul.f32 %v1222, %v1199
        %v1233 = vmul.f32 %v1225, %v1199
        %v1234 = vmul.f32 %v1228, %v1199
        %v1235 = vmul.f32 %v1231, %v1199
        %v1236 = vadd.f32 %v1232, 1e-05
        %v1237 = vadd.f32 %v1233, 1e-05
        %v1238 = vadd.f32 %v1234, 1e-05
        %v1239 = vadd.f32 %v1235, 1e-05
        %v1240 = vrsqrt.pop %v1236
        %v1241 = vrsqrt.pop %v1237
        %v1242 = vrsqrt.pop %v1238
        %v1243 = vrsqrt.pop %v1239
        %v1244 = vmul.f32 %v1204, %v1240
        %v1245 = vmul.f32 %v1205, %v1240
        %v1246 = vmul.f32 %v1206, %v1241
        %v1247 = vmul.f32 %v1207, %v1241
        %v1248 = vmul.f32 %v1208, %v1242
        %v1249 = vmul.f32 %v1209, %v1242
        %v1250 = vmul.f32 %v1210, %v1243
        %v1251 = vmul.f32 %v1211, %v1243
        %v1252 = vlaneseq
        %v1253 = vshrl.u32 %v1252, 7
        %v1254 = vsub.s32 1, %v1253
        %v1255 = vrot.slane %v474, %v1254
        %v1256 = vlaneseq
        %v1257 = vshrl.u32 %v1256, 7
        %v1258 = vsub.s32 1, %v1257
        %v1259 = vrot.slane %v475, %v1258
        %v1260 = vmul.f32 %v1244, %v1255
        %v1261 = vmul.f32 %v1245, %v1259
        %v1262 = vmul.f32 %v1246, %v1255
        %v1263 = vmul.f32 %v1247, %v1259
        %v1264 = vmul.f32 %v1248, %v1255
        %v1265 = vmul.f32 %v1249, %v1259
        %v1266 = vmul.f32 %v1250, %v1255
        %v1267 = vmul.f32 %v1251, %v1259
        %v1268 = vlaneseq
        %v1269 = vshrl.u32 %v1268, 7
        %v1270 = vsub.s32 2, %v1269
        %v1271 = vrot.slane %v474, %v1270
        %v1272 = vlaneseq
        %v1273 = vshrl.u32 %v1272, 7
        %v1274 = vsub.s32 2, %v1273
        %v1275 = vrot.slane %v475, %v1274
        %v1276 = vadd.f32 %v1260, %v1271
        %v1277 = vadd.f32 %v1261, %v1275
        %v1278 = vadd.f32 %v1262, %v1271
        %v1279 = vadd.f32 %v1263, %v1275
        %v1280 = vadd.f32 %v1264, %v1271
        %v1281 = vadd.f32 %v1265, %v1275
        %v1282 = vadd.f32 %v1266, %v1271
        %v1283 = vadd.f32 %v1267, %v1275
        %1284 = vst [vmem:[#allocation2] sm:$0xff] %v1276
        %1285 = vst [vmem:[#allocation2 + $0x8] sm:$0xff] %v1277
        %1286 = vst [vmem:[#allocation2 + $0x10] sm:$0xff] %v1278
        %1287 = vst [vmem:[#allocation2 + $0x18] sm:$0xff] %v1279
        %1288 = vst [vmem:[#allocation2 + $0x20] sm:$0xff] %v1280
        %1289 = vst [vmem:[#allocation2 + $0x28] sm:$0xff] %v1281
        %1290 = vst [vmem:[#allocation2 + $0x30] sm:$0xff] %v1282
        %1291 = vst [vmem:[#allocation2 + $0x38] sm:$0xff] %v1283
      $region68: #{_lambda_.1} parent=63 // pred_fallthru
        _
      %v1292 = vld [vmem:[%s444] sm:$0xff]
      %v1293 = vld [vmem:[%s444 + $0x8] sm:$0xff]
      %v1294 = vld [vmem:[%s444 + $0x10] sm:$0xff]
      %v1295 = vld [vmem:[%s444 + $0x18] sm:$0xff]
      %v1296 = vld [vmem:[%s3] sm:$0xff]
      %v1297 = vld [vmem:[%s3 + $0x8] sm:$0xff]
      %v1298 = vld [vmem:[%s3 + $0x10] sm:$0xff]
      %v1299 = vld [vmem:[%s3 + $0x18] sm:$0xff]
      %v1300 = vld [vmem:[%s3 + $0x20] sm:$0xff]
      %v1301 = vld [vmem:[%s3 + $0x28] sm:$0xff]
      %v1302 = vld [vmem:[%s3 + $0x30] sm:$0xff]
      %v1303 = vld [vmem:[%s3 + $0x38] sm:$0xff]
      %v1304 = vld [vmem:[%s3 + $0x40] sm:$0xff]
      %v1305 = vld [vmem:[%s3 + $0x48] sm:$0xff]
      %v1306 = vld [vmem:[%s3 + $0x50] sm:$0xff]
      %v1307 = vld [vmem:[%s3 + $0x58] sm:$0xff]
      %v1308 = vld [vmem:[%s3 + $0x60] sm:$0xff]
      %v1309 = vld [vmem:[%s3 + $0x68] sm:$0xff]
      %v1310 = vld [vmem:[%s3 + $0x70] sm:$0xff]
      %v1311 = vld [vmem:[%s3 + $0x78] sm:$0xff]
      %v1312 = vld [vmem:[%s3 + $0x80] sm:$0xff]
      %v1313 = vld [vmem:[%s3 + $0x88] sm:$0xff]
      %v1314 = vld [vmem:[%s3 + $0x90] sm:$0xff]
      %v1315 = vld [vmem:[%s3 + $0x98] sm:$0xff]
      %v1316 = vld [vmem:[%s3 + $0xa0] sm:$0xff]
      %v1317 = vld [vmem:[%s3 + $0xa8] sm:$0xff]
      %v1318 = vld [vmem:[%s3 + $0xb0] sm:$0xff]
      %v1319 = vld [vmem:[%s3 + $0xb8] sm:$0xff]
      %v1320 = vld [vmem:[%s3 + $0xc0] sm:$0xff]
      %v1321 = vld [vmem:[%s3 + $0xc8] sm:$0xff]
      %v1322 = vld [vmem:[%s3 + $0xd0] sm:$0xff]
      %v1323 = vld [vmem:[%s3 + $0xd8] sm:$0xff]
      %v1324 = vld [vmem:[%s3 + $0xe0] sm:$0xff]
      %v1325 = vld [vmem:[%s3 + $0xe8] sm:$0xff]
      %v1326 = vld [vmem:[%s3 + $0xf0] sm:$0xff]
      %v1327 = vld [vmem:[%s3 + $0xf8] sm:$0xff]
      %v1328 = vld [vmem:[#allocation2] sm:$0xff]
      %v1329 = vld [vmem:[#allocation2 + $0x8] sm:$0xff]
      %v1330 = vld [vmem:[#allocation2 + $0x10] sm:$0xff]
      %v1331 = vld [vmem:[#allocation2 + $0x18] sm:$0xff]
      %v1332 = vld [vmem:[#allocation2 + $0x20] sm:$0xff]
      %v1333 = vld [vmem:[#allocation2 + $0x28] sm:$0xff]
      %v1334 = vld [vmem:[#allocation2 + $0x30] sm:$0xff]
      %v1335 = vld [vmem:[#allocation2 + $0x38] sm:$0xff]
      %v1336 = vadd.f32 %v1328, %v1329
      %1337 = vadd.xlane.f32.xlu0 %v1336
      %v1338 = vpop.xlane.xlu0 %1337
      %v1339 = vadd.f32 %v1330, %v1331
      %1340 = vadd.xlane.f32.xlu0 %v1339
      %v1341 = vpop.xlane.xlu0 %1340
      %v1342 = vadd.f32 %v1332, %v1333
      %1343 = vadd.xlane.f32.xlu0 %v1342
      %v1344 = vpop.xlane.xlu0 %1343
      %v1345 = vadd.f32 %v1334, %v1335
      %1346 = vadd.xlane.f32.xlu0 %v1345
      %v1347 = vpop.xlane.xlu0 %1346
      %v1348 = vrcp.pop 256.0
      %v1349 = vmul.f32 %v1338, %v1348
      %v1350 = vmul.f32 %v1341, %v1348
      %v1351 = vmul.f32 %v1344, %v1348
      %v1352 = vmul.f32 %v1347, %v1348
      %v1353 = vsub.f32 %v1328, %v1349
      %v1354 = vsub.f32 %v1329, %v1349
      %v1355 = vsub.f32 %v1330, %v1350
      %v1356 = vsub.f32 %v1331, %v1350
      %v1357 = vsub.f32 %v1332, %v1351
      %v1358 = vsub.f32 %v1333, %v1351
      %v1359 = vsub.f32 %v1334, %v1352
      %v1360 = vsub.f32 %v1335, %v1352
      %v1361 = vmul.f32 %v1353, %v1353
      %v1362 = vmul.f32 %v1354, %v1354
      %v1363 = vmul.f32 %v1355, %v1355
      %v1364 = vmul.f32 %v1356, %v1356
      %v1365 = vmul.f32 %v1357, %v1357
      %v1366 = vmul.f32 %v1358, %v1358
      %v1367 = vmul.f32 %v1359, %v1359
      %v1368 = vmul.f32 %v1360, %v1360
      %v1369 = vadd.f32 %v1361, %v1362
      %1370 = vadd.xlane.f32.xlu0 %v1369
      %v1371 = vpop.xlane.xlu0 %1370
      %v1372 = vadd.f32 %v1363, %v1364
      %1373 = vadd.xlane.f32.xlu0 %v1372
      %v1374 = vpop.xlane.xlu0 %1373
      %v1375 = vadd.f32 %v1365, %v1366
      %1376 = vadd.xlane.f32.xlu0 %v1375
      %v1377 = vpop.xlane.xlu0 %1376
      %v1378 = vadd.f32 %v1367, %v1368
      %1379 = vadd.xlane.f32.xlu0 %v1378
      %v1380 = vpop.xlane.xlu0 %1379
      %v1381 = vmul.f32 %v1371, %v1348
      %v1382 = vmul.f32 %v1374, %v1348
      %v1383 = vmul.f32 %v1377, %v1348
      %v1384 = vmul.f32 %v1380, %v1348
      %v1385 = vadd.f32 %v1381, 1e-05
      %v1386 = vadd.f32 %v1382, 1e-05
      %v1387 = vadd.f32 %v1383, 1e-05
      %v1388 = vadd.f32 %v1384, 1e-05
      %v1389 = vrsqrt.pop %v1385
      %v1390 = vrsqrt.pop %v1386
      %v1391 = vrsqrt.pop %v1387
      %v1392 = vrsqrt.pop %v1388
      %v1393 = vmul.f32 %v1353, %v1389
      %v1394 = vmul.f32 %v1354, %v1389
      %v1395 = vmul.f32 %v1355, %v1390
      %v1396 = vmul.f32 %v1356, %v1390
      %v1397 = vmul.f32 %v1357, %v1391
      %v1398 = vmul.f32 %v1358, %v1391
      %v1399 = vmul.f32 %v1359, %v1392
      %v1400 = vmul.f32 %v1360, %v1392
      %v1401 = vlaneseq
      %v1402 = vshrl.u32 %v1401, 7
      %v1403 = vsub.s32 0, %v1402
      %v1404 = vrot.slane %v1292, %v1403
      %v1405 = vlaneseq
      %v1406 = vshrl.u32 %v1405, 7
      %v1407 = vsub.s32 0, %v1406
      %v1408 = vrot.slane %v1293, %v1407
      %v1409 = vmul.f32 %v1393, %v1404
      %v1410 = vmul.f32 %v1394, %v1408
      %v1411 = vmul.f32 %v1395, %v1404
      %v1412 = vmul.f32 %v1396, %v1408
      %v1413 = vmul.f32 %v1397, %v1404
      %v1414 = vmul.f32 %v1398, %v1408
      %v1415 = vmul.f32 %v1399, %v1404
      %v1416 = vmul.f32 %v1400, %v1408
      %v1417 = vlaneseq
      %v1418 = vshrl.u32 %v1417, 7
      %v1419 = vsub.s32 1, %v1418
      %v1420 = vrot.slane %v1292, %v1419
      %v1421 = vlaneseq
      %v1422 = vshrl.u32 %v1421, 7
      %v1423 = vsub.s32 1, %v1422
      %v1424 = vrot.slane %v1293, %v1423
      %v1425 = vadd.f32 %v1409, %v1420
      %v1426 = vadd.f32 %v1410, %v1424
      %v1427 = vadd.f32 %v1411, %v1420
      %v1428 = vadd.f32 %v1412, %v1424
      %v1429 = vadd.f32 %v1413, %v1420
      %v1430 = vadd.f32 %v1414, %v1424
      %v1431 = vadd.f32 %v1415, %v1420
      %v1432 = vadd.f32 %v1416, %v1424
      %v1433 = vld [vmem:[%s453] sm:$0xff]
      %v1434 = vld [vmem:[%s453 + $0x8] sm:$0xff]
      %v1435 = vld [vmem:[%s453 + $0x10] sm:$0xff]
      %v1436 = vld [vmem:[%s453 + $0x18] sm:$0xff]
      %v1437 = vld [vmem:[%s453 + $0x20] sm:$0xff]
      %v1438 = vld [vmem:[%s453 + $0x28] sm:$0xff]
      %v1439 = vld [vmem:[%s453 + $0x30] sm:$0xff]
      %v1440 = vld [vmem:[%s453 + $0x38] sm:$0xff]
      %v1441 = vld [vmem:[%s453 + $0x40] sm:$0xff]
      %v1442 = vld [vmem:[%s453 + $0x48] sm:$0xff]
      %v1443 = vld [vmem:[%s453 + $0x50] sm:$0xff]
      %v1444 = vld [vmem:[%s453 + $0x58] sm:$0xff]
      %v1445 = vld [vmem:[%s453 + $0x60] sm:$0xff]
      %v1446 = vld [vmem:[%s453 + $0x68] sm:$0xff]
      %v1447 = vld [vmem:[%s453 + $0x70] sm:$0xff]
      %v1448 = vld [vmem:[%s453 + $0x78] sm:$0xff]
      %v1449 = vld [vmem:[%s453 + $0x80] sm:$0xff]
      %v1450 = vld [vmem:[%s453 + $0x88] sm:$0xff]
      %v1451 = vld [vmem:[%s453 + $0x90] sm:$0xff]
      %v1452 = vld [vmem:[%s453 + $0x98] sm:$0xff]
      %v1453 = vld [vmem:[%s453 + $0xa0] sm:$0xff]
      %v1454 = vld [vmem:[%s453 + $0xa8] sm:$0xff]
      %v1455 = vld [vmem:[%s453 + $0xb0] sm:$0xff]
      %v1456 = vld [vmem:[%s453 + $0xb8] sm:$0xff]
      %v1457 = vld [vmem:[%s453 + $0xc0] sm:$0xff]
      %v1458 = vld [vmem:[%s453 + $0xc8] sm:$0xff]
      %v1459 = vld [vmem:[%s453 + $0xd0] sm:$0xff]
      %v1460 = vld [vmem:[%s453 + $0xd8] sm:$0xff]
      %v1461 = vld [vmem:[%s453 + $0xe0] sm:$0xff]
      %v1462 = vld [vmem:[%s453 + $0xe8] sm:$0xff]
      %v1463 = vld [vmem:[%s453 + $0xf0] sm:$0xff]
      %v1464 = vld [vmem:[%s453 + $0xf8] sm:$0xff]
      %v1465 = vld [vmem:[%s453 + $0x100] sm:$0xff]
      %v1466 = vld [vmem:[%s453 + $0x108] sm:$0xff]
      %v1467 = vld [vmem:[%s453 + $0x110] sm:$0xff]
      %v1468 = vld [vmem:[%s453 + $0x118] sm:$0xff]
      %v1469 = vld [vmem:[%s453 + $0x120] sm:$0xff]
      %v1470 = vld [vmem:[%s453 + $0x128] sm:$0xff]
      %v1471 = vld [vmem:[%s453 + $0x130] sm:$0xff]
      %v1472 = vld [vmem:[%s453 + $0x138] sm:$0xff]
      %v1473 = vld [vmem:[%s453 + $0x140] sm:$0xff]
      %v1474 = vld [vmem:[%s453 + $0x148] sm:$0xff]
      %v1475 = vld [vmem:[%s453 + $0x150] sm:$0xff]
      %v1476 = vld [vmem:[%s453 + $0x158] sm:$0xff]
      %v1477 = vld [vmem:[%s453 + $0x160] sm:$0xff]
      %v1478 = vld [vmem:[%s453 + $0x168] sm:$0xff]
      %v1479 = vld [vmem:[%s453 + $0x170] sm:$0xff]
      %v1480 = vld [vmem:[%s453 + $0x178] sm:$0xff]
      %v1481 = vld [vmem:[%s453 + $0x180] sm:$0xff]
      %v1482 = vld [vmem:[%s453 + $0x188] sm:$0xff]
      %v1483 = vld [vmem:[%s453 + $0x190] sm:$0xff]
      %v1484 = vld [vmem:[%s453 + $0x198] sm:$0xff]
      %v1485 = vld [vmem:[%s453 + $0x1a0] sm:$0xff]
      %v1486 = vld [vmem:[%s453 + $0x1a8] sm:$0xff]
      %v1487 = vld [vmem:[%s453 + $0x1b0] sm:$0xff]
      %v1488 = vld [vmem:[%s453 + $0x1b8] sm:$0xff]
      %v1489 = vld [vmem:[%s453 + $0x1c0] sm:$0xff]
      %v1490 = vld [vmem:[%s453 + $0x1c8] sm:$0xff]
      %v1491 = vld [vmem:[%s453 + $0x1d0] sm:$0xff]
      %v1492 = vld [vmem:[%s453 + $0x1d8] sm:$0xff]
      %v1493 = vld [vmem:[%s453 + $0x1e0] sm:$0xff]
      %v1494 = vld [vmem:[%s453 + $0x1e8] sm:$0xff]
      %v1495 = vld [vmem:[%s453 + $0x1f0] sm:$0xff]
      %v1496 = vld [vmem:[%s453 + $0x1f8] sm:$0xff]
      %v1497 = vld [vmem:[%s453 + $0x200] sm:$0xff]
      %v1498 = vld [vmem:[%s453 + $0x208] sm:$0xff]
      %v1499 = vld [vmem:[%s453 + $0x210] sm:$0xff]
      %v1500 = vld [vmem:[%s453 + $0x218] sm:$0xff]
      %v1501 = vld [vmem:[%s453 + $0x220] sm:$0xff]
      %v1502 = vld [vmem:[%s453 + $0x228] sm:$0xff]
      %v1503 = vld [vmem:[%s453 + $0x230] sm:$0xff]
      %v1504 = vld [vmem:[%s453 + $0x238] sm:$0xff]
      %v1505 = vld [vmem:[%s453 + $0x240] sm:$0xff]
      %v1506 = vld [vmem:[%s453 + $0x248] sm:$0xff]
      %v1507 = vld [vmem:[%s453 + $0x250] sm:$0xff]
      %v1508 = vld [vmem:[%s453 + $0x258] sm:$0xff]
      %v1509 = vld [vmem:[%s453 + $0x260] sm:$0xff]
      %v1510 = vld [vmem:[%s453 + $0x268] sm:$0xff]
      %v1511 = vld [vmem:[%s453 + $0x270] sm:$0xff]
      %v1512 = vld [vmem:[%s453 + $0x278] sm:$0xff]
      %v1513 = vld [vmem:[%s453 + $0x280] sm:$0xff]
      %v1514 = vld [vmem:[%s453 + $0x288] sm:$0xff]
      %v1515 = vld [vmem:[%s453 + $0x290] sm:$0xff]
      %v1516 = vld [vmem:[%s453 + $0x298] sm:$0xff]
      %v1517 = vld [vmem:[%s453 + $0x2a0] sm:$0xff]
      %v1518 = vld [vmem:[%s453 + $0x2a8] sm:$0xff]
      %v1519 = vld [vmem:[%s453 + $0x2b0] sm:$0xff]
      %v1520 = vld [vmem:[%s453 + $0x2b8] sm:$0xff]
      %v1521 = vld [vmem:[%s453 + $0x2c0] sm:$0xff]
      %v1522 = vld [vmem:[%s453 + $0x2c8] sm:$0xff]
      %v1523 = vld [vmem:[%s453 + $0x2d0] sm:$0xff]
      %v1524 = vld [vmem:[%s453 + $0x2d8] sm:$0xff]
      %v1525 = vld [vmem:[%s453 + $0x2e0] sm:$0xff]
      %v1526 = vld [vmem:[%s453 + $0x2e8] sm:$0xff]
      %v1527 = vld [vmem:[%s453 + $0x2f0] sm:$0xff]
      %v1528 = vld [vmem:[%s453 + $0x2f8] sm:$0xff]
      %v1529 = vpack.c.bf16 %v1427, %v1425
      %v1530 = vpack.c.bf16 %v1428, %v1426
      %v1531 = vpack.c.bf16 %v1431, %v1429
      %v1532 = vpack.c.bf16 %v1432, %v1430
      %v1629 = vunpack.c.l.b16 %v1433
      %v1630 = vunpack.c.h.b16 %v1433
      %v1631 = vunpack.c.l.b16 %v1434
      %v1632 = vunpack.c.h.b16 %v1434
      %v1633 = vunpack.c.l.b16 %v1435
      %v1634 = vunpack.c.h.b16 %v1435
      %v1635 = vunpack.c.l.b16 %v1436
      %v1636 = vunpack.c.h.b16 %v1436
      %v1637 = vunpack.c.l.b16 %v1437
      %v1638 = vunpack.c.h.b16 %v1437
      %v1639 = vunpack.c.l.b16 %v1438
      %v1640 = vunpack.c.h.b16 %v1438
      %v1641 = vunpack.c.l.b16 %v1439
      %v1642 = vunpack.c.h.b16 %v1439
      %v1643 = vunpack.c.l.b16 %v1440
      %v1644 = vunpack.c.h.b16 %v1440
      %v1645 = vunpack.c.l.b16 %v1441
      %v1646 = vunpack.c.h.b16 %v1441
      %v1647 = vunpack.c.l.b16 %v1442
      %v1648 = vunpack.c.h.b16 %v1442
      %v1649 = vunpack.c.l.b16 %v1443
      %v1650 = vunpack.c.h.b16 %v1443
      %v1651 = vunpack.c.l.b16 %v1444
      %v1652 = vunpack.c.h.b16 %v1444
      %v1653 = vunpack.c.l.b16 %v1445
      %v1654 = vunpack.c.h.b16 %v1445
      %v1655 = vunpack.c.l.b16 %v1446
      %v1656 = vunpack.c.h.b16 %v1446
      %v1657 = vunpack.c.l.b16 %v1447
      %v1658 = vunpack.c.h.b16 %v1447
      %v1659 = vunpack.c.l.b16 %v1448
      %v1660 = vunpack.c.h.b16 %v1448
      %v1661 = vunpack.c.l.b16 %v1449
      %v1662 = vunpack.c.h.b16 %v1449
      %v1663 = vunpack.c.l.b16 %v1450
      %v1664 = vunpack.c.h.b16 %v1450
      %v1665 = vunpack.c.l.b16 %v1451
      %v1666 = vunpack.c.h.b16 %v1451
      %v1667 = vunpack.c.l.b16 %v1452
      %v1668 = vunpack.c.h.b16 %v1452
      %v1669 = vunpack.c.l.b16 %v1453
      %v1670 = vunpack.c.h.b16 %v1453
      %v1671 = vunpack.c.l.b16 %v1454
      %v1672 = vunpack.c.h.b16 %v1454
      %v1673 = vunpack.c.l.b16 %v1455
      %v1674 = vunpack.c.h.b16 %v1455
      %v1675 = vunpack.c.l.b16 %v1456
      %v1676 = vunpack.c.h.b16 %v1456
      %v1677 = vunpack.c.l.b16 %v1457
      %v1678 = vunpack.c.h.b16 %v1457
      %v1679 = vunpack.c.l.b16 %v1458
      %v1680 = vunpack.c.h.b16 %v1458
      %v1681 = vunpack.c.l.b16 %v1459
      %v1682 = vunpack.c.h.b16 %v1459
      %v1683 = vunpack.c.l.b16 %v1460
      %v1684 = vunpack.c.h.b16 %v1460
      %v1685 = vunpack.c.l.b16 %v1461
      %v1686 = vunpack.c.h.b16 %v1461
      %v1687 = vunpack.c.l.b16 %v1462
      %v1688 = vunpack.c.h.b16 %v1462
      %v1689 = vunpack.c.l.b16 %v1463
      %v1690 = vunpack.c.h.b16 %v1463
      %v1691 = vunpack.c.l.b16 %v1464
      %v1692 = vunpack.c.h.b16 %v1464
      %v1693 = vunpack.c.l.b16 %v1465
      %v1694 = vunpack.c.h.b16 %v1465
      %v1695 = vunpack.c.l.b16 %v1466
      %v1696 = vunpack.c.h.b16 %v1466
      %v1697 = vunpack.c.l.b16 %v1467
      %v1698 = vunpack.c.h.b16 %v1467
      %v1699 = vunpack.c.l.b16 %v1468
      %v1700 = vunpack.c.h.b16 %v1468
      %v1701 = vunpack.c.l.b16 %v1469
      %v1702 = vunpack.c.h.b16 %v1469
      %v1703 = vunpack.c.l.b16 %v1470
      %v1704 = vunpack.c.h.b16 %v1470
      %v1705 = vunpack.c.l.b16 %v1471
      %v1706 = vunpack.c.h.b16 %v1471
      %v1707 = vunpack.c.l.b16 %v1472
      %v1708 = vunpack.c.h.b16 %v1472
      %v1709 = vunpack.c.l.b16 %v1473
      %v1710 = vunpack.c.h.b16 %v1473
      %v1711 = vunpack.c.l.b16 %v1474
      %v1712 = vunpack.c.h.b16 %v1474
      %v1713 = vunpack.c.l.b16 %v1475
      %v1714 = vunpack.c.h.b16 %v1475
      %v1715 = vunpack.c.l.b16 %v1476
      %v1716 = vunpack.c.h.b16 %v1476
      %v1717 = vunpack.c.l.b16 %v1477
      %v1718 = vunpack.c.h.b16 %v1477
      %v1719 = vunpack.c.l.b16 %v1478
      %v1720 = vunpack.c.h.b16 %v1478
      %v1721 = vunpack.c.l.b16 %v1479
      %v1722 = vunpack.c.h.b16 %v1479
      %v1723 = vunpack.c.l.b16 %v1480
      %v1724 = vunpack.c.h.b16 %v1480
      %v1725 = vunpack.c.l.b16 %v1481
      %v1726 = vunpack.c.h.b16 %v1481
      %v1727 = vunpack.c.l.b16 %v1482
      %v1728 = vunpack.c.h.b16 %v1482
      %v1729 = vunpack.c.l.b16 %v1483
      %v1730 = vunpack.c.h.b16 %v1483
      %v1731 = vunpack.c.l.b16 %v1484
      %v1732 = vunpack.c.h.b16 %v1484
      %v1733 = vunpack.c.l.b16 %v1485
      %v1734 = vunpack.c.h.b16 %v1485
      %v1735 = vunpack.c.l.b16 %v1486
      %v1736 = vunpack.c.h.b16 %v1486
      %v1737 = vunpack.c.l.b16 %v1487
      %v1738 = vunpack.c.h.b16 %v1487
      %v1739 = vunpack.c.l.b16 %v1488
      %v1740 = vunpack.c.h.b16 %v1488
      %v1741 = vunpack.c.l.b16 %v1489
      %v1742 = vunpack.c.h.b16 %v1489
      %v1743 = vunpack.c.l.b16 %v1490
      %v1744 = vunpack.c.h.b16 %v1490
      %v1745 = vunpack.c.l.b16 %v1491
      %v1746 = vunpack.c.h.b16 %v1491
      %v1747 = vunpack.c.l.b16 %v1492
      %v1748 = vunpack.c.h.b16 %v1492
      %v1749 = vunpack.c.l.b16 %v1493
      %v1750 = vunpack.c.h.b16 %v1493
      %v1751 = vunpack.c.l.b16 %v1494
      %v1752 = vunpack.c.h.b16 %v1494
      %v1753 = vunpack.c.l.b16 %v1495
      %v1754 = vunpack.c.h.b16 %v1495
      %v1755 = vunpack.c.l.b16 %v1496
      %v1756 = vunpack.c.h.b16 %v1496
      %v1757 = vunpack.c.l.b16 %v1497
      %v1758 = vunpack.c.h.b16 %v1497
      %v1759 = vunpack.c.l.b16 %v1498
      %v1760 = vunpack.c.h.b16 %v1498
      %v1761 = vunpack.c.l.b16 %v1499
      %v1762 = vunpack.c.h.b16 %v1499
      %v1763 = vunpack.c.l.b16 %v1500
      %v1764 = vunpack.c.h.b16 %v1500
      %v1765 = vunpack.c.l.b16 %v1501
      %v1766 = vunpack.c.h.b16 %v1501
      %v1767 = vunpack.c.l.b16 %v1502
      %v1768 = vunpack.c.h.b16 %v1502
      %v1769 = vunpack.c.l.b16 %v1503
      %v1770 = vunpack.c.h.b16 %v1503
      %v1771 = vunpack.c.l.b16 %v1504
      %v1772 = vunpack.c.h.b16 %v1504
      %v1773 = vunpack.c.l.b16 %v1505
      %v1774 = vunpack.c.h.b16 %v1505
      %v1775 = vunpack.c.l.b16 %v1506
      %v1776 = vunpack.c.h.b16 %v1506
      %v1777 = vunpack.c.l.b16 %v1507
      %v1778 = vunpack.c.h.b16 %v1507
      %v1779 = vunpack.c.l.b16 %v1508
      %v1780 = vunpack.c.h.b16 %v1508
      %v1781 = vunpack.c.l.b16 %v1509
      %v1782 = vunpack.c.h.b16 %v1509
      %v1783 = vunpack.c.l.b16 %v1510
      %v1784 = vunpack.c.h.b16 %v1510
      %v1785 = vunpack.c.l.b16 %v1511
      %v1786 = vunpack.c.h.b16 %v1511
      %v1787 = vunpack.c.l.b16 %v1512
      %v1788 = vunpack.c.h.b16 %v1512
      %v1789 = vunpack.c.l.b16 %v1513
      %v1790 = vunpack.c.h.b16 %v1513
      %v1791 = vunpack.c.l.b16 %v1514
      %v1792 = vunpack.c.h.b16 %v1514
      %v1793 = vunpack.c.l.b16 %v1515
      %v1794 = vunpack.c.h.b16 %v1515
      %v1795 = vunpack.c.l.b16 %v1516
      %v1796 = vunpack.c.h.b16 %v1516
      %v1797 = vunpack.c.l.b16 %v1517
      %v1798 = vunpack.c.h.b16 %v1517
      %v1799 = vunpack.c.l.b16 %v1518
      %v1800 = vunpack.c.h.b16 %v1518
      %v1801 = vunpack.c.l.b16 %v1519
      %v1802 = vunpack.c.h.b16 %v1519
      %v1803 = vunpack.c.l.b16 %v1520
      %v1804 = vunpack.c.h.b16 %v1520
      %v1805 = vunpack.c.l.b16 %v1521
      %v1806 = vunpack.c.h.b16 %v1521
      %v1807 = vunpack.c.l.b16 %v1522
      %v1808 = vunpack.c.h.b16 %v1522
      %v1809 = vunpack.c.l.b16 %v1523
      %v1810 = vunpack.c.h.b16 %v1523
      %v1811 = vunpack.c.l.b16 %v1524
      %v1812 = vunpack.c.h.b16 %v1524
      %v1813 = vunpack.c.l.b16 %v1525
      %v1814 = vunpack.c.h.b16 %v1525
      %v1815 = vunpack.c.l.b16 %v1526
      %v1816 = vunpack.c.h.b16 %v1526
      %v1817 = vunpack.c.l.b16 %v1527
      %v1818 = vunpack.c.h.b16 %v1527
      %v1819 = vunpack.c.l.b16 %v1528
      %v1820 = vunpack.c.h.b16 %v1528
      %v1821 = vpack.c.b16 %v1635, %v1629
      %v1822 = vpack.c.b16 %v1636, %v1630
      %v1823 = vpack.c.b16 %v1637, %v1631
      %v1824 = vpack.c.b16 %v1638, %v1632
      %v1825 = vpack.c.b16 %v1639, %v1633
      %v1826 = vpack.c.b16 %v1640, %v1634
      %v1827 = vpack.c.b16 %v1647, %v1641
      %v1828 = vpack.c.b16 %v1648, %v1642
      %v1829 = vpack.c.b16 %v1649, %v1643
      %v1830 = vpack.c.b16 %v1650, %v1644
      %v1831 = vpack.c.b16 %v1651, %v1645
      %v1832 = vpack.c.b16 %v1652, %v1646
      %v1833 = vpack.c.b16 %v1659, %v1653
      %v1834 = vpack.c.b16 %v1660, %v1654
      %v1835 = vpack.c.b16 %v1661, %v1655
      %v1836 = vpack.c.b16 %v1662, %v1656
      %v1837 = vpack.c.b16 %v1663, %v1657
      %v1838 = vpack.c.b16 %v1664, %v1658
      %v1839 = vpack.c.b16 %v1671, %v1665
      %v1840 = vpack.c.b16 %v1672, %v1666
      %v1841 = vpack.c.b16 %v1673, %v1667
      %v1842 = vpack.c.b16 %v1674, %v1668
      %v1843 = vpack.c.b16 %v1675, %v1669
      %v1844 = vpack.c.b16 %v1676, %v1670
      %v1845 = vpack.c.b16 %v1683, %v1677
      %v1846 = vpack.c.b16 %v1684, %v1678
      %v1847 = vpack.c.b16 %v1685, %v1679
      %v1848 = vpack.c.b16 %v1686, %v1680
      %v1849 = vpack.c.b16 %v1687, %v1681
      %v1850 = vpack.c.b16 %v1688, %v1682
      %v1851 = vpack.c.b16 %v1695, %v1689
      %v1852 = vpack.c.b16 %v1696, %v1690
      %v1853 = vpack.c.b16 %v1697, %v1691
      %v1854 = vpack.c.b16 %v1698, %v1692
      %v1855 = vpack.c.b16 %v1699, %v1693
      %v1856 = vpack.c.b16 %v1700, %v1694
      %v1857 = vpack.c.b16 %v1707, %v1701
      %v1858 = vpack.c.b16 %v1708, %v1702
      %v1859 = vpack.c.b16 %v1709, %v1703
      %v1860 = vpack.c.b16 %v1710, %v1704
      %v1861 = vpack.c.b16 %v1711, %v1705
      %v1862 = vpack.c.b16 %v1712, %v1706
      %v1863 = vpack.c.b16 %v1719, %v1713
      %v1864 = vpack.c.b16 %v1720, %v1714
      %v1865 = vpack.c.b16 %v1721, %v1715
      %v1866 = vpack.c.b16 %v1722, %v1716
      %v1867 = vpack.c.b16 %v1723, %v1717
      %v1868 = vpack.c.b16 %v1724, %v1718
      %v1869 = vpack.c.b16 %v1731, %v1725
      %v1870 = vpack.c.b16 %v1732, %v1726
      %v1871 = vpack.c.b16 %v1733, %v1727
      %v1872 = vpack.c.b16 %v1734, %v1728
      %v1873 = vpack.c.b16 %v1735, %v1729
      %v1874 = vpack.c.b16 %v1736, %v1730
      %v1875 = vpack.c.b16 %v1743, %v1737
      %v1876 = vpack.c.b16 %v1744, %v1738
      %v1877 = vpack.c.b16 %v1745, %v1739
      %v1878 = vpack.c.b16 %v1746, %v1740
      %v1879 = vpack.c.b16 %v1747, %v1741
      %v1880 = vpack.c.b16 %v1748, %v1742
      %v1881 = vpack.c.b16 %v1755, %v1749
      %v1882 = vpack.c.b16 %v1756, %v1750
      %v1883 = vpack.c.b16 %v1757, %v1751
      %v1884 = vpack.c.b16 %v1758, %v1752
      %v1885 = vpack.c.b16 %v1759, %v1753
      %v1886 = vpack.c.b16 %v1760, %v1754
      %v1887 = vpack.c.b16 %v1767, %v1761
      %v1888 = vpack.c.b16 %v1768, %v1762
      %v1889 = vpack.c.b16 %v1769, %v1763
      %v1890 = vpack.c.b16 %v1770, %v1764
      %v1891 = vpack.c.b16 %v1771, %v1765
      %v1892 = vpack.c.b16 %v1772, %v1766
      %v1893 = vpack.c.b16 %v1779, %v1773
      %v1894 = vpack.c.b16 %v1780, %v1774
      %v1895 = vpack.c.b16 %v1781, %v1775
      %v1896 = vpack.c.b16 %v1782, %v1776
      %v1897 = vpack.c.b16 %v1783, %v1777
      %v1898 = vpack.c.b16 %v1784, %v1778
      %v1899 = vpack.c.b16 %v1791, %v1785
      %v1900 = vpack.c.b16 %v1792, %v1786
      %v1901 = vpack.c.b16 %v1793, %v1787
      %v1902 = vpack.c.b16 %v1794, %v1788
      %v1903 = vpack.c.b16 %v1795, %v1789
      %v1904 = vpack.c.b16 %v1796, %v1790
      %v1905 = vpack.c.b16 %v1803, %v1797
      %v1906 = vpack.c.b16 %v1804, %v1798
      %v1907 = vpack.c.b16 %v1805, %v1799
      %v1908 = vpack.c.b16 %v1806, %v1800
      %v1909 = vpack.c.b16 %v1807, %v1801
      %v1910 = vpack.c.b16 %v1808, %v1802
      %v1911 = vpack.c.b16 %v1815, %v1809
      %v1912 = vpack.c.b16 %v1816, %v1810
      %v1913 = vpack.c.b16 %v1817, %v1811
      %v1914 = vpack.c.b16 %v1818, %v1812
      %v1915 = vpack.c.b16 %v1819, %v1813
      %v1916 = vpack.c.b16 %v1820, %v1814
      %2013 = vmatprep.subr.bf16.mxu0 %v1822
      %2014 = vmatpush1.bf16.msra.mxu0 %v1821
      %2015 = vmatprep.subr.bf16.mxu0 %v1828
      %2016 = vmatpush1.bf16.msra.mxu0 %v1827
      %2017 = vmatprep.subr.bf16.mxu0 %v1834
      %2018 = vmatpush1.bf16.msra.mxu0 %v1833
      %2019 = vmatprep.subr.bf16.mxu0 %v1840
      %2020 = vmatpush1.bf16.msra.mxu0 %v1839
      %2021 = vmatprep.subr.bf16.mxu0 %v1846
      %2022 = vmatpush1.bf16.msra.mxu0 %v1845
      %2023 = vmatprep.subr.bf16.mxu0 %v1852
      %2024 = vmatpush1.bf16.msra.mxu0 %v1851
      %2025 = vmatprep.subr.bf16.mxu0 %v1858
      %2026 = vmatpush1.bf16.msra.mxu0 %v1857
      %2027 = vmatprep.subr.bf16.mxu0 %v1864
      %2028 = vmatpush1.bf16.msra.mxu0 %v1863
      %2029 = vmatprep.subr.bf16.mxu0 %v1870
      %2030 = vmatpush1.bf16.msra.mxu0 %v1869
      %2031 = vmatprep.subr.bf16.mxu0 %v1876
      %2032 = vmatpush1.bf16.msra.mxu0 %v1875
      %2033 = vmatprep.subr.bf16.mxu0 %v1882
      %2034 = vmatpush1.bf16.msra.mxu0 %v1881
      %2035 = vmatprep.subr.bf16.mxu0 %v1888
      %2036 = vmatpush1.bf16.msra.mxu0 %v1887
      %2037 = vmatprep.subr.bf16.mxu0 %v1894
      %2038 = vmatpush1.bf16.msra.mxu0 %v1893
      %2039 = vmatprep.subr.bf16.mxu0 %v1900
      %2040 = vmatpush1.bf16.msra.mxu0 %v1899
      %2041 = vmatprep.subr.bf16.mxu0 %v1906
      %2042 = vmatpush1.bf16.msra.mxu0 %v1905
      %2043 = vmatprep.subr.bf16.mxu0 %v1912
      %2044 = vmatpush1.bf16.msra.mxu0 %v1911
      %2045 = vmatprep.mubr.bf16.mxu0 %v1530
      %2046 = vmatmul.mubr.bf16.gmra.mrb[0].mxu0 %v1529
      %v2047 = vpop.f32.mrb[0].mxu0
      %v2048 = vadd.f32 0.0, %v2047
      %v2049 = vpop.f32.mrb[0].mxu0
      %v2050 = vadd.f32 0.0, %v2049
      %v2051 = vpop.f32.mrb[0].mxu0
      %v2052 = vadd.f32 0.0, %v2051
      %v2053 = vpop.f32.mrb[0].mxu0
      %v2054 = vadd.f32 0.0, %v2053
      %2055 = vmatprep.mubr.bf16.mxu0 %v1532
      %2056 = vmatmul.mubr.bf16.gmra.mrb[0].mxu0 %v1531
      %v2057 = vpop.f32.mrb[0].mxu0
      %v2058 = vadd.f32 0.0, %v2057
      %v2059 = vpop.f32.mrb[0].mxu0
      %v2060 = vadd.f32 0.0, %v2059
      %v2061 = vpop.f32.mrb[0].mxu0
      %v2062 = vadd.f32 0.0, %v2061
      %v2063 = vpop.f32.mrb[0].mxu0
      %v2064 = vadd.f32 0.0, %v2063
      %2065 = vdwg.mxu0
      %2066 = vmatprep.subr.bf16.mxu0 %v1824
      %2067 = vmatpush1.bf16.msra.mxu0 %v1823
      %2068 = vmatprep.subr.bf16.mxu0 %v1830
      %2069 = vmatpush1.bf16.msra.mxu0 %v1829
      %2070 = vmatprep.subr.bf16.mxu0 %v1836
      %2071 = vmatpush1.bf16.msra.mxu0 %v1835
      %2072 = vmatprep.subr.bf16.mxu0 %v1842
      %2073 = vmatpush1.bf16.msra.mxu0 %v1841
      %2074 = vmatprep.subr.bf16.mxu0 %v1848
      %2075 = vmatpush1.bf16.msra.mxu0 %v1847
      %2076 = vmatprep.subr.bf16.mxu0 %v1854
      %2077 = vmatpush1.bf16.msra.mxu0 %v1853
      %2078 = vmatprep.subr.bf16.mxu0 %v1860
      %2079 = vmatpush1.bf16.msra.mxu0 %v1859
      %2080 = vmatprep.subr.bf16.mxu0 %v1866
      %2081 = vmatpush1.bf16.msra.mxu0 %v1865
      %2082 = vmatprep.subr.bf16.mxu0 %v1872
      %2083 = vmatpush1.bf16.msra.mxu0 %v1871
      %2084 = vmatprep.subr.bf16.mxu0 %v1878
      %2085 = vmatpush1.bf16.msra.mxu0 %v1877
      %2086 = vmatprep.subr.bf16.mxu0 %v1884
      %2087 = vmatpush1.bf16.msra.mxu0 %v1883
      %2088 = vmatprep.subr.bf16.mxu0 %v1890
      %2089 = vmatpush1.bf16.msra.mxu0 %v1889
      %2090 = vmatprep.subr.bf16.mxu0 %v1896
      %2091 = vmatpush1.bf16.msra.mxu0 %v1895
      %2092 = vmatprep.subr.bf16.mxu0 %v1902
      %2093 = vmatpush1.bf16.msra.mxu0 %v1901
      %2094 = vmatprep.subr.bf16.mxu0 %v1908
      %2095 = vmatpush1.bf16.msra.mxu0 %v1907
      %2096 = vmatprep.subr.bf16.mxu0 %v1914
      %2097 = vmatpush1.bf16.msra.mxu0 %v1913
      %2098 = vmatprep.mubr.bf16.mxu0 %v1530
      %2099 = vmatmul.mubr.bf16.gmra.mrb[0].mxu0 %v1529
      %v2100 = vpop.f32.mrb[0].mxu0
      %v2101 = vadd.f32 0.0, %v2100
      %v2102 = vpop.f32.mrb[0].mxu0
      %v2103 = vadd.f32 0.0, %v2102
      %v2104 = vpop.f32.mrb[0].mxu0
      %v2105 = vadd.f32 0.0, %v2104
      %v2106 = vpop.f32.mrb[0].mxu0
      %v2107 = vadd.f32 0.0, %v2106
      %2108 = vmatprep.mubr.bf16.mxu0 %v1532
      %2109 = vmatmul.mubr.bf16.gmra.mrb[0].mxu0 %v1531
      %v2110 = vpop.f32.mrb[0].mxu0
      %v2111 = vadd.f32 0.0, %v2110
      %v2112 = vpop.f32.mrb[0].mxu0
      %v2113 = vadd.f32 0.0, %v2112
      %v2114 = vpop.f32.mrb[0].mxu0
      %v2115 = vadd.f32 0.0, %v2114
      %v2116 = vpop.f32.mrb[0].mxu0
      %v2117 = vadd.f32 0.0, %v2116
      %2118 = vdwg.mxu0
      %2119 = vmatprep.subr.bf16.mxu0 %v1826
      %2120 = vmatpush1.bf16.msra.mxu0 %v1825
      %2121 = vmatprep.subr.bf16.mxu0 %v1832
      %2122 = vmatpush1.bf16.msra.mxu0 %v1831
      %2123 = vmatprep.subr.bf16.mxu0 %v1838
      %2124 = vmatpush1.bf16.msra.mxu0 %v1837
      %2125 = vmatprep.subr.bf16.mxu0 %v1844
      %2126 = vmatpush1.bf16.msra.mxu0 %v1843
      %2127 = vmatprep.subr.bf16.mxu0 %v1850
      %2128 = vmatpush1.bf16.msra.mxu0 %v1849
      %2129 = vmatprep.subr.bf16.mxu0 %v1856
      %2130 = vmatpush1.bf16.msra.mxu0 %v1855
      %2131 = vmatprep.subr.bf16.mxu0 %v1862
      %2132 = vmatpush1.bf16.msra.mxu0 %v1861
      %2133 = vmatprep.subr.bf16.mxu0 %v1868
      %2134 = vmatpush1.bf16.msra.mxu0 %v1867
      %2135 = vmatprep.subr.bf16.mxu0 %v1874
      %2136 = vmatpush1.bf16.msra.mxu0 %v1873
      %2137 = vmatprep.subr.bf16.mxu0 %v1880
      %2138 = vmatpush1.bf16.msra.mxu0 %v1879
      %2139 = vmatprep.subr.bf16.mxu0 %v1886
      %2140 = vmatpush1.bf16.msra.mxu0 %v1885
      %2141 = vmatprep.subr.bf16.mxu0 %v1892
      %2142 = vmatpush1.bf16.msra.mxu0 %v1891
      %2143 = vmatprep.subr.bf16.mxu0 %v1898
      %2144 = vmatpush1.bf16.msra.mxu0 %v1897
      %2145 = vmatprep.subr.bf16.mxu0 %v1904
      %2146 = vmatpush1.bf16.msra.mxu0 %v1903
      %2147 = vmatprep.subr.bf16.mxu0 %v1910
      %2148 = vmatpush1.bf16.msra.mxu0 %v1909
      %2149 = vmatprep.subr.bf16.mxu0 %v1916
      %2150 = vmatpush1.bf16.msra.mxu0 %v1915
      %2151 = vmatprep.mubr.bf16.mxu0 %v1530
      %2152 = vmatmul.mubr.bf16.gmra.mrb[0].mxu0 %v1529
      %v2153 = vpop.f32.mrb[0].mxu0
      %v2154 = vadd.f32 0.0, %v2153
      %v2155 = vpop.f32.mrb[0].mxu0
      %v2156 = vadd.f32 0.0, %v2155
      %v2157 = vpop.f32.mrb[0].mxu0
      %v2158 = vadd.f32 0.0, %v2157
      %v2159 = vpop.f32.mrb[0].mxu0
      %v2160 = vadd.f32 0.0, %v2159
      %2161 = vmatprep.mubr.bf16.mxu0 %v1532
      %2162 = vmatmul.mubr.bf16.gmra.mrb[0].mxu0 %v1531
      %v2163 = vpop.f32.mrb[0].mxu0
      %v2164 = vadd.f32 0.0, %v2163
      %v2165 = vpop.f32.mrb[0].mxu0
      %v2166 = vadd.f32 0.0, %v2165
      %v2167 = vpop.f32.mrb[0].mxu0
      %v2168 = vadd.f32 0.0, %v2167
      %v2169 = vpop.f32.mrb[0].mxu0
      %v2170 = vadd.f32 0.0, %v2169
      %2171 = vdwg.mxu0
      %v2172 = vlaneseq
      %v2173 = vshrl.u32 %v2172, 7
      %v2174 = vsub.s32 2, %v2173
      %v2175 = vrot.slane %v1292, %v2174
      %v2176 = vlaneseq
      %v2177 = vshrl.u32 %v2176, 7
      %v2178 = vsub.s32 2, %v2177
      %v2179 = vrot.slane %v1293, %v2178
      %v2180 = vadd.f32 %v2048, %v2175
      %v2181 = vadd.f32 %v2050, %v2179
      %v2182 = vadd.f32 %v2052, %v2175
      %v2183 = vadd.f32 %v2054, %v2179
      %v2184 = vadd.f32 %v2058, %v2175
      %v2185 = vadd.f32 %v2060, %v2179
      %v2186 = vadd.f32 %v2062, %v2175
      %v2187 = vadd.f32 %v2064, %v2179
      %v2188 = vlaneseq
      %v2189 = vshrl.u32 %v2188, 7
      %v2190 = vsub.s32 3, %v2189
      %v2191 = vrot.slane %v1292, %v2190
      %v2192 = vlaneseq
      %v2193 = vshrl.u32 %v2192, 7
      %v2194 = vsub.s32 3, %v2193
      %v2195 = vrot.slane %v1293, %v2194
      %v2196 = vadd.f32 %v2101, %v2191
      %v2197 = vadd.f32 %v2103, %v2195
      %v2198 = vadd.f32 %v2105, %v2191
      %v2199 = vadd.f32 %v2107, %v2195
      %v2200 = vadd.f32 %v2111, %v2191
      %v2201 = vadd.f32 %v2113, %v2195
      %v2202 = vadd.f32 %v2115, %v2191
      %v2203 = vadd.f32 %v2117, %v2195
      %v2204 = vlaneseq
      %v2205 = vshrl.u32 %v2204, 7
      %v2206 = vsub.s32 4, %v2205
      %v2207 = vrot.slane %v1292, %v2206
      %v2208 = vlaneseq
      %v2209 = vshrl.u32 %v2208, 7
      %v2210 = vsub.s32 4, %v2209
      %v2211 = vrot.slane %v1293, %v2210
      %v2212 = vadd.f32 %v2154, %v2207
      %v2213 = vadd.f32 %v2156, %v2211
      %v2214 = vadd.f32 %v2158, %v2207
      %v2215 = vadd.f32 %v2160, %v2211
      %v2216 = vadd.f32 %v2164, %v2207
      %v2217 = vadd.f32 %v2166, %v2211
      %v2218 = vadd.f32 %v2168, %v2207
      %v2219 = vadd.f32 %v2170, %v2211
      %v2220 = vmul.f32 %v2180, %v2196
      %v2221 = vmul.f32 %v2181, %v2197
      %v2222 = vmul.f32 %v2182, %v2198
      %v2223 = vmul.f32 %v2183, %v2199
      %v2224 = vmul.f32 %v2184, %v2200
      %v2225 = vmul.f32 %v2185, %v2201
      %v2226 = vmul.f32 %v2186, %v2202
      %v2227 = vmul.f32 %v2187, %v2203
      %v2228 = vpack.c.bf16 %v2222, %v2220
      %v2229 = vpack.c.bf16 %v2223, %v2221
      %v2230 = vpack.c.bf16 %v2226, %v2224
      %v2231 = vpack.c.bf16 %v2227, %v2225
      %v2264 = vunpack.c.l.b16 %v1296
      %v2265 = vunpack.c.h.b16 %v1296
      %v2266 = vunpack.c.l.b16 %v1297
      %v2267 = vunpack.c.h.b16 %v1297
      %v2268 = vunpack.c.l.b16 %v1298
      %v2269 = vunpack.c.h.b16 %v1298
      %v2270 = vunpack.c.l.b16 %v1299
      %v2271 = vunpack.c.h.b16 %v1299
      %v2272 = vunpack.c.l.b16 %v1300
      %v2273 = vunpack.c.h.b16 %v1300
      %v2274 = vunpack.c.l.b16 %v1301
      %v2275 = vunpack.c.h.b16 %v1301
      %v2276 = vunpack.c.l.b16 %v1302
      %v2277 = vunpack.c.h.b16 %v1302
      %v2278 = vunpack.c.l.b16 %v1303
      %v2279 = vunpack.c.h.b16 %v1303
      %v2280 = vunpack.c.l.b16 %v1304
      %v2281 = vunpack.c.h.b16 %v1304
      %v2282 = vunpack.c.l.b16 %v1305
      %v2283 = vunpack.c.h.b16 %v1305
      %v2284 = vunpack.c.l.b16 %v1306
      %v2285 = vunpack.c.h.b16 %v1306
      %v2286 = vunpack.c.l.b16 %v1307
      %v2287 = vunpack.c.h.b16 %v1307
      %v2288 = vunpack.c.l.b16 %v1308
      %v2289 = vunpack.c.h.b16 %v1308
      %v2290 = vunpack.c.l.b16 %v1309
      %v2291 = vunpack.c.h.b16 %v1309
      %v2292 = vunpack.c.l.b16 %v1310
      %v2293 = vunpack.c.h.b16 %v1310
      %v2294 = vunpack.c.l.b16 %v1311
      %v2295 = vunpack.c.h.b16 %v1311
      %v2296 = vunpack.c.l.b16 %v1312
      %v2297 = vunpack.c.h.b16 %v1312
      %v2298 = vunpack.c.l.b16 %v1313
      %v2299 = vunpack.c.h.b16 %v1313
      %v2300 = vunpack.c.l.b16 %v1314
      %v2301 = vunpack.c.h.b16 %v1314
      %v2302 = vunpack.c.l.b16 %v1315
      %v2303 = vunpack.c.h.b16 %v1315
      %v2304 = vunpack.c.l.b16 %v1316
      %v2305 = vunpack.c.h.b16 %v1316
      %v2306 = vunpack.c.l.b16 %v1317
      %v2307 = vunpack.c.h.b16 %v1317
      %v2308 = vunpack.c.l.b16 %v1318
      %v2309 = vunpack.c.h.b16 %v1318
      %v2310 = vunpack.c.l.b16 %v1319
      %v2311 = vunpack.c.h.b16 %v1319
      %v2312 = vunpack.c.l.b16 %v1320
      %v2313 = vunpack.c.h.b16 %v1320
      %v2314 = vunpack.c.l.b16 %v1321
      %v2315 = vunpack.c.h.b16 %v1321
      %v2316 = vunpack.c.l.b16 %v1322
      %v2317 = vunpack.c.h.b16 %v1322
      %v2318 = vunpack.c.l.b16 %v1323
      %v2319 = vunpack.c.h.b16 %v1323
      %v2320 = vunpack.c.l.b16 %v1324
      %v2321 = vunpack.c.h.b16 %v1324
      %v2322 = vunpack.c.l.b16 %v1325
      %v2323 = vunpack.c.h.b16 %v1325
      %v2324 = vunpack.c.l.b16 %v1326
      %v2325 = vunpack.c.h.b16 %v1326
      %v2326 = vunpack.c.l.b16 %v1327
      %v2327 = vunpack.c.h.b16 %v1327
      %v2328 = vpack.c.b16 %v2266, %v2264
      %v2329 = vpack.c.b16 %v2267, %v2265
      %v2330 = vpack.c.b16 %v2270, %v2268
      %v2331 = vpack.c.b16 %v2271, %v2269
      %v2332 = vpack.c.b16 %v2274, %v2272
      %v2333 = vpack.c.b16 %v2275, %v2273
      %v2334 = vpack.c.b16 %v2278, %v2276
      %v2335 = vpack.c.b16 %v2279, %v2277
      %v2336 = vpack.c.b16 %v2282, %v2280
      %v2337 = vpack.c.b16 %v2283, %v2281
      %v2338 = vpack.c.b16 %v2286, %v2284
      %v2339 = vpack.c.b16 %v2287, %v2285
      %v2340 = vpack.c.b16 %v2290, %v2288
      %v2341 = vpack.c.b16 %v2291, %v2289
      %v2342 = vpack.c.b16 %v2294, %v2292
      %v2343 = vpack.c.b16 %v2295, %v2293
      %v2344 = vpack.c.b16 %v2298, %v2296
      %v2345 = vpack.c.b16 %v2299, %v2297
      %v2346 = vpack.c.b16 %v2302, %v2300
      %v2347 = vpack.c.b16 %v2303, %v2301
      %v2348 = vpack.c.b16 %v2306, %v2304
      %v2349 = vpack.c.b16 %v2307, %v2305
      %v2350 = vpack.c.b16 %v2310, %v2308
      %v2351 = vpack.c.b16 %v2311, %v2309
      %v2352 = vpack.c.b16 %v2314, %v2312
      %v2353 = vpack.c.b16 %v2315, %v2313
      %v2354 = vpack.c.b16 %v2318, %v2316
      %v2355 = vpack.c.b16 %v2319, %v2317
      %v2356 = vpack.c.b16 %v2322, %v2320
      %v2357 = vpack.c.b16 %v2323, %v2321
      %v2358 = vpack.c.b16 %v2326, %v2324
      %v2359 = vpack.c.b16 %v2327, %v2325
      %2392 = vmatprep.subr.bf16.mxu0 %v2329
      %2393 = vmatpush1.bf16.msra.mxu0 %v2328
      %2394 = vmatprep.subr.bf16.mxu0 %v2331
      %2395 = vmatpush1.bf16.msra.mxu0 %v2330
      %2396 = vmatprep.subr.bf16.mxu0 %v2333
      %2397 = vmatpush1.bf16.msra.mxu0 %v2332
      %2398 = vmatprep.subr.bf16.mxu0 %v2335
      %2399 = vmatpush1.bf16.msra.mxu0 %v2334
      %2400 = vmatprep.subr.bf16.mxu0 %v2337
      %2401 = vmatpush1.bf16.msra.mxu0 %v2336
      %2402 = vmatprep.subr.bf16.mxu0 %v2339
      %2403 = vmatpush1.bf16.msra.mxu0 %v2338
      %2404 = vmatprep.subr.bf16.mxu0 %v2341
      %2405 = vmatpush1.bf16.msra.mxu0 %v2340
      %2406 = vmatprep.subr.bf16.mxu0 %v2343
      %2407 = vmatpush1.bf16.msra.mxu0 %v2342
      %2408 = vmatprep.subr.bf16.mxu0 %v2345
      %2409 = vmatpush1.bf16.msra.mxu0 %v2344
      %2410 = vmatprep.subr.bf16.mxu0 %v2347
      %2411 = vmatpush1.bf16.msra.mxu0 %v2346
      %2412 = vmatprep.subr.bf16.mxu0 %v2349
      %2413 = vmatpush1.bf16.msra.mxu0 %v2348
      %2414 = vmatprep.subr.bf16.mxu0 %v2351
      %2415 = vmatpush1.bf16.msra.mxu0 %v2350
      %2416 = vmatprep.subr.bf16.mxu0 %v2353
      %2417 = vmatpush1.bf16.msra.mxu0 %v2352
      %2418 = vmatprep.subr.bf16.mxu0 %v2355
      %2419 = vmatpush1.bf16.msra.mxu0 %v2354
      %2420 = vmatprep.subr.bf16.mxu0 %v2357
      %2421 = vmatpush1.bf16.msra.mxu0 %v2356
      %2422 = vmatprep.subr.bf16.mxu0 %v2359
      %2423 = vmatpush1.bf16.msra.mxu0 %v2358
      %2424 = vmatprep.mubr.bf16.mxu0 %v2229
      %2425 = vmatmul.mubr.bf16.gmra.mrb[0].mxu0 %v2228
      %v2426 = vpop.f32.mrb[0].mxu0
      %v2427 = vadd.f32 0.0, %v2426
      %v2428 = vpop.f32.mrb[0].mxu0
      %v2429 = vadd.f32 0.0, %v2428
      %v2430 = vpop.f32.mrb[0].mxu0
      %v2431 = vadd.f32 0.0, %v2430
      %v2432 = vpop.f32.mrb[0].mxu0
      %v2433 = vadd.f32 0.0, %v2432
      %2434 = vmatprep.mubr.bf16.mxu0 %v2231
      %2435 = vmatmul.mubr.bf16.gmra.mrb[0].mxu0 %v2230
      %v2436 = vpop.f32.mrb[0].mxu0
      %v2437 = vadd.f32 0.0, %v2436
      %v2438 = vpop.f32.mrb[0].mxu0
      %v2439 = vadd.f32 0.0, %v2438
      %v2440 = vpop.f32.mrb[0].mxu0
      %v2441 = vadd.f32 0.0, %v2440
      %v2442 = vpop.f32.mrb[0].mxu0
      %v2443 = vadd.f32 0.0, %v2442
      %2444 = vdwg.mxu0
      %v2445 = vmul.f32 %v2180, %v2200
      %v2446 = vmul.f32 %v2181, %v2201
      %v2447 = vmul.f32 %v2182, %v2202
      %v2448 = vmul.f32 %v2183, %v2203
      %v2449 = vmul.f32 %v2184, %v2196
      %v2450 = vmul.f32 %v2185, %v2197
      %v2451 = vmul.f32 %v2186, %v2198
      %v2452 = vmul.f32 %v2187, %v2199
      %v2453 = vpack.c.bf16 %v2447, %v2445
      %v2454 = vpack.c.bf16 %v2448, %v2446
      %v2455 = vpack.c.bf16 %v2451, %v2449
      %v2456 = vpack.c.bf16 %v2452, %v2450
      %2457 = vmatprep.subr.bf16.mxu0 %v2329
      %2458 = vmatpush1.bf16.msra.mxu0 %v2328
      %2459 = vmatprep.subr.bf16.mxu0 %v2331
      %2460 = vmatpush1.bf16.msra.mxu0 %v2330
      %2461 = vmatprep.subr.bf16.mxu0 %v2333
      %2462 = vmatpush1.bf16.msra.mxu0 %v2332
      %2463 = vmatprep.subr.bf16.mxu0 %v2335
      %2464 = vmatpush1.bf16.msra.mxu0 %v2334
      %2465 = vmatprep.subr.bf16.mxu0 %v2337
      %2466 = vmatpush1.bf16.msra.mxu0 %v2336
      %2467 = vmatprep.subr.bf16.mxu0 %v2339
      %2468 = vmatpush1.bf16.msra.mxu0 %v2338
      %2469 = vmatprep.subr.bf16.mxu0 %v2341
      %2470 = vmatpush1.bf16.msra.mxu0 %v2340
      %2471 = vmatprep.subr.bf16.mxu0 %v2343
      %2472 = vmatpush1.bf16.msra.mxu0 %v2342
      %2473 = vmatprep.subr.bf16.mxu0 %v2345
      %2474 = vmatpush1.bf16.msra.mxu0 %v2344
      %2475 = vmatprep.subr.bf16.mxu0 %v2347
      %2476 = vmatpush1.bf16.msra.mxu0 %v2346
      %2477 = vmatprep.subr.bf16.mxu0 %v2349
      %2478 = vmatpush1.bf16.msra.mxu0 %v2348
      %2479 = vmatprep.subr.bf16.mxu0 %v2351
      %2480 = vmatpush1.bf16.msra.mxu0 %v2350
      %2481 = vmatprep.subr.bf16.mxu0 %v2353
      %2482 = vmatpush1.bf16.msra.mxu0 %v2352
      %2483 = vmatprep.subr.bf16.mxu0 %v2355
      %2484 = vmatpush1.bf16.msra.mxu0 %v2354
      %2485 = vmatprep.subr.bf16.mxu0 %v2357
      %2486 = vmatpush1.bf16.msra.mxu0 %v2356
      %2487 = vmatprep.subr.bf16.mxu0 %v2359
      %2488 = vmatpush1.bf16.msra.mxu0 %v2358
      %2489 = vmatprep.mubr.bf16.mxu0 %v2454
      %2490 = vmatmul.mubr.bf16.gmra.mrb[0].mxu0 %v2453
      %v2491 = vpop.f32.mrb[0].mxu0
      %v2492 = vadd.f32 0.0, %v2491
      %v2493 = vpop.f32.mrb[0].mxu0
      %v2494 = vadd.f32 0.0, %v2493
      %v2495 = vpop.f32.mrb[0].mxu0
      %v2496 = vadd.f32 0.0, %v2495
      %v2497 = vpop.f32.mrb[0].mxu0
      %v2498 = vadd.f32 0.0, %v2497
      %2499 = vmatprep.mubr.bf16.mxu0 %v2456
      %2500 = vmatmul.mubr.bf16.gmra.mrb[0].mxu0 %v2455
      %v2501 = vpop.f32.mrb[0].mxu0
      %v2502 = vadd.f32 0.0, %v2501
      %v2503 = vpop.f32.mrb[0].mxu0
      %v2504 = vadd.f32 0.0, %v2503
      %v2505 = vpop.f32.mrb[0].mxu0
      %v2506 = vadd.f32 0.0, %v2505
      %v2507 = vpop.f32.mrb[0].mxu0
      %v2508 = vadd.f32 0.0, %v2507
      %2509 = vdwg.mxu0
      %v2510 = vmax.f32 %v2427, %v2492
      %v2511 = vmax.f32 %v2429, %v2494
      %v2512 = vmax.f32 %v2431, %v2496
      %v2513 = vmax.f32 %v2433, %v2498
      %v2514 = vmax.f32 %v2437, %v2502
      %v2515 = vmax.f32 %v2439, %v2504
      %v2516 = vmax.f32 %v2441, %v2506
      %v2517 = vmax.f32 %v2443, %v2508
      %v2518 = vsub.f32 %v2427, %v2510
      %v2519 = vsub.f32 %v2429, %v2511
      %v2520 = vsub.f32 %v2431, %v2512
      %v2521 = vsub.f32 %v2433, %v2513
      %v2522 = vsub.f32 %v2437, %v2514
      %v2523 = vsub.f32 %v2439, %v2515
      %v2524 = vsub.f32 %v2441, %v2516
      %v2525 = vsub.f32 %v2443, %v2517
      %v2526 = vmul.f32 %v2518, 1.442695
      %v2527 = vpow.pop %v2526
      %v2528 = vmul.f32 %v2519, 1.442695
      %v2529 = vpow.pop %v2528
      %v2530 = vmul.f32 %v2520, 1.442695
      %v2531 = vpow.pop %v2530
      %v2532 = vmul.f32 %v2521, 1.442695
      %v2533 = vpow.pop %v2532
      %v2534 = vmul.f32 %v2522, 1.442695
      %v2535 = vpow.pop %v2534
      %v2536 = vmul.f32 %v2523, 1.442695
      %v2537 = vpow.pop %v2536
      %v2538 = vmul.f32 %v2524, 1.442695
      %v2539 = vpow.pop %v2538
      %v2540 = vmul.f32 %v2525, 1.442695
      %v2541 = vpow.pop %v2540
      %v2542 = vsub.f32 %v2492, %v2510
      %v2543 = vsub.f32 %v2494, %v2511
      %v2544 = vsub.f32 %v2496, %v2512
      %v2545 = vsub.f32 %v2498, %v2513
      %v2546 = vsub.f32 %v2502, %v2514
      %v2547 = vsub.f32 %v2504, %v2515
      %v2548 = vsub.f32 %v2506, %v2516
      %v2549 = vsub.f32 %v2508, %v2517
      %v2550 = vmul.f32 %v2542, 1.442695
      %v2551 = vpow.pop %v2550
      %v2552 = vmul.f32 %v2543, 1.442695
      %v2553 = vpow.pop %v2552
      %v2554 = vmul.f32 %v2544, 1.442695
      %v2555 = vpow.pop %v2554
      %v2556 = vmul.f32 %v2545, 1.442695
      %v2557 = vpow.pop %v2556
      %v2558 = vmul.f32 %v2546, 1.442695
      %v2559 = vpow.pop %v2558
      %v2560 = vmul.f32 %v2547, 1.442695
      %v2561 = vpow.pop %v2560
      %v2562 = vmul.f32 %v2548, 1.442695
      %v2563 = vpow.pop %v2562
      %v2564 = vmul.f32 %v2549, 1.442695
      %v2565 = vpow.pop %v2564
      %v2566 = vadd.f32 %v2527, %v2551
      %v2567 = vadd.f32 %v2529, %v2553
      %v2568 = vadd.f32 %v2531, %v2555
      %v2569 = vadd.f32 %v2533, %v2557
      %v2570 = vadd.f32 %v2535, %v2559
      %v2571 = vadd.f32 %v2537, %v2561
      %v2572 = vadd.f32 %v2539, %v2563
      %v2573 = vadd.f32 %v2541, %v2565
      %v2574 = vrcp.pop %v2566
      %v2575 = vrcp.pop %v2567
      %v2576 = vrcp.pop %v2568
      %v2577 = vrcp.pop %v2569
      %v2578 = vrcp.pop %v2570
      %v2579 = vrcp.pop %v2571
      %v2580 = vrcp.pop %v2572
      %v2581 = vrcp.pop %v2573
      %v2582 = vmul.f32 %v2527, %v2574
      %v2583 = vmul.f32 %v2529, %v2575
      %v2584 = vmul.f32 %v2531, %v2576
      %v2585 = vmul.f32 %v2533, %v2577
      %v2586 = vmul.f32 %v2535, %v2578
      %v2587 = vmul.f32 %v2537, %v2579
      %v2588 = vmul.f32 %v2539, %v2580
      %v2589 = vmul.f32 %v2541, %v2581
      %v2590 = vmul.f32 %v2582, %v2212
      %v2591 = vmul.f32 %v2583, %v2213
      %v2592 = vmul.f32 %v2584, %v2214
      %v2593 = vmul.f32 %v2585, %v2215
      %v2594 = vmul.f32 %v2586, %v2216
      %v2595 = vmul.f32 %v2587, %v2217
      %v2596 = vmul.f32 %v2588, %v2218
      %v2597 = vmul.f32 %v2589, %v2219
      %v2598 = vmul.f32 %v2551, %v2574
      %v2599 = vmul.f32 %v2553, %v2575
      %v2600 = vmul.f32 %v2555, %v2576
      %v2601 = vmul.f32 %v2557, %v2577
      %v2602 = vmul.f32 %v2559, %v2578
      %v2603 = vmul.f32 %v2561, %v2579
      %v2604 = vmul.f32 %v2563, %v2580
      %v2605 = vmul.f32 %v2565, %v2581
      %v2606 = vmul.f32 %v2598, %v2216
      %v2607 = vmul.f32 %v2599, %v2217
      %v2608 = vmul.f32 %v2600, %v2218
      %v2609 = vmul.f32 %v2601, %v2219
      %v2610 = vmul.f32 %v2602, %v2212
      %v2611 = vmul.f32 %v2603, %v2213
      %v2612 = vmul.f32 %v2604, %v2214
      %v2613 = vmul.f32 %v2605, %v2215
      %v2614 = vadd.f32 %v2590, %v2606
      %v2615 = vadd.f32 %v2591, %v2607
      %v2616 = vadd.f32 %v2592, %v2608
      %v2617 = vadd.f32 %v2593, %v2609
      %v2618 = vadd.f32 %v2594, %v2610
      %v2619 = vadd.f32 %v2595, %v2611
      %v2620 = vadd.f32 %v2596, %v2612
      %v2621 = vadd.f32 %v2597, %v2613
      %v2622 = vld [vmem:[%s458] sm:$0xff]
      %v2623 = vld [vmem:[%s458 + $0x8] sm:$0xff]
      %v2624 = vld [vmem:[%s458 + $0x10] sm:$0xff]
      %v2625 = vld [vmem:[%s458 + $0x18] sm:$0xff]
      %v2626 = vld [vmem:[%s458 + $0x20] sm:$0xff]
      %v2627 = vld [vmem:[%s458 + $0x28] sm:$0xff]
      %v2628 = vld [vmem:[%s458 + $0x30] sm:$0xff]
      %v2629 = vld [vmem:[%s458 + $0x38] sm:$0xff]
      %v2630 = vld [vmem:[%s458 + $0x40] sm:$0xff]
      %v2631 = vld [vmem:[%s458 + $0x48] sm:$0xff]
      %v2632 = vld [vmem:[%s458 + $0x50] sm:$0xff]
      %v2633 = vld [vmem:[%s458 + $0x58] sm:$0xff]
      %v2634 = vld [vmem:[%s458 + $0x60] sm:$0xff]
      %v2635 = vld [vmem:[%s458 + $0x68] sm:$0xff]
      %v2636 = vld [vmem:[%s458 + $0x70] sm:$0xff]
      %v2637 = vld [vmem:[%s458 + $0x78] sm:$0xff]
      %v2638 = vld [vmem:[%s458 + $0x80] sm:$0xff]
      %v2639 = vld [vmem:[%s458 + $0x88] sm:$0xff]
      %v2640 = vld [vmem:[%s458 + $0x90] sm:$0xff]
      %v2641 = vld [vmem:[%s458 + $0x98] sm:$0xff]
      %v2642 = vld [vmem:[%s458 + $0xa0] sm:$0xff]
      %v2643 = vld [vmem:[%s458 + $0xa8] sm:$0xff]
      %v2644 = vld [vmem:[%s458 + $0xb0] sm:$0xff]
      %v2645 = vld [vmem:[%s458 + $0xb8] sm:$0xff]
      %v2646 = vld [vmem:[%s458 + $0xc0] sm:$0xff]
      %v2647 = vld [vmem:[%s458 + $0xc8] sm:$0xff]
      %v2648 = vld [vmem:[%s458 + $0xd0] sm:$0xff]
      %v2649 = vld [vmem:[%s458 + $0xd8] sm:$0xff]
      %v2650 = vld [vmem:[%s458 + $0xe0] sm:$0xff]
      %v2651 = vld [vmem:[%s458 + $0xe8] sm:$0xff]
      %v2652 = vld [vmem:[%s458 + $0xf0] sm:$0xff]
      %v2653 = vld [vmem:[%s458 + $0xf8] sm:$0xff]
      %v2654 = vpack.c.bf16 %v2616, %v2614
      %v2655 = vpack.c.bf16 %v2617, %v2615
      %v2656 = vpack.c.bf16 %v2620, %v2618
      %v2657 = vpack.c.bf16 %v2621, %v2619
      %v2658 = vlaneseq
      %v2659 = vshrl.u32 %v2658, 7
      %v2660 = vsub.s32 5, %v2659
      %v2661 = vrot.slane %v1292, %v2660
      %v2662 = vlaneseq
      %v2663 = vshrl.u32 %v2662, 7
      %v2664 = vsub.s32 5, %v2663
      %v2665 = vrot.slane %v1293, %v2664
      %v2698 = vunpack.c.l.b16 %v2622
      %v2699 = vunpack.c.h.b16 %v2622
      %v2700 = vunpack.c.l.b16 %v2623
      %v2701 = vunpack.c.h.b16 %v2623
      %v2702 = vunpack.c.l.b16 %v2624
      %v2703 = vunpack.c.h.b16 %v2624
      %v2704 = vunpack.c.l.b16 %v2625
      %v2705 = vunpack.c.h.b16 %v2625
      %v2706 = vunpack.c.l.b16 %v2626
      %v2707 = vunpack.c.h.b16 %v2626
      %v2708 = vunpack.c.l.b16 %v2627
      %v2709 = vunpack.c.h.b16 %v2627
      %v2710 = vunpack.c.l.b16 %v2628
      %v2711 = vunpack.c.h.b16 %v2628
      %v2712 = vunpack.c.l.b16 %v2629
      %v2713 = vunpack.c.h.b16 %v2629
      %v2714 = vunpack.c.l.b16 %v2630
      %v2715 = vunpack.c.h.b16 %v2630
      %v2716 = vunpack.c.l.b16 %v2631
      %v2717 = vunpack.c.h.b16 %v2631
      %v2718 = vunpack.c.l.b16 %v2632
      %v2719 = vunpack.c.h.b16 %v2632
      %v2720 = vunpack.c.l.b16 %v2633
      %v2721 = vunpack.c.h.b16 %v2633
      %v2722 = vunpack.c.l.b16 %v2634
      %v2723 = vunpack.c.h.b16 %v2634
      %v2724 = vunpack.c.l.b16 %v2635
      %v2725 = vunpack.c.h.b16 %v2635
      %v2726 = vunpack.c.l.b16 %v2636
      %v2727 = vunpack.c.h.b16 %v2636
      %v2728 = vunpack.c.l.b16 %v2637
      %v2729 = vunpack.c.h.b16 %v2637
      %v2730 = vunpack.c.l.b16 %v2638
      %v2731 = vunpack.c.h.b16 %v2638
      %v2732 = vunpack.c.l.b16 %v2639
      %v2733 = vunpack.c.h.b16 %v2639
      %v2734 = vunpack.c.l.b16 %v2640
      %v2735 = vunpack.c.h.b16 %v2640
      %v2736 = vunpack.c.l.b16 %v2641
      %v2737 = vunpack.c.h.b16 %v2641
      %v2738 = vunpack.c.l.b16 %v2642
      %v2739 = vunpack.c.h.b16 %v2642
      %v2740 = vunpack.c.l.b16 %v2643
      %v2741 = vunpack.c.h.b16 %v2643
      %v2742 = vunpack.c.l.b16 %v2644
      %v2743 = vunpack.c.h.b16 %v2644
      %v2744 = vunpack.c.l.b16 %v2645
      %v2745 = vunpack.c.h.b16 %v2645
      %v2746 = vunpack.c.l.b16 %v2646
      %v2747 = vunpack.c.h.b16 %v2646
      %v2748 = vunpack.c.l.b16 %v2647
      %v2749 = vunpack.c.h.b16 %v2647
      %v2750 = vunpack.c.l.b16 %v2648
      %v2751 = vunpack.c.h.b16 %v2648
      %v2752 = vunpack.c.l.b16 %v2649
      %v2753 = vunpack.c.h.b16 %v2649
      %v2754 = vunpack.c.l.b16 %v2650
      %v2755 = vunpack.c.h.b16 %v2650
      %v2756 = vunpack.c.l.b16 %v2651
      %v2757 = vunpack.c.h.b16 %v2651
      %v2758 = vunpack.c.l.b16 %v2652
      %v2759 = vunpack.c.h.b16 %v2652
      %v2760 = vunpack.c.l.b16 %v2653
      %v2761 = vunpack.c.h.b16 %v2653
      %v2762 = vpack.c.b16 %v2700, %v2698
      %v2763 = vpack.c.b16 %v2701, %v2699
      %v2764 = vpack.c.b16 %v2704, %v2702
      %v2765 = vpack.c.b16 %v2705, %v2703
      %v2766 = vpack.c.b16 %v2708, %v2706
      %v2767 = vpack.c.b16 %v2709, %v2707
      %v2768 = vpack.c.b16 %v2712, %v2710
      %v2769 = vpack.c.b16 %v2713, %v2711
      %v2770 = vpack.c.b16 %v2716, %v2714
      %v2771 = vpack.c.b16 %v2717, %v2715
      %v2772 = vpack.c.b16 %v2720, %v2718
      %v2773 = vpack.c.b16 %v2721, %v2719
      %v2774 = vpack.c.b16 %v2724, %v2722
      %v2775 = vpack.c.b16 %v2725, %v2723
      %v2776 = vpack.c.b16 %v2728, %v2726
      %v2777 = vpack.c.b16 %v2729, %v2727
      %v2778 = vpack.c.b16 %v2732, %v2730
      %v2779 = vpack.c.b16 %v2733, %v2731
      %v2780 = vpack.c.b16 %v2736, %v2734
      %v2781 = vpack.c.b16 %v2737, %v2735
      %v2782 = vpack.c.b16 %v2740, %v2738
      %v2783 = vpack.c.b16 %v2741, %v2739
      %v2784 = vpack.c.b16 %v2744, %v2742
      %v2785 = vpack.c.b16 %v2745, %v2743
      %v2786 = vpack.c.b16 %v2748, %v2746
      %v2787 = vpack.c.b16 %v2749, %v2747
      %v2788 = vpack.c.b16 %v2752, %v2750
      %v2789 = vpack.c.b16 %v2753, %v2751
      %v2790 = vpack.c.b16 %v2756, %v2754
      %v2791 = vpack.c.b16 %v2757, %v2755
      %v2792 = vpack.c.b16 %v2760, %v2758
      %v2793 = vpack.c.b16 %v2761, %v2759
      %2826 = vmatprep.subr.bf16.mxu0 %v2763
      %2827 = vmatpush1.bf16.msra.mxu0 %v2762
      %2828 = vmatprep.subr.bf16.mxu0 %v2765
      %2829 = vmatpush1.bf16.msra.mxu0 %v2764
      %2830 = vmatprep.subr.bf16.mxu0 %v2767
      %2831 = vmatpush1.bf16.msra.mxu0 %v2766
      %2832 = vmatprep.subr.bf16.mxu0 %v2769
      %2833 = vmatpush1.bf16.msra.mxu0 %v2768
      %2834 = vmatprep.subr.bf16.mxu0 %v2771
      %2835 = vmatpush1.bf16.msra.mxu0 %v2770
      %2836 = vmatprep.subr.bf16.mxu0 %v2773
      %2837 = vmatpush1.bf16.msra.mxu0 %v2772
      %2838 = vmatprep.subr.bf16.mxu0 %v2775
      %2839 = vmatpush1.bf16.msra.mxu0 %v2774
      %2840 = vmatprep.subr.bf16.mxu0 %v2777
      %2841 = vmatpush1.bf16.msra.mxu0 %v2776
      %2842 = vmatprep.subr.bf16.mxu0 %v2779
      %2843 = vmatpush1.bf16.msra.mxu0 %v2778
      %2844 = vmatprep.subr.bf16.mxu0 %v2781
      %2845 = vmatpush1.bf16.msra.mxu0 %v2780
      %2846 = vmatprep.subr.bf16.mxu0 %v2783
      %2847 = vmatpush1.bf16.msra.mxu0 %v2782
      %2848 = vmatprep.subr.bf16.mxu0 %v2785
      %2849 = vmatpush1.bf16.msra.mxu0 %v2784
      %2850 = vmatprep.subr.bf16.mxu0 %v2787
      %2851 = vmatpush1.bf16.msra.mxu0 %v2786
      %2852 = vmatprep.subr.bf16.mxu0 %v2789
      %2853 = vmatpush1.bf16.msra.mxu0 %v2788
      %2854 = vmatprep.subr.bf16.mxu0 %v2791
      %2855 = vmatpush1.bf16.msra.mxu0 %v2790
      %2856 = vmatprep.subr.bf16.mxu0 %v2793
      %2857 = vmatpush1.bf16.msra.mxu0 %v2792
      %2858 = vmatprep.mubr.bf16.mxu0 %v2655
      %2859 = vmatmul.mubr.bf16.gmra.mrb[0].mxu0 %v2654
      %v2860 = vpop.f32.mrb[0].mxu0
      %v2861 = vadd.f32 %v2661, %v2860
      %v2862 = vpop.f32.mrb[0].mxu0
      %v2863 = vadd.f32 %v2665, %v2862
      %v2864 = vpop.f32.mrb[0].mxu0
      %v2865 = vadd.f32 %v2661, %v2864
      %v2866 = vpop.f32.mrb[0].mxu0
      %v2867 = vadd.f32 %v2665, %v2866
      %2868 = vmatprep.mubr.bf16.mxu0 %v2657
      %2869 = vmatmul.mubr.bf16.gmra.mrb[0].mxu0 %v2656
      %v2870 = vpop.f32.mrb[0].mxu0
      %v2871 = vadd.f32 %v2661, %v2870
      %v2872 = vpop.f32.mrb[0].mxu0
      %v2873 = vadd.f32 %v2665, %v2872
      %v2874 = vpop.f32.mrb[0].mxu0
      %v2875 = vadd.f32 %v2661, %v2874
      %v2876 = vpop.f32.mrb[0].mxu0
      %v2877 = vadd.f32 %v2665, %v2876
      %2878 = vdwg.mxu0
      %v2879 = vadd.f32 %v1328, %v2861
      %v2880 = vadd.f32 %v1329, %v2863
      %v2881 = vadd.f32 %v1330, %v2865
      %v2882 = vadd.f32 %v1331, %v2867
      %v2883 = vadd.f32 %v1332, %v2871
      %v2884 = vadd.f32 %v1333, %v2873
      %v2885 = vadd.f32 %v1334, %v2875
      %v2886 = vadd.f32 %v1335, %v2877
      %v2887 = vadd.f32 %v2879, %v2880
      %2888 = vadd.xlane.f32.xlu0 %v2887
      %v2889 = vpop.xlane.xlu0 %2888
      %v2890 = vadd.f32 %v2881, %v2882
      %2891 = vadd.xlane.f32.xlu0 %v2890
      %v2892 = vpop.xlane.xlu0 %2891
      %v2893 = vadd.f32 %v2883, %v2884
      %2894 = vadd.xlane.f32.xlu0 %v2893
      %v2895 = vpop.xlane.xlu0 %2894
      %v2896 = vadd.f32 %v2885, %v2886
      %2897 = vadd.xlane.f32.xlu0 %v2896
      %v2898 = vpop.xlane.xlu0 %2897
      %v2899 = vmul.f32 %v2889, %v1348
      %v2900 = vmul.f32 %v2892, %v1348
      %v2901 = vmul.f32 %v2895, %v1348
      %v2902 = vmul.f32 %v2898, %v1348
      %v2903 = vsub.f32 %v2879, %v2899
      %v2904 = vsub.f32 %v2880, %v2899
      %v2905 = vsub.f32 %v2881, %v2900
      %v2906 = vsub.f32 %v2882, %v2900
      %v2907 = vsub.f32 %v2883, %v2901
      %v2908 = vsub.f32 %v2884, %v2901
      %v2909 = vsub.f32 %v2885, %v2902
      %v2910 = vsub.f32 %v2886, %v2902
      %v2911 = vmul.f32 %v2903, %v2903
      %v2912 = vmul.f32 %v2904, %v2904
      %v2913 = vmul.f32 %v2905, %v2905
      %v2914 = vmul.f32 %v2906, %v2906
      %v2915 = vmul.f32 %v2907, %v2907
      %v2916 = vmul.f32 %v2908, %v2908
      %v2917 = vmul.f32 %v2909, %v2909
      %v2918 = vmul.f32 %v2910, %v2910
      %v2919 = vadd.f32 %v2911, %v2912
      %2920 = vadd.xlane.f32.xlu0 %v2919
      %v2921 = vpop.xlane.xlu0 %2920
      %v2922 = vadd.f32 %v2913, %v2914
      %2923 = vadd.xlane.f32.xlu0 %v2922
      %v2924 = vpop.xlane.xlu0 %2923
      %v2925 = vadd.f32 %v2915, %v2916
      %2926 = vadd.xlane.f32.xlu0 %v2925
      %v2927 = vpop.xlane.xlu0 %2926
      %v2928 = vadd.f32 %v2917, %v2918
      %2929 = vadd.xlane.f32.xlu0 %v2928
      %v2930 = vpop.xlane.xlu0 %2929
      %v2931 = vmul.f32 %v2921, %v1348
      %v2932 = vmul.f32 %v2924, %v1348
      %v2933 = vmul.f32 %v2927, %v1348
      %v2934 = vmul.f32 %v2930, %v1348
      %v2935 = vadd.f32 %v2931, 1e-05
      %v2936 = vadd.f32 %v2932, 1e-05
      %v2937 = vadd.f32 %v2933, 1e-05
      %v2938 = vadd.f32 %v2934, 1e-05
      %v2939 = vrsqrt.pop %v2935
      %v2940 = vrsqrt.pop %v2936
      %v2941 = vrsqrt.pop %v2937
      %v2942 = vrsqrt.pop %v2938
      %v2943 = vmul.f32 %v2903, %v2939
      %v2944 = vmul.f32 %v2904, %v2939
      %v2945 = vmul.f32 %v2905, %v2940
      %v2946 = vmul.f32 %v2906, %v2940
      %v2947 = vmul.f32 %v2907, %v2941
      %v2948 = vmul.f32 %v2908, %v2941
      %v2949 = vmul.f32 %v2909, %v2942
      %v2950 = vmul.f32 %v2910, %v2942
      %v2951 = vlaneseq
      %v2952 = vshrl.u32 %v2951, 7
      %v2953 = vsub.s32 6, %v2952
      %v2954 = vrot.slane %v1292, %v2953
      %v2955 = vlaneseq
      %v2956 = vshrl.u32 %v2955, 7
      %v2957 = vsub.s32 6, %v2956
      %v2958 = vrot.slane %v1293, %v2957
      %v2959 = vmul.f32 %v2943, %v2954
      %v2960 = vmul.f32 %v2944, %v2958
      %v2961 = vmul.f32 %v2945, %v2954
      %v2962 = vmul.f32 %v2946, %v2958
      %v2963 = vmul.f32 %v2947, %v2954
      %v2964 = vmul.f32 %v2948, %v2958
      %v2965 = vmul.f32 %v2949, %v2954
      %v2966 = vmul.f32 %v2950, %v2958
      %v2967 = vlaneseq
      %v2968 = vshrl.u32 %v2967, 7
      %v2969 = vsub.s32 7, %v2968
      %v2970 = vrot.slane %v1292, %v2969
      %v2971 = vlaneseq
      %v2972 = vshrl.u32 %v2971, 7
      %v2973 = vsub.s32 7, %v2972
      %v2974 = vrot.slane %v1293, %v2973
      %v2975 = vadd.f32 %v2959, %v2970
      %v2976 = vadd.f32 %v2960, %v2974
      %v2977 = vadd.f32 %v2961, %v2970
      %v2978 = vadd.f32 %v2962, %v2974
      %v2979 = vadd.f32 %v2963, %v2970
      %v2980 = vadd.f32 %v2964, %v2974
      %v2981 = vadd.f32 %v2965, %v2970
      %v2982 = vadd.f32 %v2966, %v2974
      %v2983 = vld [vmem:[%s463] sm:$0xff]
      %v2984 = vld [vmem:[%s463 + $0x8] sm:$0xff]
      %v2985 = vld [vmem:[%s463 + $0x10] sm:$0xff]
      %v2986 = vld [vmem:[%s463 + $0x18] sm:$0xff]
      %v2987 = vld [vmem:[%s463 + $0x20] sm:$0xff]
      %v2988 = vld [vmem:[%s463 + $0x28] sm:$0xff]
      %v2989 = vld [vmem:[%s463 + $0x30] sm:$0xff]
      %v2990 = vld [vmem:[%s463 + $0x38] sm:$0xff]
      %v2991 = vld [vmem:[%s463 + $0x40] sm:$0xff]
      %v2992 = vld [vmem:[%s463 + $0x48] sm:$0xff]
      %v2993 = vld [vmem:[%s463 + $0x50] sm:$0xff]
      %v2994 = vld [vmem:[%s463 + $0x58] sm:$0xff]
      %v2995 = vld [vmem:[%s463 + $0x60] sm:$0xff]
      %v2996 = vld [vmem:[%s463 + $0x68] sm:$0xff]
      %v2997 = vld [vmem:[%s463 + $0x70] sm:$0xff]
      %v2998 = vld [vmem:[%s463 + $0x78] sm:$0xff]
      %v2999 = vld [vmem:[%s463 + $0x80] sm:$0xff]
      %v3000 = vld [vmem:[%s463 + $0x88] sm:$0xff]
      %v3001 = vld [vmem:[%s463 + $0x90] sm:$0xff]
      %v3002 = vld [vmem:[%s463 + $0x98] sm:$0xff]
      %v3003 = vld [vmem:[%s463 + $0xa0] sm:$0xff]
      %v3004 = vld [vmem:[%s463 + $0xa8] sm:$0xff]
      %v3005 = vld [vmem:[%s463 + $0xb0] sm:$0xff]
      %v3006 = vld [vmem:[%s463 + $0xb8] sm:$0xff]
      %v3007 = vld [vmem:[%s463 + $0xc0] sm:$0xff]
      %v3008 = vld [vmem:[%s463 + $0xc8] sm:$0xff]
      %v3009 = vld [vmem:[%s463 + $0xd0] sm:$0xff]
      %v3010 = vld [vmem:[%s463 + $0xd8] sm:$0xff]
      %v3011 = vld [vmem:[%s463 + $0xe0] sm:$0xff]
      %v3012 = vld [vmem:[%s463 + $0xe8] sm:$0xff]
      %v3013 = vld [vmem:[%s463 + $0xf0] sm:$0xff]
      %v3014 = vld [vmem:[%s463 + $0xf8] sm:$0xff]
      %v3015 = vld [vmem:[%s463 + $0x100] sm:$0xff]
      %v3016 = vld [vmem:[%s463 + $0x108] sm:$0xff]
      %v3017 = vld [vmem:[%s463 + $0x110] sm:$0xff]
      %v3018 = vld [vmem:[%s463 + $0x118] sm:$0xff]
      %v3019 = vld [vmem:[%s463 + $0x120] sm:$0xff]
      %v3020 = vld [vmem:[%s463 + $0x128] sm:$0xff]
      %v3021 = vld [vmem:[%s463 + $0x130] sm:$0xff]
      %v3022 = vld [vmem:[%s463 + $0x138] sm:$0xff]
      %v3023 = vld [vmem:[%s463 + $0x140] sm:$0xff]
      %v3024 = vld [vmem:[%s463 + $0x148] sm:$0xff]
      %v3025 = vld [vmem:[%s463 + $0x150] sm:$0xff]
      %v3026 = vld [vmem:[%s463 + $0x158] sm:$0xff]
      %v3027 = vld [vmem:[%s463 + $0x160] sm:$0xff]
      %v3028 = vld [vmem:[%s463 + $0x168] sm:$0xff]
      %v3029 = vld [vmem:[%s463 + $0x170] sm:$0xff]
      %v3030 = vld [vmem:[%s463 + $0x178] sm:$0xff]
      %v3031 = vld [vmem:[%s463 + $0x180] sm:$0xff]
      %v3032 = vld [vmem:[%s463 + $0x188] sm:$0xff]
      %v3033 = vld [vmem:[%s463 + $0x190] sm:$0xff]
      %v3034 = vld [vmem:[%s463 + $0x198] sm:$0xff]
      %v3035 = vld [vmem:[%s463 + $0x1a0] sm:$0xff]
      %v3036 = vld [vmem:[%s463 + $0x1a8] sm:$0xff]
      %v3037 = vld [vmem:[%s463 + $0x1b0] sm:$0xff]
      %v3038 = vld [vmem:[%s463 + $0x1b8] sm:$0xff]
      %v3039 = vld [vmem:[%s463 + $0x1c0] sm:$0xff]
      %v3040 = vld [vmem:[%s463 + $0x1c8] sm:$0xff]
      %v3041 = vld [vmem:[%s463 + $0x1d0] sm:$0xff]
      %v3042 = vld [vmem:[%s463 + $0x1d8] sm:$0xff]
      %v3043 = vld [vmem:[%s463 + $0x1e0] sm:$0xff]
      %v3044 = vld [vmem:[%s463 + $0x1e8] sm:$0xff]
      %v3045 = vld [vmem:[%s463 + $0x1f0] sm:$0xff]
      %v3046 = vld [vmem:[%s463 + $0x1f8] sm:$0xff]
      %v3047 = vld [vmem:[%s463 + $0x200] sm:$0xff]
      %v3048 = vld [vmem:[%s463 + $0x208] sm:$0xff]
      %v3049 = vld [vmem:[%s463 + $0x210] sm:$0xff]
      %v3050 = vld [vmem:[%s463 + $0x218] sm:$0xff]
      %v3051 = vld [vmem:[%s463 + $0x220] sm:$0xff]
      %v3052 = vld [vmem:[%s463 + $0x228] sm:$0xff]
      %v3053 = vld [vmem:[%s463 + $0x230] sm:$0xff]
      %v3054 = vld [vmem:[%s463 + $0x238] sm:$0xff]
      %v3055 = vld [vmem:[%s463 + $0x240] sm:$0xff]
      %v3056 = vld [vmem:[%s463 + $0x248] sm:$0xff]
      %v3057 = vld [vmem:[%s463 + $0x250] sm:$0xff]
      %v3058 = vld [vmem:[%s463 + $0x258] sm:$0xff]
      %v3059 = vld [vmem:[%s463 + $0x260] sm:$0xff]
      %v3060 = vld [vmem:[%s463 + $0x268] sm:$0xff]
      %v3061 = vld [vmem:[%s463 + $0x270] sm:$0xff]
      %v3062 = vld [vmem:[%s463 + $0x278] sm:$0xff]
      %v3063 = vld [vmem:[%s463 + $0x280] sm:$0xff]
      %v3064 = vld [vmem:[%s463 + $0x288] sm:$0xff]
      %v3065 = vld [vmem:[%s463 + $0x290] sm:$0xff]
      %v3066 = vld [vmem:[%s463 + $0x298] sm:$0xff]
      %v3067 = vld [vmem:[%s463 + $0x2a0] sm:$0xff]
      %v3068 = vld [vmem:[%s463 + $0x2a8] sm:$0xff]
      %v3069 = vld [vmem:[%s463 + $0x2b0] sm:$0xff]
      %v3070 = vld [vmem:[%s463 + $0x2b8] sm:$0xff]
      %v3071 = vld [vmem:[%s463 + $0x2c0] sm:$0xff]
      %v3072 = vld [vmem:[%s463 + $0x2c8] sm:$0xff]
      %v3073 = vld [vmem:[%s463 + $0x2d0] sm:$0xff]
      %v3074 = vld [vmem:[%s463 + $0x2d8] sm:$0xff]
      %v3075 = vld [vmem:[%s463 + $0x2e0] sm:$0xff]
      %v3076 = vld [vmem:[%s463 + $0x2e8] sm:$0xff]
      %v3077 = vld [vmem:[%s463 + $0x2f0] sm:$0xff]
      %v3078 = vld [vmem:[%s463 + $0x2f8] sm:$0xff]
      %v3079 = vld [vmem:[%s463 + $0x300] sm:$0xff]
      %v3080 = vld [vmem:[%s463 + $0x308] sm:$0xff]
      %v3081 = vld [vmem:[%s463 + $0x310] sm:$0xff]
      %v3082 = vld [vmem:[%s463 + $0x318] sm:$0xff]
      %v3083 = vld [vmem:[%s463 + $0x320] sm:$0xff]
      %v3084 = vld [vmem:[%s463 + $0x328] sm:$0xff]
      %v3085 = vld [vmem:[%s463 + $0x330] sm:$0xff]
      %v3086 = vld [vmem:[%s463 + $0x338] sm:$0xff]
      %v3087 = vld [vmem:[%s463 + $0x340] sm:$0xff]
      %v3088 = vld [vmem:[%s463 + $0x348] sm:$0xff]
      %v3089 = vld [vmem:[%s463 + $0x350] sm:$0xff]
      %v3090 = vld [vmem:[%s463 + $0x358] sm:$0xff]
      %v3091 = vld [vmem:[%s463 + $0x360] sm:$0xff]
      %v3092 = vld [vmem:[%s463 + $0x368] sm:$0xff]
      %v3093 = vld [vmem:[%s463 + $0x370] sm:$0xff]
      %v3094 = vld [vmem:[%s463 + $0x378] sm:$0xff]
      %v3095 = vld [vmem:[%s463 + $0x380] sm:$0xff]
      %v3096 = vld [vmem:[%s463 + $0x388] sm:$0xff]
      %v3097 = vld [vmem:[%s463 + $0x390] sm:$0xff]
      %v3098 = vld [vmem:[%s463 + $0x398] sm:$0xff]
      %v3099 = vld [vmem:[%s463 + $0x3a0] sm:$0xff]
      %v3100 = vld [vmem:[%s463 + $0x3a8] sm:$0xff]
      %v3101 = vld [vmem:[%s463 + $0x3b0] sm:$0xff]
      %v3102 = vld [vmem:[%s463 + $0x3b8] sm:$0xff]
      %v3103 = vld [vmem:[%s463 + $0x3c0] sm:$0xff]
      %v3104 = vld [vmem:[%s463 + $0x3c8] sm:$0xff]
      %v3105 = vld [vmem:[%s463 + $0x3d0] sm:$0xff]
      %v3106 = vld [vmem:[%s463 + $0x3d8] sm:$0xff]
      %v3107 = vld [vmem:[%s463 + $0x3e0] sm:$0xff]
      %v3108 = vld [vmem:[%s463 + $0x3e8] sm:$0xff]
      %v3109 = vld [vmem:[%s463 + $0x3f0] sm:$0xff]
      %v3110 = vld [vmem:[%s463 + $0x3f8] sm:$0xff]
      %v3111 = vpack.c.bf16 %v2977, %v2975
      %v3112 = vpack.c.bf16 %v2978, %v2976
      %v3113 = vpack.c.bf16 %v2981, %v2979
      %v3114 = vpack.c.bf16 %v2982, %v2980
      %v3115 = vld [vmem:[%s448] sm:$0xff]
      %v3117 = vlaneseq
      %v3118 = vshrl.u32 %v3117, 7
      %v3119 = vsub.s32 0, %v3118
      %v3120 = vrot.slane %v3115, %v3119
      %v3121 = vlaneseq
      %v3122 = vshrl.u32 %v3121, 7
      %v3123 = vsub.s32 1, %v3122
      %v3124 = vrot.slane %v3115, %v3123
      %v3125 = vlaneseq
      %v3126 = vshrl.u32 %v3125, 7
      %v3127 = vsub.s32 2, %v3126
      %v3128 = vrot.slane %v3115, %v3127
      %v3129 = vlaneseq
      %v3130 = vshrl.u32 %v3129, 7
      %v3131 = vsub.s32 3, %v3130
      %v3132 = vrot.slane %v3115, %v3131
      %v3133 = vlaneseq
      %v3134 = vshrl.u32 %v3133, 7
      %v3135 = vsub.s32 4, %v3134
      %v3136 = vrot.slane %v3115, %v3135
      %v3137 = vlaneseq
      %v3138 = vshrl.u32 %v3137, 7
      %v3139 = vsub.s32 5, %v3138
      %v3140 = vrot.slane %v3115, %v3139
      %v3141 = vlaneseq
      %v3142 = vshrl.u32 %v3141, 7
      %v3143 = vsub.s32 6, %v3142
      %v3144 = vrot.slane %v3115, %v3143
      %v3145 = vlaneseq
      %v3146 = vshrl.u32 %v3145, 7
      %v3147 = vsub.s32 7, %v3146
      %v3148 = vrot.slane %v3115, %v3147
      %v3285 = vunpack.c.l.b16 %v2983
      %v3286 = vunpack.c.h.b16 %v2983
      %v3287 = vunpack.c.l.b16 %v2984
      %v3288 = vunpack.c.h.b16 %v2984
      %v3289 = vunpack.c.l.b16 %v2985
      %v3290 = vunpack.c.h.b16 %v2985
      %v3291 = vunpack.c.l.b16 %v2986
      %v3292 = vunpack.c.h.b16 %v2986
      %v3293 = vunpack.c.l.b16 %v2987
      %v3294 = vunpack.c.h.b16 %v2987
      %v3295 = vunpack.c.l.b16 %v2988
      %v3296 = vunpack.c.h.b16 %v2988
      %v3297 = vunpack.c.l.b16 %v2989
      %v3298 = vunpack.c.h.b16 %v2989
      %v3299 = vunpack.c.l.b16 %v2990
      %v3300 = vunpack.c.h.b16 %v2990
      %v3301 = vunpack.c.l.b16 %v2991
      %v3302 = vunpack.c.h.b16 %v2991
      %v3303 = vunpack.c.l.b16 %v2992
      %v3304 = vunpack.c.h.b16 %v2992
      %v3305 = vunpack.c.l.b16 %v2993
      %v3306 = vunpack.c.h.b16 %v2993
      %v3307 = vunpack.c.l.b16 %v2994
      %v3308 = vunpack.c.h.b16 %v2994
      %v3309 = vunpack.c.l.b16 %v2995
      %v3310 = vunpack.c.h.b16 %v2995
      %v3311 = vunpack.c.l.b16 %v2996
      %v3312 = vunpack.c.h.b16 %v2996
      %v3313 = vunpack.c.l.b16 %v2997
      %v3314 = vunpack.c.h.b16 %v2997
      %v3315 = vunpack.c.l.b16 %v2998
      %v3316 = vunpack.c.h.b16 %v2998
      %v3317 = vunpack.c.l.b16 %v2999
      %v3318 = vunpack.c.h.b16 %v2999
      %v3319 = vunpack.c.l.b16 %v3000
      %v3320 = vunpack.c.h.b16 %v3000
      %v3321 = vunpack.c.l.b16 %v3001
      %v3322 = vunpack.c.h.b16 %v3001
      %v3323 = vunpack.c.l.b16 %v3002
      %v3324 = vunpack.c.h.b16 %v3002
      %v3325 = vunpack.c.l.b16 %v3003
      %v3326 = vunpack.c.h.b16 %v3003
      %v3327 = vunpack.c.l.b16 %v3004
      %v3328 = vunpack.c.h.b16 %v3004
      %v3329 = vunpack.c.l.b16 %v3005
      %v3330 = vunpack.c.h.b16 %v3005
      %v3331 = vunpack.c.l.b16 %v3006
      %v3332 = vunpack.c.h.b16 %v3006
      %v3333 = vunpack.c.l.b16 %v3007
      %v3334 = vunpack.c.h.b16 %v3007
      %v3335 = vunpack.c.l.b16 %v3008
      %v3336 = vunpack.c.h.b16 %v3008
      %v3337 = vunpack.c.l.b16 %v3009
      %v3338 = vunpack.c.h.b16 %v3009
      %v3339 = vunpack.c.l.b16 %v3010
      %v3340 = vunpack.c.h.b16 %v3010
      %v3341 = vunpack.c.l.b16 %v3011
      %v3342 = vunpack.c.h.b16 %v3011
      %v3343 = vunpack.c.l.b16 %v3012
      %v3344 = vunpack.c.h.b16 %v3012
      %v3345 = vunpack.c.l.b16 %v3013
      %v3346 = vunpack.c.h.b16 %v3013
      %v3347 = vunpack.c.l.b16 %v3014
      %v3348 = vunpack.c.h.b16 %v3014
      %v3349 = vunpack.c.l.b16 %v3015
      %v3350 = vunpack.c.h.b16 %v3015
      %v3351 = vunpack.c.l.b16 %v3016
      %v3352 = vunpack.c.h.b16 %v3016
      %v3353 = vunpack.c.l.b16 %v3017
      %v3354 = vunpack.c.h.b16 %v3017
      %v3355 = vunpack.c.l.b16 %v3018
      %v3356 = vunpack.c.h.b16 %v3018
      %v3357 = vunpack.c.l.b16 %v3019
      %v3358 = vunpack.c.h.b16 %v3019
      %v3359 = vunpack.c.l.b16 %v3020
      %v3360 = vunpack.c.h.b16 %v3020
      %v3361 = vunpack.c.l.b16 %v3021
      %v3362 = vunpack.c.h.b16 %v3021
      %v3363 = vunpack.c.l.b16 %v3022
      %v3364 = vunpack.c.h.b16 %v3022
      %v3365 = vunpack.c.l.b16 %v3023
      %v3366 = vunpack.c.h.b16 %v3023
      %v3367 = vunpack.c.l.b16 %v3024
      %v3368 = vunpack.c.h.b16 %v3024
      %v3369 = vunpack.c.l.b16 %v3025
      %v3370 = vunpack.c.h.b16 %v3025
      %v3371 = vunpack.c.l.b16 %v3026
      %v3372 = vunpack.c.h.b16 %v3026
      %v3373 = vunpack.c.l.b16 %v3027
      %v3374 = vunpack.c.h.b16 %v3027
      %v3375 = vunpack.c.l.b16 %v3028
      %v3376 = vunpack.c.h.b16 %v3028
      %v3377 = vunpack.c.l.b16 %v3029
      %v3378 = vunpack.c.h.b16 %v3029
      %v3379 = vunpack.c.l.b16 %v3030
      %v3380 = vunpack.c.h.b16 %v3030
      %v3381 = vunpack.c.l.b16 %v3031
      %v3382 = vunpack.c.h.b16 %v3031
      %v3383 = vunpack.c.l.b16 %v3032
      %v3384 = vunpack.c.h.b16 %v3032
      %v3385 = vunpack.c.l.b16 %v3033
      %v3386 = vunpack.c.h.b16 %v3033
      %v3387 = vunpack.c.l.b16 %v3034
      %v3388 = vunpack.c.h.b16 %v3034
      %v3389 = vunpack.c.l.b16 %v3035
      %v3390 = vunpack.c.h.b16 %v3035
      %v3391 = vunpack.c.l.b16 %v3036
      %v3392 = vunpack.c.h.b16 %v3036
      %v3393 = vunpack.c.l.b16 %v3037
      %v3394 = vunpack.c.h.b16 %v3037
      %v3395 = vunpack.c.l.b16 %v3038
      %v3396 = vunpack.c.h.b16 %v3038
      %v3397 = vunpack.c.l.b16 %v3039
      %v3398 = vunpack.c.h.b16 %v3039
      %v3399 = vunpack.c.l.b16 %v3040
      %v3400 = vunpack.c.h.b16 %v3040
      %v3401 = vunpack.c.l.b16 %v3041
      %v3402 = vunpack.c.h.b16 %v3041
      %v3403 = vunpack.c.l.b16 %v3042
      %v3404 = vunpack.c.h.b16 %v3042
      %v3405 = vunpack.c.l.b16 %v3043
      %v3406 = vunpack.c.h.b16 %v3043
      %v3407 = vunpack.c.l.b16 %v3044
      %v3408 = vunpack.c.h.b16 %v3044
      %v3409 = vunpack.c.l.b16 %v3045
      %v3410 = vunpack.c.h.b16 %v3045
      %v3411 = vunpack.c.l.b16 %v3046
      %v3412 = vunpack.c.h.b16 %v3046
      %v3413 = vunpack.c.l.b16 %v3047
      %v3414 = vunpack.c.h.b16 %v3047
      %v3415 = vunpack.c.l.b16 %v3048
      %v3416 = vunpack.c.h.b16 %v3048
      %v3417 = vunpack.c.l.b16 %v3049
      %v3418 = vunpack.c.h.b16 %v3049
      %v3419 = vunpack.c.l.b16 %v3050
      %v3420 = vunpack.c.h.b16 %v3050
      %v3421 = vunpack.c.l.b16 %v3051
      %v3422 = vunpack.c.h.b16 %v3051
      %v3423 = vunpack.c.l.b16 %v3052
      %v3424 = vunpack.c.h.b16 %v3052
      %v3425 = vunpack.c.l.b16 %v3053
      %v3426 = vunpack.c.h.b16 %v3053
      %v3427 = vunpack.c.l.b16 %v3054
      %v3428 = vunpack.c.h.b16 %v3054
      %v3429 = vunpack.c.l.b16 %v3055
      %v3430 = vunpack.c.h.b16 %v3055
      %v3431 = vunpack.c.l.b16 %v3056
      %v3432 = vunpack.c.h.b16 %v3056
      %v3433 = vunpack.c.l.b16 %v3057
      %v3434 = vunpack.c.h.b16 %v3057
      %v3435 = vunpack.c.l.b16 %v3058
      %v3436 = vunpack.c.h.b16 %v3058
      %v3437 = vunpack.c.l.b16 %v3059
      %v3438 = vunpack.c.h.b16 %v3059
      %v3439 = vunpack.c.l.b16 %v3060
      %v3440 = vunpack.c.h.b16 %v3060
      %v3441 = vunpack.c.l.b16 %v3061
      %v3442 = vunpack.c.h.b16 %v3061
      %v3443 = vunpack.c.l.b16 %v3062
      %v3444 = vunpack.c.h.b16 %v3062
      %v3445 = vunpack.c.l.b16 %v3063
      %v3446 = vunpack.c.h.b16 %v3063
      %v3447 = vunpack.c.l.b16 %v3064
      %v3448 = vunpack.c.h.b16 %v3064
      %v3449 = vunpack.c.l.b16 %v3065
      %v3450 = vunpack.c.h.b16 %v3065
      %v3451 = vunpack.c.l.b16 %v3066
      %v3452 = vunpack.c.h.b16 %v3066
      %v3453 = vunpack.c.l.b16 %v3067
      %v3454 = vunpack.c.h.b16 %v3067
      %v3455 = vunpack.c.l.b16 %v3068
      %v3456 = vunpack.c.h.b16 %v3068
      %v3457 = vunpack.c.l.b16 %v3069
      %v3458 = vunpack.c.h.b16 %v3069
      %v3459 = vunpack.c.l.b16 %v3070
      %v3460 = vunpack.c.h.b16 %v3070
      %v3461 = vunpack.c.l.b16 %v3071
      %v3462 = vunpack.c.h.b16 %v3071
      %v3463 = vunpack.c.l.b16 %v3072
      %v3464 = vunpack.c.h.b16 %v3072
      %v3465 = vunpack.c.l.b16 %v3073
      %v3466 = vunpack.c.h.b16 %v3073
      %v3467 = vunpack.c.l.b16 %v3074
      %v3468 = vunpack.c.h.b16 %v3074
      %v3469 = vunpack.c.l.b16 %v3075
      %v3470 = vunpack.c.h.b16 %v3075
      %v3471 = vunpack.c.l.b16 %v3076
      %v3472 = vunpack.c.h.b16 %v3076
      %v3473 = vunpack.c.l.b16 %v3077
      %v3474 = vunpack.c.h.b16 %v3077
      %v3475 = vunpack.c.l.b16 %v3078
      %v3476 = vunpack.c.h.b16 %v3078
      %v3477 = vunpack.c.l.b16 %v3079
      %v3478 = vunpack.c.h.b16 %v3079
      %v3479 = vunpack.c.l.b16 %v3080
      %v3480 = vunpack.c.h.b16 %v3080
      %v3481 = vunpack.c.l.b16 %v3081
      %v3482 = vunpack.c.h.b16 %v3081
      %v3483 = vunpack.c.l.b16 %v3082
      %v3484 = vunpack.c.h.b16 %v3082
      %v3485 = vunpack.c.l.b16 %v3083
      %v3486 = vunpack.c.h.b16 %v3083
      %v3487 = vunpack.c.l.b16 %v3084
      %v3488 = vunpack.c.h.b16 %v3084
      %v3489 = vunpack.c.l.b16 %v3085
      %v3490 = vunpack.c.h.b16 %v3085
      %v3491 = vunpack.c.l.b16 %v3086
      %v3492 = vunpack.c.h.b16 %v3086
      %v3493 = vunpack.c.l.b16 %v3087
      %v3494 = vunpack.c.h.b16 %v3087
      %v3495 = vunpack.c.l.b16 %v3088
      %v3496 = vunpack.c.h.b16 %v3088
      %v3497 = vunpack.c.l.b16 %v3089
      %v3498 = vunpack.c.h.b16 %v3089
      %v3499 = vunpack.c.l.b16 %v3090
      %v3500 = vunpack.c.h.b16 %v3090
      %v3501 = vunpack.c.l.b16 %v3091
      %v3502 = vunpack.c.h.b16 %v3091
      %v3503 = vunpack.c.l.b16 %v3092
      %v3504 = vunpack.c.h.b16 %v3092
      %v3505 = vunpack.c.l.b16 %v3093
      %v3506 = vunpack.c.h.b16 %v3093
      %v3507 = vunpack.c.l.b16 %v3094
      %v3508 = vunpack.c.h.b16 %v3094
      %v3509 = vunpack.c.l.b16 %v3095
      %v3510 = vunpack.c.h.b16 %v3095
      %v3511 = vunpack.c.l.b16 %v3096
      %v3512 = vunpack.c.h.b16 %v3096
      %v3513 = vunpack.c.l.b16 %v3097
      %v3514 = vunpack.c.h.b16 %v3097
      %v3515 = vunpack.c.l.b16 %v3098
      %v3516 = vunpack.c.h.b16 %v3098
      %v3517 = vunpack.c.l.b16 %v3099
      %v3518 = vunpack.c.h.b16 %v3099
      %v3519 = vunpack.c.l.b16 %v3100
      %v3520 = vunpack.c.h.b16 %v3100
      %v3521 = vunpack.c.l.b16 %v3101
      %v3522 = vunpack.c.h.b16 %v3101
      %v3523 = vunpack.c.l.b16 %v3102
      %v3524 = vunpack.c.h.b16 %v3102
      %v3525 = vunpack.c.l.b16 %v3103
      %v3526 = vunpack.c.h.b16 %v3103
      %v3527 = vunpack.c.l.b16 %v3104
      %v3528 = vunpack.c.h.b16 %v3104
      %v3529 = vunpack.c.l.b16 %v3105
      %v3530 = vunpack.c.h.b16 %v3105
      %v3531 = vunpack.c.l.b16 %v3106
      %v3532 = vunpack.c.h.b16 %v3106
      %v3533 = vunpack.c.l.b16 %v3107
      %v3534 = vunpack.c.h.b16 %v3107
      %v3535 = vunpack.c.l.b16 %v3108
      %v3536 = vunpack.c.h.b16 %v3108
      %v3537 = vunpack.c.l.b16 %v3109
      %v3538 = vunpack.c.h.b16 %v3109
      %v3539 = vunpack.c.l.b16 %v3110
      %v3540 = vunpack.c.h.b16 %v3110
      %v3541 = vpack.c.b16 %v3293, %v3285
      %v3542 = vpack.c.b16 %v3294, %v3286
      %v3543 = vpack.c.b16 %v3295, %v3287
      %v3544 = vpack.c.b16 %v3296, %v3288
      %v3545 = vpack.c.b16 %v3297, %v3289
      %v3546 = vpack.c.b16 %v3298, %v3290
      %v3547 = vpack.c.b16 %v3299, %v3291
      %v3548 = vpack.c.b16 %v3300, %v3292
      %v3549 = vpack.c.b16 %v3309, %v3301
      %v3550 = vpack.c.b16 %v3310, %v3302
      %v3551 = vpack.c.b16 %v3311, %v3303
      %v3552 = vpack.c.b16 %v3312, %v3304
      %v3553 = vpack.c.b16 %v3313, %v3305
      %v3554 = vpack.c.b16 %v3314, %v3306
      %v3555 = vpack.c.b16 %v3315, %v3307
      %v3556 = vpack.c.b16 %v3316, %v3308
      %v3557 = vpack.c.b16 %v3325, %v3317
      %v3558 = vpack.c.b16 %v3326, %v3318
      %v3559 = vpack.c.b16 %v3327, %v3319
      %v3560 = vpack.c.b16 %v3328, %v3320
      %v3561 = vpack.c.b16 %v3329, %v3321
      %v3562 = vpack.c.b16 %v3330, %v3322
      %v3563 = vpack.c.b16 %v3331, %v3323
      %v3564 = vpack.c.b16 %v3332, %v3324
      %v3565 = vpack.c.b16 %v3341, %v3333
      %v3566 = vpack.c.b16 %v3342, %v3334
      %v3567 = vpack.c.b16 %v3343, %v3335
      %v3568 = vpack.c.b16 %v3344, %v3336
      %v3569 = vpack.c.b16 %v3345, %v3337
      %v3570 = vpack.c.b16 %v3346, %v3338
      %v3571 = vpack.c.b16 %v3347, %v3339
      %v3572 = vpack.c.b16 %v3348, %v3340
      %v3573 = vpack.c.b16 %v3357, %v3349
      %v3574 = vpack.c.b16 %v3358, %v3350
      %v3575 = vpack.c.b16 %v3359, %v3351
      %v3576 = vpack.c.b16 %v3360, %v3352
      %v3577 = vpack.c.b16 %v3361, %v3353
      %v3578 = vpack.c.b16 %v3362, %v3354
      %v3579 = vpack.c.b16 %v3363, %v3355
      %v3580 = vpack.c.b16 %v3364, %v3356
      %v3581 = vpack.c.b16 %v3373, %v3365
      %v3582 = vpack.c.b16 %v3374, %v3366
      %v3583 = vpack.c.b16 %v3375, %v3367
      %v3584 = vpack.c.b16 %v3376, %v3368
      %v3585 = vpack.c.b16 %v3377, %v3369
      %v3586 = vpack.c.b16 %v3378, %v3370
      %v3587 = vpack.c.b16 %v3379, %v3371
      %v3588 = vpack.c.b16 %v3380, %v3372
      %v3589 = vpack.c.b16 %v3389, %v3381
      %v3590 = vpack.c.b16 %v3390, %v3382
      %v3591 = vpack.c.b16 %v3391, %v3383
      %v3592 = vpack.c.b16 %v3392, %v3384
      %v3593 = vpack.c.b16 %v3393, %v3385
      %v3594 = vpack.c.b16 %v3394, %v3386
      %v3595 = vpack.c.b16 %v3395, %v3387
      %v3596 = vpack.c.b16 %v3396, %v3388
      %v3597 = vpack.c.b16 %v3405, %v3397
      %v3598 = vpack.c.b16 %v3406, %v3398
      %v3599 = vpack.c.b16 %v3407, %v3399
      %v3600 = vpack.c.b16 %v3408, %v3400
      %v3601 = vpack.c.b16 %v3409, %v3401
      %v3602 = vpack.c.b16 %v3410, %v3402
      %v3603 = vpack.c.b16 %v3411, %v3403
      %v3604 = vpack.c.b16 %v3412, %v3404
      %v3605 = vpack.c.b16 %v3421, %v3413
      %v3606 = vpack.c.b16 %v3422, %v3414
      %v3607 = vpack.c.b16 %v3423, %v3415
      %v3608 = vpack.c.b16 %v3424, %v3416
      %v3609 = vpack.c.b16 %v3425, %v3417
      %v3610 = vpack.c.b16 %v3426, %v3418
      %v3611 = vpack.c.b16 %v3427, %v3419
      %v3612 = vpack.c.b16 %v3428, %v3420
      %v3613 = vpack.c.b16 %v3437, %v3429
      %v3614 = vpack.c.b16 %v3438, %v3430
      %v3615 = vpack.c.b16 %v3439, %v3431
      %v3616 = vpack.c.b16 %v3440, %v3432
      %v3617 = vpack.c.b16 %v3441, %v3433
      %v3618 = vpack.c.b16 %v3442, %v3434
      %v3619 = vpack.c.b16 %v3443, %v3435
      %v3620 = vpack.c.b16 %v3444, %v3436
      %v3621 = vpack.c.b16 %v3453, %v3445
      %v3622 = vpack.c.b16 %v3454, %v3446
      %v3623 = vpack.c.b16 %v3455, %v3447
      %v3624 = vpack.c.b16 %v3456, %v3448
      %v3625 = vpack.c.b16 %v3457, %v3449
      %v3626 = vpack.c.b16 %v3458, %v3450
      %v3627 = vpack.c.b16 %v3459, %v3451
      %v3628 = vpack.c.b16 %v3460, %v3452
      %v3629 = vpack.c.b16 %v3469, %v3461
      %v3630 = vpack.c.b16 %v3470, %v3462
      %v3631 = vpack.c.b16 %v3471, %v3463
      %v3632 = vpack.c.b16 %v3472, %v3464
      %v3633 = vpack.c.b16 %v3473, %v3465
      %v3634 = vpack.c.b16 %v3474, %v3466
      %v3635 = vpack.c.b16 %v3475, %v3467
      %v3636 = vpack.c.b16 %v3476, %v3468
      %v3637 = vpack.c.b16 %v3485, %v3477
      %v3638 = vpack.c.b16 %v3486, %v3478
      %v3639 = vpack.c.b16 %v3487, %v3479
      %v3640 = vpack.c.b16 %v3488, %v3480
      %v3641 = vpack.c.b16 %v3489, %v3481
      %v3642 = vpack.c.b16 %v3490, %v3482
      %v3643 = vpack.c.b16 %v3491, %v3483
      %v3644 = vpack.c.b16 %v3492, %v3484
      %v3645 = vpack.c.b16 %v3501, %v3493
      %v3646 = vpack.c.b16 %v3502, %v3494
      %v3647 = vpack.c.b16 %v3503, %v3495
      %v3648 = vpack.c.b16 %v3504, %v3496
      %v3649 = vpack.c.b16 %v3505, %v3497
      %v3650 = vpack.c.b16 %v3506, %v3498
      %v3651 = vpack.c.b16 %v3507, %v3499
      %v3652 = vpack.c.b16 %v3508, %v3500
      %v3653 = vpack.c.b16 %v3517, %v3509
      %v3654 = vpack.c.b16 %v3518, %v3510
      %v3655 = vpack.c.b16 %v3519, %v3511
      %v3656 = vpack.c.b16 %v3520, %v3512
      %v3657 = vpack.c.b16 %v3521, %v3513
      %v3658 = vpack.c.b16 %v3522, %v3514
      %v3659 = vpack.c.b16 %v3523, %v3515
      %v3660 = vpack.c.b16 %v3524, %v3516
      %v3661 = vpack.c.b16 %v3533, %v3525
      %v3662 = vpack.c.b16 %v3534, %v3526
      %v3663 = vpack.c.b16 %v3535, %v3527
      %v3664 = vpack.c.b16 %v3536, %v3528
      %v3665 = vpack.c.b16 %v3537, %v3529
      %v3666 = vpack.c.b16 %v3538, %v3530
      %v3667 = vpack.c.b16 %v3539, %v3531
      %v3668 = vpack.c.b16 %v3540, %v3532
      %3797 = vmatprep.subr.bf16.mxu0 %v3542
      %3798 = vmatpush1.bf16.msra.mxu0 %v3541
      %3799 = vmatprep.subr.bf16.mxu0 %v3550
      %3800 = vmatpush1.bf16.msra.mxu0 %v3549
      %3801 = vmatprep.subr.bf16.mxu0 %v3558
      %3802 = vmatpush1.bf16.msra.mxu0 %v3557
      %3803 = vmatprep.subr.bf16.mxu0 %v3566
      %3804 = vmatpush1.bf16.msra.mxu0 %v3565
      %3805 = vmatprep.subr.bf16.mxu0 %v3574
      %3806 = vmatpush1.bf16.msra.mxu0 %v3573
      %3807 = vmatprep.subr.bf16.mxu0 %v3582
      %3808 = vmatpush1.bf16.msra.mxu0 %v3581
      %3809 = vmatprep.subr.bf16.mxu0 %v3590
      %3810 = vmatpush1.bf16.msra.mxu0 %v3589
      %3811 = vmatprep.subr.bf16.mxu0 %v3598
      %3812 = vmatpush1.bf16.msra.mxu0 %v3597
      %3813 = vmatprep.subr.bf16.mxu0 %v3606
      %3814 = vmatpush1.bf16.msra.mxu0 %v3605
      %3815 = vmatprep.subr.bf16.mxu0 %v3614
      %3816 = vmatpush1.bf16.msra.mxu0 %v3613
      %3817 = vmatprep.subr.bf16.mxu0 %v3622
      %3818 = vmatpush1.bf16.msra.mxu0 %v3621
      %3819 = vmatprep.subr.bf16.mxu0 %v3630
      %3820 = vmatpush1.bf16.msra.mxu0 %v3629
      %3821 = vmatprep.subr.bf16.mxu0 %v3638
      %3822 = vmatpush1.bf16.msra.mxu0 %v3637
      %3823 = vmatprep.subr.bf16.mxu0 %v3646
      %3824 = vmatpush1.bf16.msra.mxu0 %v3645
      %3825 = vmatprep.subr.bf16.mxu0 %v3654
      %3826 = vmatpush1.bf16.msra.mxu0 %v3653
      %3827 = vmatprep.subr.bf16.mxu0 %v3662
      %3828 = vmatpush1.bf16.msra.mxu0 %v3661
      %3829 = vmatprep.mubr.bf16.mxu0 %v3112
      %3830 = vmatmul.mubr.bf16.gmra.mrb[0].mxu0 %v3111
      %v3831 = vpop.f32.mrb[0].mxu0
      %v3832 = vadd.f32 %v3120, %v3831
      %v3833 = vpop.f32.mrb[0].mxu0
      %v3834 = vadd.f32 %v3124, %v3833
      %v3835 = vpop.f32.mrb[0].mxu0
      %v3836 = vadd.f32 %v3120, %v3835
      %v3837 = vpop.f32.mrb[0].mxu0
      %v3838 = vadd.f32 %v3124, %v3837
      %3839 = vmatprep.mubr.bf16.mxu0 %v3114
      %3840 = vmatmul.mubr.bf16.gmra.mrb[0].mxu0 %v3113
      %v3841 = vpop.f32.mrb[0].mxu0
      %v3842 = vadd.f32 %v3120, %v3841
      %v3843 = vpop.f32.mrb[0].mxu0
      %v3844 = vadd.f32 %v3124, %v3843
      %v3845 = vpop.f32.mrb[0].mxu0
      %v3846 = vadd.f32 %v3120, %v3845
      %v3847 = vpop.f32.mrb[0].mxu0
      %v3848 = vadd.f32 %v3124, %v3847
      %3849 = vdwg.mxu0
      %3850 = vmatprep.subr.bf16.mxu0 %v3544
      %3851 = vmatpush1.bf16.msra.mxu0 %v3543
      %3852 = vmatprep.subr.bf16.mxu0 %v3552
      %3853 = vmatpush1.bf16.msra.mxu0 %v3551
      %3854 = vmatprep.subr.bf16.mxu0 %v3560
      %3855 = vmatpush1.bf16.msra.mxu0 %v3559
      %3856 = vmatprep.subr.bf16.mxu0 %v3568
      %3857 = vmatpush1.bf16.msra.mxu0 %v3567
      %3858 = vmatprep.subr.bf16.mxu0 %v3576
      %3859 = vmatpush1.bf16.msra.mxu0 %v3575
      %3860 = vmatprep.subr.bf16.mxu0 %v3584
      %3861 = vmatpush1.bf16.msra.mxu0 %v3583
      %3862 = vmatprep.subr.bf16.mxu0 %v3592
      %3863 = vmatpush1.bf16.msra.mxu0 %v3591
      %3864 = vmatprep.subr.bf16.mxu0 %v3600
      %3865 = vmatpush1.bf16.msra.mxu0 %v3599
      %3866 = vmatprep.subr.bf16.mxu0 %v3608
      %3867 = vmatpush1.bf16.msra.mxu0 %v3607
      %3868 = vmatprep.subr.bf16.mxu0 %v3616
      %3869 = vmatpush1.bf16.msra.mxu0 %v3615
      %3870 = vmatprep.subr.bf16.mxu0 %v3624
      %3871 = vmatpush1.bf16.msra.mxu0 %v3623
      %3872 = vmatprep.subr.bf16.mxu0 %v3632
      %3873 = vmatpush1.bf16.msra.mxu0 %v3631
      %3874 = vmatprep.subr.bf16.mxu0 %v3640
      %3875 = vmatpush1.bf16.msra.mxu0 %v3639
      %3876 = vmatprep.subr.bf16.mxu0 %v3648
      %3877 = vmatpush1.bf16.msra.mxu0 %v3647
      %3878 = vmatprep.subr.bf16.mxu0 %v3656
      %3879 = vmatpush1.bf16.msra.mxu0 %v3655
      %3880 = vmatprep.subr.bf16.mxu0 %v3664
      %3881 = vmatpush1.bf16.msra.mxu0 %v3663
      %3882 = vmatprep.mubr.bf16.mxu0 %v3112
      %3883 = vmatmul.mubr.bf16.gmra.mrb[0].mxu0 %v3111
      %v3884 = vpop.f32.mrb[0].mxu0
      %v3885 = vadd.f32 %v3128, %v3884
      %v3886 = vpop.f32.mrb[0].mxu0
      %v3887 = vadd.f32 %v3132, %v3886
      %v3888 = vpop.f32.mrb[0].mxu0
      %v3889 = vadd.f32 %v3128, %v3888
      %v3890 = vpop.f32.mrb[0].mxu0
      %v3891 = vadd.f32 %v3132, %v3890
      %3892 = vmatprep.mubr.bf16.mxu0 %v3114
      %3893 = vmatmul.mubr.bf16.gmra.mrb[0].mxu0 %v3113
      %v3894 = vpop.f32.mrb[0].mxu0
      %v3895 = vadd.f32 %v3128, %v3894
      %v3896 = vpop.f32.mrb[0].mxu0
      %v3897 = vadd.f32 %v3132, %v3896
      %v3898 = vpop.f32.mrb[0].mxu0
      %v3899 = vadd.f32 %v3128, %v3898
      %v3900 = vpop.f32.mrb[0].mxu0
      %v3901 = vadd.f32 %v3132, %v3900
      %3902 = vdwg.mxu0
      %3903 = vmatprep.subr.bf16.mxu0 %v3546
      %3904 = vmatpush1.bf16.msra.mxu0 %v3545
      %3905 = vmatprep.subr.bf16.mxu0 %v3554
      %3906 = vmatpush1.bf16.msra.mxu0 %v3553
      %3907 = vmatprep.subr.bf16.mxu0 %v3562
      %3908 = vmatpush1.bf16.msra.mxu0 %v3561
      %3909 = vmatprep.subr.bf16.mxu0 %v3570
      %3910 = vmatpush1.bf16.msra.mxu0 %v3569
      %3911 = vmatprep.subr.bf16.mxu0 %v3578
      %3912 = vmatpush1.bf16.msra.mxu0 %v3577
      %3913 = vmatprep.subr.bf16.mxu0 %v3586
      %3914 = vmatpush1.bf16.msra.mxu0 %v3585
      %3915 = vmatprep.subr.bf16.mxu0 %v3594
      %3916 = vmatpush1.bf16.msra.mxu0 %v3593
      %3917 = vmatprep.subr.bf16.mxu0 %v3602
      %3918 = vmatpush1.bf16.msra.mxu0 %v3601
      %3919 = vmatprep.subr.bf16.mxu0 %v3610
      %3920 = vmatpush1.bf16.msra.mxu0 %v3609
      %3921 = vmatprep.subr.bf16.mxu0 %v3618
      %3922 = vmatpush1.bf16.msra.mxu0 %v3617
      %3923 = vmatprep.subr.bf16.mxu0 %v3626
      %3924 = vmatpush1.bf16.msra.mxu0 %v3625
      %3925 = vmatprep.subr.bf16.mxu0 %v3634
      %3926 = vmatpush1.bf16.msra.mxu0 %v3633
      %3927 = vmatprep.subr.bf16.mxu0 %v3642
      %3928 = vmatpush1.bf16.msra.mxu0 %v3641
      %3929 = vmatprep.subr.bf16.mxu0 %v3650
      %3930 = vmatpush1.bf16.msra.mxu0 %v3649
      %3931 = vmatprep.subr.bf16.mxu0 %v3658
      %3932 = vmatpush1.bf16.msra.mxu0 %v3657
      %3933 = vmatprep.subr.bf16.mxu0 %v3666
      %3934 = vmatpush1.bf16.msra.mxu0 %v3665
      %3935 = vmatprep.mubr.bf16.mxu0 %v3112
      %3936 = vmatmul.mubr.bf16.gmra.mrb[0].mxu0 %v3111
      %v3937 = vpop.f32.mrb[0].mxu0
      %v3938 = vadd.f32 %v3136, %v3937
      %v3939 = vpop.f32.mrb[0].mxu0
      %v3940 = vadd.f32 %v3140, %v3939
      %v3941 = vpop.f32.mrb[0].mxu0
      %v3942 = vadd.f32 %v3136, %v3941
      %v3943 = vpop.f32.mrb[0].mxu0
      %v3944 = vadd.f32 %v3140, %v3943
      %3945 = vmatprep.mubr.bf16.mxu0 %v3114
      %3946 = vmatmul.mubr.bf16.gmra.mrb[0].mxu0 %v3113
      %v3947 = vpop.f32.mrb[0].mxu0
      %v3948 = vadd.f32 %v3136, %v3947
      %v3949 = vpop.f32.mrb[0].mxu0
      %v3950 = vadd.f32 %v3140, %v3949
      %v3951 = vpop.f32.mrb[0].mxu0
      %v3952 = vadd.f32 %v3136, %v3951
      %v3953 = vpop.f32.mrb[0].mxu0
      %v3954 = vadd.f32 %v3140, %v3953
      %3955 = vdwg.mxu0
      %3956 = vmatprep.subr.bf16.mxu0 %v3548
      %3957 = vmatpush1.bf16.msra.mxu0 %v3547
      %3958 = vmatprep.subr.bf16.mxu0 %v3556
      %3959 = vmatpush1.bf16.msra.mxu0 %v3555
      %3960 = vmatprep.subr.bf16.mxu0 %v3564
      %3961 = vmatpush1.bf16.msra.mxu0 %v3563
      %3962 = vmatprep.subr.bf16.mxu0 %v3572
      %3963 = vmatpush1.bf16.msra.mxu0 %v3571
      %3964 = vmatprep.subr.bf16.mxu0 %v3580
      %3965 = vmatpush1.bf16.msra.mxu0 %v3579
      %3966 = vmatprep.subr.bf16.mxu0 %v3588
      %3967 = vmatpush1.bf16.msra.mxu0 %v3587
      %3968 = vmatprep.subr.bf16.mxu0 %v3596
      %3969 = vmatpush1.bf16.msra.mxu0 %v3595
      %3970 = vmatprep.subr.bf16.mxu0 %v3604
      %3971 = vmatpush1.bf16.msra.mxu0 %v3603
      %3972 = vmatprep.subr.bf16.mxu0 %v3612
      %3973 = vmatpush1.bf16.msra.mxu0 %v3611
      %3974 = vmatprep.subr.bf16.mxu0 %v3620
      %3975 = vmatpush1.bf16.msra.mxu0 %v3619
      %3976 = vmatprep.subr.bf16.mxu0 %v3628
      %3977 = vmatpush1.bf16.msra.mxu0 %v3627
      %3978 = vmatprep.subr.bf16.mxu0 %v3636
      %3979 = vmatpush1.bf16.msra.mxu0 %v3635
      %3980 = vmatprep.subr.bf16.mxu0 %v3644
      %3981 = vmatpush1.bf16.msra.mxu0 %v3643
      %3982 = vmatprep.subr.bf16.mxu0 %v3652
      %3983 = vmatpush1.bf16.msra.mxu0 %v3651
      %3984 = vmatprep.subr.bf16.mxu0 %v3660
      %3985 = vmatpush1.bf16.msra.mxu0 %v3659
      %3986 = vmatprep.subr.bf16.mxu0 %v3668
      %3987 = vmatpush1.bf16.msra.mxu0 %v3667
      %3988 = vmatprep.mubr.bf16.mxu0 %v3112
      %3989 = vmatmul.mubr.bf16.gmra.mrb[0].mxu0 %v3111
      %v3990 = vpop.f32.mrb[0].mxu0
      %v3991 = vadd.f32 %v3144, %v3990
      %v3992 = vpop.f32.mrb[0].mxu0
      %v3993 = vadd.f32 %v3148, %v3992
      %v3994 = vpop.f32.mrb[0].mxu0
      %v3995 = vadd.f32 %v3144, %v3994
      %v3996 = vpop.f32.mrb[0].mxu0
      %v3997 = vadd.f32 %v3148, %v3996
      %3998 = vmatprep.mubr.bf16.mxu0 %v3114
      %3999 = vmatmul.mubr.bf16.gmra.mrb[0].mxu0 %v3113
      %v4000 = vpop.f32.mrb[0].mxu0
      %v4001 = vadd.f32 %v3144, %v4000
      %v4002 = vpop.f32.mrb[0].mxu0
      %v4003 = vadd.f32 %v3148, %v4002
      %v4004 = vpop.f32.mrb[0].mxu0
      %v4005 = vadd.f32 %v3144, %v4004
      %v4006 = vpop.f32.mrb[0].mxu0
      %v4007 = vadd.f32 %v3148, %v4006
      %4008 = vdwg.mxu0
      %v4009 = vmul.f32 %v3832, 0.5
      %v4010 = vmul.f32 %v3834, 0.5
      %v4011 = vmul.f32 %v3885, 0.5
      %v4012 = vmul.f32 %v3887, 0.5
      %v4013 = vmul.f32 %v3938, 0.5
      %v4014 = vmul.f32 %v3940, 0.5
      %v4015 = vmul.f32 %v3991, 0.5
      %v4016 = vmul.f32 %v3993, 0.5
      %v4017 = vmul.f32 %v3836, 0.5
      %v4018 = vmul.f32 %v3838, 0.5
      %v4019 = vmul.f32 %v3889, 0.5
      %v4020 = vmul.f32 %v3891, 0.5
      %v4021 = vmul.f32 %v3942, 0.5
      %v4022 = vmul.f32 %v3944, 0.5
      %v4023 = vmul.f32 %v3995, 0.5
      %v4024 = vmul.f32 %v3997, 0.5
      %v4025 = vmul.f32 %v3842, 0.5
      %v4026 = vmul.f32 %v3844, 0.5
      %v4027 = vmul.f32 %v3895, 0.5
      %v4028 = vmul.f32 %v3897, 0.5
      %v4029 = vmul.f32 %v3948, 0.5
      %v4030 = vmul.f32 %v3950, 0.5
      %v4031 = vmul.f32 %v4001, 0.5
      %v4032 = vmul.f32 %v4003, 0.5
      %v4033 = vmul.f32 %v3846, 0.5
      %v4034 = vmul.f32 %v3848, 0.5
      %v4035 = vmul.f32 %v3899, 0.5
      %v4036 = vmul.f32 %v3901, 0.5
      %v4037 = vmul.f32 %v3952, 0.5
      %v4038 = vmul.f32 %v3954, 0.5
      %v4039 = vmul.f32 %v4005, 0.5
      %v4040 = vmul.f32 %v4007, 0.5
      %v4041 = vmul.f32 %v3832, 0.70710677
      %v4042 = vmul.f32 %v3834, 0.70710677
      %v4043 = vmul.f32 %v3885, 0.70710677
      %v4044 = vmul.f32 %v3887, 0.70710677
      %v4045 = vmul.f32 %v3938, 0.70710677
      %v4046 = vmul.f32 %v3940, 0.70710677
      %v4047 = vmul.f32 %v3991, 0.70710677
      %v4048 = vmul.f32 %v3993, 0.70710677
      %v4049 = vmul.f32 %v3836, 0.70710677
      %v4050 = vmul.f32 %v3838, 0.70710677
      %v4051 = vmul.f32 %v3889, 0.70710677
      %v4052 = vmul.f32 %v3891, 0.70710677
      %v4053 = vmul.f32 %v3942, 0.70710677
      %v4054 = vmul.f32 %v3944, 0.70710677
      %v4055 = vmul.f32 %v3995, 0.70710677
      %v4056 = vmul.f32 %v3997, 0.70710677
      %v4057 = vmul.f32 %v3842, 0.70710677
      %v4058 = vmul.f32 %v3844, 0.70710677
      %v4059 = vmul.f32 %v3895, 0.70710677
      %v4060 = vmul.f32 %v3897, 0.70710677
      %v4061 = vmul.f32 %v3948, 0.70710677
      %v4062 = vmul.f32 %v3950, 0.70710677
      %v4063 = vmul.f32 %v4001, 0.70710677
      %v4064 = vmul.f32 %v4003, 0.70710677
      %v4065 = vmul.f32 %v3846, 0.70710677
      %v4066 = vmul.f32 %v3848, 0.70710677
      %v4067 = vmul.f32 %v3899, 0.70710677
      %v4068 = vmul.f32 %v3901, 0.70710677
      %v4069 = vmul.f32 %v3952, 0.70710677
      %v4070 = vmul.f32 %v3954, 0.70710677
      %v4071 = vmul.f32 %v4005, 0.70710677
      %v4072 = vmul.f32 %v4007, 0.70710677
      %vm4073 = vcmp.ge.f32.partialorder %v4041, 0.0
      %vm4074 = vcmp.ge.f32.partialorder %v4042, 0.0
      %vm4075 = vcmp.ge.f32.partialorder %v4043, 0.0
      %vm4076 = vcmp.ge.f32.partialorder %v4044, 0.0
      %vm4077 = vcmp.ge.f32.partialorder %v4045, 0.0
      %vm4078 = vcmp.ge.f32.partialorder %v4046, 0.0
      %vm4079 = vcmp.ge.f32.partialorder %v4047, 0.0
      %vm4080 = vcmp.ge.f32.partialorder %v4048, 0.0
      %vm4081 = vcmp.ge.f32.partialorder %v4049, 0.0
      %vm4082 = vcmp.ge.f32.partialorder %v4050, 0.0
      %vm4083 = vcmp.ge.f32.partialorder %v4051, 0.0
      %vm4084 = vcmp.ge.f32.partialorder %v4052, 0.0
      %vm4085 = vcmp.ge.f32.partialorder %v4053, 0.0
      %vm4086 = vcmp.ge.f32.partialorder %v4054, 0.0
      %vm4087 = vcmp.ge.f32.partialorder %v4055, 0.0
      %vm4088 = vcmp.ge.f32.partialorder %v4056, 0.0
      %vm4089 = vcmp.ge.f32.partialorder %v4057, 0.0
      %vm4090 = vcmp.ge.f32.partialorder %v4058, 0.0
      %vm4091 = vcmp.ge.f32.partialorder %v4059, 0.0
      %vm4092 = vcmp.ge.f32.partialorder %v4060, 0.0
      %vm4093 = vcmp.ge.f32.partialorder %v4061, 0.0
      %vm4094 = vcmp.ge.f32.partialorder %v4062, 0.0
      %vm4095 = vcmp.ge.f32.partialorder %v4063, 0.0
      %vm4096 = vcmp.ge.f32.partialorder %v4064, 0.0
      %vm4097 = vcmp.ge.f32.partialorder %v4065, 0.0
      %vm4098 = vcmp.ge.f32.partialorder %v4066, 0.0
      %vm4099 = vcmp.ge.f32.partialorder %v4067, 0.0
      %vm4100 = vcmp.ge.f32.partialorder %v4068, 0.0
      %vm4101 = vcmp.ge.f32.partialorder %v4069, 0.0
      %vm4102 = vcmp.ge.f32.partialorder %v4070, 0.0
      %vm4103 = vcmp.ge.f32.partialorder %v4071, 0.0
      %vm4104 = vcmp.ge.f32.partialorder %v4072, 0.0
      %v4105 = vsel %vm4073, 1.0, -1.0
      %v4106 = vsel %vm4074, 1.0, -1.0
      %v4107 = vsel %vm4075, 1.0, -1.0
      %v4108 = vsel %vm4076, 1.0, -1.0
      %v4109 = vsel %vm4077, 1.0, -1.0
      %v4110 = vsel %vm4078, 1.0, -1.0
      %v4111 = vsel %vm4079, 1.0, -1.0
      %v4112 = vsel %vm4080, 1.0, -1.0
      %v4113 = vsel %vm4081, 1.0, -1.0
      %v4114 = vsel %vm4082, 1.0, -1.0
      %v4115 = vsel %vm4083, 1.0, -1.0
      %v4116 = vsel %vm4084, 1.0, -1.0
      %v4117 = vsel %vm4085, 1.0, -1.0
      %v4118 = vsel %vm4086, 1.0, -1.0
      %v4119 = vsel %vm4087, 1.0, -1.0
      %v4120 = vsel %vm4088, 1.0, -1.0
      %v4121 = vsel %vm4089, 1.0, -1.0
      %v4122 = vsel %vm4090, 1.0, -1.0
      %v4123 = vsel %vm4091, 1.0, -1.0
      %v4124 = vsel %vm4092, 1.0, -1.0
      %v4125 = vsel %vm4093, 1.0, -1.0
      %v4126 = vsel %vm4094, 1.0, -1.0
      %v4127 = vsel %vm4095, 1.0, -1.0
      %v4128 = vsel %vm4096, 1.0, -1.0
      %v4129 = vsel %vm4097, 1.0, -1.0
      %v4130 = vsel %vm4098, 1.0, -1.0
      %v4131 = vsel %vm4099, 1.0, -1.0
      %v4132 = vsel %vm4100, 1.0, -1.0
      %v4133 = vsel %vm4101, 1.0, -1.0
      %v4134 = vsel %vm4102, 1.0, -1.0
      %v4135 = vsel %vm4103, 1.0, -1.0
      %v4136 = vsel %vm4104, 1.0, -1.0
      %v4137 = vand.u32 2147483647, %v4041
      %v4138 = vand.u32 2147483647, %v4042
      %v4139 = vand.u32 2147483647, %v4043
      %v4140 = vand.u32 2147483647, %v4044
      %v4141 = vand.u32 2147483647, %v4045
      %v4142 = vand.u32 2147483647, %v4046
      %v4143 = vand.u32 2147483647, %v4047
      %v4144 = vand.u32 2147483647, %v4048
      %v4145 = vand.u32 2147483647, %v4049
      %v4146 = vand.u32 2147483647, %v4050
      %v4147 = vand.u32 2147483647, %v4051
      %v4148 = vand.u32 2147483647, %v4052
      %v4149 = vand.u32 2147483647, %v4053
      %v4150 = vand.u32 2147483647, %v4054
      %v4151 = vand.u32 2147483647, %v4055
      %v4152 = vand.u32 2147483647, %v4056
      %v4153 = vand.u32 2147483647, %v4057
      %v4154 = vand.u32 2147483647, %v4058
      %v4155 = vand.u32 2147483647, %v4059
      %v4156 = vand.u32 2147483647, %v4060
      %v4157 = vand.u32 2147483647, %v4061
      %v4158 = vand.u32 2147483647, %v4062
      %v4159 = vand.u32 2147483647, %v4063
      %v4160 = vand.u32 2147483647, %v4064
      %v4161 = vand.u32 2147483647, %v4065
      %v4162 = vand.u32 2147483647, %v4066
      %v4163 = vand.u32 2147483647, %v4067
      %v4164 = vand.u32 2147483647, %v4068
      %v4165 = vand.u32 2147483647, %v4069
      %v4166 = vand.u32 2147483647, %v4070
      %v4167 = vand.u32 2147483647, %v4071
      %v4168 = vand.u32 2147483647, %v4072
      %v4169 = vmul.f32 %v4137, 0.3275911
      %v4170 = vmul.f32 %v4138, 0.3275911
      %v4171 = vmul.f32 %v4139, 0.3275911
      %v4172 = vmul.f32 %v4140, 0.3275911
      %v4173 = vmul.f32 %v4141, 0.3275911
      %v4174 = vmul.f32 %v4142, 0.3275911
      %v4175 = vmul.f32 %v4143, 0.3275911
      %v4176 = vmul.f32 %v4144, 0.3275911
      %v4177 = vmul.f32 %v4145, 0.3275911
      %v4178 = vmul.f32 %v4146, 0.3275911
      %v4179 = vmul.f32 %v4147, 0.3275911
      %v4180 = vmul.f32 %v4148, 0.3275911
      %v4181 = vmul.f32 %v4149, 0.3275911
      %v4182 = vmul.f32 %v4150, 0.3275911
      %v4183 = vmul.f32 %v4151, 0.3275911
      %v4184 = vmul.f32 %v4152, 0.3275911
      %v4185 = vmul.f32 %v4153, 0.3275911
      %v4186 = vmul.f32 %v4154, 0.3275911
      %v4187 = vmul.f32 %v4155, 0.3275911
      %v4188 = vmul.f32 %v4156, 0.3275911
      %v4189 = vmul.f32 %v4157, 0.3275911
      %v4190 = vmul.f32 %v4158, 0.3275911
      %v4191 = vmul.f32 %v4159, 0.3275911
      %v4192 = vmul.f32 %v4160, 0.3275911
      %v4193 = vmul.f32 %v4161, 0.3275911
      %v4194 = vmul.f32 %v4162, 0.3275911
      %v4195 = vmul.f32 %v4163, 0.3275911
      %v4196 = vmul.f32 %v4164, 0.3275911
      %v4197 = vmul.f32 %v4165, 0.3275911
      %v4198 = vmul.f32 %v4166, 0.3275911
      %v4199 = vmul.f32 %v4167, 0.3275911
      %v4200 = vmul.f32 %v4168, 0.3275911
      %v4201 = vadd.f32 %v4169, 1.0
      %v4202 = vadd.f32 %v4170, 1.0
      %v4203 = vadd.f32 %v4171, 1.0
      %v4204 = vadd.f32 %v4172, 1.0
      %v4205 = vadd.f32 %v4173, 1.0
      %v4206 = vadd.f32 %v4174, 1.0
      %v4207 = vadd.f32 %v4175, 1.0
      %v4208 = vadd.f32 %v4176, 1.0
      %v4209 = vadd.f32 %v4177, 1.0
      %v4210 = vadd.f32 %v4178, 1.0
      %v4211 = vadd.f32 %v4179, 1.0
      %v4212 = vadd.f32 %v4180, 1.0
      %v4213 = vadd.f32 %v4181, 1.0
      %v4214 = vadd.f32 %v4182, 1.0
      %v4215 = vadd.f32 %v4183, 1.0
      %v4216 = vadd.f32 %v4184, 1.0
      %v4217 = vadd.f32 %v4185, 1.0
      %v4218 = vadd.f32 %v4186, 1.0
      %v4219 = vadd.f32 %v4187, 1.0
      %v4220 = vadd.f32 %v4188, 1.0
      %v4221 = vadd.f32 %v4189, 1.0
      %v4222 = vadd.f32 %v4190, 1.0
      %v4223 = vadd.f32 %v4191, 1.0
      %v4224 = vadd.f32 %v4192, 1.0
      %v4225 = vadd.f32 %v4193, 1.0
      %v4226 = vadd.f32 %v4194, 1.0
      %v4227 = vadd.f32 %v4195, 1.0
      %v4228 = vadd.f32 %v4196, 1.0
      %v4229 = vadd.f32 %v4197, 1.0
      %v4230 = vadd.f32 %v4198, 1.0
      %v4231 = vadd.f32 %v4199, 1.0
      %v4232 = vadd.f32 %v4200, 1.0
      %v4233 = vrcp.pop %v4201
      %v4234 = vrcp.pop %v4202
      %v4235 = vrcp.pop %v4203
      %v4236 = vrcp.pop %v4204
      %v4237 = vrcp.pop %v4205
      %v4238 = vrcp.pop %v4206
      %v4239 = vrcp.pop %v4207
      %v4240 = vrcp.pop %v4208
      %v4241 = vrcp.pop %v4209
      %v4242 = vrcp.pop %v4210
      %v4243 = vrcp.pop %v4211
      %v4244 = vrcp.pop %v4212
      %v4245 = vrcp.pop %v4213
      %v4246 = vrcp.pop %v4214
      %v4247 = vrcp.pop %v4215
      %v4248 = vrcp.pop %v4216
      %v4249 = vrcp.pop %v4217
      %v4250 = vrcp.pop %v4218
      %v4251 = vrcp.pop %v4219
      %v4252 = vrcp.pop %v4220
      %v4253 = vrcp.pop %v4221
      %v4254 = vrcp.pop %v4222
      %v4255 = vrcp.pop %v4223
      %v4256 = vrcp.pop %v4224
      %v4257 = vrcp.pop %v4225
      %v4258 = vrcp.pop %v4226
      %v4259 = vrcp.pop %v4227
      %v4260 = vrcp.pop %v4228
      %v4261 = vrcp.pop %v4229
      %v4262 = vrcp.pop %v4230
      %v4263 = vrcp.pop %v4231
      %v4264 = vrcp.pop %v4232
      %v4265 = vmul.f32 %v4233, 1.0614054
      %v4266 = vmul.f32 %v4234, 1.0614054
      %v4267 = vmul.f32 %v4235, 1.0614054
      %v4268 = vmul.f32 %v4236, 1.0614054
      %v4269 = vmul.f32 %v4237, 1.0614054
      %v4270 = vmul.f32 %v4238, 1.0614054
      %v4271 = vmul.f32 %v4239, 1.0614054
      %v4272 = vmul.f32 %v4240, 1.0614054
      %v4273 = vmul.f32 %v4241, 1.0614054
      %v4274 = vmul.f32 %v4242, 1.0614054
      %v4275 = vmul.f32 %v4243, 1.0614054
      %v4276 = vmul.f32 %v4244, 1.0614054
      %v4277 = vmul.f32 %v4245, 1.0614054
      %v4278 = vmul.f32 %v4246, 1.0614054
      %v4279 = vmul.f32 %v4247, 1.0614054
      %v4280 = vmul.f32 %v4248, 1.0614054
      %v4281 = vmul.f32 %v4249, 1.0614054
      %v4282 = vmul.f32 %v4250, 1.0614054
      %v4283 = vmul.f32 %v4251, 1.0614054
      %v4284 = vmul.f32 %v4252, 1.0614054
      %v4285 = vmul.f32 %v4253, 1.0614054
      %v4286 = vmul.f32 %v4254, 1.0614054
      %v4287 = vmul.f32 %v4255, 1.0614054
      %v4288 = vmul.f32 %v4256, 1.0614054
      %v4289 = vmul.f32 %v4257, 1.0614054
      %v4290 = vmul.f32 %v4258, 1.0614054
      %v4291 = vmul.f32 %v4259, 1.0614054
      %v4292 = vmul.f32 %v4260, 1.0614054
      %v4293 = vmul.f32 %v4261, 1.0614054
      %v4294 = vmul.f32 %v4262, 1.0614054
      %v4295 = vmul.f32 %v4263, 1.0614054
      %v4296 = vmul.f32 %v4264, 1.0614054
      %v4297 = vadd.f32 %v4265, -1.4531521
      %v4298 = vadd.f32 %v4266, -1.4531521
      %v4299 = vadd.f32 %v4267, -1.4531521
      %v4300 = vadd.f32 %v4268, -1.4531521
      %v4301 = vadd.f32 %v4269, -1.4531521
      %v4302 = vadd.f32 %v4270, -1.4531521
      %v4303 = vadd.f32 %v4271, -1.4531521
      %v4304 = vadd.f32 %v4272, -1.4531521
      %v4305 = vadd.f32 %v4273, -1.4531521
      %v4306 = vadd.f32 %v4274, -1.4531521
      %v4307 = vadd.f32 %v4275, -1.4531521
      %v4308 = vadd.f32 %v4276, -1.4531521
      %v4309 = vadd.f32 %v4277, -1.4531521
      %v4310 = vadd.f32 %v4278, -1.4531521
      %v4311 = vadd.f32 %v4279, -1.4531521
      %v4312 = vadd.f32 %v4280, -1.4531521
      %v4313 = vadd.f32 %v4281, -1.4531521
      %v4314 = vadd.f32 %v4282, -1.4531521
      %v4315 = vadd.f32 %v4283, -1.4531521
      %v4316 = vadd.f32 %v4284, -1.4531521
      %v4317 = vadd.f32 %v4285, -1.4531521
      %v4318 = vadd.f32 %v4286, -1.4531521
      %v4319 = vadd.f32 %v4287, -1.4531521
      %v4320 = vadd.f32 %v4288, -1.4531521
      %v4321 = vadd.f32 %v4289, -1.4531521
      %v4322 = vadd.f32 %v4290, -1.4531521
      %v4323 = vadd.f32 %v4291, -1.4531521
      %v4324 = vadd.f32 %v4292, -1.4531521
      %v4325 = vadd.f32 %v4293, -1.4531521
      %v4326 = vadd.f32 %v4294, -1.4531521
      %v4327 = vadd.f32 %v4295, -1.4531521
      %v4328 = vadd.f32 %v4296, -1.4531521
      %v4329 = vmul.f32 %v4233, %v4297
      %v4330 = vmul.f32 %v4234, %v4298
      %v4331 = vmul.f32 %v4235, %v4299
      %v4332 = vmul.f32 %v4236, %v4300
      %v4333 = vmul.f32 %v4237, %v4301
      %v4334 = vmul.f32 %v4238, %v4302
      %v4335 = vmul.f32 %v4239, %v4303
      %v4336 = vmul.f32 %v4240, %v4304
      %v4337 = vmul.f32 %v4241, %v4305
      %v4338 = vmul.f32 %v4242, %v4306
      %v4339 = vmul.f32 %v4243, %v4307
      %v4340 = vmul.f32 %v4244, %v4308
      %v4341 = vmul.f32 %v4245, %v4309
      %v4342 = vmul.f32 %v4246, %v4310
      %v4343 = vmul.f32 %v4247, %v4311
      %v4344 = vmul.f32 %v4248, %v4312
      %v4345 = vmul.f32 %v4249, %v4313
      %v4346 = vmul.f32 %v4250, %v4314
      %v4347 = vmul.f32 %v4251, %v4315
      %v4348 = vmul.f32 %v4252, %v4316
      %v4349 = vmul.f32 %v4253, %v4317
      %v4350 = vmul.f32 %v4254, %v4318
      %v4351 = vmul.f32 %v4255, %v4319
      %v4352 = vmul.f32 %v4256, %v4320
      %v4353 = vmul.f32 %v4257, %v4321
      %v4354 = vmul.f32 %v4258, %v4322
      %v4355 = vmul.f32 %v4259, %v4323
      %v4356 = vmul.f32 %v4260, %v4324
      %v4357 = vmul.f32 %v4261, %v4325
      %v4358 = vmul.f32 %v4262, %v4326
      %v4359 = vmul.f32 %v4263, %v4327
      %v4360 = vmul.f32 %v4264, %v4328
      %v4361 = vadd.f32 %v4329, 1.4214138
      %v4362 = vadd.f32 %v4330, 1.4214138
      %v4363 = vadd.f32 %v4331, 1.4214138
      %v4364 = vadd.f32 %v4332, 1.4214138
      %v4365 = vadd.f32 %v4333, 1.4214138
      %v4366 = vadd.f32 %v4334, 1.4214138
      %v4367 = vadd.f32 %v4335, 1.4214138
      %v4368 = vadd.f32 %v4336, 1.4214138
      %v4369 = vadd.f32 %v4337, 1.4214138
      %v4370 = vadd.f32 %v4338, 1.4214138
      %v4371 = vadd.f32 %v4339, 1.4214138
      %v4372 = vadd.f32 %v4340, 1.4214138
      %v4373 = vadd.f32 %v4341, 1.4214138
      %v4374 = vadd.f32 %v4342, 1.4214138
      %v4375 = vadd.f32 %v4343, 1.4214138
      %v4376 = vadd.f32 %v4344, 1.4214138
      %v4377 = vadd.f32 %v4345, 1.4214138
      %v4378 = vadd.f32 %v4346, 1.4214138
      %v4379 = vadd.f32 %v4347, 1.4214138
      %v4380 = vadd.f32 %v4348, 1.4214138
      %v4381 = vadd.f32 %v4349, 1.4214138
      %v4382 = vadd.f32 %v4350, 1.4214138
      %v4383 = vadd.f32 %v4351, 1.4214138
      %v4384 = vadd.f32 %v4352, 1.4214138
      %v4385 = vadd.f32 %v4353, 1.4214138
      %v4386 = vadd.f32 %v4354, 1.4214138
      %v4387 = vadd.f32 %v4355, 1.4214138
      %v4388 = vadd.f32 %v4356, 1.4214138
      %v4389 = vadd.f32 %v4357, 1.4214138
      %v4390 = vadd.f32 %v4358, 1.4214138
      %v4391 = vadd.f32 %v4359, 1.4214138
      %v4392 = vadd.f32 %v4360, 1.4214138
      %v4393 = vmul.f32 %v4233, %v4361
      %v4394 = vmul.f32 %v4234, %v4362
      %v4395 = vmul.f32 %v4235, %v4363
      %v4396 = vmul.f32 %v4236, %v4364
      %v4397 = vmul.f32 %v4237, %v4365
      %v4398 = vmul.f32 %v4238, %v4366
      %v4399 = vmul.f32 %v4239, %v4367
      %v4400 = vmul.f32 %v4240, %v4368
      %v4401 = vmul.f32 %v4241, %v4369
      %v4402 = vmul.f32 %v4242, %v4370
      %v4403 = vmul.f32 %v4243, %v4371
      %v4404 = vmul.f32 %v4244, %v4372
      %v4405 = vmul.f32 %v4245, %v4373
      %v4406 = vmul.f32 %v4246, %v4374
      %v4407 = vmul.f32 %v4247, %v4375
      %v4408 = vmul.f32 %v4248, %v4376
      %v4409 = vmul.f32 %v4249, %v4377
      %v4410 = vmul.f32 %v4250, %v4378
      %v4411 = vmul.f32 %v4251, %v4379
      %v4412 = vmul.f32 %v4252, %v4380
      %v4413 = vmul.f32 %v4253, %v4381
      %v4414 = vmul.f32 %v4254, %v4382
      %v4415 = vmul.f32 %v4255, %v4383
      %v4416 = vmul.f32 %v4256, %v4384
      %v4417 = vmul.f32 %v4257, %v4385
      %v4418 = vmul.f32 %v4258, %v4386
      %v4419 = vmul.f32 %v4259, %v4387
      %v4420 = vmul.f32 %v4260, %v4388
      %v4421 = vmul.f32 %v4261, %v4389
      %v4422 = vmul.f32 %v4262, %v4390
      %v4423 = vmul.f32 %v4263, %v4391
      %v4424 = vmul.f32 %v4264, %v4392
      %v4425 = vadd.f32 %v4393, -0.28449672
      %v4426 = vadd.f32 %v4394, -0.28449672
      %v4427 = vadd.f32 %v4395, -0.28449672
      %v4428 = vadd.f32 %v4396, -0.28449672
      %v4429 = vadd.f32 %v4397, -0.28449672
      %v4430 = vadd.f32 %v4398, -0.28449672
      %v4431 = vadd.f32 %v4399, -0.28449672
      %v4432 = vadd.f32 %v4400, -0.28449672
      %v4433 = vadd.f32 %v4401, -0.28449672
      %v4434 = vadd.f32 %v4402, -0.28449672
      %v4435 = vadd.f32 %v4403, -0.28449672
      %v4436 = vadd.f32 %v4404, -0.28449672
      %v4437 = vadd.f32 %v4405, -0.28449672
      %v4438 = vadd.f32 %v4406, -0.28449672
      %v4439 = vadd.f32 %v4407, -0.28449672
      %v4440 = vadd.f32 %v4408, -0.28449672
      %v4441 = vadd.f32 %v4409, -0.28449672
      %v4442 = vadd.f32 %v4410, -0.28449672
      %v4443 = vadd.f32 %v4411, -0.28449672
      %v4444 = vadd.f32 %v4412, -0.28449672
      %v4445 = vadd.f32 %v4413, -0.28449672
      %v4446 = vadd.f32 %v4414, -0.28449672
      %v4447 = vadd.f32 %v4415, -0.28449672
      %v4448 = vadd.f32 %v4416, -0.28449672
      %v4449 = vadd.f32 %v4417, -0.28449672
      %v4450 = vadd.f32 %v4418, -0.28449672
      %v4451 = vadd.f32 %v4419, -0.28449672
      %v4452 = vadd.f32 %v4420, -0.28449672
      %v4453 = vadd.f32 %v4421, -0.28449672
      %v4454 = vadd.f32 %v4422, -0.28449672
      %v4455 = vadd.f32 %v4423, -0.28449672
      %v4456 = vadd.f32 %v4424, -0.28449672
      %v4457 = vmul.f32 %v4233, %v4425
      %v4458 = vmul.f32 %v4234, %v4426
      %v4459 = vmul.f32 %v4235, %v4427
      %v4460 = vmul.f32 %v4236, %v4428
      %v4461 = vmul.f32 %v4237, %v4429
      %v4462 = vmul.f32 %v4238, %v4430
      %v4463 = vmul.f32 %v4239, %v4431
      %v4464 = vmul.f32 %v4240, %v4432
      %v4465 = vmul.f32 %v4241, %v4433
      %v4466 = vmul.f32 %v4242, %v4434
      %v4467 = vmul.f32 %v4243, %v4435
      %v4468 = vmul.f32 %v4244, %v4436
      %v4469 = vmul.f32 %v4245, %v4437
      %v4470 = vmul.f32 %v4246, %v4438
      %v4471 = vmul.f32 %v4247, %v4439
      %v4472 = vmul.f32 %v4248, %v4440
      %v4473 = vmul.f32 %v4249, %v4441
      %v4474 = vmul.f32 %v4250, %v4442
      %v4475 = vmul.f32 %v4251, %v4443
      %v4476 = vmul.f32 %v4252, %v4444
      %v4477 = vmul.f32 %v4253, %v4445
      %v4478 = vmul.f32 %v4254, %v4446
      %v4479 = vmul.f32 %v4255, %v4447
      %v4480 = vmul.f32 %v4256, %v4448
      %v4481 = vmul.f32 %v4257, %v4449
      %v4482 = vmul.f32 %v4258, %v4450
      %v4483 = vmul.f32 %v4259, %v4451
      %v4484 = vmul.f32 %v4260, %v4452
      %v4485 = vmul.f32 %v4261, %v4453
      %v4486 = vmul.f32 %v4262, %v4454
      %v4487 = vmul.f32 %v4263, %v4455
      %v4488 = vmul.f32 %v4264, %v4456
      %v4489 = vadd.f32 %v4457, 0.2548296
      %v4490 = vadd.f32 %v4458, 0.2548296
      %v4491 = vadd.f32 %v4459, 0.2548296
      %v4492 = vadd.f32 %v4460, 0.2548296
      %v4493 = vadd.f32 %v4461, 0.2548296
      %v4494 = vadd.f32 %v4462, 0.2548296
      %v4495 = vadd.f32 %v4463, 0.2548296
      %v4496 = vadd.f32 %v4464, 0.2548296
      %v4497 = vadd.f32 %v4465, 0.2548296
      %v4498 = vadd.f32 %v4466, 0.2548296
      %v4499 = vadd.f32 %v4467, 0.2548296
      %v4500 = vadd.f32 %v4468, 0.2548296
      %v4501 = vadd.f32 %v4469, 0.2548296
      %v4502 = vadd.f32 %v4470, 0.2548296
      %v4503 = vadd.f32 %v4471, 0.2548296
      %v4504 = vadd.f32 %v4472, 0.2548296
      %v4505 = vadd.f32 %v4473, 0.2548296
      %v4506 = vadd.f32 %v4474, 0.2548296
      %v4507 = vadd.f32 %v4475, 0.2548296
      %v4508 = vadd.f32 %v4476, 0.2548296
      %v4509 = vadd.f32 %v4477, 0.2548296
      %v4510 = vadd.f32 %v4478, 0.2548296
      %v4511 = vadd.f32 %v4479, 0.2548296
      %v4512 = vadd.f32 %v4480, 0.2548296
      %v4513 = vadd.f32 %v4481, 0.2548296
      %v4514 = vadd.f32 %v4482, 0.2548296
      %v4515 = vadd.f32 %v4483, 0.2548296
      %v4516 = vadd.f32 %v4484, 0.2548296
      %v4517 = vadd.f32 %v4485, 0.2548296
      %v4518 = vadd.f32 %v4486, 0.2548296
      %v4519 = vadd.f32 %v4487, 0.2548296
      %v4520 = vadd.f32 %v4488, 0.2548296
      %v4521 = vmul.f32 %v4233, %v4489
      %v4522 = vmul.f32 %v4234, %v4490
      %v4523 = vmul.f32 %v4235, %v4491
      %v4524 = vmul.f32 %v4236, %v4492
      %v4525 = vmul.f32 %v4237, %v4493
      %v4526 = vmul.f32 %v4238, %v4494
      %v4527 = vmul.f32 %v4239, %v4495
      %v4528 = vmul.f32 %v4240, %v4496
      %v4529 = vmul.f32 %v4241, %v4497
      %v4530 = vmul.f32 %v4242, %v4498
      %v4531 = vmul.f32 %v4243, %v4499
      %v4532 = vmul.f32 %v4244, %v4500
      %v4533 = vmul.f32 %v4245, %v4501
      %v4534 = vmul.f32 %v4246, %v4502
      %v4535 = vmul.f32 %v4247, %v4503
      %v4536 = vmul.f32 %v4248, %v4504
      %v4537 = vmul.f32 %v4249, %v4505
      %v4538 = vmul.f32 %v4250, %v4506
      %v4539 = vmul.f32 %v4251, %v4507
      %v4540 = vmul.f32 %v4252, %v4508
      %v4541 = vmul.f32 %v4253, %v4509
      %v4542 = vmul.f32 %v4254, %v4510
      %v4543 = vmul.f32 %v4255, %v4511
      %v4544 = vmul.f32 %v4256, %v4512
      %v4545 = vmul.f32 %v4257, %v4513
      %v4546 = vmul.f32 %v4258, %v4514
      %v4547 = vmul.f32 %v4259, %v4515
      %v4548 = vmul.f32 %v4260, %v4516
      %v4549 = vmul.f32 %v4261, %v4517
      %v4550 = vmul.f32 %v4262, %v4518
      %v4551 = vmul.f32 %v4263, %v4519
      %v4552 = vmul.f32 %v4264, %v4520
      %v4553 = vsub.f32 0.0, %v4137
      %v4554 = vsub.f32 0.0, %v4138
      %v4555 = vsub.f32 0.0, %v4139
      %v4556 = vsub.f32 0.0, %v4140
      %v4557 = vsub.f32 0.0, %v4141
      %v4558 = vsub.f32 0.0, %v4142
      %v4559 = vsub.f32 0.0, %v4143
      %v4560 = vsub.f32 0.0, %v4144
      %v4561 = vsub.f32 0.0, %v4145
      %v4562 = vsub.f32 0.0, %v4146
      %v4563 = vsub.f32 0.0, %v4147
      %v4564 = vsub.f32 0.0, %v4148
      %v4565 = vsub.f32 0.0, %v4149
      %v4566 = vsub.f32 0.0, %v4150
      %v4567 = vsub.f32 0.0, %v4151
      %v4568 = vsub.f32 0.0, %v4152
      %v4569 = vsub.f32 0.0, %v4153
      %v4570 = vsub.f32 0.0, %v4154
      %v4571 = vsub.f32 0.0, %v4155
      %v4572 = vsub.f32 0.0, %v4156
      %v4573 = vsub.f32 0.0, %v4157
      %v4574 = vsub.f32 0.0, %v4158
      %v4575 = vsub.f32 0.0, %v4159
      %v4576 = vsub.f32 0.0, %v4160
      %v4577 = vsub.f32 0.0, %v4161
      %v4578 = vsub.f32 0.0, %v4162
      %v4579 = vsub.f32 0.0, %v4163
      %v4580 = vsub.f32 0.0, %v4164
      %v4581 = vsub.f32 0.0, %v4165
      %v4582 = vsub.f32 0.0, %v4166
      %v4583 = vsub.f32 0.0, %v4167
      %v4584 = vsub.f32 0.0, %v4168
      %v4585 = vmul.f32 %v4553, %v4137
      %v4586 = vmul.f32 %v4554, %v4138
      %v4587 = vmul.f32 %v4555, %v4139
      %v4588 = vmul.f32 %v4556, %v4140
      %v4589 = vmul.f32 %v4557, %v4141
      %v4590 = vmul.f32 %v4558, %v4142
      %v4591 = vmul.f32 %v4559, %v4143
      %v4592 = vmul.f32 %v4560, %v4144
      %v4593 = vmul.f32 %v4561, %v4145
      %v4594 = vmul.f32 %v4562, %v4146
      %v4595 = vmul.f32 %v4563, %v4147
      %v4596 = vmul.f32 %v4564, %v4148
      %v4597 = vmul.f32 %v4565, %v4149
      %v4598 = vmul.f32 %v4566, %v4150
      %v4599 = vmul.f32 %v4567, %v4151
      %v4600 = vmul.f32 %v4568, %v4152
      %v4601 = vmul.f32 %v4569, %v4153
      %v4602 = vmul.f32 %v4570, %v4154
      %v4603 = vmul.f32 %v4571, %v4155
      %v4604 = vmul.f32 %v4572, %v4156
      %v4605 = vmul.f32 %v4573, %v4157
      %v4606 = vmul.f32 %v4574, %v4158
      %v4607 = vmul.f32 %v4575, %v4159
      %v4608 = vmul.f32 %v4576, %v4160
      %v4609 = vmul.f32 %v4577, %v4161
      %v4610 = vmul.f32 %v4578, %v4162
      %v4611 = vmul.f32 %v4579, %v4163
      %v4612 = vmul.f32 %v4580, %v4164
      %v4613 = vmul.f32 %v4581, %v4165
      %v4614 = vmul.f32 %v4582, %v4166
      %v4615 = vmul.f32 %v4583, %v4167
      %v4616 = vmul.f32 %v4584, %v4168
      %v4617 = vmul.f32 %v4585, 1.442695
      %v4618 = vpow.pop %v4617
      %v4619 = vmul.f32 %v4586, 1.442695
      %v4620 = vpow.pop %v4619
      %v4621 = vmul.f32 %v4587, 1.442695
      %v4622 = vpow.pop %v4621
      %v4623 = vmul.f32 %v4588, 1.442695
      %v4624 = vpow.pop %v4623
      %v4625 = vmul.f32 %v4589, 1.442695
      %v4626 = vpow.pop %v4625
      %v4627 = vmul.f32 %v4590, 1.442695
      %v4628 = vpow.pop %v4627
      %v4629 = vmul.f32 %v4591, 1.442695
      %v4630 = vpow.pop %v4629
      %v4631 = vmul.f32 %v4592, 1.442695
      %v4632 = vpow.pop %v4631
      %v4633 = vmul.f32 %v4593, 1.442695
      %v4634 = vpow.pop %v4633
      %v4635 = vmul.f32 %v4594, 1.442695
      %v4636 = vpow.pop %v4635
      %v4637 = vmul.f32 %v4595, 1.442695
      %v4638 = vpow.pop %v4637
      %v4639 = vmul.f32 %v4596, 1.442695
      %v4640 = vpow.pop %v4639
      %v4641 = vmul.f32 %v4597, 1.442695
      %v4642 = vpow.pop %v4641
      %v4643 = vmul.f32 %v4598, 1.442695
      %v4644 = vpow.pop %v4643
      %v4645 = vmul.f32 %v4599, 1.442695
      %v4646 = vpow.pop %v4645
      %v4647 = vmul.f32 %v4600, 1.442695
      %v4648 = vpow.pop %v4647
      %v4649 = vmul.f32 %v4601, 1.442695
      %v4650 = vpow.pop %v4649
      %v4651 = vmul.f32 %v4602, 1.442695
      %v4652 = vpow.pop %v4651
      %v4653 = vmul.f32 %v4603, 1.442695
      %v4654 = vpow.pop %v4653
      %v4655 = vmul.f32 %v4604, 1.442695
      %v4656 = vpow.pop %v4655
      %v4657 = vmul.f32 %v4605, 1.442695
      %v4658 = vpow.pop %v4657
      %v4659 = vmul.f32 %v4606, 1.442695
      %v4660 = vpow.pop %v4659
      %v4661 = vmul.f32 %v4607, 1.442695
      %v4662 = vpow.pop %v4661
      %v4663 = vmul.f32 %v4608, 1.442695
      %v4664 = vpow.pop %v4663
      %v4665 = vmul.f32 %v4609, 1.442695
      %v4666 = vpow.pop %v4665
      %v4667 = vmul.f32 %v4610, 1.442695
      %v4668 = vpow.pop %v4667
      %v4669 = vmul.f32 %v4611, 1.442695
      %v4670 = vpow.pop %v4669
      %v4671 = vmul.f32 %v4612, 1.442695
      %v4672 = vpow.pop %v4671
      %v4673 = vmul.f32 %v4613, 1.442695
      %v4674 = vpow.pop %v4673
      %v4675 = vmul.f32 %v4614, 1.442695
      %v4676 = vpow.pop %v4675
      %v4677 = vmul.f32 %v4615, 1.442695
      %v4678 = vpow.pop %v4677
      %v4679 = vmul.f32 %v4616, 1.442695
      %v4680 = vpow.pop %v4679
      %v4681 = vmul.f32 %v4521, %v4618
      %v4682 = vmul.f32 %v4522, %v4620
      %v4683 = vmul.f32 %v4523, %v4622
      %v4684 = vmul.f32 %v4524, %v4624
      %v4685 = vmul.f32 %v4525, %v4626
      %v4686 = vmul.f32 %v4526, %v4628
      %v4687 = vmul.f32 %v4527, %v4630
      %v4688 = vmul.f32 %v4528, %v4632
      %v4689 = vmul.f32 %v4529, %v4634
      %v4690 = vmul.f32 %v4530, %v4636
      %v4691 = vmul.f32 %v4531, %v4638
      %v4692 = vmul.f32 %v4532, %v4640
      %v4693 = vmul.f32 %v4533, %v4642
      %v4694 = vmul.f32 %v4534, %v4644
      %v4695 = vmul.f32 %v4535, %v4646
      %v4696 = vmul.f32 %v4536, %v4648
      %v4697 = vmul.f32 %v4537, %v4650
      %v4698 = vmul.f32 %v4538, %v4652
      %v4699 = vmul.f32 %v4539, %v4654
      %v4700 = vmul.f32 %v4540, %v4656
      %v4701 = vmul.f32 %v4541, %v4658
      %v4702 = vmul.f32 %v4542, %v4660
      %v4703 = vmul.f32 %v4543, %v4662
      %v4704 = vmul.f32 %v4544, %v4664
      %v4705 = vmul.f32 %v4545, %v4666
      %v4706 = vmul.f32 %v4546, %v4668
      %v4707 = vmul.f32 %v4547, %v4670
      %v4708 = vmul.f32 %v4548, %v4672
      %v4709 = vmul.f32 %v4549, %v4674
      %v4710 = vmul.f32 %v4550, %v4676
      %v4711 = vmul.f32 %v4551, %v4678
      %v4712 = vmul.f32 %v4552, %v4680
      %v4713 = vsub.f32 1.0, %v4681
      %v4714 = vsub.f32 1.0, %v4682
      %v4715 = vsub.f32 1.0, %v4683
      %v4716 = vsub.f32 1.0, %v4684
      %v4717 = vsub.f32 1.0, %v4685
      %v4718 = vsub.f32 1.0, %v4686
      %v4719 = vsub.f32 1.0, %v4687
      %v4720 = vsub.f32 1.0, %v4688
      %v4721 = vsub.f32 1.0, %v4689
      %v4722 = vsub.f32 1.0, %v4690
      %v4723 = vsub.f32 1.0, %v4691
      %v4724 = vsub.f32 1.0, %v4692
      %v4725 = vsub.f32 1.0, %v4693
      %v4726 = vsub.f32 1.0, %v4694
      %v4727 = vsub.f32 1.0, %v4695
      %v4728 = vsub.f32 1.0, %v4696
      %v4729 = vsub.f32 1.0, %v4697
      %v4730 = vsub.f32 1.0, %v4698
      %v4731 = vsub.f32 1.0, %v4699
      %v4732 = vsub.f32 1.0, %v4700
      %v4733 = vsub.f32 1.0, %v4701
      %v4734 = vsub.f32 1.0, %v4702
      %v4735 = vsub.f32 1.0, %v4703
      %v4736 = vsub.f32 1.0, %v4704
      %v4737 = vsub.f32 1.0, %v4705
      %v4738 = vsub.f32 1.0, %v4706
      %v4739 = vsub.f32 1.0, %v4707
      %v4740 = vsub.f32 1.0, %v4708
      %v4741 = vsub.f32 1.0, %v4709
      %v4742 = vsub.f32 1.0, %v4710
      %v4743 = vsub.f32 1.0, %v4711
      %v4744 = vsub.f32 1.0, %v4712
      %v4745 = vmul.f32 %v4105, %v4713
      %v4746 = vmul.f32 %v4106, %v4714
      %v4747 = vmul.f32 %v4107, %v4715
      %v4748 = vmul.f32 %v4108, %v4716
      %v4749 = vmul.f32 %v4109, %v4717
      %v4750 = vmul.f32 %v4110, %v4718
      %v4751 = vmul.f32 %v4111, %v4719
      %v4752 = vmul.f32 %v4112, %v4720
      %v4753 = vmul.f32 %v4113, %v4721
      %v4754 = vmul.f32 %v4114, %v4722
      %v4755 = vmul.f32 %v4115, %v4723
      %v4756 = vmul.f32 %v4116, %v4724
      %v4757 = vmul.f32 %v4117, %v4725
      %v4758 = vmul.f32 %v4118, %v4726
      %v4759 = vmul.f32 %v4119, %v4727
      %v4760 = vmul.f32 %v4120, %v4728
      %v4761 = vmul.f32 %v4121, %v4729
      %v4762 = vmul.f32 %v4122, %v4730
      %v4763 = vmul.f32 %v4123, %v4731
      %v4764 = vmul.f32 %v4124, %v4732
      %v4765 = vmul.f32 %v4125, %v4733
      %v4766 = vmul.f32 %v4126, %v4734
      %v4767 = vmul.f32 %v4127, %v4735
      %v4768 = vmul.f32 %v4128, %v4736
      %v4769 = vmul.f32 %v4129, %v4737
      %v4770 = vmul.f32 %v4130, %v4738
      %v4771 = vmul.f32 %v4131, %v4739
      %v4772 = vmul.f32 %v4132, %v4740
      %v4773 = vmul.f32 %v4133, %v4741
      %v4774 = vmul.f32 %v4134, %v4742
      %v4775 = vmul.f32 %v4135, %v4743
      %v4776 = vmul.f32 %v4136, %v4744
      %v4777 = vadd.f32 %v4745, 1.0
      %v4778 = vadd.f32 %v4746, 1.0
      %v4779 = vadd.f32 %v4747, 1.0
      %v4780 = vadd.f32 %v4748, 1.0
      %v4781 = vadd.f32 %v4749, 1.0
      %v4782 = vadd.f32 %v4750, 1.0
      %v4783 = vadd.f32 %v4751, 1.0
      %v4784 = vadd.f32 %v4752, 1.0
      %v4785 = vadd.f32 %v4753, 1.0
      %v4786 = vadd.f32 %v4754, 1.0
      %v4787 = vadd.f32 %v4755, 1.0
      %v4788 = vadd.f32 %v4756, 1.0
      %v4789 = vadd.f32 %v4757, 1.0
      %v4790 = vadd.f32 %v4758, 1.0
      %v4791 = vadd.f32 %v4759, 1.0
      %v4792 = vadd.f32 %v4760, 1.0
      %v4793 = vadd.f32 %v4761, 1.0
      %v4794 = vadd.f32 %v4762, 1.0
      %v4795 = vadd.f32 %v4763, 1.0
      %v4796 = vadd.f32 %v4764, 1.0
      %v4797 = vadd.f32 %v4765, 1.0
      %v4798 = vadd.f32 %v4766, 1.0
      %v4799 = vadd.f32 %v4767, 1.0
      %v4800 = vadd.f32 %v4768, 1.0
      %v4801 = vadd.f32 %v4769, 1.0
      %v4802 = vadd.f32 %v4770, 1.0
      %v4803 = vadd.f32 %v4771, 1.0
      %v4804 = vadd.f32 %v4772, 1.0
      %v4805 = vadd.f32 %v4773, 1.0
      %v4806 = vadd.f32 %v4774, 1.0
      %v4807 = vadd.f32 %v4775, 1.0
      %v4808 = vadd.f32 %v4776, 1.0
      %v4809 = vmul.f32 %v4009, %v4777
      %v4810 = vmul.f32 %v4010, %v4778
      %v4811 = vmul.f32 %v4011, %v4779
      %v4812 = vmul.f32 %v4012, %v4780
      %v4813 = vmul.f32 %v4013, %v4781
      %v4814 = vmul.f32 %v4014, %v4782
      %v4815 = vmul.f32 %v4015, %v4783
      %v4816 = vmul.f32 %v4016, %v4784
      %v4817 = vmul.f32 %v4017, %v4785
      %v4818 = vmul.f32 %v4018, %v4786
      %v4819 = vmul.f32 %v4019, %v4787
      %v4820 = vmul.f32 %v4020, %v4788
      %v4821 = vmul.f32 %v4021, %v4789
      %v4822 = vmul.f32 %v4022, %v4790
      %v4823 = vmul.f32 %v4023, %v4791
      %v4824 = vmul.f32 %v4024, %v4792
      %v4825 = vmul.f32 %v4025, %v4793
      %v4826 = vmul.f32 %v4026, %v4794
      %v4827 = vmul.f32 %v4027, %v4795
      %v4828 = vmul.f32 %v4028, %v4796
      %v4829 = vmul.f32 %v4029, %v4797
      %v4830 = vmul.f32 %v4030, %v4798
      %v4831 = vmul.f32 %v4031, %v4799
      %v4832 = vmul.f32 %v4032, %v4800
      %v4833 = vmul.f32 %v4033, %v4801
      %v4834 = vmul.f32 %v4034, %v4802
      %v4835 = vmul.f32 %v4035, %v4803
      %v4836 = vmul.f32 %v4036, %v4804
      %v4837 = vmul.f32 %v4037, %v4805
      %v4838 = vmul.f32 %v4038, %v4806
      %v4839 = vmul.f32 %v4039, %v4807
      %v4840 = vmul.f32 %v4040, %v4808
      %v4841 = vld [vmem:[%s468] sm:$0xff]
      %v4842 = vld [vmem:[%s468 + $0x8] sm:$0xff]
      %v4843 = vld [vmem:[%s468 + $0x10] sm:$0xff]
      %v4844 = vld [vmem:[%s468 + $0x18] sm:$0xff]
      %v4845 = vld [vmem:[%s468 + $0x20] sm:$0xff]
      %v4846 = vld [vmem:[%s468 + $0x28] sm:$0xff]
      %v4847 = vld [vmem:[%s468 + $0x30] sm:$0xff]
      %v4848 = vld [vmem:[%s468 + $0x38] sm:$0xff]
      %v4849 = vld [vmem:[%s468 + $0x40] sm:$0xff]
      %v4850 = vld [vmem:[%s468 + $0x48] sm:$0xff]
      %v4851 = vld [vmem:[%s468 + $0x50] sm:$0xff]
      %v4852 = vld [vmem:[%s468 + $0x58] sm:$0xff]
      %v4853 = vld [vmem:[%s468 + $0x60] sm:$0xff]
      %v4854 = vld [vmem:[%s468 + $0x68] sm:$0xff]
      %v4855 = vld [vmem:[%s468 + $0x70] sm:$0xff]
      %v4856 = vld [vmem:[%s468 + $0x78] sm:$0xff]
      %v4857 = vld [vmem:[%s468 + $0x80] sm:$0xff]
      %v4858 = vld [vmem:[%s468 + $0x88] sm:$0xff]
      %v4859 = vld [vmem:[%s468 + $0x90] sm:$0xff]
      %v4860 = vld [vmem:[%s468 + $0x98] sm:$0xff]
      %v4861 = vld [vmem:[%s468 + $0xa0] sm:$0xff]
      %v4862 = vld [vmem:[%s468 + $0xa8] sm:$0xff]
      %v4863 = vld [vmem:[%s468 + $0xb0] sm:$0xff]
      %v4864 = vld [vmem:[%s468 + $0xb8] sm:$0xff]
      %v4865 = vld [vmem:[%s468 + $0xc0] sm:$0xff]
      %v4866 = vld [vmem:[%s468 + $0xc8] sm:$0xff]
      %v4867 = vld [vmem:[%s468 + $0xd0] sm:$0xff]
      %v4868 = vld [vmem:[%s468 + $0xd8] sm:$0xff]
      %v4869 = vld [vmem:[%s468 + $0xe0] sm:$0xff]
      %v4870 = vld [vmem:[%s468 + $0xe8] sm:$0xff]
      %v4871 = vld [vmem:[%s468 + $0xf0] sm:$0xff]
      %v4872 = vld [vmem:[%s468 + $0xf8] sm:$0xff]
      %v4873 = vld [vmem:[%s468 + $0x100] sm:$0xff]
      %v4874 = vld [vmem:[%s468 + $0x108] sm:$0xff]
      %v4875 = vld [vmem:[%s468 + $0x110] sm:$0xff]
      %v4876 = vld [vmem:[%s468 + $0x118] sm:$0xff]
      %v4877 = vld [vmem:[%s468 + $0x120] sm:$0xff]
      %v4878 = vld [vmem:[%s468 + $0x128] sm:$0xff]
      %v4879 = vld [vmem:[%s468 + $0x130] sm:$0xff]
      %v4880 = vld [vmem:[%s468 + $0x138] sm:$0xff]
      %v4881 = vld [vmem:[%s468 + $0x140] sm:$0xff]
      %v4882 = vld [vmem:[%s468 + $0x148] sm:$0xff]
      %v4883 = vld [vmem:[%s468 + $0x150] sm:$0xff]
      %v4884 = vld [vmem:[%s468 + $0x158] sm:$0xff]
      %v4885 = vld [vmem:[%s468 + $0x160] sm:$0xff]
      %v4886 = vld [vmem:[%s468 + $0x168] sm:$0xff]
      %v4887 = vld [vmem:[%s468 + $0x170] sm:$0xff]
      %v4888 = vld [vmem:[%s468 + $0x178] sm:$0xff]
      %v4889 = vld [vmem:[%s468 + $0x180] sm:$0xff]
      %v4890 = vld [vmem:[%s468 + $0x188] sm:$0xff]
      %v4891 = vld [vmem:[%s468 + $0x190] sm:$0xff]
      %v4892 = vld [vmem:[%s468 + $0x198] sm:$0xff]
      %v4893 = vld [vmem:[%s468 + $0x1a0] sm:$0xff]
      %v4894 = vld [vmem:[%s468 + $0x1a8] sm:$0xff]
      %v4895 = vld [vmem:[%s468 + $0x1b0] sm:$0xff]
      %v4896 = vld [vmem:[%s468 + $0x1b8] sm:$0xff]
      %v4897 = vld [vmem:[%s468 + $0x1c0] sm:$0xff]
      %v4898 = vld [vmem:[%s468 + $0x1c8] sm:$0xff]
      %v4899 = vld [vmem:[%s468 + $0x1d0] sm:$0xff]
      %v4900 = vld [vmem:[%s468 + $0x1d8] sm:$0xff]
      %v4901 = vld [vmem:[%s468 + $0x1e0] sm:$0xff]
      %v4902 = vld [vmem:[%s468 + $0x1e8] sm:$0xff]
      %v4903 = vld [vmem:[%s468 + $0x1f0] sm:$0xff]
      %v4904 = vld [vmem:[%s468 + $0x1f8] sm:$0xff]
      %v4905 = vld [vmem:[%s468 + $0x200] sm:$0xff]
      %v4906 = vld [vmem:[%s468 + $0x208] sm:$0xff]
      %v4907 = vld [vmem:[%s468 + $0x210] sm:$0xff]
      %v4908 = vld [vmem:[%s468 + $0x218] sm:$0xff]
      %v4909 = vld [vmem:[%s468 + $0x220] sm:$0xff]
      %v4910 = vld [vmem:[%s468 + $0x228] sm:$0xff]
      %v4911 = vld [vmem:[%s468 + $0x230] sm:$0xff]
      %v4912 = vld [vmem:[%s468 + $0x238] sm:$0xff]
      %v4913 = vld [vmem:[%s468 + $0x240] sm:$0xff]
      %v4914 = vld [vmem:[%s468 + $0x248] sm:$0xff]
      %v4915 = vld [vmem:[%s468 + $0x250] sm:$0xff]
      %v4916 = vld [vmem:[%s468 + $0x258] sm:$0xff]
      %v4917 = vld [vmem:[%s468 + $0x260] sm:$0xff]
      %v4918 = vld [vmem:[%s468 + $0x268] sm:$0xff]
      %v4919 = vld [vmem:[%s468 + $0x270] sm:$0xff]
      %v4920 = vld [vmem:[%s468 + $0x278] sm:$0xff]
      %v4921 = vld [vmem:[%s468 + $0x280] sm:$0xff]
      %v4922 = vld [vmem:[%s468 + $0x288] sm:$0xff]
      %v4923 = vld [vmem:[%s468 + $0x290] sm:$0xff]
      %v4924 = vld [vmem:[%s468 + $0x298] sm:$0xff]
      %v4925 = vld [vmem:[%s468 + $0x2a0] sm:$0xff]
      %v4926 = vld [vmem:[%s468 + $0x2a8] sm:$0xff]
      %v4927 = vld [vmem:[%s468 + $0x2b0] sm:$0xff]
      %v4928 = vld [vmem:[%s468 + $0x2b8] sm:$0xff]
      %v4929 = vld [vmem:[%s468 + $0x2c0] sm:$0xff]
      %v4930 = vld [vmem:[%s468 + $0x2c8] sm:$0xff]
      %v4931 = vld [vmem:[%s468 + $0x2d0] sm:$0xff]
      %v4932 = vld [vmem:[%s468 + $0x2d8] sm:$0xff]
      %v4933 = vld [vmem:[%s468 + $0x2e0] sm:$0xff]
      %v4934 = vld [vmem:[%s468 + $0x2e8] sm:$0xff]
      %v4935 = vld [vmem:[%s468 + $0x2f0] sm:$0xff]
      %v4936 = vld [vmem:[%s468 + $0x2f8] sm:$0xff]
      %v4937 = vld [vmem:[%s468 + $0x300] sm:$0xff]
      %v4938 = vld [vmem:[%s468 + $0x308] sm:$0xff]
      %v4939 = vld [vmem:[%s468 + $0x310] sm:$0xff]
      %v4940 = vld [vmem:[%s468 + $0x318] sm:$0xff]
      %v4941 = vld [vmem:[%s468 + $0x320] sm:$0xff]
      %v4942 = vld [vmem:[%s468 + $0x328] sm:$0xff]
      %v4943 = vld [vmem:[%s468 + $0x330] sm:$0xff]
      %v4944 = vld [vmem:[%s468 + $0x338] sm:$0xff]
      %v4945 = vld [vmem:[%s468 + $0x340] sm:$0xff]
      %v4946 = vld [vmem:[%s468 + $0x348] sm:$0xff]
      %v4947 = vld [vmem:[%s468 + $0x350] sm:$0xff]
      %v4948 = vld [vmem:[%s468 + $0x358] sm:$0xff]
      %v4949 = vld [vmem:[%s468 + $0x360] sm:$0xff]
      %v4950 = vld [vmem:[%s468 + $0x368] sm:$0xff]
      %v4951 = vld [vmem:[%s468 + $0x370] sm:$0xff]
      %v4952 = vld [vmem:[%s468 + $0x378] sm:$0xff]
      %v4953 = vld [vmem:[%s468 + $0x380] sm:$0xff]
      %v4954 = vld [vmem:[%s468 + $0x388] sm:$0xff]
      %v4955 = vld [vmem:[%s468 + $0x390] sm:$0xff]
      %v4956 = vld [vmem:[%s468 + $0x398] sm:$0xff]
      %v4957 = vld [vmem:[%s468 + $0x3a0] sm:$0xff]
      %v4958 = vld [vmem:[%s468 + $0x3a8] sm:$0xff]
      %v4959 = vld [vmem:[%s468 + $0x3b0] sm:$0xff]
      %v4960 = vld [vmem:[%s468 + $0x3b8] sm:$0xff]
      %v4961 = vld [vmem:[%s468 + $0x3c0] sm:$0xff]
      %v4962 = vld [vmem:[%s468 + $0x3c8] sm:$0xff]
      %v4963 = vld [vmem:[%s468 + $0x3d0] sm:$0xff]
      %v4964 = vld [vmem:[%s468 + $0x3d8] sm:$0xff]
      %v4965 = vld [vmem:[%s468 + $0x3e0] sm:$0xff]
      %v4966 = vld [vmem:[%s468 + $0x3e8] sm:$0xff]
      %v4967 = vld [vmem:[%s468 + $0x3f0] sm:$0xff]
      %v4968 = vld [vmem:[%s468 + $0x3f8] sm:$0xff]
      %v4969 = vpack.c.bf16 %v4817, %v4809
      %v4970 = vpack.c.bf16 %v4818, %v4810
      %v4971 = vpack.c.bf16 %v4819, %v4811
      %v4972 = vpack.c.bf16 %v4820, %v4812
      %v4973 = vpack.c.bf16 %v4821, %v4813
      %v4974 = vpack.c.bf16 %v4822, %v4814
      %v4975 = vpack.c.bf16 %v4823, %v4815
      %v4976 = vpack.c.bf16 %v4824, %v4816
      %v4977 = vpack.c.bf16 %v4833, %v4825
      %v4978 = vpack.c.bf16 %v4834, %v4826
      %v4979 = vpack.c.bf16 %v4835, %v4827
      %v4980 = vpack.c.bf16 %v4836, %v4828
      %v4981 = vpack.c.bf16 %v4837, %v4829
      %v4982 = vpack.c.bf16 %v4838, %v4830
      %v4983 = vpack.c.bf16 %v4839, %v4831
      %v4984 = vpack.c.bf16 %v4840, %v4832
      %v4985 = vlaneseq
      %v4986 = vshrl.u32 %v4985, 7
      %v4987 = vsub.s32 0, %v4986
      %v4988 = vrot.slane %v1294, %v4987
      %v4989 = vlaneseq
      %v4990 = vshrl.u32 %v4989, 7
      %v4991 = vsub.s32 0, %v4990
      %v4992 = vrot.slane %v1295, %v4991
      %v5121 = vunpack.c.l.b16 %v4841
      %v5122 = vunpack.c.h.b16 %v4841
      %v5123 = vunpack.c.l.b16 %v4842
      %v5124 = vunpack.c.h.b16 %v4842
      %v5125 = vunpack.c.l.b16 %v4843
      %v5126 = vunpack.c.h.b16 %v4843
      %v5127 = vunpack.c.l.b16 %v4844
      %v5128 = vunpack.c.h.b16 %v4844
      %v5129 = vunpack.c.l.b16 %v4845
      %v5130 = vunpack.c.h.b16 %v4845
      %v5131 = vunpack.c.l.b16 %v4846
      %v5132 = vunpack.c.h.b16 %v4846
      %v5133 = vunpack.c.l.b16 %v4847
      %v5134 = vunpack.c.h.b16 %v4847
      %v5135 = vunpack.c.l.b16 %v4848
      %v5136 = vunpack.c.h.b16 %v4848
      %v5137 = vunpack.c.l.b16 %v4849
      %v5138 = vunpack.c.h.b16 %v4849
      %v5139 = vunpack.c.l.b16 %v4850
      %v5140 = vunpack.c.h.b16 %v4850
      %v5141 = vunpack.c.l.b16 %v4851
      %v5142 = vunpack.c.h.b16 %v4851
      %v5143 = vunpack.c.l.b16 %v4852
      %v5144 = vunpack.c.h.b16 %v4852
      %v5145 = vunpack.c.l.b16 %v4853
      %v5146 = vunpack.c.h.b16 %v4853
      %v5147 = vunpack.c.l.b16 %v4854
      %v5148 = vunpack.c.h.b16 %v4854
      %v5149 = vunpack.c.l.b16 %v4855
      %v5150 = vunpack.c.h.b16 %v4855
      %v5151 = vunpack.c.l.b16 %v4856
      %v5152 = vunpack.c.h.b16 %v4856
      %v5153 = vunpack.c.l.b16 %v4857
      %v5154 = vunpack.c.h.b16 %v4857
      %v5155 = vunpack.c.l.b16 %v4858
      %v5156 = vunpack.c.h.b16 %v4858
      %v5157 = vunpack.c.l.b16 %v4859
      %v5158 = vunpack.c.h.b16 %v4859
      %v5159 = vunpack.c.l.b16 %v4860
      %v5160 = vunpack.c.h.b16 %v4860
      %v5161 = vunpack.c.l.b16 %v4861
      %v5162 = vunpack.c.h.b16 %v4861
      %v5163 = vunpack.c.l.b16 %v4862
      %v5164 = vunpack.c.h.b16 %v4862
      %v5165 = vunpack.c.l.b16 %v4863
      %v5166 = vunpack.c.h.b16 %v4863
      %v5167 = vunpack.c.l.b16 %v4864
      %v5168 = vunpack.c.h.b16 %v4864
      %v5169 = vunpack.c.l.b16 %v4865
      %v5170 = vunpack.c.h.b16 %v4865
      %v5171 = vunpack.c.l.b16 %v4866
      %v5172 = vunpack.c.h.b16 %v4866
      %v5173 = vunpack.c.l.b16 %v4867
      %v5174 = vunpack.c.h.b16 %v4867
      %v5175 = vunpack.c.l.b16 %v4868
      %v5176 = vunpack.c.h.b16 %v4868
      %v5177 = vunpack.c.l.b16 %v4869
      %v5178 = vunpack.c.h.b16 %v4869
      %v5179 = vunpack.c.l.b16 %v4870
      %v5180 = vunpack.c.h.b16 %v4870
      %v5181 = vunpack.c.l.b16 %v4871
      %v5182 = vunpack.c.h.b16 %v4871
      %v5183 = vunpack.c.l.b16 %v4872
      %v5184 = vunpack.c.h.b16 %v4872
      %v5185 = vunpack.c.l.b16 %v4873
      %v5186 = vunpack.c.h.b16 %v4873
      %v5187 = vunpack.c.l.b16 %v4874
      %v5188 = vunpack.c.h.b16 %v4874
      %v5189 = vunpack.c.l.b16 %v4875
      %v5190 = vunpack.c.h.b16 %v4875
      %v5191 = vunpack.c.l.b16 %v4876
      %v5192 = vunpack.c.h.b16 %v4876
      %v5193 = vunpack.c.l.b16 %v4877
      %v5194 = vunpack.c.h.b16 %v4877
      %v5195 = vunpack.c.l.b16 %v4878
      %v5196 = vunpack.c.h.b16 %v4878
      %v5197 = vunpack.c.l.b16 %v4879
      %v5198 = vunpack.c.h.b16 %v4879
      %v5199 = vunpack.c.l.b16 %v4880
      %v5200 = vunpack.c.h.b16 %v4880
      %v5201 = vunpack.c.l.b16 %v4881
      %v5202 = vunpack.c.h.b16 %v4881
      %v5203 = vunpack.c.l.b16 %v4882
      %v5204 = vunpack.c.h.b16 %v4882
      %v5205 = vunpack.c.l.b16 %v4883
      %v5206 = vunpack.c.h.b16 %v4883
      %v5207 = vunpack.c.l.b16 %v4884
      %v5208 = vunpack.c.h.b16 %v4884
      %v5209 = vunpack.c.l.b16 %v4885
      %v5210 = vunpack.c.h.b16 %v4885
      %v5211 = vunpack.c.l.b16 %v4886
      %v5212 = vunpack.c.h.b16 %v4886
      %v5213 = vunpack.c.l.b16 %v4887
      %v5214 = vunpack.c.h.b16 %v4887
      %v5215 = vunpack.c.l.b16 %v4888
      %v5216 = vunpack.c.h.b16 %v4888
      %v5217 = vunpack.c.l.b16 %v4889
      %v5218 = vunpack.c.h.b16 %v4889
      %v5219 = vunpack.c.l.b16 %v4890
      %v5220 = vunpack.c.h.b16 %v4890
      %v5221 = vunpack.c.l.b16 %v4891
      %v5222 = vunpack.c.h.b16 %v4891
      %v5223 = vunpack.c.l.b16 %v4892
      %v5224 = vunpack.c.h.b16 %v4892
      %v5225 = vunpack.c.l.b16 %v4893
      %v5226 = vunpack.c.h.b16 %v4893
      %v5227 = vunpack.c.l.b16 %v4894
      %v5228 = vunpack.c.h.b16 %v4894
      %v5229 = vunpack.c.l.b16 %v4895
      %v5230 = vunpack.c.h.b16 %v4895
      %v5231 = vunpack.c.l.b16 %v4896
      %v5232 = vunpack.c.h.b16 %v4896
      %v5233 = vunpack.c.l.b16 %v4897
      %v5234 = vunpack.c.h.b16 %v4897
      %v5235 = vunpack.c.l.b16 %v4898
      %v5236 = vunpack.c.h.b16 %v4898
      %v5237 = vunpack.c.l.b16 %v4899
      %v5238 = vunpack.c.h.b16 %v4899
      %v5239 = vunpack.c.l.b16 %v4900
      %v5240 = vunpack.c.h.b16 %v4900
      %v5241 = vunpack.c.l.b16 %v4901
      %v5242 = vunpack.c.h.b16 %v4901
      %v5243 = vunpack.c.l.b16 %v4902
      %v5244 = vunpack.c.h.b16 %v4902
      %v5245 = vunpack.c.l.b16 %v4903
      %v5246 = vunpack.c.h.b16 %v4903
      %v5247 = vunpack.c.l.b16 %v4904
      %v5248 = vunpack.c.h.b16 %v4904
      %v5249 = vunpack.c.l.b16 %v4905
      %v5250 = vunpack.c.h.b16 %v4905
      %v5251 = vunpack.c.l.b16 %v4906
      %v5252 = vunpack.c.h.b16 %v4906
      %v5253 = vunpack.c.l.b16 %v4907
      %v5254 = vunpack.c.h.b16 %v4907
      %v5255 = vunpack.c.l.b16 %v4908
      %v5256 = vunpack.c.h.b16 %v4908
      %v5257 = vunpack.c.l.b16 %v4909
      %v5258 = vunpack.c.h.b16 %v4909
      %v5259 = vunpack.c.l.b16 %v4910
      %v5260 = vunpack.c.h.b16 %v4910
      %v5261 = vunpack.c.l.b16 %v4911
      %v5262 = vunpack.c.h.b16 %v4911
      %v5263 = vunpack.c.l.b16 %v4912
      %v5264 = vunpack.c.h.b16 %v4912
      %v5265 = vunpack.c.l.b16 %v4913
      %v5266 = vunpack.c.h.b16 %v4913
      %v5267 = vunpack.c.l.b16 %v4914
      %v5268 = vunpack.c.h.b16 %v4914
      %v5269 = vunpack.c.l.b16 %v4915
      %v5270 = vunpack.c.h.b16 %v4915
      %v5271 = vunpack.c.l.b16 %v4916
      %v5272 = vunpack.c.h.b16 %v4916
      %v5273 = vunpack.c.l.b16 %v4917
      %v5274 = vunpack.c.h.b16 %v4917
      %v5275 = vunpack.c.l.b16 %v4918
      %v5276 = vunpack.c.h.b16 %v4918
      %v5277 = vunpack.c.l.b16 %v4919
      %v5278 = vunpack.c.h.b16 %v4919
      %v5279 = vunpack.c.l.b16 %v4920
      %v5280 = vunpack.c.h.b16 %v4920
      %v5281 = vunpack.c.l.b16 %v4921
      %v5282 = vunpack.c.h.b16 %v4921
      %v5283 = vunpack.c.l.b16 %v4922
      %v5284 = vunpack.c.h.b16 %v4922
      %v5285 = vunpack.c.l.b16 %v4923
      %v5286 = vunpack.c.h.b16 %v4923
      %v5287 = vunpack.c.l.b16 %v4924
      %v5288 = vunpack.c.h.b16 %v4924
      %v5289 = vunpack.c.l.b16 %v4925
      %v5290 = vunpack.c.h.b16 %v4925
      %v5291 = vunpack.c.l.b16 %v4926
      %v5292 = vunpack.c.h.b16 %v4926
      %v5293 = vunpack.c.l.b16 %v4927
      %v5294 = vunpack.c.h.b16 %v4927
      %v5295 = vunpack.c.l.b16 %v4928
      %v5296 = vunpack.c.h.b16 %v4928
      %v5297 = vunpack.c.l.b16 %v4929
      %v5298 = vunpack.c.h.b16 %v4929
      %v5299 = vunpack.c.l.b16 %v4930
      %v5300 = vunpack.c.h.b16 %v4930
      %v5301 = vunpack.c.l.b16 %v4931
      %v5302 = vunpack.c.h.b16 %v4931
      %v5303 = vunpack.c.l.b16 %v4932
      %v5304 = vunpack.c.h.b16 %v4932
      %v5305 = vunpack.c.l.b16 %v4933
      %v5306 = vunpack.c.h.b16 %v4933
      %v5307 = vunpack.c.l.b16 %v4934
      %v5308 = vunpack.c.h.b16 %v4934
      %v5309 = vunpack.c.l.b16 %v4935
      %v5310 = vunpack.c.h.b16 %v4935
      %v5311 = vunpack.c.l.b16 %v4936
      %v5312 = vunpack.c.h.b16 %v4936
      %v5313 = vunpack.c.l.b16 %v4937
      %v5314 = vunpack.c.h.b16 %v4937
      %v5315 = vunpack.c.l.b16 %v4938
      %v5316 = vunpack.c.h.b16 %v4938
      %v5317 = vunpack.c.l.b16 %v4939
      %v5318 = vunpack.c.h.b16 %v4939
      %v5319 = vunpack.c.l.b16 %v4940
      %v5320 = vunpack.c.h.b16 %v4940
      %v5321 = vunpack.c.l.b16 %v4941
      %v5322 = vunpack.c.h.b16 %v4941
      %v5323 = vunpack.c.l.b16 %v4942
      %v5324 = vunpack.c.h.b16 %v4942
      %v5325 = vunpack.c.l.b16 %v4943
      %v5326 = vunpack.c.h.b16 %v4943
      %v5327 = vunpack.c.l.b16 %v4944
      %v5328 = vunpack.c.h.b16 %v4944
      %v5329 = vunpack.c.l.b16 %v4945
      %v5330 = vunpack.c.h.b16 %v4945
      %v5331 = vunpack.c.l.b16 %v4946
      %v5332 = vunpack.c.h.b16 %v4946
      %v5333 = vunpack.c.l.b16 %v4947
      %v5334 = vunpack.c.h.b16 %v4947
      %v5335 = vunpack.c.l.b16 %v4948
      %v5336 = vunpack.c.h.b16 %v4948
      %v5337 = vunpack.c.l.b16 %v4949
      %v5338 = vunpack.c.h.b16 %v4949
      %v5339 = vunpack.c.l.b16 %v4950
      %v5340 = vunpack.c.h.b16 %v4950
      %v5341 = vunpack.c.l.b16 %v4951
      %v5342 = vunpack.c.h.b16 %v4951
      %v5343 = vunpack.c.l.b16 %v4952
      %v5344 = vunpack.c.h.b16 %v4952
      %v5345 = vunpack.c.l.b16 %v4953
      %v5346 = vunpack.c.h.b16 %v4953
      %v5347 = vunpack.c.l.b16 %v4954
      %v5348 = vunpack.c.h.b16 %v4954
      %v5349 = vunpack.c.l.b16 %v4955
      %v5350 = vunpack.c.h.b16 %v4955
      %v5351 = vunpack.c.l.b16 %v4956
      %v5352 = vunpack.c.h.b16 %v4956
      %v5353 = vunpack.c.l.b16 %v4957
      %v5354 = vunpack.c.h.b16 %v4957
      %v5355 = vunpack.c.l.b16 %v4958
      %v5356 = vunpack.c.h.b16 %v4958
      %v5357 = vunpack.c.l.b16 %v4959
      %v5358 = vunpack.c.h.b16 %v4959
      %v5359 = vunpack.c.l.b16 %v4960
      %v5360 = vunpack.c.h.b16 %v4960
      %v5361 = vunpack.c.l.b16 %v4961
      %v5362 = vunpack.c.h.b16 %v4961
      %v5363 = vunpack.c.l.b16 %v4962
      %v5364 = vunpack.c.h.b16 %v4962
      %v5365 = vunpack.c.l.b16 %v4963
      %v5366 = vunpack.c.h.b16 %v4963
      %v5367 = vunpack.c.l.b16 %v4964
      %v5368 = vunpack.c.h.b16 %v4964
      %v5369 = vunpack.c.l.b16 %v4965
      %v5370 = vunpack.c.h.b16 %v4965
      %v5371 = vunpack.c.l.b16 %v4966
      %v5372 = vunpack.c.h.b16 %v4966
      %v5373 = vunpack.c.l.b16 %v4967
      %v5374 = vunpack.c.h.b16 %v4967
      %v5375 = vunpack.c.l.b16 %v4968
      %v5376 = vunpack.c.h.b16 %v4968
      %v5377 = vpack.c.b16 %v5123, %v5121
      %v5378 = vpack.c.b16 %v5124, %v5122
      %v5379 = vpack.c.b16 %v5127, %v5125
      %v5380 = vpack.c.b16 %v5128, %v5126
      %v5381 = vpack.c.b16 %v5131, %v5129
      %v5382 = vpack.c.b16 %v5132, %v5130
      %v5383 = vpack.c.b16 %v5135, %v5133
      %v5384 = vpack.c.b16 %v5136, %v5134
      %v5385 = vpack.c.b16 %v5139, %v5137
      %v5386 = vpack.c.b16 %v5140, %v5138
      %v5387 = vpack.c.b16 %v5143, %v5141
      %v5388 = vpack.c.b16 %v5144, %v5142
      %v5389 = vpack.c.b16 %v5147, %v5145
      %v5390 = vpack.c.b16 %v5148, %v5146
      %v5391 = vpack.c.b16 %v5151, %v5149
      %v5392 = vpack.c.b16 %v5152, %v5150
      %v5393 = vpack.c.b16 %v5155, %v5153
      %v5394 = vpack.c.b16 %v5156, %v5154
      %v5395 = vpack.c.b16 %v5159, %v5157
      %v5396 = vpack.c.b16 %v5160, %v5158
      %v5397 = vpack.c.b16 %v5163, %v5161
      %v5398 = vpack.c.b16 %v5164, %v5162
      %v5399 = vpack.c.b16 %v5167, %v5165
      %v5400 = vpack.c.b16 %v5168, %v5166
      %v5401 = vpack.c.b16 %v5171, %v5169
      %v5402 = vpack.c.b16 %v5172, %v5170
      %v5403 = vpack.c.b16 %v5175, %v5173
      %v5404 = vpack.c.b16 %v5176, %v5174
      %v5405 = vpack.c.b16 %v5179, %v5177
      %v5406 = vpack.c.b16 %v5180, %v5178
      %v5407 = vpack.c.b16 %v5183, %v5181
      %v5408 = vpack.c.b16 %v5184, %v5182
      %v5409 = vpack.c.b16 %v5187, %v5185
      %v5410 = vpack.c.b16 %v5188, %v5186
      %v5411 = vpack.c.b16 %v5191, %v5189
      %v5412 = vpack.c.b16 %v5192, %v5190
      %v5413 = vpack.c.b16 %v5195, %v5193
      %v5414 = vpack.c.b16 %v5196, %v5194
      %v5415 = vpack.c.b16 %v5199, %v5197
      %v5416 = vpack.c.b16 %v5200, %v5198
      %v5417 = vpack.c.b16 %v5203, %v5201
      %v5418 = vpack.c.b16 %v5204, %v5202
      %v5419 = vpack.c.b16 %v5207, %v5205
      %v5420 = vpack.c.b16 %v5208, %v5206
      %v5421 = vpack.c.b16 %v5211, %v5209
      %v5422 = vpack.c.b16 %v5212, %v5210
      %v5423 = vpack.c.b16 %v5215, %v5213
      %v5424 = vpack.c.b16 %v5216, %v5214
      %v5425 = vpack.c.b16 %v5219, %v5217
      %v5426 = vpack.c.b16 %v5220, %v5218
      %v5427 = vpack.c.b16 %v5223, %v5221
      %v5428 = vpack.c.b16 %v5224, %v5222
      %v5429 = vpack.c.b16 %v5227, %v5225
      %v5430 = vpack.c.b16 %v5228, %v5226
      %v5431 = vpack.c.b16 %v5231, %v5229
      %v5432 = vpack.c.b16 %v5232, %v5230
      %v5433 = vpack.c.b16 %v5235, %v5233
      %v5434 = vpack.c.b16 %v5236, %v5234
      %v5435 = vpack.c.b16 %v5239, %v5237
      %v5436 = vpack.c.b16 %v5240, %v5238
      %v5437 = vpack.c.b16 %v5243, %v5241
      %v5438 = vpack.c.b16 %v5244, %v5242
      %v5439 = vpack.c.b16 %v5247, %v5245
      %v5440 = vpack.c.b16 %v5248, %v5246
      %v5441 = vpack.c.b16 %v5251, %v5249
      %v5442 = vpack.c.b16 %v5252, %v5250
      %v5443 = vpack.c.b16 %v5255, %v5253
      %v5444 = vpack.c.b16 %v5256, %v5254
      %v5445 = vpack.c.b16 %v5259, %v5257
      %v5446 = vpack.c.b16 %v5260, %v5258
      %v5447 = vpack.c.b16 %v5263, %v5261
      %v5448 = vpack.c.b16 %v5264, %v5262
      %v5449 = vpack.c.b16 %v5267, %v5265
      %v5450 = vpack.c.b16 %v5268, %v5266
      %v5451 = vpack.c.b16 %v5271, %v5269
      %v5452 = vpack.c.b16 %v5272, %v5270
      %v5453 = vpack.c.b16 %v5275, %v5273
      %v5454 = vpack.c.b16 %v5276, %v5274
      %v5455 = vpack.c.b16 %v5279, %v5277
      %v5456 = vpack.c.b16 %v5280, %v5278
      %v5457 = vpack.c.b16 %v5283, %v5281
      %v5458 = vpack.c.b16 %v5284, %v5282
      %v5459 = vpack.c.b16 %v5287, %v5285
      %v5460 = vpack.c.b16 %v5288, %v5286
      %v5461 = vpack.c.b16 %v5291, %v5289
      %v5462 = vpack.c.b16 %v5292, %v5290
      %v5463 = vpack.c.b16 %v5295, %v5293
      %v5464 = vpack.c.b16 %v5296, %v5294
      %v5465 = vpack.c.b16 %v5299, %v5297
      %v5466 = vpack.c.b16 %v5300, %v5298
      %v5467 = vpack.c.b16 %v5303, %v5301
      %v5468 = vpack.c.b16 %v5304, %v5302
      %v5469 = vpack.c.b16 %v5307, %v5305
      %v5470 = vpack.c.b16 %v5308, %v5306
      %v5471 = vpack.c.b16 %v5311, %v5309
      %v5472 = vpack.c.b16 %v5312, %v5310
      %v5473 = vpack.c.b16 %v5315, %v5313
      %v5474 = vpack.c.b16 %v5316, %v5314
      %v5475 = vpack.c.b16 %v5319, %v5317
      %v5476 = vpack.c.b16 %v5320, %v5318
      %v5477 = vpack.c.b16 %v5323, %v5321
      %v5478 = vpack.c.b16 %v5324, %v5322
      %v5479 = vpack.c.b16 %v5327, %v5325
      %v5480 = vpack.c.b16 %v5328, %v5326
      %v5481 = vpack.c.b16 %v5331, %v5329
      %v5482 = vpack.c.b16 %v5332, %v5330
      %v5483 = vpack.c.b16 %v5335, %v5333
      %v5484 = vpack.c.b16 %v5336, %v5334
      %v5485 = vpack.c.b16 %v5339, %v5337
      %v5486 = vpack.c.b16 %v5340, %v5338
      %v5487 = vpack.c.b16 %v5343, %v5341
      %v5488 = vpack.c.b16 %v5344, %v5342
      %v5489 = vpack.c.b16 %v5347, %v5345
      %v5490 = vpack.c.b16 %v5348, %v5346
      %v5491 = vpack.c.b16 %v5351, %v5349
      %v5492 = vpack.c.b16 %v5352, %v5350
      %v5493 = vpack.c.b16 %v5355, %v5353
      %v5494 = vpack.c.b16 %v5356, %v5354
      %v5495 = vpack.c.b16 %v5359, %v5357
      %v5496 = vpack.c.b16 %v5360, %v5358
      %v5497 = vpack.c.b16 %v5363, %v5361
      %v5498 = vpack.c.b16 %v5364, %v5362
      %v5499 = vpack.c.b16 %v5367, %v5365
      %v5500 = vpack.c.b16 %v5368, %v5366
      %v5501 = vpack.c.b16 %v5371, %v5369
      %v5502 = vpack.c.b16 %v5372, %v5370
      %v5503 = vpack.c.b16 %v5375, %v5373
      %v5504 = vpack.c.b16 %v5376, %v5374
      %5633 = vmatprep.subr.bf16.mxu0 %v5378
      %5634 = vmatpush1.bf16.msra.mxu0 %v5377
      %5635 = vmatprep.subr.bf16.mxu0 %v5380
      %5636 = vmatpush1.bf16.msra.mxu0 %v5379
      %5637 = vmatprep.subr.bf16.mxu0 %v5382
      %5638 = vmatpush1.bf16.msra.mxu0 %v5381
      %5639 = vmatprep.subr.bf16.mxu0 %v5384
      %5640 = vmatpush1.bf16.msra.mxu0 %v5383
      %5641 = vmatprep.subr.bf16.mxu0 %v5386
      %5642 = vmatpush1.bf16.msra.mxu0 %v5385
      %5643 = vmatprep.subr.bf16.mxu0 %v5388
      %5644 = vmatpush1.bf16.msra.mxu0 %v5387
      %5645 = vmatprep.subr.bf16.mxu0 %v5390
      %5646 = vmatpush1.bf16.msra.mxu0 %v5389
      %5647 = vmatprep.subr.bf16.mxu0 %v5392
      %5648 = vmatpush1.bf16.msra.mxu0 %v5391
      %5649 = vmatprep.subr.bf16.mxu0 %v5394
      %5650 = vmatpush1.bf16.msra.mxu0 %v5393
      %5651 = vmatprep.subr.bf16.mxu0 %v5396
      %5652 = vmatpush1.bf16.msra.mxu0 %v5395
      %5653 = vmatprep.subr.bf16.mxu0 %v5398
      %5654 = vmatpush1.bf16.msra.mxu0 %v5397
      %5655 = vmatprep.subr.bf16.mxu0 %v5400
      %5656 = vmatpush1.bf16.msra.mxu0 %v5399
      %5657 = vmatprep.subr.bf16.mxu0 %v5402
      %5658 = vmatpush1.bf16.msra.mxu0 %v5401
      %5659 = vmatprep.subr.bf16.mxu0 %v5404
      %5660 = vmatpush1.bf16.msra.mxu0 %v5403
      %5661 = vmatprep.subr.bf16.mxu0 %v5406
      %5662 = vmatpush1.bf16.msra.mxu0 %v5405
      %5663 = vmatprep.subr.bf16.mxu0 %v5408
      %5664 = vmatpush1.bf16.msra.mxu0 %v5407
      %5665 = vmatprep.mubr.bf16.mxu0 %v4970
      %5666 = vmatmul.mubr.bf16.gmra.mrb[0].mxu0 %v4969
      %v5667 = vpop.f32.mrb[0].mxu0
      %v5668 = vadd.f32 %v4988, %v5667
      %v5669 = vpop.f32.mrb[0].mxu0
      %v5670 = vadd.f32 %v4992, %v5669
      %v5671 = vpop.f32.mrb[0].mxu0
      %v5672 = vadd.f32 %v4988, %v5671
      %v5673 = vpop.f32.mrb[0].mxu0
      %v5674 = vadd.f32 %v4992, %v5673
      %5675 = vmatprep.mubr.bf16.mxu0 %v4978
      %5676 = vmatmul.mubr.bf16.gmra.mrb[0].mxu0 %v4977
      %v5677 = vpop.f32.mrb[0].mxu0
      %v5678 = vadd.f32 %v4988, %v5677
      %v5679 = vpop.f32.mrb[0].mxu0
      %v5680 = vadd.f32 %v4992, %v5679
      %v5681 = vpop.f32.mrb[0].mxu0
      %v5682 = vadd.f32 %v4988, %v5681
      %v5683 = vpop.f32.mrb[0].mxu0
      %v5684 = vadd.f32 %v4992, %v5683
      %5685 = vdwg.mxu0
      %5686 = vmatprep.subr.bf16.mxu0 %v5410
      %5687 = vmatpush1.bf16.msra.mxu0 %v5409
      %5688 = vmatprep.subr.bf16.mxu0 %v5412
      %5689 = vmatpush1.bf16.msra.mxu0 %v5411
      %5690 = vmatprep.subr.bf16.mxu0 %v5414
      %5691 = vmatpush1.bf16.msra.mxu0 %v5413
      %5692 = vmatprep.subr.bf16.mxu0 %v5416
      %5693 = vmatpush1.bf16.msra.mxu0 %v5415
      %5694 = vmatprep.subr.bf16.mxu0 %v5418
      %5695 = vmatpush1.bf16.msra.mxu0 %v5417
      %5696 = vmatprep.subr.bf16.mxu0 %v5420
      %5697 = vmatpush1.bf16.msra.mxu0 %v5419
      %5698 = vmatprep.subr.bf16.mxu0 %v5422
      %5699 = vmatpush1.bf16.msra.mxu0 %v5421
      %5700 = vmatprep.subr.bf16.mxu0 %v5424
      %5701 = vmatpush1.bf16.msra.mxu0 %v5423
      %5702 = vmatprep.subr.bf16.mxu0 %v5426
      %5703 = vmatpush1.bf16.msra.mxu0 %v5425
      %5704 = vmatprep.subr.bf16.mxu0 %v5428
      %5705 = vmatpush1.bf16.msra.mxu0 %v5427
      %5706 = vmatprep.subr.bf16.mxu0 %v5430
      %5707 = vmatpush1.bf16.msra.mxu0 %v5429
      %5708 = vmatprep.subr.bf16.mxu0 %v5432
      %5709 = vmatpush1.bf16.msra.mxu0 %v5431
      %5710 = vmatprep.subr.bf16.mxu0 %v5434
      %5711 = vmatpush1.bf16.msra.mxu0 %v5433
      %5712 = vmatprep.subr.bf16.mxu0 %v5436
      %5713 = vmatpush1.bf16.msra.mxu0 %v5435
      %5714 = vmatprep.subr.bf16.mxu0 %v5438
      %5715 = vmatpush1.bf16.msra.mxu0 %v5437
      %5716 = vmatprep.subr.bf16.mxu0 %v5440
      %5717 = vmatpush1.bf16.msra.mxu0 %v5439
      %5718 = vmatprep.mubr.bf16.mxu0 %v4972
      %5719 = vmatmul.mubr.bf16.gmra.mrb[0].mxu0 %v4971
      %v5720 = vpop.f32.mrb[0].mxu0
      %v5721 = vadd.f32 %v5668, %v5720
      %v5722 = vpop.f32.mrb[0].mxu0
      %v5723 = vadd.f32 %v5670, %v5722
      %v5724 = vpop.f32.mrb[0].mxu0
      %v5725 = vadd.f32 %v5672, %v5724
      %v5726 = vpop.f32.mrb[0].mxu0
      %v5727 = vadd.f32 %v5674, %v5726
      %5728 = vmatprep.mubr.bf16.mxu0 %v4980
      %5729 = vmatmul.mubr.bf16.gmra.mrb[0].mxu0 %v4979
      %v5730 = vpop.f32.mrb[0].mxu0
      %v5731 = vadd.f32 %v5678, %v5730
      %v5732 = vpop.f32.mrb[0].mxu0
      %v5733 = vadd.f32 %v5680, %v5732
      %v5734 = vpop.f32.mrb[0].mxu0
      %v5735 = vadd.f32 %v5682, %v5734
      %v5736 = vpop.f32.mrb[0].mxu0
      %v5737 = vadd.f32 %v5684, %v5736
      %5738 = vdwg.mxu0
      %5739 = vmatprep.subr.bf16.mxu0 %v5442
      %5740 = vmatpush1.bf16.msra.mxu0 %v5441
      %5741 = vmatprep.subr.bf16.mxu0 %v5444
      %5742 = vmatpush1.bf16.msra.mxu0 %v5443
      %5743 = vmatprep.subr.bf16.mxu0 %v5446
      %5744 = vmatpush1.bf16.msra.mxu0 %v5445
      %5745 = vmatprep.subr.bf16.mxu0 %v5448
      %5746 = vmatpush1.bf16.msra.mxu0 %v5447
      %5747 = vmatprep.subr.bf16.mxu0 %v5450
      %5748 = vmatpush1.bf16.msra.mxu0 %v5449
      %5749 = vmatprep.subr.bf16.mxu0 %v5452
      %5750 = vmatpush1.bf16.msra.mxu0 %v5451
      %5751 = vmatprep.subr.bf16.mxu0 %v5454
      %5752 = vmatpush1.bf16.msra.mxu0 %v5453
      %5753 = vmatprep.subr.bf16.mxu0 %v5456
      %5754 = vmatpush1.bf16.msra.mxu0 %v5455
      %5755 = vmatprep.subr.bf16.mxu0 %v5458
      %5756 = vmatpush1.bf16.msra.mxu0 %v5457
      %5757 = vmatprep.subr.bf16.mxu0 %v5460
      %5758 = vmatpush1.bf16.msra.mxu0 %v5459
      %5759 = vmatprep.subr.bf16.mxu0 %v5462
      %5760 = vmatpush1.bf16.msra.mxu0 %v5461
      %5761 = vmatprep.subr.bf16.mxu0 %v5464
      %5762 = vmatpush1.bf16.msra.mxu0 %v5463
      %5763 = vmatprep.subr.bf16.mxu0 %v5466
      %5764 = vmatpush1.bf16.msra.mxu0 %v5465
      %5765 = vmatprep.subr.bf16.mxu0 %v5468
      %5766 = vmatpush1.bf16.msra.mxu0 %v5467
      %5767 = vmatprep.subr.bf16.mxu0 %v5470
      %5768 = vmatpush1.bf16.msra.mxu0 %v5469
      %5769 = vmatprep.subr.bf16.mxu0 %v5472
      %5770 = vmatpush1.bf16.msra.mxu0 %v5471
      %5771 = vmatprep.mubr.bf16.mxu0 %v4974
      %5772 = vmatmul.mubr.bf16.gmra.mrb[0].mxu0 %v4973
      %v5773 = vpop.f32.mrb[0].mxu0
      %v5774 = vadd.f32 %v5721, %v5773
      %v5775 = vpop.f32.mrb[0].mxu0
      %v5776 = vadd.f32 %v5723, %v5775
      %v5777 = vpop.f32.mrb[0].mxu0
      %v5778 = vadd.f32 %v5725, %v5777
      %v5779 = vpop.f32.mrb[0].mxu0
      %v5780 = vadd.f32 %v5727, %v5779
      %5781 = vmatprep.mubr.bf16.mxu0 %v4982
      %5782 = vmatmul.mubr.bf16.gmra.mrb[0].mxu0 %v4981
      %v5783 = vpop.f32.mrb[0].mxu0
      %v5784 = vadd.f32 %v5731, %v5783
      %v5785 = vpop.f32.mrb[0].mxu0
      %v5786 = vadd.f32 %v5733, %v5785
      %v5787 = vpop.f32.mrb[0].mxu0
      %v5788 = vadd.f32 %v5735, %v5787
      %v5789 = vpop.f32.mrb[0].mxu0
      %v5790 = vadd.f32 %v5737, %v5789
      %5791 = vdwg.mxu0
      %5792 = vmatprep.subr.bf16.mxu0 %v5474
      %5793 = vmatpush1.bf16.msra.mxu0 %v5473
      %5794 = vmatprep.subr.bf16.mxu0 %v5476
      %5795 = vmatpush1.bf16.msra.mxu0 %v5475
      %5796 = vmatprep.subr.bf16.mxu0 %v5478
      %5797 = vmatpush1.bf16.msra.mxu0 %v5477
      %5798 = vmatprep.subr.bf16.mxu0 %v5480
      %5799 = vmatpush1.bf16.msra.mxu0 %v5479
      %5800 = vmatprep.subr.bf16.mxu0 %v5482
      %5801 = vmatpush1.bf16.msra.mxu0 %v5481
      %5802 = vmatprep.subr.bf16.mxu0 %v5484
      %5803 = vmatpush1.bf16.msra.mxu0 %v5483
      %5804 = vmatprep.subr.bf16.mxu0 %v5486
      %5805 = vmatpush1.bf16.msra.mxu0 %v5485
      %5806 = vmatprep.subr.bf16.mxu0 %v5488
      %5807 = vmatpush1.bf16.msra.mxu0 %v5487
      %5808 = vmatprep.subr.bf16.mxu0 %v5490
      %5809 = vmatpush1.bf16.msra.mxu0 %v5489
      %5810 = vmatprep.subr.bf16.mxu0 %v5492
      %5811 = vmatpush1.bf16.msra.mxu0 %v5491
      %5812 = vmatprep.subr.bf16.mxu0 %v5494
      %5813 = vmatpush1.bf16.msra.mxu0 %v5493
      %5814 = vmatprep.subr.bf16.mxu0 %v5496
      %5815 = vmatpush1.bf16.msra.mxu0 %v5495
      %5816 = vmatprep.subr.bf16.mxu0 %v5498
      %5817 = vmatpush1.bf16.msra.mxu0 %v5497
      %5818 = vmatprep.subr.bf16.mxu0 %v5500
      %5819 = vmatpush1.bf16.msra.mxu0 %v5499
      %5820 = vmatprep.subr.bf16.mxu0 %v5502
      %5821 = vmatpush1.bf16.msra.mxu0 %v5501
      %5822 = vmatprep.subr.bf16.mxu0 %v5504
      %5823 = vmatpush1.bf16.msra.mxu0 %v5503
      %5824 = vmatprep.mubr.bf16.mxu0 %v4976
      %5825 = vmatmul.mubr.bf16.gmra.mrb[0].mxu0 %v4975
      %v5826 = vpop.f32.mrb[0].mxu0
      %v5827 = vadd.f32 %v5774, %v5826
      %v5828 = vpop.f32.mrb[0].mxu0
      %v5829 = vadd.f32 %v5776, %v5828
      %v5830 = vpop.f32.mrb[0].mxu0
      %v5831 = vadd.f32 %v5778, %v5830
      %v5832 = vpop.f32.mrb[0].mxu0
      %v5833 = vadd.f32 %v5780, %v5832
      %5834 = vmatprep.mubr.bf16.mxu0 %v4984
      %5835 = vmatmul.mubr.bf16.gmra.mrb[0].mxu0 %v4983
      %v5836 = vpop.f32.mrb[0].mxu0
      %v5837 = vadd.f32 %v5784, %v5836
      %v5838 = vpop.f32.mrb[0].mxu0
      %v5839 = vadd.f32 %v5786, %v5838
      %v5840 = vpop.f32.mrb[0].mxu0
      %v5841 = vadd.f32 %v5788, %v5840
      %v5842 = vpop.f32.mrb[0].mxu0
      %v5843 = vadd.f32 %v5790, %v5842
      %5844 = vdwg.mxu0
      %v5845 = vadd.f32 %v2879, %v5827
      %v5846 = vadd.f32 %v2880, %v5829
      %v5847 = vadd.f32 %v2881, %v5831
      %v5848 = vadd.f32 %v2882, %v5833
      %v5849 = vadd.f32 %v2883, %v5837
      %v5850 = vadd.f32 %v2884, %v5839
      %v5851 = vadd.f32 %v2885, %v5841
      %v5852 = vadd.f32 %v2886, %v5843
      %5853 = vst [vmem:[#allocation2] sm:$0xff] %v5845
      %5854 = vst [vmem:[#allocation2 + $0x8] sm:$0xff] %v5846
      %5855 = vst [vmem:[#allocation2 + $0x10] sm:$0xff] %v5847
      %5856 = vst [vmem:[#allocation2 + $0x18] sm:$0xff] %v5848
      %5857 = vst [vmem:[#allocation2 + $0x20] sm:$0xff] %v5849
      %5858 = vst [vmem:[#allocation2 + $0x28] sm:$0xff] %v5850
      %5859 = vst [vmem:[#allocation2 + $0x30] sm:$0xff] %v5851
      %5860 = vst [vmem:[#allocation2 + $0x38] sm:$0xff] %v5852
      %p5861 = scmp.eq.s32.totalorder %s22, 3
      // Predicated region
      $region69: #{_lambda_.1} parent=63 // pred_check
        %p5862 = pneg %p5861
      $region70: #{_lambda_.1} parent=63 // pred_check_branch
        %5864 = sbr.rel (%p5862) target = $region72
      $region71: #{_lambda_.1} parent=63 // pred_region
        %v5865 = vld [vmem:[%s2] sm:$0xff]
        %v5866 = vld [vmem:[%s2 + $0x8] sm:$0xff]
        %v5867 = vld [vmem:[%s4] sm:$0xff]
        %v5868 = vld [vmem:[%s4 + $0x8] sm:$0xff]
        %v5869 = vld [vmem:[%s4 + $0x10] sm:$0xff]
        %v5870 = vld [vmem:[%s4 + $0x18] sm:$0xff]
        %v5871 = vld [vmem:[%s4 + $0x20] sm:$0xff]
        %v5872 = vld [vmem:[%s4 + $0x28] sm:$0xff]
        %v5873 = vld [vmem:[%s4 + $0x30] sm:$0xff]
        %v5874 = vld [vmem:[%s4 + $0x38] sm:$0xff]
        %v5875 = vld [vmem:[%s4 + $0x40] sm:$0xff]
        %v5876 = vld [vmem:[%s4 + $0x48] sm:$0xff]
        %v5877 = vld [vmem:[%s4 + $0x50] sm:$0xff]
        %v5878 = vld [vmem:[%s4 + $0x58] sm:$0xff]
        %v5879 = vld [vmem:[%s4 + $0x60] sm:$0xff]
        %v5880 = vld [vmem:[%s4 + $0x68] sm:$0xff]
        %v5881 = vld [vmem:[%s4 + $0x70] sm:$0xff]
        %v5882 = vld [vmem:[%s4 + $0x78] sm:$0xff]
        %v5883 = vld [vmem:[%s4 + $0x80] sm:$0xff]
        %v5884 = vld [vmem:[%s4 + $0x88] sm:$0xff]
        %v5885 = vld [vmem:[%s4 + $0x90] sm:$0xff]
        %v5886 = vld [vmem:[%s4 + $0x98] sm:$0xff]
        %v5887 = vld [vmem:[%s4 + $0xa0] sm:$0xff]
        %v5888 = vld [vmem:[%s4 + $0xa8] sm:$0xff]
        %v5889 = vld [vmem:[%s4 + $0xb0] sm:$0xff]
        %v5890 = vld [vmem:[%s4 + $0xb8] sm:$0xff]
        %v5891 = vld [vmem:[%s4 + $0xc0] sm:$0xff]
        %v5892 = vld [vmem:[%s4 + $0xc8] sm:$0xff]
        %v5893 = vld [vmem:[%s4 + $0xd0] sm:$0xff]
        %v5894 = vld [vmem:[%s4 + $0xd8] sm:$0xff]
        %v5895 = vld [vmem:[%s4 + $0xe0] sm:$0xff]
        %v5896 = vld [vmem:[%s4 + $0xe8] sm:$0xff]
        %v5897 = vld [vmem:[%s4 + $0xf0] sm:$0xff]
        %v5898 = vld [vmem:[%s4 + $0xf8] sm:$0xff]
        %v5899 = vld [vmem:[%s4 + $0x100] sm:$0xff]
        %v5900 = vld [vmem:[%s4 + $0x108] sm:$0xff]
        %v5901 = vld [vmem:[%s4 + $0x110] sm:$0xff]
        %v5902 = vld [vmem:[%s4 + $0x118] sm:$0xff]
        %v5903 = vld [vmem:[%s4 + $0x120] sm:$0xff]
        %v5904 = vld [vmem:[%s4 + $0x128] sm:$0xff]
        %v5905 = vld [vmem:[%s4 + $0x130] sm:$0xff]
        %v5906 = vld [vmem:[%s4 + $0x138] sm:$0xff]
        %v5907 = vld [vmem:[%s4 + $0x140] sm:$0xff]
        %v5908 = vld [vmem:[%s4 + $0x148] sm:$0xff]
        %v5909 = vld [vmem:[%s4 + $0x150] sm:$0xff]
        %v5910 = vld [vmem:[%s4 + $0x158] sm:$0xff]
        %v5911 = vld [vmem:[%s4 + $0x160] sm:$0xff]
        %v5912 = vld [vmem:[%s4 + $0x168] sm:$0xff]
        %v5913 = vld [vmem:[%s4 + $0x170] sm:$0xff]
        %v5914 = vld [vmem:[%s4 + $0x178] sm:$0xff]
        %v5915 = vld [vmem:[%s4 + $0x180] sm:$0xff]
        %v5916 = vld [vmem:[%s4 + $0x188] sm:$0xff]
        %v5917 = vld [vmem:[%s4 + $0x190] sm:$0xff]
        %v5918 = vld [vmem:[%s4 + $0x198] sm:$0xff]
        %v5919 = vld [vmem:[%s4 + $0x1a0] sm:$0xff]
        %v5920 = vld [vmem:[%s4 + $0x1a8] sm:$0xff]
        %v5921 = vld [vmem:[%s4 + $0x1b0] sm:$0xff]
        %v5922 = vld [vmem:[%s4 + $0x1b8] sm:$0xff]
        %v5923 = vld [vmem:[%s4 + $0x1c0] sm:$0xff]
        %v5924 = vld [vmem:[%s4 + $0x1c8] sm:$0xff]
        %v5925 = vld [vmem:[%s4 + $0x1d0] sm:$0xff]
        %v5926 = vld [vmem:[%s4 + $0x1d8] sm:$0xff]
        %v5927 = vld [vmem:[%s4 + $0x1e0] sm:$0xff]
        %v5928 = vld [vmem:[%s4 + $0x1e8] sm:$0xff]
        %v5929 = vld [vmem:[%s4 + $0x1f0] sm:$0xff]
        %v5930 = vld [vmem:[%s4 + $0x1f8] sm:$0xff]
        %v5933 = vrot.slane %v5865, 3
        %v5934 = vrot.slane %v5866, 3
        %5937 = vmatprep.subr.mxu0 %v5846
        %5938 = vmatpush1.xpose.msra.mxu0 %v5845
        %5939 = vmatprep.subr.mxu0 %v5848
        %5940 = vmatpush1.xpose.msra.mxu0 %v5847
        %5941 = vmatprep.subr.mxu0 0.0
        %5942 = vmatpush1.xpose.msra.mxu0 0.0
        %5943 = vmatprep.subr.mxu0 0.0
        %5944 = vmatpush1.xpose.msra.mxu0 0.0
        %5945 = vmatprep.subr.mxu0 0.0
        %5946 = vmatpush1.xpose.msra.mxu0 0.0
        %5947 = vmatprep.subr.mxu0 0.0
        %5948 = vmatpush1.xpose.msra.mxu0 0.0
        %5949 = vmatprep.subr.mxu0 0.0
        %5950 = vmatpush1.xpose.msra.mxu0 0.0
        %5951 = vmatprep.subr.mxu0 0.0
        %5952 = vmatpush1.xpose.msra.mxu0 0.0
        %5953 = vmatprep.subr.mxu0 0.0
        %5954 = vmatpush1.xpose.msra.mxu0 0.0
        %5955 = vmatprep.subr.mxu0 0.0
        %5956 = vmatpush1.xpose.msra.mxu0 0.0
        %5957 = vmatprep.subr.mxu0 0.0
        %5958 = vmatpush1.xpose.msra.mxu0 0.0
        %5959 = vmatprep.subr.mxu0 0.0
        %5960 = vmatpush1.xpose.msra.mxu0 0.0
        %5961 = vmatprep.subr.mxu0 0.0
        %5962 = vmatpush1.xpose.msra.mxu0 0.0
        %5963 = vmatprep.subr.mxu0 0.0
        %5964 = vmatpush1.xpose.msra.mxu0 0.0
        %5965 = vmatprep.subr.mxu0 0.0
        %5966 = vmatpush1.xpose.msra.mxu0 0.0
        %5967 = vmatprep.subr.mxu0 0.0
        %5968 = vmatpush1.xpose.msra.mxu0 0.0
        %5969 = vmatprep.subr.mxu0 0.0
        %5970 = vmatpush1.xpose.msra.mxu0 0.0
        %5971 = vmatprep.subr.mxu0 0.0
        %5972 = vmatpush1.xpose.msra.mxu0 0.0
        %5973 = vmatprep.subr.mxu0 0.0
        %5974 = vmatpush1.xpose.msra.mxu0 0.0
        %5975 = vmatprep.subr.mxu0 0.0
        %5976 = vmatpush1.xpose.msra.mxu0 0.0
        %5977 = vmatprep.subr.mxu0 0.0
        %5978 = vmatpush1.xpose.msra.mxu0 0.0
        %5979 = vmatprep.subr.mxu0 0.0
        %5980 = vmatpush1.xpose.msra.mxu0 0.0
        %5981 = vmatprep.subr.mxu0 0.0
        %5982 = vmatpush1.xpose.msra.mxu0 0.0
        %5983 = vmatprep.subr.mxu0 0.0
        %5984 = vmatpush1.xpose.msra.mxu0 0.0
        %5985 = vmatprep.subr.mxu0 0.0
        %5986 = vmatpush1.xpose.msra.mxu0 0.0
        %5987 = vmatprep.subr.mxu0 0.0
        %5988 = vmatpush1.xpose.msra.mxu0 0.0
        %5989 = vmatprep.subr.mxu0 0.0
        %5990 = vmatpush1.xpose.msra.mxu0 0.0
        %5991 = vmatprep.subr.mxu0 0.0
        %5992 = vmatpush1.xpose.msra.mxu0 0.0
        %5993 = vmatprep.subr.mxu0 0.0
        %5994 = vmatpush1.xpose.msra.mxu0 0.0
        %5995 = vmatprep.subr.mxu0 0.0
        %5996 = vmatpush1.xpose.msra.mxu0 0.0
        %5997 = vmatprep.subr.mxu0 0.0
        %5998 = vmatpush1.xpose.msra.mxu0 0.0
        %5999 = vmatprep.subr.mxu0 0.0
        %6000 = vmatpush1.xpose.msra.mxu0 0.0
        %6001 = vmatprep.mubr.f32.mxu0 %v5934
        %6002 = vmatmul.mubr.f32.gmra.mrb[0].mxu0 %v5933
        %v6003 = vpop.f32.mrb[0].mxu0
        %v6004 = vadd.f32 0.0, %v6003
        %v6005 = vpop.f32.mrb[0].mxu0
        %6006 = vdwg.mxu0
        %6007 = vset.pattern.permute.xlu0 0
        %6008 = vperm.xlu0 %6007, %v5865
        %v6009 = vpop.permute.xlu0 %6008
        %v6010 = vrot.slane %v6009, 4
        %vm6012 = vcmask 130048
        %v6014 = vsel %vm6012, %v6004, 0
        %6016 = vmatprep.subr.mxu0 %v5868
        %6017 = vmatpush1.msra.mxu0 %v5867
        %6018 = vmatprep.subr.mxu0 %v5900
        %6019 = vmatpush1.msra.mxu0 %v5899
        %6020 = vmatprep.subr.mxu0 0.0
        %6021 = vmatpush1.msra.mxu0 0.0
        %6022 = vmatprep.subr.mxu0 0.0
        %6023 = vmatpush1.msra.mxu0 0.0
        %6024 = vmatprep.subr.mxu0 0.0
        %6025 = vmatpush1.msra.mxu0 0.0
        %6026 = vmatprep.subr.mxu0 0.0
        %6027 = vmatpush1.msra.mxu0 0.0
        %6028 = vmatprep.subr.mxu0 0.0
        %6029 = vmatpush1.msra.mxu0 0.0
        %6030 = vmatprep.subr.mxu0 0.0
        %6031 = vmatpush1.msra.mxu0 0.0
        %6032 = vmatprep.subr.mxu0 0.0
        %6033 = vmatpush1.msra.mxu0 0.0
        %6034 = vmatprep.subr.mxu0 0.0
        %6035 = vmatpush1.msra.mxu0 0.0
        %6036 = vmatprep.subr.mxu0 0.0
        %6037 = vmatpush1.msra.mxu0 0.0
        %6038 = vmatprep.subr.mxu0 0.0
        %6039 = vmatpush1.msra.mxu0 0.0
        %6040 = vmatprep.subr.mxu0 0.0
        %6041 = vmatpush1.msra.mxu0 0.0
        %6042 = vmatprep.subr.mxu0 0.0
        %6043 = vmatpush1.msra.mxu0 0.0
        %6044 = vmatprep.subr.mxu0 0.0
        %6045 = vmatpush1.msra.mxu0 0.0
        %6046 = vmatprep.subr.mxu0 0.0
        %6047 = vmatpush1.msra.mxu0 0.0
        %6048 = vmatprep.subr.mxu0 0.0
        %6049 = vmatpush1.msra.mxu0 0.0
        %6050 = vmatprep.subr.mxu0 0.0
        %6051 = vmatpush1.msra.mxu0 0.0
        %6052 = vmatprep.subr.mxu0 0.0
        %6053 = vmatpush1.msra.mxu0 0.0
        %6054 = vmatprep.subr.mxu0 0.0
        %6055 = vmatpush1.msra.mxu0 0.0
        %6056 = vmatprep.subr.mxu0 0.0
        %6057 = vmatpush1.msra.mxu0 0.0
        %6058 = vmatprep.subr.mxu0 0.0
        %6059 = vmatpush1.msra.mxu0 0.0
        %6060 = vmatprep.subr.mxu0 0.0
        %6061 = vmatpush1.msra.mxu0 0.0
        %6062 = vmatprep.subr.mxu0 0.0
        %6063 = vmatpush1.msra.mxu0 0.0
        %6064 = vmatprep.subr.mxu0 0.0
        %6065 = vmatpush1.msra.mxu0 0.0
        %6066 = vmatprep.subr.mxu0 0.0
        %6067 = vmatpush1.msra.mxu0 0.0
        %6068 = vmatprep.subr.mxu0 0.0
        %6069 = vmatpush1.msra.mxu0 0.0
        %6070 = vmatprep.subr.mxu0 0.0
        %6071 = vmatpush1.msra.mxu0 0.0
        %6072 = vmatprep.subr.mxu0 0.0
        %6073 = vmatpush1.msra.mxu0 0.0
        %6074 = vmatprep.subr.mxu0 0.0
        %6075 = vmatpush1.msra.mxu0 0.0
        %6076 = vmatprep.subr.mxu0 0.0
        %6077 = vmatpush1.msra.mxu0 0.0
        %6078 = vmatprep.subr.mxu0 0.0
        %6079 = vmatpush1.msra.mxu0 0.0
        %6080 = vmatprep.mubr.f32.mxu0 0.0
        %6081 = vmatmul.mubr.f32.gmra.mrb[0].mxu0 %v6014
        %v6082 = vpop.f32.mrb[0].mxu0
        %v6083 = vadd.f32 %v6010, %v6082
        %v6084 = vpop.f32.mrb[0].mxu0
        %v6085 = vadd.f32 %v6010, %v6084
        %6086 = vdwg.mxu0
        %6087 = vmatprep.subr.mxu0 %v5870
        %6088 = vmatpush1.msra.mxu0 %v5869
        %6089 = vmatprep.subr.mxu0 %v5902
        %6090 = vmatpush1.msra.mxu0 %v5901
        %6091 = vmatprep.subr.mxu0 0.0
        %6092 = vmatpush1.msra.mxu0 0.0
        %6093 = vmatprep.subr.mxu0 0.0
        %6094 = vmatpush1.msra.mxu0 0.0
        %6095 = vmatprep.subr.mxu0 0.0
        %6096 = vmatpush1.msra.mxu0 0.0
        %6097 = vmatprep.subr.mxu0 0.0
        %6098 = vmatpush1.msra.mxu0 0.0
        %6099 = vmatprep.subr.mxu0 0.0
        %6100 = vmatpush1.msra.mxu0 0.0
        %6101 = vmatprep.subr.mxu0 0.0
        %6102 = vmatpush1.msra.mxu0 0.0
        %6103 = vmatprep.subr.mxu0 0.0
        %6104 = vmatpush1.msra.mxu0 0.0
        %6105 = vmatprep.subr.mxu0 0.0
        %6106 = vmatpush1.msra.mxu0 0.0
        %6107 = vmatprep.subr.mxu0 0.0
        %6108 = vmatpush1.msra.mxu0 0.0
        %6109 = vmatprep.subr.mxu0 0.0
        %6110 = vmatpush1.msra.mxu0 0.0
        %6111 = vmatprep.subr.mxu0 0.0
        %6112 = vmatpush1.msra.mxu0 0.0
        %6113 = vmatprep.subr.mxu0 0.0
        %6114 = vmatpush1.msra.mxu0 0.0
        %6115 = vmatprep.subr.mxu0 0.0
        %6116 = vmatpush1.msra.mxu0 0.0
        %6117 = vmatprep.subr.mxu0 0.0
        %6118 = vmatpush1.msra.mxu0 0.0
        %6119 = vmatprep.subr.mxu0 0.0
        %6120 = vmatpush1.msra.mxu0 0.0
        %6121 = vmatprep.subr.mxu0 0.0
        %6122 = vmatpush1.msra.mxu0 0.0
        %6123 = vmatprep.subr.mxu0 0.0
        %6124 = vmatpush1.msra.mxu0 0.0
        %6125 = vmatprep.subr.mxu0 0.0
        %6126 = vmatpush1.msra.mxu0 0.0
        %6127 = vmatprep.subr.mxu0 0.0
        %6128 = vmatpush1.msra.mxu0 0.0
        %6129 = vmatprep.subr.mxu0 0.0
        %6130 = vmatpush1.msra.mxu0 0.0
        %6131 = vmatprep.subr.mxu0 0.0
        %6132 = vmatpush1.msra.mxu0 0.0
        %6133 = vmatprep.subr.mxu0 0.0
        %6134 = vmatpush1.msra.mxu0 0.0
        %6135 = vmatprep.subr.mxu0 0.0
        %6136 = vmatpush1.msra.mxu0 0.0
        %6137 = vmatprep.subr.mxu0 0.0
        %6138 = vmatpush1.msra.mxu0 0.0
        %6139 = vmatprep.subr.mxu0 0.0
        %6140 = vmatpush1.msra.mxu0 0.0
        %6141 = vmatprep.subr.mxu0 0.0
        %6142 = vmatpush1.msra.mxu0 0.0
        %6143 = vmatprep.subr.mxu0 0.0
        %6144 = vmatpush1.msra.mxu0 0.0
        %6145 = vmatprep.subr.mxu0 0.0
        %6146 = vmatpush1.msra.mxu0 0.0
        %6147 = vmatprep.subr.mxu0 0.0
        %6148 = vmatpush1.msra.mxu0 0.0
        %6149 = vmatprep.subr.mxu0 0.0
        %6150 = vmatpush1.msra.mxu0 0.0
        %6151 = vmatprep.mubr.f32.mxu0 0.0
        %6152 = vmatmul.mubr.f32.gmra.mrb[0].mxu0 %v6014
        %v6153 = vpop.f32.mrb[0].mxu0
        %v6154 = vadd.f32 %v6010, %v6153
        %v6155 = vpop.f32.mrb[0].mxu0
        %v6156 = vadd.f32 %v6010, %v6155
        %6157 = vdwg.mxu0
        %6158 = vmatprep.subr.mxu0 %v5872
        %6159 = vmatpush1.msra.mxu0 %v5871
        %6160 = vmatprep.subr.mxu0 %v5904
        %6161 = vmatpush1.msra.mxu0 %v5903
        %6162 = vmatprep.subr.mxu0 0.0
        %6163 = vmatpush1.msra.mxu0 0.0
        %6164 = vmatprep.subr.mxu0 0.0
        %6165 = vmatpush1.msra.mxu0 0.0
        %6166 = vmatprep.subr.mxu0 0.0
        %6167 = vmatpush1.msra.mxu0 0.0
        %6168 = vmatprep.subr.mxu0 0.0
        %6169 = vmatpush1.msra.mxu0 0.0
        %6170 = vmatprep.subr.mxu0 0.0
        %6171 = vmatpush1.msra.mxu0 0.0
        %6172 = vmatprep.subr.mxu0 0.0
        %6173 = vmatpush1.msra.mxu0 0.0
        %6174 = vmatprep.subr.mxu0 0.0
        %6175 = vmatpush1.msra.mxu0 0.0
        %6176 = vmatprep.subr.mxu0 0.0
        %6177 = vmatpush1.msra.mxu0 0.0
        %6178 = vmatprep.subr.mxu0 0.0
        %6179 = vmatpush1.msra.mxu0 0.0
        %6180 = vmatprep.subr.mxu0 0.0
        %6181 = vmatpush1.msra.mxu0 0.0
        %6182 = vmatprep.subr.mxu0 0.0
        %6183 = vmatpush1.msra.mxu0 0.0
        %6184 = vmatprep.subr.mxu0 0.0
        %6185 = vmatpush1.msra.mxu0 0.0
        %6186 = vmatprep.subr.mxu0 0.0
        %6187 = vmatpush1.msra.mxu0 0.0
        %6188 = vmatprep.subr.mxu0 0.0
        %6189 = vmatpush1.msra.mxu0 0.0
        %6190 = vmatprep.subr.mxu0 0.0
        %6191 = vmatpush1.msra.mxu0 0.0
        %6192 = vmatprep.subr.mxu0 0.0
        %6193 = vmatpush1.msra.mxu0 0.0
        %6194 = vmatprep.subr.mxu0 0.0
        %6195 = vmatpush1.msra.mxu0 0.0
        %6196 = vmatprep.subr.mxu0 0.0
        %6197 = vmatpush1.msra.mxu0 0.0
        %6198 = vmatprep.subr.mxu0 0.0
        %6199 = vmatpush1.msra.mxu0 0.0
        %6200 = vmatprep.subr.mxu0 0.0
        %6201 = vmatpush1.msra.mxu0 0.0
        %6202 = vmatprep.subr.mxu0 0.0
        %6203 = vmatpush1.msra.mxu0 0.0
        %6204 = vmatprep.subr.mxu0 0.0
        %6205 = vmatpush1.msra.mxu0 0.0
        %6206 = vmatprep.subr.mxu0 0.0
        %6207 = vmatpush1.msra.mxu0 0.0
        %6208 = vmatprep.subr.mxu0 0.0
        %6209 = vmatpush1.msra.mxu0 0.0
        %6210 = vmatprep.subr.mxu0 0.0
        %6211 = vmatpush1.msra.mxu0 0.0
        %6212 = vmatprep.subr.mxu0 0.0
        %6213 = vmatpush1.msra.mxu0 0.0
        %6214 = vmatprep.subr.mxu0 0.0
        %6215 = vmatpush1.msra.mxu0 0.0
        %6216 = vmatprep.subr.mxu0 0.0
        %6217 = vmatpush1.msra.mxu0 0.0
        %6218 = vmatprep.subr.mxu0 0.0
        %6219 = vmatpush1.msra.mxu0 0.0
        %6220 = vmatprep.subr.mxu0 0.0
        %6221 = vmatpush1.msra.mxu0 0.0
        %6222 = vmatprep.mubr.f32.mxu0 0.0
        %6223 = vmatmul.mubr.f32.gmra.mrb[0].mxu0 %v6014
        %v6224 = vpop.f32.mrb[0].mxu0
        %v6225 = vadd.f32 %v6010, %v6224
        %v6226 = vpop.f32.mrb[0].mxu0
        %v6227 = vadd.f32 %v6010, %v6226
        %6228 = vdwg.mxu0
        %6229 = vmatprep.subr.mxu0 %v5874
        %6230 = vmatpush1.msra.mxu0 %v5873
        %6231 = vmatprep.subr.mxu0 %v5906
        %6232 = vmatpush1.msra.mxu0 %v5905
        %6233 = vmatprep.subr.mxu0 0.0
        %6234 = vmatpush1.msra.mxu0 0.0
        %6235 = vmatprep.subr.mxu0 0.0
        %6236 = vmatpush1.msra.mxu0 0.0
        %6237 = vmatprep.subr.mxu0 0.0
        %6238 = vmatpush1.msra.mxu0 0.0
        %6239 = vmatprep.subr.mxu0 0.0
        %6240 = vmatpush1.msra.mxu0 0.0
        %6241 = vmatprep.subr.mxu0 0.0
        %6242 = vmatpush1.msra.mxu0 0.0
        %6243 = vmatprep.subr.mxu0 0.0
        %6244 = vmatpush1.msra.mxu0 0.0
        %6245 = vmatprep.subr.mxu0 0.0
        %6246 = vmatpush1.msra.mxu0 0.0
        %6247 = vmatprep.subr.mxu0 0.0
        %6248 = vmatpush1.msra.mxu0 0.0
        %6249 = vmatprep.subr.mxu0 0.0
        %6250 = vmatpush1.msra.mxu0 0.0
        %6251 = vmatprep.subr.mxu0 0.0
        %6252 = vmatpush1.msra.mxu0 0.0
        %6253 = vmatprep.subr.mxu0 0.0
        %6254 = vmatpush1.msra.mxu0 0.0
        %6255 = vmatprep.subr.mxu0 0.0
        %6256 = vmatpush1.msra.mxu0 0.0
        %6257 = vmatprep.subr.mxu0 0.0
        %6258 = vmatpush1.msra.mxu0 0.0
        %6259 = vmatprep.subr.mxu0 0.0
        %6260 = vmatpush1.msra.mxu0 0.0
        %6261 = vmatprep.subr.mxu0 0.0
        %6262 = vmatpush1.msra.mxu0 0.0
        %6263 = vmatprep.subr.mxu0 0.0
        %6264 = vmatpush1.msra.mxu0 0.0
        %6265 = vmatprep.subr.mxu0 0.0
        %6266 = vmatpush1.msra.mxu0 0.0
        %6267 = vmatprep.subr.mxu0 0.0
        %6268 = vmatpush1.msra.mxu0 0.0
        %6269 = vmatprep.subr.mxu0 0.0
        %6270 = vmatpush1.msra.mxu0 0.0
        %6271 = vmatprep.subr.mxu0 0.0
        %6272 = vmatpush1.msra.mxu0 0.0
        %6273 = vmatprep.subr.mxu0 0.0
        %6274 = vmatpush1.msra.mxu0 0.0
        %6275 = vmatprep.subr.mxu0 0.0
        %6276 = vmatpush1.msra.mxu0 0.0
        %6277 = vmatprep.subr.mxu0 0.0
        %6278 = vmatpush1.msra.mxu0 0.0
        %6279 = vmatprep.subr.mxu0 0.0
        %6280 = vmatpush1.msra.mxu0 0.0
        %6281 = vmatprep.subr.mxu0 0.0
        %6282 = vmatpush1.msra.mxu0 0.0
        %6283 = vmatprep.subr.mxu0 0.0
        %6284 = vmatpush1.msra.mxu0 0.0
        %6285 = vmatprep.subr.mxu0 0.0
        %6286 = vmatpush1.msra.mxu0 0.0
        %6287 = vmatprep.subr.mxu0 0.0
        %6288 = vmatpush1.msra.mxu0 0.0
        %6289 = vmatprep.subr.mxu0 0.0
        %6290 = vmatpush1.msra.mxu0 0.0
        %6291 = vmatprep.subr.mxu0 0.0
        %6292 = vmatpush1.msra.mxu0 0.0
        %6293 = vmatprep.mubr.f32.mxu0 0.0
        %6294 = vmatmul.mubr.f32.gmra.mrb[0].mxu0 %v6014
        %v6295 = vpop.f32.mrb[0].mxu0
        %v6296 = vadd.f32 %v6010, %v6295
        %v6297 = vpop.f32.mrb[0].mxu0
        %v6298 = vadd.f32 %v6010, %v6297
        %6299 = vdwg.mxu0
        %6300 = vmatprep.subr.mxu0 %v5876
        %6301 = vmatpush1.msra.mxu0 %v5875
        %6302 = vmatprep.subr.mxu0 %v5908
        %6303 = vmatpush1.msra.mxu0 %v5907
        %6304 = vmatprep.subr.mxu0 0.0
        %6305 = vmatpush1.msra.mxu0 0.0
        %6306 = vmatprep.subr.mxu0 0.0
        %6307 = vmatpush1.msra.mxu0 0.0
        %6308 = vmatprep.subr.mxu0 0.0
        %6309 = vmatpush1.msra.mxu0 0.0
        %6310 = vmatprep.subr.mxu0 0.0
        %6311 = vmatpush1.msra.mxu0 0.0
        %6312 = vmatprep.subr.mxu0 0.0
        %6313 = vmatpush1.msra.mxu0 0.0
        %6314 = vmatprep.subr.mxu0 0.0
        %6315 = vmatpush1.msra.mxu0 0.0
        %6316 = vmatprep.subr.mxu0 0.0
        %6317 = vmatpush1.msra.mxu0 0.0
        %6318 = vmatprep.subr.mxu0 0.0
        %6319 = vmatpush1.msra.mxu0 0.0
        %6320 = vmatprep.subr.mxu0 0.0
        %6321 = vmatpush1.msra.mxu0 0.0
        %6322 = vmatprep.subr.mxu0 0.0
        %6323 = vmatpush1.msra.mxu0 0.0
        %6324 = vmatprep.subr.mxu0 0.0
        %6325 = vmatpush1.msra.mxu0 0.0
        %6326 = vmatprep.subr.mxu0 0.0
        %6327 = vmatpush1.msra.mxu0 0.0
        %6328 = vmatprep.subr.mxu0 0.0
        %6329 = vmatpush1.msra.mxu0 0.0
        %6330 = vmatprep.subr.mxu0 0.0
        %6331 = vmatpush1.msra.mxu0 0.0
        %6332 = vmatprep.subr.mxu0 0.0
        %6333 = vmatpush1.msra.mxu0 0.0
        %6334 = vmatprep.subr.mxu0 0.0
        %6335 = vmatpush1.msra.mxu0 0.0
        %6336 = vmatprep.subr.mxu0 0.0
        %6337 = vmatpush1.msra.mxu0 0.0
        %6338 = vmatprep.subr.mxu0 0.0
        %6339 = vmatpush1.msra.mxu0 0.0
        %6340 = vmatprep.subr.mxu0 0.0
        %6341 = vmatpush1.msra.mxu0 0.0
        %6342 = vmatprep.subr.mxu0 0.0
        %6343 = vmatpush1.msra.mxu0 0.0
        %6344 = vmatprep.subr.mxu0 0.0
        %6345 = vmatpush1.msra.mxu0 0.0
        %6346 = vmatprep.subr.mxu0 0.0
        %6347 = vmatpush1.msra.mxu0 0.0
        %6348 = vmatprep.subr.mxu0 0.0
        %6349 = vmatpush1.msra.mxu0 0.0
        %6350 = vmatprep.subr.mxu0 0.0
        %6351 = vmatpush1.msra.mxu0 0.0
        %6352 = vmatprep.subr.mxu0 0.0
        %6353 = vmatpush1.msra.mxu0 0.0
        %6354 = vmatprep.subr.mxu0 0.0
        %6355 = vmatpush1.msra.mxu0 0.0
        %6356 = vmatprep.subr.mxu0 0.0
        %6357 = vmatpush1.msra.mxu0 0.0
        %6358 = vmatprep.subr.mxu0 0.0
        %6359 = vmatpush1.msra.mxu0 0.0
        %6360 = vmatprep.subr.mxu0 0.0
        %6361 = vmatpush1.msra.mxu0 0.0
        %6362 = vmatprep.subr.mxu0 0.0
        %6363 = vmatpush1.msra.mxu0 0.0
        %6364 = vmatprep.mubr.f32.mxu0 0.0
        %6365 = vmatmul.mubr.f32.gmra.mrb[0].mxu0 %v6014
        %v6366 = vpop.f32.mrb[0].mxu0
        %v6367 = vadd.f32 %v6010, %v6366
        %v6368 = vpop.f32.mrb[0].mxu0
        %v6369 = vadd.f32 %v6010, %v6368
        %6370 = vdwg.mxu0
        %6371 = vmatprep.subr.mxu0 %v5878
        %6372 = vmatpush1.msra.mxu0 %v5877
        %6373 = vmatprep.subr.mxu0 %v5910
        %6374 = vmatpush1.msra.mxu0 %v5909
        %6375 = vmatprep.subr.mxu0 0.0
        %6376 = vmatpush1.msra.mxu0 0.0
        %6377 = vmatprep.subr.mxu0 0.0
        %6378 = vmatpush1.msra.mxu0 0.0
        %6379 = vmatprep.subr.mxu0 0.0
        %6380 = vmatpush1.msra.mxu0 0.0
        %6381 = vmatprep.subr.mxu0 0.0
        %6382 = vmatpush1.msra.mxu0 0.0
        %6383 = vmatprep.subr.mxu0 0.0
        %6384 = vmatpush1.msra.mxu0 0.0
        %6385 = vmatprep.subr.mxu0 0.0
        %6386 = vmatpush1.msra.mxu0 0.0
        %6387 = vmatprep.subr.mxu0 0.0
        %6388 = vmatpush1.msra.mxu0 0.0
        %6389 = vmatprep.subr.mxu0 0.0
        %6390 = vmatpush1.msra.mxu0 0.0
        %6391 = vmatprep.subr.mxu0 0.0
        %6392 = vmatpush1.msra.mxu0 0.0
        %6393 = vmatprep.subr.mxu0 0.0
        %6394 = vmatpush1.msra.mxu0 0.0
        %6395 = vmatprep.subr.mxu0 0.0
        %6396 = vmatpush1.msra.mxu0 0.0
        %6397 = vmatprep.subr.mxu0 0.0
        %6398 = vmatpush1.msra.mxu0 0.0
        %6399 = vmatprep.subr.mxu0 0.0
        %6400 = vmatpush1.msra.mxu0 0.0
        %6401 = vmatprep.subr.mxu0 0.0
        %6402 = vmatpush1.msra.mxu0 0.0
        %6403 = vmatprep.subr.mxu0 0.0
        %6404 = vmatpush1.msra.mxu0 0.0
        %6405 = vmatprep.subr.mxu0 0.0
        %6406 = vmatpush1.msra.mxu0 0.0
        %6407 = vmatprep.subr.mxu0 0.0
        %6408 = vmatpush1.msra.mxu0 0.0
        %6409 = vmatprep.subr.mxu0 0.0
        %6410 = vmatpush1.msra.mxu0 0.0
        %6411 = vmatprep.subr.mxu0 0.0
        %6412 = vmatpush1.msra.mxu0 0.0
        %6413 = vmatprep.subr.mxu0 0.0
        %6414 = vmatpush1.msra.mxu0 0.0
        %6415 = vmatprep.subr.mxu0 0.0
        %6416 = vmatpush1.msra.mxu0 0.0
        %6417 = vmatprep.subr.mxu0 0.0
        %6418 = vmatpush1.msra.mxu0 0.0
        %6419 = vmatprep.subr.mxu0 0.0
        %6420 = vmatpush1.msra.mxu0 0.0
        %6421 = vmatprep.subr.mxu0 0.0
        %6422 = vmatpush1.msra.mxu0 0.0
        %6423 = vmatprep.subr.mxu0 0.0
        %6424 = vmatpush1.msra.mxu0 0.0
        %6425 = vmatprep.subr.mxu0 0.0
        %6426 = vmatpush1.msra.mxu0 0.0
        %6427 = vmatprep.subr.mxu0 0.0
        %6428 = vmatpush1.msra.mxu0 0.0
        %6429 = vmatprep.subr.mxu0 0.0
        %6430 = vmatpush1.msra.mxu0 0.0
        %6431 = vmatprep.subr.mxu0 0.0
        %6432 = vmatpush1.msra.mxu0 0.0
        %6433 = vmatprep.subr.mxu0 0.0
        %6434 = vmatpush1.msra.mxu0 0.0
        %6435 = vmatprep.mubr.f32.mxu0 0.0
        %6436 = vmatmul.mubr.f32.gmra.mrb[0].mxu0 %v6014
        %v6437 = vpop.f32.mrb[0].mxu0
        %v6438 = vadd.f32 %v6010, %v6437
        %v6439 = vpop.f32.mrb[0].mxu0
        %v6440 = vadd.f32 %v6010, %v6439
        %6441 = vdwg.mxu0
        %6442 = vmatprep.subr.mxu0 %v5880
        %6443 = vmatpush1.msra.mxu0 %v5879
        %6444 = vmatprep.subr.mxu0 %v5912
        %6445 = vmatpush1.msra.mxu0 %v5911
        %6446 = vmatprep.subr.mxu0 0.0
        %6447 = vmatpush1.msra.mxu0 0.0
        %6448 = vmatprep.subr.mxu0 0.0
        %6449 = vmatpush1.msra.mxu0 0.0
        %6450 = vmatprep.subr.mxu0 0.0
        %6451 = vmatpush1.msra.mxu0 0.0
        %6452 = vmatprep.subr.mxu0 0.0
        %6453 = vmatpush1.msra.mxu0 0.0
        %6454 = vmatprep.subr.mxu0 0.0
        %6455 = vmatpush1.msra.mxu0 0.0
        %6456 = vmatprep.subr.mxu0 0.0
        %6457 = vmatpush1.msra.mxu0 0.0
        %6458 = vmatprep.subr.mxu0 0.0
        %6459 = vmatpush1.msra.mxu0 0.0
        %6460 = vmatprep.subr.mxu0 0.0
        %6461 = vmatpush1.msra.mxu0 0.0
        %6462 = vmatprep.subr.mxu0 0.0
        %6463 = vmatpush1.msra.mxu0 0.0
        %6464 = vmatprep.subr.mxu0 0.0
        %6465 = vmatpush1.msra.mxu0 0.0
        %6466 = vmatprep.subr.mxu0 0.0
        %6467 = vmatpush1.msra.mxu0 0.0
        %6468 = vmatprep.subr.mxu0 0.0
        %6469 = vmatpush1.msra.mxu0 0.0
        %6470 = vmatprep.subr.mxu0 0.0
        %6471 = vmatpush1.msra.mxu0 0.0
        %6472 = vmatprep.subr.mxu0 0.0
        %6473 = vmatpush1.msra.mxu0 0.0
        %6474 = vmatprep.subr.mxu0 0.0
        %6475 = vmatpush1.msra.mxu0 0.0
        %6476 = vmatprep.subr.mxu0 0.0
        %6477 = vmatpush1.msra.mxu0 0.0
        %6478 = vmatprep.subr.mxu0 0.0
        %6479 = vmatpush1.msra.mxu0 0.0
        %6480 = vmatprep.subr.mxu0 0.0
        %6481 = vmatpush1.msra.mxu0 0.0
        %6482 = vmatprep.subr.mxu0 0.0
        %6483 = vmatpush1.msra.mxu0 0.0
        %6484 = vmatprep.subr.mxu0 0.0
        %6485 = vmatpush1.msra.mxu0 0.0
        %6486 = vmatprep.subr.mxu0 0.0
        %6487 = vmatpush1.msra.mxu0 0.0
        %6488 = vmatprep.subr.mxu0 0.0
        %6489 = vmatpush1.msra.mxu0 0.0
        %6490 = vmatprep.subr.mxu0 0.0
        %6491 = vmatpush1.msra.mxu0 0.0
        %6492 = vmatprep.subr.mxu0 0.0
        %6493 = vmatpush1.msra.mxu0 0.0
        %6494 = vmatprep.subr.mxu0 0.0
        %6495 = vmatpush1.msra.mxu0 0.0
        %6496 = vmatprep.subr.mxu0 0.0
        %6497 = vmatpush1.msra.mxu0 0.0
        %6498 = vmatprep.subr.mxu0 0.0
        %6499 = vmatpush1.msra.mxu0 0.0
        %6500 = vmatprep.subr.mxu0 0.0
        %6501 = vmatpush1.msra.mxu0 0.0
        %6502 = vmatprep.subr.mxu0 0.0
        %6503 = vmatpush1.msra.mxu0 0.0
        %6504 = vmatprep.subr.mxu0 0.0
        %6505 = vmatpush1.msra.mxu0 0.0
        %6506 = vmatprep.mubr.f32.mxu0 0.0
        %6507 = vmatmul.mubr.f32.gmra.mrb[0].mxu0 %v6014
        %v6508 = vpop.f32.mrb[0].mxu0
        %v6509 = vadd.f32 %v6010, %v6508
        %v6510 = vpop.f32.mrb[0].mxu0
        %v6511 = vadd.f32 %v6010, %v6510
        %6512 = vdwg.mxu0
        %6513 = vmatprep.subr.mxu0 %v5882
        %6514 = vmatpush1.msra.mxu0 %v5881
        %6515 = vmatprep.subr.mxu0 %v5914
        %6516 = vmatpush1.msra.mxu0 %v5913
        %6517 = vmatprep.subr.mxu0 0.0
        %6518 = vmatpush1.msra.mxu0 0.0
        %6519 = vmatprep.subr.mxu0 0.0
        %6520 = vmatpush1.msra.mxu0 0.0
        %6521 = vmatprep.subr.mxu0 0.0
        %6522 = vmatpush1.msra.mxu0 0.0
        %6523 = vmatprep.subr.mxu0 0.0
        %6524 = vmatpush1.msra.mxu0 0.0
        %6525 = vmatprep.subr.mxu0 0.0
        %6526 = vmatpush1.msra.mxu0 0.0
        %6527 = vmatprep.subr.mxu0 0.0
        %6528 = vmatpush1.msra.mxu0 0.0
        %6529 = vmatprep.subr.mxu0 0.0
        %6530 = vmatpush1.msra.mxu0 0.0
        %6531 = vmatprep.subr.mxu0 0.0
        %6532 = vmatpush1.msra.mxu0 0.0
        %6533 = vmatprep.subr.mxu0 0.0
        %6534 = vmatpush1.msra.mxu0 0.0
        %6535 = vmatprep.subr.mxu0 0.0
        %6536 = vmatpush1.msra.mxu0 0.0
        %6537 = vmatprep.subr.mxu0 0.0
        %6538 = vmatpush1.msra.mxu0 0.0
        %6539 = vmatprep.subr.mxu0 0.0
        %6540 = vmatpush1.msra.mxu0 0.0
        %6541 = vmatprep.subr.mxu0 0.0
        %6542 = vmatpush1.msra.mxu0 0.0
        %6543 = vmatprep.subr.mxu0 0.0
        %6544 = vmatpush1.msra.mxu0 0.0
        %6545 = vmatprep.subr.mxu0 0.0
        %6546 = vmatpush1.msra.mxu0 0.0
        %6547 = vmatprep.subr.mxu0 0.0
        %6548 = vmatpush1.msra.mxu0 0.0
        %6549 = vmatprep.subr.mxu0 0.0
        %6550 = vmatpush1.msra.mxu0 0.0
        %6551 = vmatprep.subr.mxu0 0.0
        %6552 = vmatpush1.msra.mxu0 0.0
        %6553 = vmatprep.subr.mxu0 0.0
        %6554 = vmatpush1.msra.mxu0 0.0
        %6555 = vmatprep.subr.mxu0 0.0
        %6556 = vmatpush1.msra.mxu0 0.0
        %6557 = vmatprep.subr.mxu0 0.0
        %6558 = vmatpush1.msra.mxu0 0.0
        %6559 = vmatprep.subr.mxu0 0.0
        %6560 = vmatpush1.msra.mxu0 0.0
        %6561 = vmatprep.subr.mxu0 0.0
        %6562 = vmatpush1.msra.mxu0 0.0
        %6563 = vmatprep.subr.mxu0 0.0
        %6564 = vmatpush1.msra.mxu0 0.0
        %6565 = vmatprep.subr.mxu0 0.0
        %6566 = vmatpush1.msra.mxu0 0.0
        %6567 = vmatprep.subr.mxu0 0.0
        %6568 = vmatpush1.msra.mxu0 0.0
        %6569 = vmatprep.subr.mxu0 0.0
        %6570 = vmatpush1.msra.mxu0 0.0
        %6571 = vmatprep.subr.mxu0 0.0
        %6572 = vmatpush1.msra.mxu0 0.0
        %6573 = vmatprep.subr.mxu0 0.0
        %6574 = vmatpush1.msra.mxu0 0.0
        %6575 = vmatprep.subr.mxu0 0.0
        %6576 = vmatpush1.msra.mxu0 0.0
        %6577 = vmatprep.mubr.f32.mxu0 0.0
        %6578 = vmatmul.mubr.f32.gmra.mrb[0].mxu0 %v6014
        %v6579 = vpop.f32.mrb[0].mxu0
        %v6580 = vadd.f32 %v6010, %v6579
        %v6581 = vpop.f32.mrb[0].mxu0
        %v6582 = vadd.f32 %v6010, %v6581
        %6583 = vdwg.mxu0
        %6584 = vmatprep.subr.mxu0 %v5884
        %6585 = vmatpush1.msra.mxu0 %v5883
        %6586 = vmatprep.subr.mxu0 %v5916
        %6587 = vmatpush1.msra.mxu0 %v5915
        %6588 = vmatprep.subr.mxu0 0.0
        %6589 = vmatpush1.msra.mxu0 0.0
        %6590 = vmatprep.subr.mxu0 0.0
        %6591 = vmatpush1.msra.mxu0 0.0
        %6592 = vmatprep.subr.mxu0 0.0
        %6593 = vmatpush1.msra.mxu0 0.0
        %6594 = vmatprep.subr.mxu0 0.0
        %6595 = vmatpush1.msra.mxu0 0.0
        %6596 = vmatprep.subr.mxu0 0.0
        %6597 = vmatpush1.msra.mxu0 0.0
        %6598 = vmatprep.subr.mxu0 0.0
        %6599 = vmatpush1.msra.mxu0 0.0
        %6600 = vmatprep.subr.mxu0 0.0
        %6601 = vmatpush1.msra.mxu0 0.0
        %6602 = vmatprep.subr.mxu0 0.0
        %6603 = vmatpush1.msra.mxu0 0.0
        %6604 = vmatprep.subr.mxu0 0.0
        %6605 = vmatpush1.msra.mxu0 0.0
        %6606 = vmatprep.subr.mxu0 0.0
        %6607 = vmatpush1.msra.mxu0 0.0
        %6608 = vmatprep.subr.mxu0 0.0
        %6609 = vmatpush1.msra.mxu0 0.0
        %6610 = vmatprep.subr.mxu0 0.0
        %6611 = vmatpush1.msra.mxu0 0.0
        %6612 = vmatprep.subr.mxu0 0.0
        %6613 = vmatpush1.msra.mxu0 0.0
        %6614 = vmatprep.subr.mxu0 0.0
        %6615 = vmatpush1.msra.mxu0 0.0
        %6616 = vmatprep.subr.mxu0 0.0
        %6617 = vmatpush1.msra.mxu0 0.0
        %6618 = vmatprep.subr.mxu0 0.0
        %6619 = vmatpush1.msra.mxu0 0.0
        %6620 = vmatprep.subr.mxu0 0.0
        %6621 = vmatpush1.msra.mxu0 0.0
        %6622 = vmatprep.subr.mxu0 0.0
        %6623 = vmatpush1.msra.mxu0 0.0
        %6624 = vmatprep.subr.mxu0 0.0
        %6625 = vmatpush1.msra.mxu0 0.0
        %6626 = vmatprep.subr.mxu0 0.0
        %6627 = vmatpush1.msra.mxu0 0.0
        %6628 = vmatprep.subr.mxu0 0.0
        %6629 = vmatpush1.msra.mxu0 0.0
        %6630 = vmatprep.subr.mxu0 0.0
        %6631 = vmatpush1.msra.mxu0 0.0
        %6632 = vmatprep.subr.mxu0 0.0
        %6633 = vmatpush1.msra.mxu0 0.0
        %6634 = vmatprep.subr.mxu0 0.0
        %6635 = vmatpush1.msra.mxu0 0.0
        %6636 = vmatprep.subr.mxu0 0.0
        %6637 = vmatpush1.msra.mxu0 0.0
        %6638 = vmatprep.subr.mxu0 0.0
        %6639 = vmatpush1.msra.mxu0 0.0
        %6640 = vmatprep.subr.mxu0 0.0
        %6641 = vmatpush1.msra.mxu0 0.0
        %6642 = vmatprep.subr.mxu0 0.0
        %6643 = vmatpush1.msra.mxu0 0.0
        %6644 = vmatprep.subr.mxu0 0.0
        %6645 = vmatpush1.msra.mxu0 0.0
        %6646 = vmatprep.subr.mxu0 0.0
        %6647 = vmatpush1.msra.mxu0 0.0
        %6648 = vmatprep.mubr.f32.mxu0 0.0
        %6649 = vmatmul.mubr.f32.gmra.mrb[0].mxu0 %v6014
        %v6650 = vpop.f32.mrb[0].mxu0
        %v6651 = vadd.f32 %v6010, %v6650
        %v6652 = vpop.f32.mrb[0].mxu0
        %v6653 = vadd.f32 %v6010, %v6652
        %6654 = vdwg.mxu0
        %6655 = vmatprep.subr.mxu0 %v5886
        %6656 = vmatpush1.msra.mxu0 %v5885
        %6657 = vmatprep.subr.mxu0 %v5918
        %6658 = vmatpush1.msra.mxu0 %v5917
        %6659 = vmatprep.subr.mxu0 0.0
        %6660 = vmatpush1.msra.mxu0 0.0
        %6661 = vmatprep.subr.mxu0 0.0
        %6662 = vmatpush1.msra.mxu0 0.0
        %6663 = vmatprep.subr.mxu0 0.0
        %6664 = vmatpush1.msra.mxu0 0.0
        %6665 = vmatprep.subr.mxu0 0.0
        %6666 = vmatpush1.msra.mxu0 0.0
        %6667 = vmatprep.subr.mxu0 0.0
        %6668 = vmatpush1.msra.mxu0 0.0
        %6669 = vmatprep.subr.mxu0 0.0
        %6670 = vmatpush1.msra.mxu0 0.0
        %6671 = vmatprep.subr.mxu0 0.0
        %6672 = vmatpush1.msra.mxu0 0.0
        %6673 = vmatprep.subr.mxu0 0.0
        %6674 = vmatpush1.msra.mxu0 0.0
        %6675 = vmatprep.subr.mxu0 0.0
        %6676 = vmatpush1.msra.mxu0 0.0
        %6677 = vmatprep.subr.mxu0 0.0
        %6678 = vmatpush1.msra.mxu0 0.0
        %6679 = vmatprep.subr.mxu0 0.0
        %6680 = vmatpush1.msra.mxu0 0.0
        %6681 = vmatprep.subr.mxu0 0.0
        %6682 = vmatpush1.msra.mxu0 0.0
        %6683 = vmatprep.subr.mxu0 0.0
        %6684 = vmatpush1.msra.mxu0 0.0
        %6685 = vmatprep.subr.mxu0 0.0
        %6686 = vmatpush1.msra.mxu0 0.0
        %6687 = vmatprep.subr.mxu0 0.0
        %6688 = vmatpush1.msra.mxu0 0.0
        %6689 = vmatprep.subr.mxu0 0.0
        %6690 = vmatpush1.msra.mxu0 0.0
        %6691 = vmatprep.subr.mxu0 0.0
        %6692 = vmatpush1.msra.mxu0 0.0
        %6693 = vmatprep.subr.mxu0 0.0
        %6694 = vmatpush1.msra.mxu0 0.0
        %6695 = vmatprep.subr.mxu0 0.0
        %6696 = vmatpush1.msra.mxu0 0.0
        %6697 = vmatprep.subr.mxu0 0.0
        %6698 = vmatpush1.msra.mxu0 0.0
        %6699 = vmatprep.subr.mxu0 0.0
        %6700 = vmatpush1.msra.mxu0 0.0
        %6701 = vmatprep.subr.mxu0 0.0
        %6702 = vmatpush1.msra.mxu0 0.0
        %6703 = vmatprep.subr.mxu0 0.0
        %6704 = vmatpush1.msra.mxu0 0.0
        %6705 = vmatprep.subr.mxu0 0.0
        %6706 = vmatpush1.msra.mxu0 0.0
        %6707 = vmatprep.subr.mxu0 0.0
        %6708 = vmatpush1.msra.mxu0 0.0
        %6709 = vmatprep.subr.mxu0 0.0
        %6710 = vmatpush1.msra.mxu0 0.0
        %6711 = vmatprep.subr.mxu0 0.0
        %6712 = vmatpush1.msra.mxu0 0.0
        %6713 = vmatprep.subr.mxu0 0.0
        %6714 = vmatpush1.msra.mxu0 0.0
        %6715 = vmatprep.subr.mxu0 0.0
        %6716 = vmatpush1.msra.mxu0 0.0
        %6717 = vmatprep.subr.mxu0 0.0
        %6718 = vmatpush1.msra.mxu0 0.0
        %6719 = vmatprep.mubr.f32.mxu0 0.0
        %6720 = vmatmul.mubr.f32.gmra.mrb[0].mxu0 %v6014
        %v6721 = vpop.f32.mrb[0].mxu0
        %v6722 = vadd.f32 %v6010, %v6721
        %v6723 = vpop.f32.mrb[0].mxu0
        %v6724 = vadd.f32 %v6010, %v6723
        %6725 = vdwg.mxu0
        %6726 = vmatprep.subr.mxu0 %v5888
        %6727 = vmatpush1.msra.mxu0 %v5887
        %6728 = vmatprep.subr.mxu0 %v5920
        %6729 = vmatpush1.msra.mxu0 %v5919
        %6730 = vmatprep.subr.mxu0 0.0
        %6731 = vmatpush1.msra.mxu0 0.0
        %6732 = vmatprep.subr.mxu0 0.0
        %6733 = vmatpush1.msra.mxu0 0.0
        %6734 = vmatprep.subr.mxu0 0.0
        %6735 = vmatpush1.msra.mxu0 0.0
        %6736 = vmatprep.subr.mxu0 0.0
        %6737 = vmatpush1.msra.mxu0 0.0
        %6738 = vmatprep.subr.mxu0 0.0
        %6739 = vmatpush1.msra.mxu0 0.0
        %6740 = vmatprep.subr.mxu0 0.0
        %6741 = vmatpush1.msra.mxu0 0.0
        %6742 = vmatprep.subr.mxu0 0.0
        %6743 = vmatpush1.msra.mxu0 0.0
        %6744 = vmatprep.subr.mxu0 0.0
        %6745 = vmatpush1.msra.mxu0 0.0
        %6746 = vmatprep.subr.mxu0 0.0
        %6747 = vmatpush1.msra.mxu0 0.0
        %6748 = vmatprep.subr.mxu0 0.0
        %6749 = vmatpush1.msra.mxu0 0.0
        %6750 = vmatprep.subr.mxu0 0.0
        %6751 = vmatpush1.msra.mxu0 0.0
        %6752 = vmatprep.subr.mxu0 0.0
        %6753 = vmatpush1.msra.mxu0 0.0
        %6754 = vmatprep.subr.mxu0 0.0
        %6755 = vmatpush1.msra.mxu0 0.0
        %6756 = vmatprep.subr.mxu0 0.0
        %6757 = vmatpush1.msra.mxu0 0.0
        %6758 = vmatprep.subr.mxu0 0.0
        %6759 = vmatpush1.msra.mxu0 0.0
        %6760 = vmatprep.subr.mxu0 0.0
        %6761 = vmatpush1.msra.mxu0 0.0
        %6762 = vmatprep.subr.mxu0 0.0
        %6763 = vmatpush1.msra.mxu0 0.0
        %6764 = vmatprep.subr.mxu0 0.0
        %6765 = vmatpush1.msra.mxu0 0.0
        %6766 = vmatprep.subr.mxu0 0.0
        %6767 = vmatpush1.msra.mxu0 0.0
        %6768 = vmatprep.subr.mxu0 0.0
        %6769 = vmatpush1.msra.mxu0 0.0
        %6770 = vmatprep.subr.mxu0 0.0
        %6771 = vmatpush1.msra.mxu0 0.0
        %6772 = vmatprep.subr.mxu0 0.0
        %6773 = vmatpush1.msra.mxu0 0.0
        %6774 = vmatprep.subr.mxu0 0.0
        %6775 = vmatpush1.msra.mxu0 0.0
        %6776 = vmatprep.subr.mxu0 0.0
        %6777 = vmatpush1.msra.mxu0 0.0
        %6778 = vmatprep.subr.mxu0 0.0
        %6779 = vmatpush1.msra.mxu0 0.0
        %6780 = vmatprep.subr.mxu0 0.0
        %6781 = vmatpush1.msra.mxu0 0.0
        %6782 = vmatprep.subr.mxu0 0.0
        %6783 = vmatpush1.msra.mxu0 0.0
        %6784 = vmatprep.subr.mxu0 0.0
        %6785 = vmatpush1.msra.mxu0 0.0
        %6786 = vmatprep.subr.mxu0 0.0
        %6787 = vmatpush1.msra.mxu0 0.0
        %6788 = vmatprep.subr.mxu0 0.0
        %6789 = vmatpush1.msra.mxu0 0.0
        %6790 = vmatprep.mubr.f32.mxu0 0.0
        %6791 = vmatmul.mubr.f32.gmra.mrb[0].mxu0 %v6014
        %v6792 = vpop.f32.mrb[0].mxu0
        %v6793 = vadd.f32 %v6010, %v6792
        %v6794 = vpop.f32.mrb[0].mxu0
        %v6795 = vadd.f32 %v6010, %v6794
        %6796 = vdwg.mxu0
        %6797 = vmatprep.subr.mxu0 %v5890
        %6798 = vmatpush1.msra.mxu0 %v5889
        %6799 = vmatprep.subr.mxu0 %v5922
        %6800 = vmatpush1.msra.mxu0 %v5921
        %6801 = vmatprep.subr.mxu0 0.0
        %6802 = vmatpush1.msra.mxu0 0.0
        %6803 = vmatprep.subr.mxu0 0.0
        %6804 = vmatpush1.msra.mxu0 0.0
        %6805 = vmatprep.subr.mxu0 0.0
        %6806 = vmatpush1.msra.mxu0 0.0
        %6807 = vmatprep.subr.mxu0 0.0
        %6808 = vmatpush1.msra.mxu0 0.0
        %6809 = vmatprep.subr.mxu0 0.0
        %6810 = vmatpush1.msra.mxu0 0.0
        %6811 = vmatprep.subr.mxu0 0.0
        %6812 = vmatpush1.msra.mxu0 0.0
        %6813 = vmatprep.subr.mxu0 0.0
        %6814 = vmatpush1.msra.mxu0 0.0
        %6815 = vmatprep.subr.mxu0 0.0
        %6816 = vmatpush1.msra.mxu0 0.0
        %6817 = vmatprep.subr.mxu0 0.0
        %6818 = vmatpush1.msra.mxu0 0.0
        %6819 = vmatprep.subr.mxu0 0.0
        %6820 = vmatpush1.msra.mxu0 0.0
        %6821 = vmatprep.subr.mxu0 0.0
        %6822 = vmatpush1.msra.mxu0 0.0
        %6823 = vmatprep.subr.mxu0 0.0
        %6824 = vmatpush1.msra.mxu0 0.0
        %6825 = vmatprep.subr.mxu0 0.0
        %6826 = vmatpush1.msra.mxu0 0.0
        %6827 = vmatprep.subr.mxu0 0.0
        %6828 = vmatpush1.msra.mxu0 0.0
        %6829 = vmatprep.subr.mxu0 0.0
        %6830 = vmatpush1.msra.mxu0 0.0
        %6831 = vmatprep.subr.mxu0 0.0
        %6832 = vmatpush1.msra.mxu0 0.0
        %6833 = vmatprep.subr.mxu0 0.0
        %6834 = vmatpush1.msra.mxu0 0.0
        %6835 = vmatprep.subr.mxu0 0.0
        %6836 = vmatpush1.msra.mxu0 0.0
        %6837 = vmatprep.subr.mxu0 0.0
        %6838 = vmatpush1.msra.mxu0 0.0
        %6839 = vmatprep.subr.mxu0 0.0
        %6840 = vmatpush1.msra.mxu0 0.0
        %6841 = vmatprep.subr.mxu0 0.0
        %6842 = vmatpush1.msra.mxu0 0.0
        %6843 = vmatprep.subr.mxu0 0.0
        %6844 = vmatpush1.msra.mxu0 0.0
        %6845 = vmatprep.subr.mxu0 0.0
        %6846 = vmatpush1.msra.mxu0 0.0
        %6847 = vmatprep.subr.mxu0 0.0
        %6848 = vmatpush1.msra.mxu0 0.0
        %6849 = vmatprep.subr.mxu0 0.0
        %6850 = vmatpush1.msra.mxu0 0.0
        %6851 = vmatprep.subr.mxu0 0.0
        %6852 = vmatpush1.msra.mxu0 0.0
        %6853 = vmatprep.subr.mxu0 0.0
        %6854 = vmatpush1.msra.mxu0 0.0
        %6855 = vmatprep.subr.mxu0 0.0
        %6856 = vmatpush1.msra.mxu0 0.0
        %6857 = vmatprep.subr.mxu0 0.0
        %6858 = vmatpush1.msra.mxu0 0.0
        %6859 = vmatprep.subr.mxu0 0.0
        %6860 = vmatpush1.msra.mxu0 0.0
        %6861 = vmatprep.mubr.f32.mxu0 0.0
        %6862 = vmatmul.mubr.f32.gmra.mrb[0].mxu0 %v6014
        %v6863 = vpop.f32.mrb[0].mxu0
        %v6864 = vadd.f32 %v6010, %v6863
        %v6865 = vpop.f32.mrb[0].mxu0
        %v6866 = vadd.f32 %v6010, %v6865
        %6867 = vdwg.mxu0
        %6868 = vmatprep.subr.mxu0 %v5892
        %6869 = vmatpush1.msra.mxu0 %v5891
        %6870 = vmatprep.subr.mxu0 %v5924
        %6871 = vmatpush1.msra.mxu0 %v5923
        %6872 = vmatprep.subr.mxu0 0.0
        %6873 = vmatpush1.msra.mxu0 0.0
        %6874 = vmatprep.subr.mxu0 0.0
        %6875 = vmatpush1.msra.mxu0 0.0
        %6876 = vmatprep.subr.mxu0 0.0
        %6877 = vmatpush1.msra.mxu0 0.0
        %6878 = vmatprep.subr.mxu0 0.0
        %6879 = vmatpush1.msra.mxu0 0.0
        %6880 = vmatprep.subr.mxu0 0.0
        %6881 = vmatpush1.msra.mxu0 0.0
        %6882 = vmatprep.subr.mxu0 0.0
        %6883 = vmatpush1.msra.mxu0 0.0
        %6884 = vmatprep.subr.mxu0 0.0
        %6885 = vmatpush1.msra.mxu0 0.0
        %6886 = vmatprep.subr.mxu0 0.0
        %6887 = vmatpush1.msra.mxu0 0.0
        %6888 = vmatprep.subr.mxu0 0.0
        %6889 = vmatpush1.msra.mxu0 0.0
        %6890 = vmatprep.subr.mxu0 0.0
        %6891 = vmatpush1.msra.mxu0 0.0
        %6892 = vmatprep.subr.mxu0 0.0
        %6893 = vmatpush1.msra.mxu0 0.0
        %6894 = vmatprep.subr.mxu0 0.0
        %6895 = vmatpush1.msra.mxu0 0.0
        %6896 = vmatprep.subr.mxu0 0.0
        %6897 = vmatpush1.msra.mxu0 0.0
        %6898 = vmatprep.subr.mxu0 0.0
        %6899 = vmatpush1.msra.mxu0 0.0
        %6900 = vmatprep.subr.mxu0 0.0
        %6901 = vmatpush1.msra.mxu0 0.0
        %6902 = vmatprep.subr.mxu0 0.0
        %6903 = vmatpush1.msra.mxu0 0.0
        %6904 = vmatprep.subr.mxu0 0.0
        %6905 = vmatpush1.msra.mxu0 0.0
        %6906 = vmatprep.subr.mxu0 0.0
        %6907 = vmatpush1.msra.mxu0 0.0
        %6908 = vmatprep.subr.mxu0 0.0
        %6909 = vmatpush1.msra.mxu0 0.0
        %6910 = vmatprep.subr.mxu0 0.0
        %6911 = vmatpush1.msra.mxu0 0.0
        %6912 = vmatprep.subr.mxu0 0.0
        %6913 = vmatpush1.msra.mxu0 0.0
        %6914 = vmatprep.subr.mxu0 0.0
        %6915 = vmatpush1.msra.mxu0 0.0
        %6916 = vmatprep.subr.mxu0 0.0
        %6917 = vmatpush1.msra.mxu0 0.0
        %6918 = vmatprep.subr.mxu0 0.0
        %6919 = vmatpush1.msra.mxu0 0.0
        %6920 = vmatprep.subr.mxu0 0.0
        %6921 = vmatpush1.msra.mxu0 0.0
        %6922 = vmatprep.subr.mxu0 0.0
        %6923 = vmatpush1.msra.mxu0 0.0
        %6924 = vmatprep.subr.mxu0 0.0
        %6925 = vmatpush1.msra.mxu0 0.0
        %6926 = vmatprep.subr.mxu0 0.0
        %6927 = vmatpush1.msra.mxu0 0.0
        %6928 = vmatprep.subr.mxu0 0.0
        %6929 = vmatpush1.msra.mxu0 0.0
        %6930 = vmatprep.subr.mxu0 0.0
        %6931 = vmatpush1.msra.mxu0 0.0
        %6932 = vmatprep.mubr.f32.mxu0 0.0
        %6933 = vmatmul.mubr.f32.gmra.mrb[0].mxu0 %v6014
        %v6934 = vpop.f32.mrb[0].mxu0
        %v6935 = vadd.f32 %v6010, %v6934
        %v6936 = vpop.f32.mrb[0].mxu0
        %v6937 = vadd.f32 %v6010, %v6936
        %6938 = vdwg.mxu0
        %6939 = vmatprep.subr.mxu0 %v5894
        %6940 = vmatpush1.msra.mxu0 %v5893
        %6941 = vmatprep.subr.mxu0 %v5926
        %6942 = vmatpush1.msra.mxu0 %v5925
        %6943 = vmatprep.subr.mxu0 0.0
        %6944 = vmatpush1.msra.mxu0 0.0
        %6945 = vmatprep.subr.mxu0 0.0
        %6946 = vmatpush1.msra.mxu0 0.0
        %6947 = vmatprep.subr.mxu0 0.0
        %6948 = vmatpush1.msra.mxu0 0.0
        %6949 = vmatprep.subr.mxu0 0.0
        %6950 = vmatpush1.msra.mxu0 0.0
        %6951 = vmatprep.subr.mxu0 0.0
        %6952 = vmatpush1.msra.mxu0 0.0
        %6953 = vmatprep.subr.mxu0 0.0
        %6954 = vmatpush1.msra.mxu0 0.0
        %6955 = vmatprep.subr.mxu0 0.0
        %6956 = vmatpush1.msra.mxu0 0.0
        %6957 = vmatprep.subr.mxu0 0.0
        %6958 = vmatpush1.msra.mxu0 0.0
        %6959 = vmatprep.subr.mxu0 0.0
        %6960 = vmatpush1.msra.mxu0 0.0
        %6961 = vmatprep.subr.mxu0 0.0
        %6962 = vmatpush1.msra.mxu0 0.0
        %6963 = vmatprep.subr.mxu0 0.0
        %6964 = vmatpush1.msra.mxu0 0.0
        %6965 = vmatprep.subr.mxu0 0.0
        %6966 = vmatpush1.msra.mxu0 0.0
        %6967 = vmatprep.subr.mxu0 0.0
        %6968 = vmatpush1.msra.mxu0 0.0
        %6969 = vmatprep.subr.mxu0 0.0
        %6970 = vmatpush1.msra.mxu0 0.0
        %6971 = vmatprep.subr.mxu0 0.0
        %6972 = vmatpush1.msra.mxu0 0.0
        %6973 = vmatprep.subr.mxu0 0.0
        %6974 = vmatpush1.msra.mxu0 0.0
        %6975 = vmatprep.subr.mxu0 0.0
        %6976 = vmatpush1.msra.mxu0 0.0
        %6977 = vmatprep.subr.mxu0 0.0
        %6978 = vmatpush1.msra.mxu0 0.0
        %6979 = vmatprep.subr.mxu0 0.0
        %6980 = vmatpush1.msra.mxu0 0.0
        %6981 = vmatprep.subr.mxu0 0.0
        %6982 = vmatpush1.msra.mxu0 0.0
        %6983 = vmatprep.subr.mxu0 0.0
        %6984 = vmatpush1.msra.mxu0 0.0
        %6985 = vmatprep.subr.mxu0 0.0
        %6986 = vmatpush1.msra.mxu0 0.0
        %6987 = vmatprep.subr.mxu0 0.0
        %6988 = vmatpush1.msra.mxu0 0.0
        %6989 = vmatprep.subr.mxu0 0.0
        %6990 = vmatpush1.msra.mxu0 0.0
        %6991 = vmatprep.subr.mxu0 0.0
        %6992 = vmatpush1.msra.mxu0 0.0
        %6993 = vmatprep.subr.mxu0 0.0
        %6994 = vmatpush1.msra.mxu0 0.0
        %6995 = vmatprep.subr.mxu0 0.0
        %6996 = vmatpush1.msra.mxu0 0.0
        %6997 = vmatprep.subr.mxu0 0.0
        %6998 = vmatpush1.msra.mxu0 0.0
        %6999 = vmatprep.subr.mxu0 0.0
        %7000 = vmatpush1.msra.mxu0 0.0
        %7001 = vmatprep.subr.mxu0 0.0
        %7002 = vmatpush1.msra.mxu0 0.0
        %7003 = vmatprep.mubr.f32.mxu0 0.0
        %7004 = vmatmul.mubr.f32.gmra.mrb[0].mxu0 %v6014
        %v7005 = vpop.f32.mrb[0].mxu0
        %v7006 = vadd.f32 %v6010, %v7005
        %v7007 = vpop.f32.mrb[0].mxu0
        %v7008 = vadd.f32 %v6010, %v7007
        %7009 = vdwg.mxu0
        %7010 = vmatprep.subr.mxu0 %v5896
        %7011 = vmatpush1.msra.mxu0 %v5895
        %7012 = vmatprep.subr.mxu0 %v5928
        %7013 = vmatpush1.msra.mxu0 %v5927
        %7014 = vmatprep.subr.mxu0 0.0
        %7015 = vmatpush1.msra.mxu0 0.0
        %7016 = vmatprep.subr.mxu0 0.0
        %7017 = vmatpush1.msra.mxu0 0.0
        %7018 = vmatprep.subr.mxu0 0.0
        %7019 = vmatpush1.msra.mxu0 0.0
        %7020 = vmatprep.subr.mxu0 0.0
        %7021 = vmatpush1.msra.mxu0 0.0
        %7022 = vmatprep.subr.mxu0 0.0
        %7023 = vmatpush1.msra.mxu0 0.0
        %7024 = vmatprep.subr.mxu0 0.0
        %7025 = vmatpush1.msra.mxu0 0.0
        %7026 = vmatprep.subr.mxu0 0.0
        %7027 = vmatpush1.msra.mxu0 0.0
        %7028 = vmatprep.subr.mxu0 0.0
        %7029 = vmatpush1.msra.mxu0 0.0
        %7030 = vmatprep.subr.mxu0 0.0
        %7031 = vmatpush1.msra.mxu0 0.0
        %7032 = vmatprep.subr.mxu0 0.0
        %7033 = vmatpush1.msra.mxu0 0.0
        %7034 = vmatprep.subr.mxu0 0.0
        %7035 = vmatpush1.msra.mxu0 0.0
        %7036 = vmatprep.subr.mxu0 0.0
        %7037 = vmatpush1.msra.mxu0 0.0
        %7038 = vmatprep.subr.mxu0 0.0
        %7039 = vmatpush1.msra.mxu0 0.0
        %7040 = vmatprep.subr.mxu0 0.0
        %7041 = vmatpush1.msra.mxu0 0.0
        %7042 = vmatprep.subr.mxu0 0.0
        %7043 = vmatpush1.msra.mxu0 0.0
        %7044 = vmatprep.subr.mxu0 0.0
        %7045 = vmatpush1.msra.mxu0 0.0
        %7046 = vmatprep.subr.mxu0 0.0
        %7047 = vmatpush1.msra.mxu0 0.0
        %7048 = vmatprep.subr.mxu0 0.0
        %7049 = vmatpush1.msra.mxu0 0.0
        %7050 = vmatprep.subr.mxu0 0.0
        %7051 = vmatpush1.msra.mxu0 0.0
        %7052 = vmatprep.subr.mxu0 0.0
        %7053 = vmatpush1.msra.mxu0 0.0
        %7054 = vmatprep.subr.mxu0 0.0
        %7055 = vmatpush1.msra.mxu0 0.0
        %7056 = vmatprep.subr.mxu0 0.0
        %7057 = vmatpush1.msra.mxu0 0.0
        %7058 = vmatprep.subr.mxu0 0.0
        %7059 = vmatpush1.msra.mxu0 0.0
        %7060 = vmatprep.subr.mxu0 0.0
        %7061 = vmatpush1.msra.mxu0 0.0
        %7062 = vmatprep.subr.mxu0 0.0
        %7063 = vmatpush1.msra.mxu0 0.0
        %7064 = vmatprep.subr.mxu0 0.0
        %7065 = vmatpush1.msra.mxu0 0.0
        %7066 = vmatprep.subr.mxu0 0.0
        %7067 = vmatpush1.msra.mxu0 0.0
        %7068 = vmatprep.subr.mxu0 0.0
        %7069 = vmatpush1.msra.mxu0 0.0
        %7070 = vmatprep.subr.mxu0 0.0
        %7071 = vmatpush1.msra.mxu0 0.0
        %7072 = vmatprep.subr.mxu0 0.0
        %7073 = vmatpush1.msra.mxu0 0.0
        %7074 = vmatprep.mubr.f32.mxu0 0.0
        %7075 = vmatmul.mubr.f32.gmra.mrb[0].mxu0 %v6014
        %v7076 = vpop.f32.mrb[0].mxu0
        %v7077 = vadd.f32 %v6010, %v7076
        %v7078 = vpop.f32.mrb[0].mxu0
        %v7079 = vadd.f32 %v6010, %v7078
        %7080 = vdwg.mxu0
        %7081 = vmatprep.subr.mxu0 %v5898
        %7082 = vmatpush1.msra.mxu0 %v5897
        %7083 = vmatprep.subr.mxu0 %v5930
        %7084 = vmatpush1.msra.mxu0 %v5929
        %7085 = vmatprep.subr.mxu0 0.0
        %7086 = vmatpush1.msra.mxu0 0.0
        %7087 = vmatprep.subr.mxu0 0.0
        %7088 = vmatpush1.msra.mxu0 0.0
        %7089 = vmatprep.subr.mxu0 0.0
        %7090 = vmatpush1.msra.mxu0 0.0
        %7091 = vmatprep.subr.mxu0 0.0
        %7092 = vmatpush1.msra.mxu0 0.0
        %7093 = vmatprep.subr.mxu0 0.0
        %7094 = vmatpush1.msra.mxu0 0.0
        %7095 = vmatprep.subr.mxu0 0.0
        %7096 = vmatpush1.msra.mxu0 0.0
        %7097 = vmatprep.subr.mxu0 0.0
        %7098 = vmatpush1.msra.mxu0 0.0
        %7099 = vmatprep.subr.mxu0 0.0
        %7100 = vmatpush1.msra.mxu0 0.0
        %7101 = vmatprep.subr.mxu0 0.0
        %7102 = vmatpush1.msra.mxu0 0.0
        %7103 = vmatprep.subr.mxu0 0.0
        %7104 = vmatpush1.msra.mxu0 0.0
        %7105 = vmatprep.subr.mxu0 0.0
        %7106 = vmatpush1.msra.mxu0 0.0
        %7107 = vmatprep.subr.mxu0 0.0
        %7108 = vmatpush1.msra.mxu0 0.0
        %7109 = vmatprep.subr.mxu0 0.0
        %7110 = vmatpush1.msra.mxu0 0.0
        %7111 = vmatprep.subr.mxu0 0.0
        %7112 = vmatpush1.msra.mxu0 0.0
        %7113 = vmatprep.subr.mxu0 0.0
        %7114 = vmatpush1.msra.mxu0 0.0
        %7115 = vmatprep.subr.mxu0 0.0
        %7116 = vmatpush1.msra.mxu0 0.0
        %7117 = vmatprep.subr.mxu0 0.0
        %7118 = vmatpush1.msra.mxu0 0.0
        %7119 = vmatprep.subr.mxu0 0.0
        %7120 = vmatpush1.msra.mxu0 0.0
        %7121 = vmatprep.subr.mxu0 0.0
        %7122 = vmatpush1.msra.mxu0 0.0
        %7123 = vmatprep.subr.mxu0 0.0
        %7124 = vmatpush1.msra.mxu0 0.0
        %7125 = vmatprep.subr.mxu0 0.0
        %7126 = vmatpush1.msra.mxu0 0.0
        %7127 = vmatprep.subr.mxu0 0.0
        %7128 = vmatpush1.msra.mxu0 0.0
        %7129 = vmatprep.subr.mxu0 0.0
        %7130 = vmatpush1.msra.mxu0 0.0
        %7131 = vmatprep.subr.mxu0 0.0
        %7132 = vmatpush1.msra.mxu0 0.0
        %7133 = vmatprep.subr.mxu0 0.0
        %7134 = vmatpush1.msra.mxu0 0.0
        %7135 = vmatprep.subr.mxu0 0.0
        %7136 = vmatpush1.msra.mxu0 0.0
        %7137 = vmatprep.subr.mxu0 0.0
        %7138 = vmatpush1.msra.mxu0 0.0
        %7139 = vmatprep.subr.mxu0 0.0
        %7140 = vmatpush1.msra.mxu0 0.0
        %7141 = vmatprep.subr.mxu0 0.0
        %7142 = vmatpush1.msra.mxu0 0.0
        %7143 = vmatprep.subr.mxu0 0.0
        %7144 = vmatpush1.msra.mxu0 0.0
        %7145 = vmatprep.mubr.f32.mxu0 0.0
        %7146 = vmatmul.mubr.f32.gmra.mrb[0].mxu0 %v6014
        %v7147 = vpop.f32.mrb[0].mxu0
        %v7148 = vadd.f32 %v6010, %v7147
        %v7149 = vpop.f32.mrb[0].mxu0
        %v7150 = vadd.f32 %v6010, %v7149
        %7151 = vdwg.mxu0
        %7152 = vmatprep.subr.mxu0 %v5850
        %7153 = vmatpush1.xpose.msra.mxu0 %v5849
        %7154 = vmatprep.subr.mxu0 %v5852
        %7155 = vmatpush1.xpose.msra.mxu0 %v5851
        %7156 = vmatprep.subr.mxu0 0.0
        %7157 = vmatpush1.xpose.msra.mxu0 0.0
        %7158 = vmatprep.subr.mxu0 0.0
        %7159 = vmatpush1.xpose.msra.mxu0 0.0
        %7160 = vmatprep.subr.mxu0 0.0
        %7161 = vmatpush1.xpose.msra.mxu0 0.0
        %7162 = vmatprep.subr.mxu0 0.0
        %7163 = vmatpush1.xpose.msra.mxu0 0.0
        %7164 = vmatprep.subr.mxu0 0.0
        %7165 = vmatpush1.xpose.msra.mxu0 0.0
        %7166 = vmatprep.subr.mxu0 0.0
        %7167 = vmatpush1.xpose.msra.mxu0 0.0
        %7168 = vmatprep.subr.mxu0 0.0
        %7169 = vmatpush1.xpose.msra.mxu0 0.0
        %7170 = vmatprep.subr.mxu0 0.0
        %7171 = vmatpush1.xpose.msra.mxu0 0.0
        %7172 = vmatprep.subr.mxu0 0.0
        %7173 = vmatpush1.xpose.msra.mxu0 0.0
        %7174 = vmatprep.subr.mxu0 0.0
        %7175 = vmatpush1.xpose.msra.mxu0 0.0
        %7176 = vmatprep.subr.mxu0 0.0
        %7177 = vmatpush1.xpose.msra.mxu0 0.0
        %7178 = vmatprep.subr.mxu0 0.0
        %7179 = vmatpush1.xpose.msra.mxu0 0.0
        %7180 = vmatprep.subr.mxu0 0.0
        %7181 = vmatpush1.xpose.msra.mxu0 0.0
        %7182 = vmatprep.subr.mxu0 0.0
        %7183 = vmatpush1.xpose.msra.mxu0 0.0
        %7184 = vmatprep.subr.mxu0 0.0
        %7185 = vmatpush1.xpose.msra.mxu0 0.0
        %7186 = vmatprep.subr.mxu0 0.0
        %7187 = vmatpush1.xpose.msra.mxu0 0.0
        %7188 = vmatprep.subr.mxu0 0.0
        %7189 = vmatpush1.xpose.msra.mxu0 0.0
        %7190 = vmatprep.subr.mxu0 0.0
        %7191 = vmatpush1.xpose.msra.mxu0 0.0
        %7192 = vmatprep.subr.mxu0 0.0
        %7193 = vmatpush1.xpose.msra.mxu0 0.0
        %7194 = vmatprep.subr.mxu0 0.0
        %7195 = vmatpush1.xpose.msra.mxu0 0.0
        %7196 = vmatprep.subr.mxu0 0.0
        %7197 = vmatpush1.xpose.msra.mxu0 0.0
        %7198 = vmatprep.subr.mxu0 0.0
        %7199 = vmatpush1.xpose.msra.mxu0 0.0
        %7200 = vmatprep.subr.mxu0 0.0
        %7201 = vmatpush1.xpose.msra.mxu0 0.0
        %7202 = vmatprep.subr.mxu0 0.0
        %7203 = vmatpush1.xpose.msra.mxu0 0.0
        %7204 = vmatprep.subr.mxu0 0.0
        %7205 = vmatpush1.xpose.msra.mxu0 0.0
        %7206 = vmatprep.subr.mxu0 0.0
        %7207 = vmatpush1.xpose.msra.mxu0 0.0
        %7208 = vmatprep.subr.mxu0 0.0
        %7209 = vmatpush1.xpose.msra.mxu0 0.0
        %7210 = vmatprep.subr.mxu0 0.0
        %7211 = vmatpush1.xpose.msra.mxu0 0.0
        %7212 = vmatprep.subr.mxu0 0.0
        %7213 = vmatpush1.xpose.msra.mxu0 0.0
        %7214 = vmatprep.subr.mxu0 0.0
        %7215 = vmatpush1.xpose.msra.mxu0 0.0
        %7216 = vmatprep.mubr.f32.mxu0 %v5934
        %7217 = vmatmul.mubr.f32.gmra.mrb[0].mxu0 %v5933
        %v7218 = vpop.f32.mrb[0].mxu0
        %v7219 = vadd.f32 0.0, %v7218
        %v7220 = vpop.f32.mrb[0].mxu0
        %7221 = vdwg.mxu0
        %v7223 = vsel %vm6012, %v7219, 0
        %7225 = vmatprep.subr.mxu0 %v5868
        %7226 = vmatpush1.msra.mxu0 %v5867
        %7227 = vmatprep.subr.mxu0 %v5900
        %7228 = vmatpush1.msra.mxu0 %v5899
        %7229 = vmatprep.subr.mxu0 0.0
        %7230 = vmatpush1.msra.mxu0 0.0
        %7231 = vmatprep.subr.mxu0 0.0
        %7232 = vmatpush1.msra.mxu0 0.0
        %7233 = vmatprep.subr.mxu0 0.0
        %7234 = vmatpush1.msra.mxu0 0.0
        %7235 = vmatprep.subr.mxu0 0.0
        %7236 = vmatpush1.msra.mxu0 0.0
        %7237 = vmatprep.subr.mxu0 0.0
        %7238 = vmatpush1.msra.mxu0 0.0
        %7239 = vmatprep.subr.mxu0 0.0
        %7240 = vmatpush1.msra.mxu0 0.0
        %7241 = vmatprep.subr.mxu0 0.0
        %7242 = vmatpush1.msra.mxu0 0.0
        %7243 = vmatprep.subr.mxu0 0.0
        %7244 = vmatpush1.msra.mxu0 0.0
        %7245 = vmatprep.subr.mxu0 0.0
        %7246 = vmatpush1.msra.mxu0 0.0
        %7247 = vmatprep.subr.mxu0 0.0
        %7248 = vmatpush1.msra.mxu0 0.0
        %7249 = vmatprep.subr.mxu0 0.0
        %7250 = vmatpush1.msra.mxu0 0.0
        %7251 = vmatprep.subr.mxu0 0.0
        %7252 = vmatpush1.msra.mxu0 0.0
        %7253 = vmatprep.subr.mxu0 0.0
        %7254 = vmatpush1.msra.mxu0 0.0
        %7255 = vmatprep.subr.mxu0 0.0
        %7256 = vmatpush1.msra.mxu0 0.0
        %7257 = vmatprep.subr.mxu0 0.0
        %7258 = vmatpush1.msra.mxu0 0.0
        %7259 = vmatprep.subr.mxu0 0.0
        %7260 = vmatpush1.msra.mxu0 0.0
        %7261 = vmatprep.subr.mxu0 0.0
        %7262 = vmatpush1.msra.mxu0 0.0
        %7263 = vmatprep.subr.mxu0 0.0
        %7264 = vmatpush1.msra.mxu0 0.0
        %7265 = vmatprep.subr.mxu0 0.0
        %7266 = vmatpush1.msra.mxu0 0.0
        %7267 = vmatprep.subr.mxu0 0.0
        %7268 = vmatpush1.msra.mxu0 0.0
        %7269 = vmatprep.subr.mxu0 0.0
        %7270 = vmatpush1.msra.mxu0 0.0
        %7271 = vmatprep.subr.mxu0 0.0
        %7272 = vmatpush1.msra.mxu0 0.0
        %7273 = vmatprep.subr.mxu0 0.0
        %7274 = vmatpush1.msra.mxu0 0.0
        %7275 = vmatprep.subr.mxu0 0.0
        %7276 = vmatpush1.msra.mxu0 0.0
        %7277 = vmatprep.subr.mxu0 0.0
        %7278 = vmatpush1.msra.mxu0 0.0
        %7279 = vmatprep.subr.mxu0 0.0
        %7280 = vmatpush1.msra.mxu0 0.0
        %7281 = vmatprep.subr.mxu0 0.0
        %7282 = vmatpush1.msra.mxu0 0.0
        %7283 = vmatprep.subr.mxu0 0.0
        %7284 = vmatpush1.msra.mxu0 0.0
        %7285 = vmatprep.subr.mxu0 0.0
        %7286 = vmatpush1.msra.mxu0 0.0
        %7287 = vmatprep.subr.mxu0 0.0
        %7288 = vmatpush1.msra.mxu0 0.0
        %7289 = vmatprep.mubr.f32.mxu0 0.0
        %7290 = vmatmul.mubr.f32.gmra.mrb[0].mxu0 %v7223
        %v7291 = vpop.f32.mrb[0].mxu0
        %v7292 = vadd.f32 %v6010, %v7291
        %v7293 = vpop.f32.mrb[0].mxu0
        %v7294 = vadd.f32 %v6010, %v7293
        %7295 = vdwg.mxu0
        %7296 = vmatprep.subr.mxu0 %v5870
        %7297 = vmatpush1.msra.mxu0 %v5869
        %7298 = vmatprep.subr.mxu0 %v5902
        %7299 = vmatpush1.msra.mxu0 %v5901
        %7300 = vmatprep.subr.mxu0 0.0
        %7301 = vmatpush1.msra.mxu0 0.0
        %7302 = vmatprep.subr.mxu0 0.0
        %7303 = vmatpush1.msra.mxu0 0.0
        %7304 = vmatprep.subr.mxu0 0.0
        %7305 = vmatpush1.msra.mxu0 0.0
        %7306 = vmatprep.subr.mxu0 0.0
        %7307 = vmatpush1.msra.mxu0 0.0
        %7308 = vmatprep.subr.mxu0 0.0
        %7309 = vmatpush1.msra.mxu0 0.0
        %7310 = vmatprep.subr.mxu0 0.0
        %7311 = vmatpush1.msra.mxu0 0.0
        %7312 = vmatprep.subr.mxu0 0.0
        %7313 = vmatpush1.msra.mxu0 0.0
        %7314 = vmatprep.subr.mxu0 0.0
        %7315 = vmatpush1.msra.mxu0 0.0
        %7316 = vmatprep.subr.mxu0 0.0
        %7317 = vmatpush1.msra.mxu0 0.0
        %7318 = vmatprep.subr.mxu0 0.0
        %7319 = vmatpush1.msra.mxu0 0.0
        %7320 = vmatprep.subr.mxu0 0.0
        %7321 = vmatpush1.msra.mxu0 0.0
        %7322 = vmatprep.subr.mxu0 0.0
        %7323 = vmatpush1.msra.mxu0 0.0
        %7324 = vmatprep.subr.mxu0 0.0
        %7325 = vmatpush1.msra.mxu0 0.0
        %7326 = vmatprep.subr.mxu0 0.0
        %7327 = vmatpush1.msra.mxu0 0.0
        %7328 = vmatprep.subr.mxu0 0.0
        %7329 = vmatpush1.msra.mxu0 0.0
        %7330 = vmatprep.subr.mxu0 0.0
        %7331 = vmatpush1.msra.mxu0 0.0
        %7332 = vmatprep.subr.mxu0 0.0
        %7333 = vmatpush1.msra.mxu0 0.0
        %7334 = vmatprep.subr.mxu0 0.0
        %7335 = vmatpush1.msra.mxu0 0.0
        %7336 = vmatprep.subr.mxu0 0.0
        %7337 = vmatpush1.msra.mxu0 0.0
        %7338 = vmatprep.subr.mxu0 0.0
        %7339 = vmatpush1.msra.mxu0 0.0
        %7340 = vmatprep.subr.mxu0 0.0
        %7341 = vmatpush1.msra.mxu0 0.0
        %7342 = vmatprep.subr.mxu0 0.0
        %7343 = vmatpush1.msra.mxu0 0.0
        %7344 = vmatprep.subr.mxu0 0.0
        %7345 = vmatpush1.msra.mxu0 0.0
        %7346 = vmatprep.subr.mxu0 0.0
        %7347 = vmatpush1.msra.mxu0 0.0
        %7348 = vmatprep.subr.mxu0 0.0
        %7349 = vmatpush1.msra.mxu0 0.0
        %7350 = vmatprep.subr.mxu0 0.0
        %7351 = vmatpush1.msra.mxu0 0.0
        %7352 = vmatprep.subr.mxu0 0.0
        %7353 = vmatpush1.msra.mxu0 0.0
        %7354 = vmatprep.subr.mxu0 0.0
        %7355 = vmatpush1.msra.mxu0 0.0
        %7356 = vmatprep.subr.mxu0 0.0
        %7357 = vmatpush1.msra.mxu0 0.0
        %7358 = vmatprep.subr.mxu0 0.0
        %7359 = vmatpush1.msra.mxu0 0.0
        %7360 = vmatprep.mubr.f32.mxu0 0.0
        %7361 = vmatmul.mubr.f32.gmra.mrb[0].mxu0 %v7223
        %v7362 = vpop.f32.mrb[0].mxu0
        %v7363 = vadd.f32 %v6010, %v7362
        %v7364 = vpop.f32.mrb[0].mxu0
        %v7365 = vadd.f32 %v6010, %v7364
        %7366 = vdwg.mxu0
        %7367 = vmatprep.subr.mxu0 %v5872
        %7368 = vmatpush1.msra.mxu0 %v5871
        %7369 = vmatprep.subr.mxu0 %v5904
        %7370 = vmatpush1.msra.mxu0 %v5903
        %7371 = vmatprep.subr.mxu0 0.0
        %7372 = vmatpush1.msra.mxu0 0.0
        %7373 = vmatprep.subr.mxu0 0.0
        %7374 = vmatpush1.msra.mxu0 0.0
        %7375 = vmatprep.subr.mxu0 0.0
        %7376 = vmatpush1.msra.mxu0 0.0
        %7377 = vmatprep.subr.mxu0 0.0
        %7378 = vmatpush1.msra.mxu0 0.0
        %7379 = vmatprep.subr.mxu0 0.0
        %7380 = vmatpush1.msra.mxu0 0.0
        %7381 = vmatprep.subr.mxu0 0.0
        %7382 = vmatpush1.msra.mxu0 0.0
        %7383 = vmatprep.subr.mxu0 0.0
        %7384 = vmatpush1.msra.mxu0 0.0
        %7385 = vmatprep.subr.mxu0 0.0
        %7386 = vmatpush1.msra.mxu0 0.0
        %7387 = vmatprep.subr.mxu0 0.0
        %7388 = vmatpush1.msra.mxu0 0.0
        %7389 = vmatprep.subr.mxu0 0.0
        %7390 = vmatpush1.msra.mxu0 0.0
        %7391 = vmatprep.subr.mxu0 0.0
        %7392 = vmatpush1.msra.mxu0 0.0
        %7393 = vmatprep.subr.mxu0 0.0
        %7394 = vmatpush1.msra.mxu0 0.0
        %7395 = vmatprep.subr.mxu0 0.0
        %7396 = vmatpush1.msra.mxu0 0.0
        %7397 = vmatprep.subr.mxu0 0.0
        %7398 = vmatpush1.msra.mxu0 0.0
        %7399 = vmatprep.subr.mxu0 0.0
        %7400 = vmatpush1.msra.mxu0 0.0
        %7401 = vmatprep.subr.mxu0 0.0
        %7402 = vmatpush1.msra.mxu0 0.0
        %7403 = vmatprep.subr.mxu0 0.0
        %7404 = vmatpush1.msra.mxu0 0.0
        %7405 = vmatprep.subr.mxu0 0.0
        %7406 = vmatpush1.msra.mxu0 0.0
        %7407 = vmatprep.subr.mxu0 0.0
        %7408 = vmatpush1.msra.mxu0 0.0
        %7409 = vmatprep.subr.mxu0 0.0
        %7410 = vmatpush1.msra.mxu0 0.0
        %7411 = vmatprep.subr.mxu0 0.0
        %7412 = vmatpush1.msra.mxu0 0.0
        %7413 = vmatprep.subr.mxu0 0.0
        %7414 = vmatpush1.msra.mxu0 0.0
        %7415 = vmatprep.subr.mxu0 0.0
        %7416 = vmatpush1.msra.mxu0 0.0
        %7417 = vmatprep.subr.mxu0 0.0
        %7418 = vmatpush1.msra.mxu0 0.0
        %7419 = vmatprep.subr.mxu0 0.0
        %7420 = vmatpush1.msra.mxu0 0.0
        %7421 = vmatprep.subr.mxu0 0.0
        %7422 = vmatpush1.msra.mxu0 0.0
        %7423 = vmatprep.subr.mxu0 0.0
        %7424 = vmatpush1.msra.mxu0 0.0
        %7425 = vmatprep.subr.mxu0 0.0
        %7426 = vmatpush1.msra.mxu0 0.0
        %7427 = vmatprep.subr.mxu0 0.0
        %7428 = vmatpush1.msra.mxu0 0.0
        %7429 = vmatprep.subr.mxu0 0.0
        %7430 = vmatpush1.msra.mxu0 0.0
        %7431 = vmatprep.mubr.f32.mxu0 0.0
        %7432 = vmatmul.mubr.f32.gmra.mrb[0].mxu0 %v7223
        %v7433 = vpop.f32.mrb[0].mxu0
        %v7434 = vadd.f32 %v6010, %v7433
        %v7435 = vpop.f32.mrb[0].mxu0
        %v7436 = vadd.f32 %v6010, %v7435
        %7437 = vdwg.mxu0
        %7438 = vmatprep.subr.mxu0 %v5874
        %7439 = vmatpush1.msra.mxu0 %v5873
        %7440 = vmatprep.subr.mxu0 %v5906
        %7441 = vmatpush1.msra.mxu0 %v5905
        %7442 = vmatprep.subr.mxu0 0.0
        %7443 = vmatpush1.msra.mxu0 0.0
        %7444 = vmatprep.subr.mxu0 0.0
        %7445 = vmatpush1.msra.mxu0 0.0
        %7446 = vmatprep.subr.mxu0 0.0
        %7447 = vmatpush1.msra.mxu0 0.0
        %7448 = vmatprep.subr.mxu0 0.0
        %7449 = vmatpush1.msra.mxu0 0.0
        %7450 = vmatprep.subr.mxu0 0.0
        %7451 = vmatpush1.msra.mxu0 0.0
        %7452 = vmatprep.subr.mxu0 0.0
        %7453 = vmatpush1.msra.mxu0 0.0
        %7454 = vmatprep.subr.mxu0 0.0
        %7455 = vmatpush1.msra.mxu0 0.0
        %7456 = vmatprep.subr.mxu0 0.0
        %7457 = vmatpush1.msra.mxu0 0.0
        %7458 = vmatprep.subr.mxu0 0.0
        %7459 = vmatpush1.msra.mxu0 0.0
        %7460 = vmatprep.subr.mxu0 0.0
        %7461 = vmatpush1.msra.mxu0 0.0
        %7462 = vmatprep.subr.mxu0 0.0
        %7463 = vmatpush1.msra.mxu0 0.0
        %7464 = vmatprep.subr.mxu0 0.0
        %7465 = vmatpush1.msra.mxu0 0.0
        %7466 = vmatprep.subr.mxu0 0.0
        %7467 = vmatpush1.msra.mxu0 0.0
        %7468 = vmatprep.subr.mxu0 0.0
        %7469 = vmatpush1.msra.mxu0 0.0
        %7470 = vmatprep.subr.mxu0 0.0
        %7471 = vmatpush1.msra.mxu0 0.0
        %7472 = vmatprep.subr.mxu0 0.0
        %7473 = vmatpush1.msra.mxu0 0.0
        %7474 = vmatprep.subr.mxu0 0.0
        %7475 = vmatpush1.msra.mxu0 0.0
        %7476 = vmatprep.subr.mxu0 0.0
        %7477 = vmatpush1.msra.mxu0 0.0
        %7478 = vmatprep.subr.mxu0 0.0
        %7479 = vmatpush1.msra.mxu0 0.0
        %7480 = vmatprep.subr.mxu0 0.0
        %7481 = vmatpush1.msra.mxu0 0.0
        %7482 = vmatprep.subr.mxu0 0.0
        %7483 = vmatpush1.msra.mxu0 0.0
        %7484 = vmatprep.subr.mxu0 0.0
        %7485 = vmatpush1.msra.mxu0 0.0
        %7486 = vmatprep.subr.mxu0 0.0
        %7487 = vmatpush1.msra.mxu0 0.0
        %7488 = vmatprep.subr.mxu0 0.0
        %7489 = vmatpush1.msra.mxu0 0.0
        %7490 = vmatprep.subr.mxu0 0.0
        %7491 = vmatpush1.msra.mxu0 0.0
        %7492 = vmatprep.subr.mxu0 0.0
        %7493 = vmatpush1.msra.mxu0 0.0
        %7494 = vmatprep.subr.mxu0 0.0
        %7495 = vmatpush1.msra.mxu0 0.0
        %7496 = vmatprep.subr.mxu0 0.0
        %7497 = vmatpush1.msra.mxu0 0.0
        %7498 = vmatprep.subr.mxu0 0.0
        %7499 = vmatpush1.msra.mxu0 0.0
        %7500 = vmatprep.subr.mxu0 0.0
        %7501 = vmatpush1.msra.mxu0 0.0
        %7502 = vmatprep.mubr.f32.mxu0 0.0
        %7503 = vmatmul.mubr.f32.gmra.mrb[0].mxu0 %v7223
        %v7504 = vpop.f32.mrb[0].mxu0
        %v7505 = vadd.f32 %v6010, %v7504
        %v7506 = vpop.f32.mrb[0].mxu0
        %v7507 = vadd.f32 %v6010, %v7506
        %7508 = vdwg.mxu0
        %7509 = vmatprep.subr.mxu0 %v5876
        %7510 = vmatpush1.msra.mxu0 %v5875
        %7511 = vmatprep.subr.mxu0 %v5908
        %7512 = vmatpush1.msra.mxu0 %v5907
        %7513 = vmatprep.subr.mxu0 0.0
        %7514 = vmatpush1.msra.mxu0 0.0
        %7515 = vmatprep.subr.mxu0 0.0
        %7516 = vmatpush1.msra.mxu0 0.0
        %7517 = vmatprep.subr.mxu0 0.0
        %7518 = vmatpush1.msra.mxu0 0.0
        %7519 = vmatprep.subr.mxu0 0.0
        %7520 = vmatpush1.msra.mxu0 0.0
        %7521 = vmatprep.subr.mxu0 0.0
        %7522 = vmatpush1.msra.mxu0 0.0
        %7523 = vmatprep.subr.mxu0 0.0
        %7524 = vmatpush1.msra.mxu0 0.0
        %7525 = vmatprep.subr.mxu0 0.0
        %7526 = vmatpush1.msra.mxu0 0.0
        %7527 = vmatprep.subr.mxu0 0.0
        %7528 = vmatpush1.msra.mxu0 0.0
        %7529 = vmatprep.subr.mxu0 0.0
        %7530 = vmatpush1.msra.mxu0 0.0
        %7531 = vmatprep.subr.mxu0 0.0
        %7532 = vmatpush1.msra.mxu0 0.0
        %7533 = vmatprep.subr.mxu0 0.0
        %7534 = vmatpush1.msra.mxu0 0.0
        %7535 = vmatprep.subr.mxu0 0.0
        %7536 = vmatpush1.msra.mxu0 0.0
        %7537 = vmatprep.subr.mxu0 0.0
        %7538 = vmatpush1.msra.mxu0 0.0
        %7539 = vmatprep.subr.mxu0 0.0
        %7540 = vmatpush1.msra.mxu0 0.0
        %7541 = vmatprep.subr.mxu0 0.0
        %7542 = vmatpush1.msra.mxu0 0.0
        %7543 = vmatprep.subr.mxu0 0.0
        %7544 = vmatpush1.msra.mxu0 0.0
        %7545 = vmatprep.subr.mxu0 0.0
        %7546 = vmatpush1.msra.mxu0 0.0
        %7547 = vmatprep.subr.mxu0 0.0
        %7548 = vmatpush1.msra.mxu0 0.0
        %7549 = vmatprep.subr.mxu0 0.0
        %7550 = vmatpush1.msra.mxu0 0.0
        %7551 = vmatprep.subr.mxu0 0.0
        %7552 = vmatpush1.msra.mxu0 0.0
        %7553 = vmatprep.subr.mxu0 0.0
        %7554 = vmatpush1.msra.mxu0 0.0
        %7555 = vmatprep.subr.mxu0 0.0
        %7556 = vmatpush1.msra.mxu0 0.0
        %7557 = vmatprep.subr.mxu0 0.0
        %7558 = vmatpush1.msra.mxu0 0.0
        %7559 = vmatprep.subr.mxu0 0.0
        %7560 = vmatpush1.msra.mxu0 0.0
        %7561 = vmatprep.subr.mxu0 0.0
        %7562 = vmatpush1.msra.mxu0 0.0
        %7563 = vmatprep.subr.mxu0 0.0
        %7564 = vmatpush1.msra.mxu0 0.0
        %7565 = vmatprep.subr.mxu0 0.0
        %7566 = vmatpush1.msra.mxu0 0.0
        %7567 = vmatprep.subr.mxu0 0.0
        %7568 = vmatpush1.msra.mxu0 0.0
        %7569 = vmatprep.subr.mxu0 0.0
        %7570 = vmatpush1.msra.mxu0 0.0
        %7571 = vmatprep.subr.mxu0 0.0
        %7572 = vmatpush1.msra.mxu0 0.0
        %7573 = vmatprep.mubr.f32.mxu0 0.0
        %7574 = vmatmul.mubr.f32.gmra.mrb[0].mxu0 %v7223
        %v7575 = vpop.f32.mrb[0].mxu0
        %v7576 = vadd.f32 %v6010, %v7575
        %v7577 = vpop.f32.mrb[0].mxu0
        %v7578 = vadd.f32 %v6010, %v7577
        %7579 = vdwg.mxu0
        %7580 = vmatprep.subr.mxu0 %v5878
        %7581 = vmatpush1.msra.mxu0 %v5877
        %7582 = vmatprep.subr.mxu0 %v5910
        %7583 = vmatpush1.msra.mxu0 %v5909
        %7584 = vmatprep.subr.mxu0 0.0
        %7585 = vmatpush1.msra.mxu0 0.0
        %7586 = vmatprep.subr.mxu0 0.0
        %7587 = vmatpush1.msra.mxu0 0.0
        %7588 = vmatprep.subr.mxu0 0.0
        %7589 = vmatpush1.msra.mxu0 0.0
        %7590 = vmatprep.subr.mxu0 0.0
        %7591 = vmatpush1.msra.mxu0 0.0
        %7592 = vmatprep.subr.mxu0 0.0
        %7593 = vmatpush1.msra.mxu0 0.0
        %7594 = vmatprep.subr.mxu0 0.0
        %7595 = vmatpush1.msra.mxu0 0.0
        %7596 = vmatprep.subr.mxu0 0.0
        %7597 = vmatpush1.msra.mxu0 0.0
        %7598 = vmatprep.subr.mxu0 0.0
        %7599 = vmatpush1.msra.mxu0 0.0
        %7600 = vmatprep.subr.mxu0 0.0
        %7601 = vmatpush1.msra.mxu0 0.0
        %7602 = vmatprep.subr.mxu0 0.0
        %7603 = vmatpush1.msra.mxu0 0.0
        %7604 = vmatprep.subr.mxu0 0.0
        %7605 = vmatpush1.msra.mxu0 0.0
        %7606 = vmatprep.subr.mxu0 0.0
        %7607 = vmatpush1.msra.mxu0 0.0
        %7608 = vmatprep.subr.mxu0 0.0
        %7609 = vmatpush1.msra.mxu0 0.0
        %7610 = vmatprep.subr.mxu0 0.0
        %7611 = vmatpush1.msra.mxu0 0.0
        %7612 = vmatprep.subr.mxu0 0.0
        %7613 = vmatpush1.msra.mxu0 0.0
        %7614 = vmatprep.subr.mxu0 0.0
        %7615 = vmatpush1.msra.mxu0 0.0
        %7616 = vmatprep.subr.mxu0 0.0
        %7617 = vmatpush1.msra.mxu0 0.0
        %7618 = vmatprep.subr.mxu0 0.0
        %7619 = vmatpush1.msra.mxu0 0.0
        %7620 = vmatprep.subr.mxu0 0.0
        %7621 = vmatpush1.msra.mxu0 0.0
        %7622 = vmatprep.subr.mxu0 0.0
        %7623 = vmatpush1.msra.mxu0 0.0
        %7624 = vmatprep.subr.mxu0 0.0
        %7625 = vmatpush1.msra.mxu0 0.0
        %7626 = vmatprep.subr.mxu0 0.0
        %7627 = vmatpush1.msra.mxu0 0.0
        %7628 = vmatprep.subr.mxu0 0.0
        %7629 = vmatpush1.msra.mxu0 0.0
        %7630 = vmatprep.subr.mxu0 0.0
        %7631 = vmatpush1.msra.mxu0 0.0
        %7632 = vmatprep.subr.mxu0 0.0
        %7633 = vmatpush1.msra.mxu0 0.0
        %7634 = vmatprep.subr.mxu0 0.0
        %7635 = vmatpush1.msra.mxu0 0.0
        %7636 = vmatprep.subr.mxu0 0.0
        %7637 = vmatpush1.msra.mxu0 0.0
        %7638 = vmatprep.subr.mxu0 0.0
        %7639 = vmatpush1.msra.mxu0 0.0
        %7640 = vmatprep.subr.mxu0 0.0
        %7641 = vmatpush1.msra.mxu0 0.0
        %7642 = vmatprep.subr.mxu0 0.0
        %7643 = vmatpush1.msra.mxu0 0.0
        %7644 = vmatprep.mubr.f32.mxu0 0.0
        %7645 = vmatmul.mubr.f32.gmra.mrb[0].mxu0 %v7223
        %v7646 = vpop.f32.mrb[0].mxu0
        %v7647 = vadd.f32 %v6010, %v7646
        %v7648 = vpop.f32.mrb[0].mxu0
        %v7649 = vadd.f32 %v6010, %v7648
        %7650 = vdwg.mxu0
        %7651 = vmatprep.subr.mxu0 %v5880
        %7652 = vmatpush1.msra.mxu0 %v5879
        %7653 = vmatprep.subr.mxu0 %v5912
        %7654 = vmatpush1.msra.mxu0 %v5911
        %7655 = vmatprep.subr.mxu0 0.0
        %7656 = vmatpush1.msra.mxu0 0.0
        %7657 = vmatprep.subr.mxu0 0.0
        %7658 = vmatpush1.msra.mxu0 0.0
        %7659 = vmatprep.subr.mxu0 0.0
        %7660 = vmatpush1.msra.mxu0 0.0
        %7661 = vmatprep.subr.mxu0 0.0
        %7662 = vmatpush1.msra.mxu0 0.0
        %7663 = vmatprep.subr.mxu0 0.0
        %7664 = vmatpush1.msra.mxu0 0.0
        %7665 = vmatprep.subr.mxu0 0.0
        %7666 = vmatpush1.msra.mxu0 0.0
        %7667 = vmatprep.subr.mxu0 0.0
        %7668 = vmatpush1.msra.mxu0 0.0
        %7669 = vmatprep.subr.mxu0 0.0
        %7670 = vmatpush1.msra.mxu0 0.0
        %7671 = vmatprep.subr.mxu0 0.0
        %7672 = vmatpush1.msra.mxu0 0.0
        %7673 = vmatprep.subr.mxu0 0.0
        %7674 = vmatpush1.msra.mxu0 0.0
        %7675 = vmatprep.subr.mxu0 0.0
        %7676 = vmatpush1.msra.mxu0 0.0
        %7677 = vmatprep.subr.mxu0 0.0
        %7678 = vmatpush1.msra.mxu0 0.0
        %7679 = vmatprep.subr.mxu0 0.0
        %7680 = vmatpush1.msra.mxu0 0.0
        %7681 = vmatprep.subr.mxu0 0.0
        %7682 = vmatpush1.msra.mxu0 0.0
        %7683 = vmatprep.subr.mxu0 0.0
        %7684 = vmatpush1.msra.mxu0 0.0
        %7685 = vmatprep.subr.mxu0 0.0
        %7686 = vmatpush1.msra.mxu0 0.0
        %7687 = vmatprep.subr.mxu0 0.0
        %7688 = vmatpush1.msra.mxu0 0.0
        %7689 = vmatprep.subr.mxu0 0.0
        %7690 = vmatpush1.msra.mxu0 0.0
        %7691 = vmatprep.subr.mxu0 0.0
        %7692 = vmatpush1.msra.mxu0 0.0
        %7693 = vmatprep.subr.mxu0 0.0
        %7694 = vmatpush1.msra.mxu0 0.0
        %7695 = vmatprep.subr.mxu0 0.0
        %7696 = vmatpush1.msra.mxu0 0.0
        %7697 = vmatprep.subr.mxu0 0.0
        %7698 = vmatpush1.msra.mxu0 0.0
        %7699 = vmatprep.subr.mxu0 0.0
        %7700 = vmatpush1.msra.mxu0 0.0
        %7701 = vmatprep.subr.mxu0 0.0
        %7702 = vmatpush1.msra.mxu0 0.0
        %7703 = vmatprep.subr.mxu0 0.0
        %7704 = vmatpush1.msra.mxu0 0.0
        %7705 = vmatprep.subr.mxu0 0.0
        %7706 = vmatpush1.msra.mxu0 0.0
        %7707 = vmatprep.subr.mxu0 0.0
        %7708 = vmatpush1.msra.mxu0 0.0
        %7709 = vmatprep.subr.mxu0 0.0
        %7710 = vmatpush1.msra.mxu0 0.0
        %7711 = vmatprep.subr.mxu0 0.0
        %7712 = vmatpush1.msra.mxu0 0.0
        %7713 = vmatprep.subr.mxu0 0.0
        %7714 = vmatpush1.msra.mxu0 0.0
        %7715 = vmatprep.mubr.f32.mxu0 0.0
        %7716 = vmatmul.mubr.f32.gmra.mrb[0].mxu0 %v7223
        %v7717 = vpop.f32.mrb[0].mxu0
        %v7718 = vadd.f32 %v6010, %v7717
        %v7719 = vpop.f32.mrb[0].mxu0
        %v7720 = vadd.f32 %v6010, %v7719
        %7721 = vdwg.mxu0
        %7722 = vmatprep.subr.mxu0 %v5882
        %7723 = vmatpush1.msra.mxu0 %v5881
        %7724 = vmatprep.subr.mxu0 %v5914
        %7725 = vmatpush1.msra.mxu0 %v5913
        %7726 = vmatprep.subr.mxu0 0.0
        %7727 = vmatpush1.msra.mxu0 0.0
        %7728 = vmatprep.subr.mxu0 0.0
        %7729 = vmatpush1.msra.mxu0 0.0
        %7730 = vmatprep.subr.mxu0 0.0
        %7731 = vmatpush1.msra.mxu0 0.0
        %7732 = vmatprep.subr.mxu0 0.0
        %7733 = vmatpush1.msra.mxu0 0.0
        %7734 = vmatprep.subr.mxu0 0.0
        %7735 = vmatpush1.msra.mxu0 0.0
        %7736 = vmatprep.subr.mxu0 0.0
        %7737 = vmatpush1.msra.mxu0 0.0
        %7738 = vmatprep.subr.mxu0 0.0
        %7739 = vmatpush1.msra.mxu0 0.0
        %7740 = vmatprep.subr.mxu0 0.0
        %7741 = vmatpush1.msra.mxu0 0.0
        %7742 = vmatprep.subr.mxu0 0.0
        %7743 = vmatpush1.msra.mxu0 0.0
        %7744 = vmatprep.subr.mxu0 0.0
        %7745 = vmatpush1.msra.mxu0 0.0
        %7746 = vmatprep.subr.mxu0 0.0
        %7747 = vmatpush1.msra.mxu0 0.0
        %7748 = vmatprep.subr.mxu0 0.0
        %7749 = vmatpush1.msra.mxu0 0.0
        %7750 = vmatprep.subr.mxu0 0.0
        %7751 = vmatpush1.msra.mxu0 0.0
        %7752 = vmatprep.subr.mxu0 0.0
        %7753 = vmatpush1.msra.mxu0 0.0
        %7754 = vmatprep.subr.mxu0 0.0
        %7755 = vmatpush1.msra.mxu0 0.0
        %7756 = vmatprep.subr.mxu0 0.0
        %7757 = vmatpush1.msra.mxu0 0.0
        %7758 = vmatprep.subr.mxu0 0.0
        %7759 = vmatpush1.msra.mxu0 0.0
        %7760 = vmatprep.subr.mxu0 0.0
        %7761 = vmatpush1.msra.mxu0 0.0
        %7762 = vmatprep.subr.mxu0 0.0
        %7763 = vmatpush1.msra.mxu0 0.0
        %7764 = vmatprep.subr.mxu0 0.0
        %7765 = vmatpush1.msra.mxu0 0.0
        %7766 = vmatprep.subr.mxu0 0.0
        %7767 = vmatpush1.msra.mxu0 0.0
        %7768 = vmatprep.subr.mxu0 0.0
        %7769 = vmatpush1.msra.mxu0 0.0
        %7770 = vmatprep.subr.mxu0 0.0
        %7771 = vmatpush1.msra.mxu0 0.0
        %7772 = vmatprep.subr.mxu0 0.0
        %7773 = vmatpush1.msra.mxu0 0.0
        %7774 = vmatprep.subr.mxu0 0.0
        %7775 = vmatpush1.msra.mxu0 0.0
        %7776 = vmatprep.subr.mxu0 0.0
        %7777 = vmatpush1.msra.mxu0 0.0
        %7778 = vmatprep.subr.mxu0 0.0
        %7779 = vmatpush1.msra.mxu0 0.0
        %7780 = vmatprep.subr.mxu0 0.0
        %7781 = vmatpush1.msra.mxu0 0.0
        %7782 = vmatprep.subr.mxu0 0.0
        %7783 = vmatpush1.msra.mxu0 0.0
        %7784 = vmatprep.subr.mxu0 0.0
        %7785 = vmatpush1.msra.mxu0 0.0
        %7786 = vmatprep.mubr.f32.mxu0 0.0
        %7787 = vmatmul.mubr.f32.gmra.mrb[0].mxu0 %v7223
        %v7788 = vpop.f32.mrb[0].mxu0
        %v7789 = vadd.f32 %v6010, %v7788
        %v7790 = vpop.f32.mrb[0].mxu0
        %v7791 = vadd.f32 %v6010, %v7790
        %7792 = vdwg.mxu0
        %7793 = vmatprep.subr.mxu0 %v5884
        %7794 = vmatpush1.msra.mxu0 %v5883
        %7795 = vmatprep.subr.mxu0 %v5916
        %7796 = vmatpush1.msra.mxu0 %v5915
        %7797 = vmatprep.subr.mxu0 0.0
        %7798 = vmatpush1.msra.mxu0 0.0
        %7799 = vmatprep.subr.mxu0 0.0
        %7800 = vmatpush1.msra.mxu0 0.0
        %7801 = vmatprep.subr.mxu0 0.0
        %7802 = vmatpush1.msra.mxu0 0.0
        %7803 = vmatprep.subr.mxu0 0.0
        %7804 = vmatpush1.msra.mxu0 0.0
        %7805 = vmatprep.subr.mxu0 0.0
        %7806 = vmatpush1.msra.mxu0 0.0
        %7807 = vmatprep.subr.mxu0 0.0
        %7808 = vmatpush1.msra.mxu0 0.0
        %7809 = vmatprep.subr.mxu0 0.0
        %7810 = vmatpush1.msra.mxu0 0.0
        %7811 = vmatprep.subr.mxu0 0.0
        %7812 = vmatpush1.msra.mxu0 0.0
        %7813 = vmatprep.subr.mxu0 0.0
        %7814 = vmatpush1.msra.mxu0 0.0
        %7815 = vmatprep.subr.mxu0 0.0
        %7816 = vmatpush1.msra.mxu0 0.0
        %7817 = vmatprep.subr.mxu0 0.0
        %7818 = vmatpush1.msra.mxu0 0.0
        %7819 = vmatprep.subr.mxu0 0.0
        %7820 = vmatpush1.msra.mxu0 0.0
        %7821 = vmatprep.subr.mxu0 0.0
        %7822 = vmatpush1.msra.mxu0 0.0
        %7823 = vmatprep.subr.mxu0 0.0
        %7824 = vmatpush1.msra.mxu0 0.0
        %7825 = vmatprep.subr.mxu0 0.0
        %7826 = vmatpush1.msra.mxu0 0.0
        %7827 = vmatprep.subr.mxu0 0.0
        %7828 = vmatpush1.msra.mxu0 0.0
        %7829 = vmatprep.subr.mxu0 0.0
        %7830 = vmatpush1.msra.mxu0 0.0
        %7831 = vmatprep.subr.mxu0 0.0
        %7832 = vmatpush1.msra.mxu0 0.0
        %7833 = vmatprep.subr.mxu0 0.0
        %7834 = vmatpush1.msra.mxu0 0.0
        %7835 = vmatprep.subr.mxu0 0.0
        %7836 = vmatpush1.msra.mxu0 0.0
        %7837 = vmatprep.subr.mxu0 0.0
        %7838 = vmatpush1.msra.mxu0 0.0
        %7839 = vmatprep.subr.mxu0 0.0
        %7840 = vmatpush1.msra.mxu0 0.0
        %7841 = vmatprep.subr.mxu0 0.0
        %7842 = vmatpush1.msra.mxu0 0.0
        %7843 = vmatprep.subr.mxu0 0.0
        %7844 = vmatpush1.msra.mxu0 0.0
        %7845 = vmatprep.subr.mxu0 0.0
        %7846 = vmatpush1.msra.mxu0 0.0
        %7847 = vmatprep.subr.mxu0 0.0
        %7848 = vmatpush1.msra.mxu0 0.0
        %7849 = vmatprep.subr.mxu0 0.0
        %7850 = vmatpush1.msra.mxu0 0.0
        %7851 = vmatprep.subr.mxu0 0.0
        %7852 = vmatpush1.msra.mxu0 0.0
        %7853 = vmatprep.subr.mxu0 0.0
        %7854 = vmatpush1.msra.mxu0 0.0
        %7855 = vmatprep.subr.mxu0 0.0
        %7856 = vmatpush1.msra.mxu0 0.0
        %7857 = vmatprep.mubr.f32.mxu0 0.0
        %7858 = vmatmul.mubr.f32.gmra.mrb[0].mxu0 %v7223
        %v7859 = vpop.f32.mrb[0].mxu0
        %v7860 = vadd.f32 %v6010, %v7859
        %v7861 = vpop.f32.mrb[0].mxu0
        %v7862 = vadd.f32 %v6010, %v7861
        %7863 = vdwg.mxu0
        %7864 = vmatprep.subr.mxu0 %v5886
        %7865 = vmatpush1.msra.mxu0 %v5885
        %7866 = vmatprep.subr.mxu0 %v5918
        %7867 = vmatpush1.msra.mxu0 %v5917
        %7868 = vmatprep.subr.mxu0 0.0
        %7869 = vmatpush1.msra.mxu0 0.0
        %7870 = vmatprep.subr.mxu0 0.0
        %7871 = vmatpush1.msra.mxu0 0.0
        %7872 = vmatprep.subr.mxu0 0.0
        %7873 = vmatpush1.msra.mxu0 0.0
        %7874 = vmatprep.subr.mxu0 0.0
        %7875 = vmatpush1.msra.mxu0 0.0
        %7876 = vmatprep.subr.mxu0 0.0
        %7877 = vmatpush1.msra.mxu0 0.0
        %7878 = vmatprep.subr.mxu0 0.0
        %7879 = vmatpush1.msra.mxu0 0.0
        %7880 = vmatprep.subr.mxu0 0.0
        %7881 = vmatpush1.msra.mxu0 0.0
        %7882 = vmatprep.subr.mxu0 0.0
        %7883 = vmatpush1.msra.mxu0 0.0
        %7884 = vmatprep.subr.mxu0 0.0
        %7885 = vmatpush1.msra.mxu0 0.0
        %7886 = vmatprep.subr.mxu0 0.0
        %7887 = vmatpush1.msra.mxu0 0.0
        %7888 = vmatprep.subr.mxu0 0.0
        %7889 = vmatpush1.msra.mxu0 0.0
        %7890 = vmatprep.subr.mxu0 0.0
        %7891 = vmatpush1.msra.mxu0 0.0
        %7892 = vmatprep.subr.mxu0 0.0
        %7893 = vmatpush1.msra.mxu0 0.0
        %7894 = vmatprep.subr.mxu0 0.0
        %7895 = vmatpush1.msra.mxu0 0.0
        %7896 = vmatprep.subr.mxu0 0.0
        %7897 = vmatpush1.msra.mxu0 0.0
        %7898 = vmatprep.subr.mxu0 0.0
        %7899 = vmatpush1.msra.mxu0 0.0
        %7900 = vmatprep.subr.mxu0 0.0
        %7901 = vmatpush1.msra.mxu0 0.0
        %7902 = vmatprep.subr.mxu0 0.0
        %7903 = vmatpush1.msra.mxu0 0.0
        %7904 = vmatprep.subr.mxu0 0.0
        %7905 = vmatpush1.msra.mxu0 0.0
        %7906 = vmatprep.subr.mxu0 0.0
        %7907 = vmatpush1.msra.mxu0 0.0
        %7908 = vmatprep.subr.mxu0 0.0
        %7909 = vmatpush1.msra.mxu0 0.0
        %7910 = vmatprep.subr.mxu0 0.0
        %7911 = vmatpush1.msra.mxu0 0.0
        %7912 = vmatprep.subr.mxu0 0.0
        %7913 = vmatpush1.msra.mxu0 0.0
        %7914 = vmatprep.subr.mxu0 0.0
        %7915 = vmatpush1.msra.mxu0 0.0
        %7916 = vmatprep.subr.mxu0 0.0
        %7917 = vmatpush1.msra.mxu0 0.0
        %7918 = vmatprep.subr.mxu0 0.0
        %7919 = vmatpush1.msra.mxu0 0.0
        %7920 = vmatprep.subr.mxu0 0.0
        %7921 = vmatpush1.msra.mxu0 0.0
        %7922 = vmatprep.subr.mxu0 0.0
        %7923 = vmatpush1.msra.mxu0 0.0
        %7924 = vmatprep.subr.mxu0 0.0
        %7925 = vmatpush1.msra.mxu0 0.0
        %7926 = vmatprep.subr.mxu0 0.0
        %7927 = vmatpush1.msra.mxu0 0.0
        %7928 = vmatprep.mubr.f32.mxu0 0.0
        %7929 = vmatmul.mubr.f32.gmra.mrb[0].mxu0 %v7223
        %v7930 = vpop.f32.mrb[0].mxu0
        %v7931 = vadd.f32 %v6010, %v7930
        %v7932 = vpop.f32.mrb[0].mxu0
        %v7933 = vadd.f32 %v6010, %v7932
        %7934 = vdwg.mxu0
        %7935 = vmatprep.subr.mxu0 %v5888
        %7936 = vmatpush1.msra.mxu0 %v5887
        %7937 = vmatprep.subr.mxu0 %v5920
        %7938 = vmatpush1.msra.mxu0 %v5919
        %7939 = vmatprep.subr.mxu0 0.0
        %7940 = vmatpush1.msra.mxu0 0.0
        %7941 = vmatprep.subr.mxu0 0.0
        %7942 = vmatpush1.msra.mxu0 0.0
        %7943 = vmatprep.subr.mxu0 0.0
        %7944 = vmatpush1.msra.mxu0 0.0
        %7945 = vmatprep.subr.mxu0 0.0
        %7946 = vmatpush1.msra.mxu0 0.0
        %7947 = vmatprep.subr.mxu0 0.0
        %7948 = vmatpush1.msra.mxu0 0.0
        %7949 = vmatprep.subr.mxu0 0.0
        %7950 = vmatpush1.msra.mxu0 0.0
        %7951 = vmatprep.subr.mxu0 0.0
        %7952 = vmatpush1.msra.mxu0 0.0
        %7953 = vmatprep.subr.mxu0 0.0
        %7954 = vmatpush1.msra.mxu0 0.0
        %7955 = vmatprep.subr.mxu0 0.0
        %7956 = vmatpush1.msra.mxu0 0.0
        %7957 = vmatprep.subr.mxu0 0.0
        %7958 = vmatpush1.msra.mxu0 0.0
        %7959 = vmatprep.subr.mxu0 0.0
        %7960 = vmatpush1.msra.mxu0 0.0
        %7961 = vmatprep.subr.mxu0 0.0
        %7962 = vmatpush1.msra.mxu0 0.0
        %7963 = vmatprep.subr.mxu0 0.0
        %7964 = vmatpush1.msra.mxu0 0.0
        %7965 = vmatprep.subr.mxu0 0.0
        %7966 = vmatpush1.msra.mxu0 0.0
        %7967 = vmatprep.subr.mxu0 0.0
        %7968 = vmatpush1.msra.mxu0 0.0
        %7969 = vmatprep.subr.mxu0 0.0
        %7970 = vmatpush1.msra.mxu0 0.0
        %7971 = vmatprep.subr.mxu0 0.0
        %7972 = vmatpush1.msra.mxu0 0.0
        %7973 = vmatprep.subr.mxu0 0.0
        %7974 = vmatpush1.msra.mxu0 0.0
        %7975 = vmatprep.subr.mxu0 0.0
        %7976 = vmatpush1.msra.mxu0 0.0
        %7977 = vmatprep.subr.mxu0 0.0
        %7978 = vmatpush1.msra.mxu0 0.0
        %7979 = vmatprep.subr.mxu0 0.0
        %7980 = vmatpush1.msra.mxu0 0.0
        %7981 = vmatprep.subr.mxu0 0.0
        %7982 = vmatpush1.msra.mxu0 0.0
        %7983 = vmatprep.subr.mxu0 0.0
        %7984 = vmatpush1.msra.mxu0 0.0
        %7985 = vmatprep.subr.mxu0 0.0
        %7986 = vmatpush1.msra.mxu0 0.0
        %7987 = vmatprep.subr.mxu0 0.0
        %7988 = vmatpush1.msra.mxu0 0.0
        %7989 = vmatprep.subr.mxu0 0.0
        %7990 = vmatpush1.msra.mxu0 0.0
        %7991 = vmatprep.subr.mxu0 0.0
        %7992 = vmatpush1.msra.mxu0 0.0
        %7993 = vmatprep.subr.mxu0 0.0
        %7994 = vmatpush1.msra.mxu0 0.0
        %7995 = vmatprep.subr.mxu0 0.0
        %7996 = vmatpush1.msra.mxu0 0.0
        %7997 = vmatprep.subr.mxu0 0.0
        %7998 = vmatpush1.msra.mxu0 0.0
        %7999 = vmatprep.mubr.f32.mxu0 0.0
        %8000 = vmatmul.mubr.f32.gmra.mrb[0].mxu0 %v7223
        %v8001 = vpop.f32.mrb[0].mxu0
        %v8002 = vadd.f32 %v6010, %v8001
        %v8003 = vpop.f32.mrb[0].mxu0
        %v8004 = vadd.f32 %v6010, %v8003
        %8005 = vdwg.mxu0
        %8006 = vmatprep.subr.mxu0 %v5890
        %8007 = vmatpush1.msra.mxu0 %v5889
        %8008 = vmatprep.subr.mxu0 %v5922
        %8009 = vmatpush1.msra.mxu0 %v5921
        %8010 = vmatprep.subr.mxu0 0.0
        %8011 = vmatpush1.msra.mxu0 0.0
        %8012 = vmatprep.subr.mxu0 0.0
        %8013 = vmatpush1.msra.mxu0 0.0
        %8014 = vmatprep.subr.mxu0 0.0
        %8015 = vmatpush1.msra.mxu0 0.0
        %8016 = vmatprep.subr.mxu0 0.0
        %8017 = vmatpush1.msra.mxu0 0.0
        %8018 = vmatprep.subr.mxu0 0.0
        %8019 = vmatpush1.msra.mxu0 0.0
        %8020 = vmatprep.subr.mxu0 0.0
        %8021 = vmatpush1.msra.mxu0 0.0
        %8022 = vmatprep.subr.mxu0 0.0
        %8023 = vmatpush1.msra.mxu0 0.0
        %8024 = vmatprep.subr.mxu0 0.0
        %8025 = vmatpush1.msra.mxu0 0.0
        %8026 = vmatprep.subr.mxu0 0.0
        %8027 = vmatpush1.msra.mxu0 0.0
        %8028 = vmatprep.subr.mxu0 0.0
        %8029 = vmatpush1.msra.mxu0 0.0
        %8030 = vmatprep.subr.mxu0 0.0
        %8031 = vmatpush1.msra.mxu0 0.0
        %8032 = vmatprep.subr.mxu0 0.0
        %8033 = vmatpush1.msra.mxu0 0.0
        %8034 = vmatprep.subr.mxu0 0.0
        %8035 = vmatpush1.msra.mxu0 0.0
        %8036 = vmatprep.subr.mxu0 0.0
        %8037 = vmatpush1.msra.mxu0 0.0
        %8038 = vmatprep.subr.mxu0 0.0
        %8039 = vmatpush1.msra.mxu0 0.0
        %8040 = vmatprep.subr.mxu0 0.0
        %8041 = vmatpush1.msra.mxu0 0.0
        %8042 = vmatprep.subr.mxu0 0.0
        %8043 = vmatpush1.msra.mxu0 0.0
        %8044 = vmatprep.subr.mxu0 0.0
        %8045 = vmatpush1.msra.mxu0 0.0
        %8046 = vmatprep.subr.mxu0 0.0
        %8047 = vmatpush1.msra.mxu0 0.0
        %8048 = vmatprep.subr.mxu0 0.0
        %8049 = vmatpush1.msra.mxu0 0.0
        %8050 = vmatprep.subr.mxu0 0.0
        %8051 = vmatpush1.msra.mxu0 0.0
        %8052 = vmatprep.subr.mxu0 0.0
        %8053 = vmatpush1.msra.mxu0 0.0
        %8054 = vmatprep.subr.mxu0 0.0
        %8055 = vmatpush1.msra.mxu0 0.0
        %8056 = vmatprep.subr.mxu0 0.0
        %8057 = vmatpush1.msra.mxu0 0.0
        %8058 = vmatprep.subr.mxu0 0.0
        %8059 = vmatpush1.msra.mxu0 0.0
        %8060 = vmatprep.subr.mxu0 0.0
        %8061 = vmatpush1.msra.mxu0 0.0
        %8062 = vmatprep.subr.mxu0 0.0
        %8063 = vmatpush1.msra.mxu0 0.0
        %8064 = vmatprep.subr.mxu0 0.0
        %8065 = vmatpush1.msra.mxu0 0.0
        %8066 = vmatprep.subr.mxu0 0.0
        %8067 = vmatpush1.msra.mxu0 0.0
        %8068 = vmatprep.subr.mxu0 0.0
        %8069 = vmatpush1.msra.mxu0 0.0
        %8070 = vmatprep.mubr.f32.mxu0 0.0
        %8071 = vmatmul.mubr.f32.gmra.mrb[0].mxu0 %v7223
        %v8072 = vpop.f32.mrb[0].mxu0
        %v8073 = vadd.f32 %v6010, %v8072
        %v8074 = vpop.f32.mrb[0].mxu0
        %v8075 = vadd.f32 %v6010, %v8074
        %8076 = vdwg.mxu0
        %8077 = vmatprep.subr.mxu0 %v5892
        %8078 = vmatpush1.msra.mxu0 %v5891
        %8079 = vmatprep.subr.mxu0 %v5924
        %8080 = vmatpush1.msra.mxu0 %v5923
        %8081 = vmatprep.subr.mxu0 0.0
        %8082 = vmatpush1.msra.mxu0 0.0
        %8083 = vmatprep.subr.mxu0 0.0
        %8084 = vmatpush1.msra.mxu0 0.0
        %8085 = vmatprep.subr.mxu0 0.0
        %8086 = vmatpush1.msra.mxu0 0.0
        %8087 = vmatprep.subr.mxu0 0.0
        %8088 = vmatpush1.msra.mxu0 0.0
        %8089 = vmatprep.subr.mxu0 0.0
        %8090 = vmatpush1.msra.mxu0 0.0
        %8091 = vmatprep.subr.mxu0 0.0
        %8092 = vmatpush1.msra.mxu0 0.0
        %8093 = vmatprep.subr.mxu0 0.0
        %8094 = vmatpush1.msra.mxu0 0.0
        %8095 = vmatprep.subr.mxu0 0.0
        %8096 = vmatpush1.msra.mxu0 0.0
        %8097 = vmatprep.subr.mxu0 0.0
        %8098 = vmatpush1.msra.mxu0 0.0
        %8099 = vmatprep.subr.mxu0 0.0
        %8100 = vmatpush1.msra.mxu0 0.0
        %8101 = vmatprep.subr.mxu0 0.0
        %8102 = vmatpush1.msra.mxu0 0.0
        %8103 = vmatprep.subr.mxu0 0.0
        %8104 = vmatpush1.msra.mxu0 0.0
        %8105 = vmatprep.subr.mxu0 0.0
        %8106 = vmatpush1.msra.mxu0 0.0
        %8107 = vmatprep.subr.mxu0 0.0
        %8108 = vmatpush1.msra.mxu0 0.0
        %8109 = vmatprep.subr.mxu0 0.0
        %8110 = vmatpush1.msra.mxu0 0.0
        %8111 = vmatprep.subr.mxu0 0.0
        %8112 = vmatpush1.msra.mxu0 0.0
        %8113 = vmatprep.subr.mxu0 0.0
        %8114 = vmatpush1.msra.mxu0 0.0
        %8115 = vmatprep.subr.mxu0 0.0
        %8116 = vmatpush1.msra.mxu0 0.0
        %8117 = vmatprep.subr.mxu0 0.0
        %8118 = vmatpush1.msra.mxu0 0.0
        %8119 = vmatprep.subr.mxu0 0.0
        %8120 = vmatpush1.msra.mxu0 0.0
        %8121 = vmatprep.subr.mxu0 0.0
        %8122 = vmatpush1.msra.mxu0 0.0
        %8123 = vmatprep.subr.mxu0 0.0
        %8124 = vmatpush1.msra.mxu0 0.0
        %8125 = vmatprep.subr.mxu0 0.0
        %8126 = vmatpush1.msra.mxu0 0.0
        %8127 = vmatprep.subr.mxu0 0.0
        %8128 = vmatpush1.msra.mxu0 0.0
        %8129 = vmatprep.subr.mxu0 0.0
        %8130 = vmatpush1.msra.mxu0 0.0
        %8131 = vmatprep.subr.mxu0 0.0
        %8132 = vmatpush1.msra.mxu0 0.0
        %8133 = vmatprep.subr.mxu0 0.0
        %8134 = vmatpush1.msra.mxu0 0.0
        %8135 = vmatprep.subr.mxu0 0.0
        %8136 = vmatpush1.msra.mxu0 0.0
        %8137 = vmatprep.subr.mxu0 0.0
        %8138 = vmatpush1.msra.mxu0 0.0
        %8139 = vmatprep.subr.mxu0 0.0
        %8140 = vmatpush1.msra.mxu0 0.0
        %8141 = vmatprep.mubr.f32.mxu0 0.0
        %8142 = vmatmul.mubr.f32.gmra.mrb[0].mxu0 %v7223
        %v8143 = vpop.f32.mrb[0].mxu0
        %v8144 = vadd.f32 %v6010, %v8143
        %v8145 = vpop.f32.mrb[0].mxu0
        %v8146 = vadd.f32 %v6010, %v8145
        %8147 = vdwg.mxu0
        %8148 = vmatprep.subr.mxu0 %v5894
        %8149 = vmatpush1.msra.mxu0 %v5893
        %8150 = vmatprep.subr.mxu0 %v5926
        %8151 = vmatpush1.msra.mxu0 %v5925
        %8152 = vmatprep.subr.mxu0 0.0
        %8153 = vmatpush1.msra.mxu0 0.0
        %8154 = vmatprep.subr.mxu0 0.0
        %8155 = vmatpush1.msra.mxu0 0.0
        %8156 = vmatprep.subr.mxu0 0.0
        %8157 = vmatpush1.msra.mxu0 0.0
        %8158 = vmatprep.subr.mxu0 0.0
        %8159 = vmatpush1.msra.mxu0 0.0
        %8160 = vmatprep.subr.mxu0 0.0
        %8161 = vmatpush1.msra.mxu0 0.0
        %8162 = vmatprep.subr.mxu0 0.0
        %8163 = vmatpush1.msra.mxu0 0.0
        %8164 = vmatprep.subr.mxu0 0.0
        %8165 = vmatpush1.msra.mxu0 0.0
        %8166 = vmatprep.subr.mxu0 0.0
        %8167 = vmatpush1.msra.mxu0 0.0
        %8168 = vmatprep.subr.mxu0 0.0
        %8169 = vmatpush1.msra.mxu0 0.0
        %8170 = vmatprep.subr.mxu0 0.0
        %8171 = vmatpush1.msra.mxu0 0.0
        %8172 = vmatprep.subr.mxu0 0.0
        %8173 = vmatpush1.msra.mxu0 0.0
        %8174 = vmatprep.subr.mxu0 0.0
        %8175 = vmatpush1.msra.mxu0 0.0
        %8176 = vmatprep.subr.mxu0 0.0
        %8177 = vmatpush1.msra.mxu0 0.0
        %8178 = vmatprep.subr.mxu0 0.0
        %8179 = vmatpush1.msra.mxu0 0.0
        %8180 = vmatprep.subr.mxu0 0.0
        %8181 = vmatpush1.msra.mxu0 0.0
        %8182 = vmatprep.subr.mxu0 0.0
        %8183 = vmatpush1.msra.mxu0 0.0
        %8184 = vmatprep.subr.mxu0 0.0
        %8185 = vmatpush1.msra.mxu0 0.0
        %8186 = vmatprep.subr.mxu0 0.0
        %8187 = vmatpush1.msra.mxu0 0.0
        %8188 = vmatprep.subr.mxu0 0.0
        %8189 = vmatpush1.msra.mxu0 0.0
        %8190 = vmatprep.subr.mxu0 0.0
        %8191 = vmatpush1.msra.mxu0 0.0
        %8192 = vmatprep.subr.mxu0 0.0
        %8193 = vmatpush1.msra.mxu0 0.0
        %8194 = vmatprep.subr.mxu0 0.0
        %8195 = vmatpush1.msra.mxu0 0.0
        %8196 = vmatprep.subr.mxu0 0.0
        %8197 = vmatpush1.msra.mxu0 0.0
        %8198 = vmatprep.subr.mxu0 0.0
        %8199 = vmatpush1.msra.mxu0 0.0
        %8200 = vmatprep.subr.mxu0 0.0
        %8201 = vmatpush1.msra.mxu0 0.0
        %8202 = vmatprep.subr.mxu0 0.0
        %8203 = vmatpush1.msra.mxu0 0.0
        %8204 = vmatprep.subr.mxu0 0.0
        %8205 = vmatpush1.msra.mxu0 0.0
        %8206 = vmatprep.subr.mxu0 0.0
        %8207 = vmatpush1.msra.mxu0 0.0
        %8208 = vmatprep.subr.mxu0 0.0
        %8209 = vmatpush1.msra.mxu0 0.0
        %8210 = vmatprep.subr.mxu0 0.0
        %8211 = vmatpush1.msra.mxu0 0.0
        %8212 = vmatprep.mubr.f32.mxu0 0.0
        %8213 = vmatmul.mubr.f32.gmra.mrb[0].mxu0 %v7223
        %v8214 = vpop.f32.mrb[0].mxu0
        %v8215 = vadd.f32 %v6010, %v8214
        %v8216 = vpop.f32.mrb[0].mxu0
        %v8217 = vadd.f32 %v6010, %v8216
        %8218 = vdwg.mxu0
        %8219 = vmatprep.subr.mxu0 %v5896
        %8220 = vmatpush1.msra.mxu0 %v5895
        %8221 = vmatprep.subr.mxu0 %v5928
        %8222 = vmatpush1.msra.mxu0 %v5927
        %8223 = vmatprep.subr.mxu0 0.0
        %8224 = vmatpush1.msra.mxu0 0.0
        %8225 = vmatprep.subr.mxu0 0.0
        %8226 = vmatpush1.msra.mxu0 0.0
        %8227 = vmatprep.subr.mxu0 0.0
        %8228 = vmatpush1.msra.mxu0 0.0
        %8229 = vmatprep.subr.mxu0 0.0
        %8230 = vmatpush1.msra.mxu0 0.0
        %8231 = vmatprep.subr.mxu0 0.0
        %8232 = vmatpush1.msra.mxu0 0.0
        %8233 = vmatprep.subr.mxu0 0.0
        %8234 = vmatpush1.msra.mxu0 0.0
        %8235 = vmatprep.subr.mxu0 0.0
        %8236 = vmatpush1.msra.mxu0 0.0
        %8237 = vmatprep.subr.mxu0 0.0
        %8238 = vmatpush1.msra.mxu0 0.0
        %8239 = vmatprep.subr.mxu0 0.0
        %8240 = vmatpush1.msra.mxu0 0.0
        %8241 = vmatprep.subr.mxu0 0.0
        %8242 = vmatpush1.msra.mxu0 0.0
        %8243 = vmatprep.subr.mxu0 0.0
        %8244 = vmatpush1.msra.mxu0 0.0
        %8245 = vmatprep.subr.mxu0 0.0
        %8246 = vmatpush1.msra.mxu0 0.0
        %8247 = vmatprep.subr.mxu0 0.0
        %8248 = vmatpush1.msra.mxu0 0.0
        %8249 = vmatprep.subr.mxu0 0.0
        %8250 = vmatpush1.msra.mxu0 0.0
        %8251 = vmatprep.subr.mxu0 0.0
        %8252 = vmatpush1.msra.mxu0 0.0
        %8253 = vmatprep.subr.mxu0 0.0
        %8254 = vmatpush1.msra.mxu0 0.0
        %8255 = vmatprep.subr.mxu0 0.0
        %8256 = vmatpush1.msra.mxu0 0.0
        %8257 = vmatprep.subr.mxu0 0.0
        %8258 = vmatpush1.msra.mxu0 0.0
        %8259 = vmatprep.subr.mxu0 0.0
        %8260 = vmatpush1.msra.mxu0 0.0
        %8261 = vmatprep.subr.mxu0 0.0
        %8262 = vmatpush1.msra.mxu0 0.0
        %8263 = vmatprep.subr.mxu0 0.0
        %8264 = vmatpush1.msra.mxu0 0.0
        %8265 = vmatprep.subr.mxu0 0.0
        %8266 = vmatpush1.msra.mxu0 0.0
        %8267 = vmatprep.subr.mxu0 0.0
        %8268 = vmatpush1.msra.mxu0 0.0
        %8269 = vmatprep.subr.mxu0 0.0
        %8270 = vmatpush1.msra.mxu0 0.0
        %8271 = vmatprep.subr.mxu0 0.0
        %8272 = vmatpush1.msra.mxu0 0.0
        %8273 = vmatprep.subr.mxu0 0.0
        %8274 = vmatpush1.msra.mxu0 0.0
        %8275 = vmatprep.subr.mxu0 0.0
        %8276 = vmatpush1.msra.mxu0 0.0
        %8277 = vmatprep.subr.mxu0 0.0
        %8278 = vmatpush1.msra.mxu0 0.0
        %8279 = vmatprep.subr.mxu0 0.0
        %8280 = vmatpush1.msra.mxu0 0.0
        %8281 = vmatprep.subr.mxu0 0.0
        %8282 = vmatpush1.msra.mxu0 0.0
        %8283 = vmatprep.mubr.f32.mxu0 0.0
        %8284 = vmatmul.mubr.f32.gmra.mrb[0].mxu0 %v7223
        %v8285 = vpop.f32.mrb[0].mxu0
        %v8286 = vadd.f32 %v6010, %v8285
        %v8287 = vpop.f32.mrb[0].mxu0
        %v8288 = vadd.f32 %v6010, %v8287
        %8289 = vdwg.mxu0
        %8290 = vmatprep.subr.mxu0 %v5898
        %8291 = vmatpush1.msra.mxu0 %v5897
        %8292 = vmatprep.subr.mxu0 %v5930
        %8293 = vmatpush1.msra.mxu0 %v5929
        %8294 = vmatprep.subr.mxu0 0.0
        %8295 = vmatpush1.msra.mxu0 0.0
        %8296 = vmatprep.subr.mxu0 0.0
        %8297 = vmatpush1.msra.mxu0 0.0
        %8298 = vmatprep.subr.mxu0 0.0
        %8299 = vmatpush1.msra.mxu0 0.0
        %8300 = vmatprep.subr.mxu0 0.0
        %8301 = vmatpush1.msra.mxu0 0.0
        %8302 = vmatprep.subr.mxu0 0.0
        %8303 = vmatpush1.msra.mxu0 0.0
        %8304 = vmatprep.subr.mxu0 0.0
        %8305 = vmatpush1.msra.mxu0 0.0
        %8306 = vmatprep.subr.mxu0 0.0
        %8307 = vmatpush1.msra.mxu0 0.0
        %8308 = vmatprep.subr.mxu0 0.0
        %8309 = vmatpush1.msra.mxu0 0.0
        %8310 = vmatprep.subr.mxu0 0.0
        %8311 = vmatpush1.msra.mxu0 0.0
        %8312 = vmatprep.subr.mxu0 0.0
        %8313 = vmatpush1.msra.mxu0 0.0
        %8314 = vmatprep.subr.mxu0 0.0
        %8315 = vmatpush1.msra.mxu0 0.0
        %8316 = vmatprep.subr.mxu0 0.0
        %8317 = vmatpush1.msra.mxu0 0.0
        %8318 = vmatprep.subr.mxu0 0.0
        %8319 = vmatpush1.msra.mxu0 0.0
        %8320 = vmatprep.subr.mxu0 0.0
        %8321 = vmatpush1.msra.mxu0 0.0
        %8322 = vmatprep.subr.mxu0 0.0
        %8323 = vmatpush1.msra.mxu0 0.0
        %8324 = vmatprep.subr.mxu0 0.0
        %8325 = vmatpush1.msra.mxu0 0.0
        %8326 = vmatprep.subr.mxu0 0.0
        %8327 = vmatpush1.msra.mxu0 0.0
        %8328 = vmatprep.subr.mxu0 0.0
        %8329 = vmatpush1.msra.mxu0 0.0
        %8330 = vmatprep.subr.mxu0 0.0
        %8331 = vmatpush1.msra.mxu0 0.0
        %8332 = vmatprep.subr.mxu0 0.0
        %8333 = vmatpush1.msra.mxu0 0.0
        %8334 = vmatprep.subr.mxu0 0.0
        %8335 = vmatpush1.msra.mxu0 0.0
        %8336 = vmatprep.subr.mxu0 0.0
        %8337 = vmatpush1.msra.mxu0 0.0
        %8338 = vmatprep.subr.mxu0 0.0
        %8339 = vmatpush1.msra.mxu0 0.0
        %8340 = vmatprep.subr.mxu0 0.0
        %8341 = vmatpush1.msra.mxu0 0.0
        %8342 = vmatprep.subr.mxu0 0.0
        %8343 = vmatpush1.msra.mxu0 0.0
        %8344 = vmatprep.subr.mxu0 0.0
        %8345 = vmatpush1.msra.mxu0 0.0
        %8346 = vmatprep.subr.mxu0 0.0
        %8347 = vmatpush1.msra.mxu0 0.0
        %8348 = vmatprep.subr.mxu0 0.0
        %8349 = vmatpush1.msra.mxu0 0.0
        %8350 = vmatprep.subr.mxu0 0.0
        %8351 = vmatpush1.msra.mxu0 0.0
        %8352 = vmatprep.subr.mxu0 0.0
        %8353 = vmatpush1.msra.mxu0 0.0
        %8354 = vmatprep.mubr.f32.mxu0 0.0
        %8355 = vmatmul.mubr.f32.gmra.mrb[0].mxu0 %v7223
        %v8356 = vpop.f32.mrb[0].mxu0
        %v8357 = vadd.f32 %v6010, %v8356
        %v8358 = vpop.f32.mrb[0].mxu0
        %v8359 = vadd.f32 %v6010, %v8358
        %8360 = vdwg.mxu0
        %vm8361 = vcmask 1040384
        %v8362 = vsel %vm8361, %v6083, inf
        %v8363 = vsel %vm8361, %v6085, inf
        %v8364 = vsel %vm8361, %v6154, inf
        %v8365 = vsel %vm8361, %v6156, inf
        %v8366 = vsel %vm8361, %v6225, inf
        %v8367 = vmin.f32 %v8362, %v8366
        %v8368 = vsel %vm8361, %v6227, inf
        %v8369 = vmin.f32 %v8363, %v8368
        %v8370 = vsel %vm8361, %v6296, inf
        %v8371 = vmin.f32 %v8364, %v8370
        %v8372 = vsel %vm8361, %v6298, inf
        %v8373 = vmin.f32 %v8365, %v8372
        %v8374 = vsel %vm8361, %v6367, inf
        %v8375 = vmin.f32 %v8367, %v8374
        %v8376 = vsel %vm8361, %v6369, inf
        %v8377 = vmin.f32 %v8369, %v8376
        %v8378 = vsel %vm8361, %v6438, inf
        %v8379 = vmin.f32 %v8371, %v8378
        %v8380 = vsel %vm8361, %v6440, inf
        %v8381 = vmin.f32 %v8373, %v8380
        %v8382 = vsel %vm8361, %v6509, inf
        %v8383 = vmin.f32 %v8375, %v8382
        %v8384 = vsel %vm8361, %v6511, inf
        %v8385 = vmin.f32 %v8377, %v8384
        %v8386 = vsel %vm8361, %v6580, inf
        %v8387 = vmin.f32 %v8379, %v8386
        %v8388 = vsel %vm8361, %v6582, inf
        %v8389 = vmin.f32 %v8381, %v8388
        %v8390 = vsel %vm8361, %v6651, inf
        %v8391 = vmin.f32 %v8383, %v8390
        %v8392 = vsel %vm8361, %v6653, inf
        %v8393 = vmin.f32 %v8385, %v8392
        %v8394 = vsel %vm8361, %v6722, inf
        %v8395 = vmin.f32 %v8387, %v8394
        %v8396 = vsel %vm8361, %v6724, inf
        %v8397 = vmin.f32 %v8389, %v8396
        %v8398 = vsel %vm8361, %v6793, inf
        %v8399 = vmin.f32 %v8391, %v8398
        %v8400 = vsel %vm8361, %v6795, inf
        %v8401 = vmin.f32 %v8393, %v8400
        %v8402 = vsel %vm8361, %v6864, inf
        %v8403 = vmin.f32 %v8395, %v8402
        %v8404 = vsel %vm8361, %v6866, inf
        %v8405 = vmin.f32 %v8397, %v8404
        %v8406 = vsel %vm8361, %v6935, inf
        %v8407 = vmin.f32 %v8399, %v8406
        %v8408 = vsel %vm8361, %v6937, inf
        %v8409 = vmin.f32 %v8401, %v8408
        %v8410 = vsel %vm8361, %v7006, inf
        %v8411 = vmin.f32 %v8403, %v8410
        %v8412 = vsel %vm8361, %v7008, inf
        %v8413 = vmin.f32 %v8405, %v8412
        %v8414 = vsel %vm8361, %v7077, inf
        %v8415 = vmin.f32 %v8407, %v8414
        %v8416 = vsel %vm8361, %v7079, inf
        %v8417 = vmin.f32 %v8409, %v8416
        %v8418 = vsel %vm8361, %v7148, inf
        %v8419 = vmin.f32 %v8411, %v8418
        %v8420 = vsel %vm8361, %v7150, inf
        %v8421 = vmin.f32 %v8413, %v8420
        %v8422 = vmin.f32 %v8415, %v8417
        %v8423 = vmin.f32 %v8419, %v8421
        %v8424 = vmin.f32 %v8422, %v8423
        %8425 = vmin.xlane.f32.xlu0 %v8424
        %v8426 = vpop.xlane.xlu0 %8425
        %v8427 = vsel %vm8361, %v6083, -inf
        %v8428 = vsel %vm8361, %v6085, -inf
        %v8429 = vsel %vm8361, %v6154, -inf
        %v8430 = vsel %vm8361, %v6156, -inf
        %v8431 = vsel %vm8361, %v6225, -inf
        %v8432 = vmax.f32 %v8427, %v8431
        %v8433 = vsel %vm8361, %v6227, -inf
        %v8434 = vmax.f32 %v8428, %v8433
        %v8435 = vsel %vm8361, %v6296, -inf
        %v8436 = vmax.f32 %v8429, %v8435
        %v8437 = vsel %vm8361, %v6298, -inf
        %v8438 = vmax.f32 %v8430, %v8437
        %v8439 = vsel %vm8361, %v6367, -inf
        %v8440 = vmax.f32 %v8432, %v8439
        %v8441 = vsel %vm8361, %v6369, -inf
        %v8442 = vmax.f32 %v8434, %v8441
        %v8443 = vsel %vm8361, %v6438, -inf
        %v8444 = vmax.f32 %v8436, %v8443
        %v8445 = vsel %vm8361, %v6440, -inf
        %v8446 = vmax.f32 %v8438, %v8445
        %v8447 = vsel %vm8361, %v6509, -inf
        %v8448 = vmax.f32 %v8440, %v8447
        %v8449 = vsel %vm8361, %v6511, -inf
        %v8450 = vmax.f32 %v8442, %v8449
        %v8451 = vsel %vm8361, %v6580, -inf
        %v8452 = vmax.f32 %v8444, %v8451
        %v8453 = vsel %vm8361, %v6582, -inf
        %v8454 = vmax.f32 %v8446, %v8453
        %v8455 = vsel %vm8361, %v6651, -inf
        %v8456 = vmax.f32 %v8448, %v8455
        %v8457 = vsel %vm8361, %v6653, -inf
        %v8458 = vmax.f32 %v8450, %v8457
        %v8459 = vsel %vm8361, %v6722, -inf
        %v8460 = vmax.f32 %v8452, %v8459
        %v8461 = vsel %vm8361, %v6724, -inf
        %v8462 = vmax.f32 %v8454, %v8461
        %v8463 = vsel %vm8361, %v6793, -inf
        %v8464 = vmax.f32 %v8456, %v8463
        %v8465 = vsel %vm8361, %v6795, -inf
        %v8466 = vmax.f32 %v8458, %v8465
        %v8467 = vsel %vm8361, %v6864, -inf
        %v8468 = vmax.f32 %v8460, %v8467
        %v8469 = vsel %vm8361, %v6866, -inf
        %v8470 = vmax.f32 %v8462, %v8469
        %v8471 = vsel %vm8361, %v6935, -inf
        %v8472 = vmax.f32 %v8464, %v8471
        %v8473 = vsel %vm8361, %v6937, -inf
        %v8474 = vmax.f32 %v8466, %v8473
        %v8475 = vsel %vm8361, %v7006, -inf
        %v8476 = vmax.f32 %v8468, %v8475
        %v8477 = vsel %vm8361, %v7008, -inf
        %v8478 = vmax.f32 %v8470, %v8477
        %v8479 = vsel %vm8361, %v7077, -inf
        %v8480 = vmax.f32 %v8472, %v8479
        %v8481 = vsel %vm8361, %v7079, -inf
        %v8482 = vmax.f32 %v8474, %v8481
        %v8483 = vsel %vm8361, %v7148, -inf
        %v8484 = vmax.f32 %v8476, %v8483
        %v8485 = vsel %vm8361, %v7150, -inf
        %v8486 = vmax.f32 %v8478, %v8485
        %v8487 = vmax.f32 %v8480, %v8482
        %v8488 = vmax.f32 %v8484, %v8486
        %v8489 = vmax.f32 %v8487, %v8488
        %8490 = vmax.xlane.f32.xlu0 %v8489
        %v8491 = vpop.xlane.xlu0 %8490
        %v8492 = vsel %vm8361, %v7292, inf
        %v8493 = vsel %vm8361, %v7294, inf
        %v8494 = vsel %vm8361, %v7363, inf
        %v8495 = vsel %vm8361, %v7365, inf
        %v8496 = vsel %vm8361, %v7434, inf
        %v8497 = vmin.f32 %v8492, %v8496
        %v8498 = vsel %vm8361, %v7436, inf
        %v8499 = vmin.f32 %v8493, %v8498
        %v8500 = vsel %vm8361, %v7505, inf
        %v8501 = vmin.f32 %v8494, %v8500
        %v8502 = vsel %vm8361, %v7507, inf
        %v8503 = vmin.f32 %v8495, %v8502
        %v8504 = vsel %vm8361, %v7576, inf
        %v8505 = vmin.f32 %v8497, %v8504
        %v8506 = vsel %vm8361, %v7578, inf
        %v8507 = vmin.f32 %v8499, %v8506
        %v8508 = vsel %vm8361, %v7647, inf
        %v8509 = vmin.f32 %v8501, %v8508
        %v8510 = vsel %vm8361, %v7649, inf
        %v8511 = vmin.f32 %v8503, %v8510
        %v8512 = vsel %vm8361, %v7718, inf
        %v8513 = vmin.f32 %v8505, %v8512
        %v8514 = vsel %vm8361, %v7720, inf
        %v8515 = vmin.f32 %v8507, %v8514
        %v8516 = vsel %vm8361, %v7789, inf
        %v8517 = vmin.f32 %v8509, %v8516
        %v8518 = vsel %vm8361, %v7791, inf
        %v8519 = vmin.f32 %v8511, %v8518
        %v8520 = vsel %vm8361, %v7860, inf
        %v8521 = vmin.f32 %v8513, %v8520
        %v8522 = vsel %vm8361, %v7862, inf
        %v8523 = vmin.f32 %v8515, %v8522
        %v8524 = vsel %vm8361, %v7931, inf
        %v8525 = vmin.f32 %v8517, %v8524
        %v8526 = vsel %vm8361, %v7933, inf
        %v8527 = vmin.f32 %v8519, %v8526
        %v8528 = vsel %vm8361, %v8002, inf
        %v8529 = vmin.f32 %v8521, %v8528
        %v8530 = vsel %vm8361, %v8004, inf
        %v8531 = vmin.f32 %v8523, %v8530
        %v8532 = vsel %vm8361, %v8073, inf
        %v8533 = vmin.f32 %v8525, %v8532
        %v8534 = vsel %vm8361, %v8075, inf
        %v8535 = vmin.f32 %v8527, %v8534
        %v8536 = vsel %vm8361, %v8144, inf
        %v8537 = vmin.f32 %v8529, %v8536
        %v8538 = vsel %vm8361, %v8146, inf
        %v8539 = vmin.f32 %v8531, %v8538
        %v8540 = vsel %vm8361, %v8215, inf
        %v8541 = vmin.f32 %v8533, %v8540
        %v8542 = vsel %vm8361, %v8217, inf
        %v8543 = vmin.f32 %v8535, %v8542
        %v8544 = vsel %vm8361, %v8286, inf
        %v8545 = vmin.f32 %v8537, %v8544
        %v8546 = vsel %vm8361, %v8288, inf
        %v8547 = vmin.f32 %v8539, %v8546
        %v8548 = vsel %vm8361, %v8357, inf
        %v8549 = vmin.f32 %v8541, %v8548
        %v8550 = vsel %vm8361, %v8359, inf
        %v8551 = vmin.f32 %v8543, %v8550
        %v8552 = vmin.f32 %v8545, %v8547
        %v8553 = vmin.f32 %v8549, %v8551
        %v8554 = vmin.f32 %v8552, %v8553
        %8555 = vmin.xlane.f32.xlu0 %v8554
        %v8556 = vpop.xlane.xlu0 %8555
        %v8557 = vmin.f32 %v8426, %v8556
        %v8558 = vsel %vm8361, %v7292, -inf
        %v8559 = vsel %vm8361, %v7294, -inf
        %v8560 = vsel %vm8361, %v7363, -inf
        %v8561 = vsel %vm8361, %v7365, -inf
        %v8562 = vsel %vm8361, %v7434, -inf
        %v8563 = vmax.f32 %v8558, %v8562
        %v8564 = vsel %vm8361, %v7436, -inf
        %v8565 = vmax.f32 %v8559, %v8564
        %v8566 = vsel %vm8361, %v7505, -inf
        %v8567 = vmax.f32 %v8560, %v8566
        %v8568 = vsel %vm8361, %v7507, -inf
        %v8569 = vmax.f32 %v8561, %v8568
        %v8570 = vsel %vm8361, %v7576, -inf
        %v8571 = vmax.f32 %v8563, %v8570
        %v8572 = vsel %vm8361, %v7578, -inf
        %v8573 = vmax.f32 %v8565, %v8572
        %v8574 = vsel %vm8361, %v7647, -inf
        %v8575 = vmax.f32 %v8567, %v8574
        %v8576 = vsel %vm8361, %v7649, -inf
        %v8577 = vmax.f32 %v8569, %v8576
        %v8578 = vsel %vm8361, %v7718, -inf
        %v8579 = vmax.f32 %v8571, %v8578
        %v8580 = vsel %vm8361, %v7720, -inf
        %v8581 = vmax.f32 %v8573, %v8580
        %v8582 = vsel %vm8361, %v7789, -inf
        %v8583 = vmax.f32 %v8575, %v8582
        %v8584 = vsel %vm8361, %v7791, -inf
        %v8585 = vmax.f32 %v8577, %v8584
        %v8586 = vsel %vm8361, %v7860, -inf
        %v8587 = vmax.f32 %v8579, %v8586
        %v8588 = vsel %vm8361, %v7862, -inf
        %v8589 = vmax.f32 %v8581, %v8588
        %v8590 = vsel %vm8361, %v7931, -inf
        %v8591 = vmax.f32 %v8583, %v8590
        %v8592 = vsel %vm8361, %v7933, -inf
        %v8593 = vmax.f32 %v8585, %v8592
        %v8594 = vsel %vm8361, %v8002, -inf
        %v8595 = vmax.f32 %v8587, %v8594
        %v8596 = vsel %vm8361, %v8004, -inf
        %v8597 = vmax.f32 %v8589, %v8596
        %v8598 = vsel %vm8361, %v8073, -inf
        %v8599 = vmax.f32 %v8591, %v8598
        %v8600 = vsel %vm8361, %v8075, -inf
        %v8601 = vmax.f32 %v8593, %v8600
        %v8602 = vsel %vm8361, %v8144, -inf
        %v8603 = vmax.f32 %v8595, %v8602
        %v8604 = vsel %vm8361, %v8146, -inf
        %v8605 = vmax.f32 %v8597, %v8604
        %v8606 = vsel %vm8361, %v8215, -inf
        %v8607 = vmax.f32 %v8599, %v8606
        %v8608 = vsel %vm8361, %v8217, -inf
        %v8609 = vmax.f32 %v8601, %v8608
        %v8610 = vsel %vm8361, %v8286, -inf
        %v8611 = vmax.f32 %v8603, %v8610
        %v8612 = vsel %vm8361, %v8288, -inf
        %v8613 = vmax.f32 %v8605, %v8612
        %v8614 = vsel %vm8361, %v8357, -inf
        %v8615 = vmax.f32 %v8607, %v8614
        %v8616 = vsel %vm8361, %v8359, -inf
        %v8617 = vmax.f32 %v8609, %v8616
        %v8618 = vmax.f32 %v8611, %v8613
        %v8619 = vmax.f32 %v8615, %v8617
        %v8620 = vmax.f32 %v8618, %v8619
        %8621 = vmax.xlane.f32.xlu0 %v8620
        %v8622 = vpop.xlane.xlu0 %8621
        %v8623 = vmax.f32 %v8491, %v8622
        %v8624 = vsub.f32 %v8623, %v8557
        %v8625 = vadd.f32 %v8624, 1e-05
        %v8626 = vrcp.pop %v8625
        %v8627 = vmul.f32 1.0, %v8626
        %v8628 = vsub.f32 %v6083, %v8557
        %v8629 = vsub.f32 %v6085, %v8557
        %v8630 = vsub.f32 %v6154, %v8557
        %v8631 = vsub.f32 %v6156, %v8557
        %v8632 = vsub.f32 %v6225, %v8557
        %v8633 = vsub.f32 %v6227, %v8557
        %v8634 = vsub.f32 %v6296, %v8557
        %v8635 = vsub.f32 %v6298, %v8557
        %v8636 = vsub.f32 %v6367, %v8557
        %v8637 = vsub.f32 %v6369, %v8557
        %v8638 = vsub.f32 %v6438, %v8557
        %v8639 = vsub.f32 %v6440, %v8557
        %v8640 = vsub.f32 %v6509, %v8557
        %v8641 = vsub.f32 %v6511, %v8557
        %v8642 = vsub.f32 %v6580, %v8557
        %v8643 = vsub.f32 %v6582, %v8557
        %v8644 = vsub.f32 %v6651, %v8557
        %v8645 = vsub.f32 %v6653, %v8557
        %v8646 = vsub.f32 %v6722, %v8557
        %v8647 = vsub.f32 %v6724, %v8557
        %v8648 = vsub.f32 %v6793, %v8557
        %v8649 = vsub.f32 %v6795, %v8557
        %v8650 = vsub.f32 %v6864, %v8557
        %v8651 = vsub.f32 %v6866, %v8557
        %v8652 = vsub.f32 %v6935, %v8557
        %v8653 = vsub.f32 %v6937, %v8557
        %v8654 = vsub.f32 %v7006, %v8557
        %v8655 = vsub.f32 %v7008, %v8557
        %v8656 = vsub.f32 %v7077, %v8557
        %v8657 = vsub.f32 %v7079, %v8557
        %v8658 = vsub.f32 %v7148, %v8557
        %v8659 = vsub.f32 %v7150, %v8557
        %v8660 = vmul.f32 %v8628, %v8627
        %v8661 = vmul.f32 %v8629, %v8627
        %v8662 = vmul.f32 %v8630, %v8627
        %v8663 = vmul.f32 %v8631, %v8627
        %v8664 = vmul.f32 %v8632, %v8627
        %v8665 = vmul.f32 %v8633, %v8627
        %v8666 = vmul.f32 %v8634, %v8627
        %v8667 = vmul.f32 %v8635, %v8627
        %v8668 = vmul.f32 %v8636, %v8627
        %v8669 = vmul.f32 %v8637, %v8627
        %v8670 = vmul.f32 %v8638, %v8627
        %v8671 = vmul.f32 %v8639, %v8627
        %v8672 = vmul.f32 %v8640, %v8627
        %v8673 = vmul.f32 %v8641, %v8627
        %v8674 = vmul.f32 %v8642, %v8627
        %v8675 = vmul.f32 %v8643, %v8627
        %v8676 = vmul.f32 %v8644, %v8627
        %v8677 = vmul.f32 %v8645, %v8627
        %v8678 = vmul.f32 %v8646, %v8627
        %v8679 = vmul.f32 %v8647, %v8627
        %v8680 = vmul.f32 %v8648, %v8627
        %v8681 = vmul.f32 %v8649, %v8627
        %v8682 = vmul.f32 %v8650, %v8627
        %v8683 = vmul.f32 %v8651, %v8627
        %v8684 = vmul.f32 %v8652, %v8627
        %v8685 = vmul.f32 %v8653, %v8627
        %v8686 = vmul.f32 %v8654, %v8627
        %v8687 = vmul.f32 %v8655, %v8627
        %v8688 = vmul.f32 %v8656, %v8627
        %v8689 = vmul.f32 %v8657, %v8627
        %v8690 = vmul.f32 %v8658, %v8627
        %v8691 = vmul.f32 %v8659, %v8627
        %v8724 = vcombine.low %v8660, %v8661
        %v8725 = vcombine.low %v8662, %v8663
        %v8726 = vcombine.low %v8664, %v8665
        %v8727 = vcombine.low %v8666, %v8667
        %v8729 = vunpack.c.l.s4 1966171168
        %v8730 = vunpack.c.0.s8 %v8729
        %v8731 = vlaneseq
        %v8732 = vshrl.u32 %v8731, 7
        %v8733 = vsub.s32 %v8730, %v8732
        %v8734 = vrot.slane %v8724, %v8733
        %v8736 = vunpack.c.l.s4 1966171168
        %v8737 = vunpack.c.0.s8 %v8736
        %v8738 = vlaneseq
        %v8739 = vshrl.u32 %v8738, 7
        %v8740 = vsub.s32 %v8737, %v8739
        %v8741 = vrot.slane %v8725, %v8740
        %v8743 = vunpack.c.l.s4 1966171168
        %v8744 = vunpack.c.0.s8 %v8743
        %v8745 = vlaneseq
        %v8746 = vshrl.u32 %v8745, 7
        %v8747 = vsub.s32 %v8744, %v8746
        %v8748 = vrot.slane %v8726, %v8747
        %v8750 = vunpack.c.l.s4 1966171168
        %v8751 = vunpack.c.0.s8 %v8750
        %v8752 = vlaneseq
        %v8753 = vshrl.u32 %v8752, 7
        %v8754 = vsub.s32 %v8751, %v8753
        %v8755 = vrot.slane %v8727, %v8754
        %v8756 = vcombine.low %v8734, %v8741
        %v8757 = vcombine.low %v8748, %v8755
        %v8759 = vunpack.c.l.s4 1966171168
        %v8760 = vunpack.c.0.s8 %v8759
        %v8761 = vlaneseq
        %v8762 = vshrl.u32 %v8761, 7
        %v8763 = vsub.s32 %v8760, %v8762
        %v8764 = vrot.slane %v8756, %v8763
        %v8766 = vunpack.c.l.s4 1966171168
        %v8767 = vunpack.c.0.s8 %v8766
        %v8768 = vlaneseq
        %v8769 = vshrl.u32 %v8768, 7
        %v8770 = vsub.s32 %v8767, %v8769
        %v8771 = vrot.slane %v8757, %v8770
        %v8772 = vcombine.low %v8764, %v8771
        %v8773 = vcombine.low %v8668, %v8669
        %v8774 = vcombine.low %v8670, %v8671
        %v8775 = vcombine.low %v8672, %v8673
        %v8776 = vcombine.low %v8674, %v8675
        %v8778 = vunpack.c.l.s4 1966171168
        %v8779 = vunpack.c.0.s8 %v8778
        %v8780 = vlaneseq
        %v8781 = vshrl.u32 %v8780, 7
        %v8782 = vsub.s32 %v8779, %v8781
        %v8783 = vrot.slane %v8773, %v8782
        %v8785 = vunpack.c.l.s4 1966171168
        %v8786 = vunpack.c.0.s8 %v8785
        %v8787 = vlaneseq
        %v8788 = vshrl.u32 %v8787, 7
        %v8789 = vsub.s32 %v8786, %v8788
        %v8790 = vrot.slane %v8774, %v8789
        %v8792 = vunpack.c.l.s4 1966171168
        %v8793 = vunpack.c.0.s8 %v8792
        %v8794 = vlaneseq
        %v8795 = vshrl.u32 %v8794, 7
        %v8796 = vsub.s32 %v8793, %v8795
        %v8797 = vrot.slane %v8775, %v8796
        %v8799 = vunpack.c.l.s4 1966171168
        %v8800 = vunpack.c.0.s8 %v8799
        %v8801 = vlaneseq
        %v8802 = vshrl.u32 %v8801, 7
        %v8803 = vsub.s32 %v8800, %v8802
        %v8804 = vrot.slane %v8776, %v8803
        %v8805 = vcombine.low %v8783, %v8790
        %v8806 = vcombine.low %v8797, %v8804
        %v8808 = vunpack.c.l.s4 1966171168
        %v8809 = vunpack.c.0.s8 %v8808
        %v8810 = vlaneseq
        %v8811 = vshrl.u32 %v8810, 7
        %v8812 = vsub.s32 %v8809, %v8811
        %v8813 = vrot.slane %v8805, %v8812
        %v8815 = vunpack.c.l.s4 1966171168
        %v8816 = vunpack.c.0.s8 %v8815
        %v8817 = vlaneseq
        %v8818 = vshrl.u32 %v8817, 7
        %v8819 = vsub.s32 %v8816, %v8818
        %v8820 = vrot.slane %v8806, %v8819
        %v8821 = vcombine.low %v8813, %v8820
        %v8822 = vcombine.low %v8676, %v8677
        %v8823 = vcombine.low %v8678, %v8679
        %v8824 = vcombine.low %v8680, %v8681
        %v8825 = vcombine.low %v8682, %v8683
        %v8827 = vunpack.c.l.s4 1966171168
        %v8828 = vunpack.c.0.s8 %v8827
        %v8829 = vlaneseq
        %v8830 = vshrl.u32 %v8829, 7
        %v8831 = vsub.s32 %v8828, %v8830
        %v8832 = vrot.slane %v8822, %v8831
        %v8834 = vunpack.c.l.s4 1966171168
        %v8835 = vunpack.c.0.s8 %v8834
        %v8836 = vlaneseq
        %v8837 = vshrl.u32 %v8836, 7
        %v8838 = vsub.s32 %v8835, %v8837
        %v8839 = vrot.slane %v8823, %v8838
        %v8841 = vunpack.c.l.s4 1966171168
        %v8842 = vunpack.c.0.s8 %v8841
        %v8843 = vlaneseq
        %v8844 = vshrl.u32 %v8843, 7
        %v8845 = vsub.s32 %v8842, %v8844
        %v8846 = vrot.slane %v8824, %v8845
        %v8848 = vunpack.c.l.s4 1966171168
        %v8849 = vunpack.c.0.s8 %v8848
        %v8850 = vlaneseq
        %v8851 = vshrl.u32 %v8850, 7
        %v8852 = vsub.s32 %v8849, %v8851
        %v8853 = vrot.slane %v8825, %v8852
        %v8854 = vcombine.low %v8832, %v8839
        %v8855 = vcombine.low %v8846, %v8853
        %v8857 = vunpack.c.l.s4 1966171168
        %v8858 = vunpack.c.0.s8 %v8857
        %v8859 = vlaneseq
        %v8860 = vshrl.u32 %v8859, 7
        %v8861 = vsub.s32 %v8858, %v8860
        %v8862 = vrot.slane %v8854, %v8861
        %v8864 = vunpack.c.l.s4 1966171168
        %v8865 = vunpack.c.0.s8 %v8864
        %v8866 = vlaneseq
        %v8867 = vshrl.u32 %v8866, 7
        %v8868 = vsub.s32 %v8865, %v8867
        %v8869 = vrot.slane %v8855, %v8868
        %v8870 = vcombine.low %v8862, %v8869
        %v8871 = vcombine.low %v8684, %v8685
        %v8872 = vcombine.low %v8686, %v8687
        %v8873 = vcombine.low %v8688, %v8689
        %v8874 = vcombine.low %v8690, %v8691
        %v8876 = vunpack.c.l.s4 1966171168
        %v8877 = vunpack.c.0.s8 %v8876
        %v8878 = vlaneseq
        %v8879 = vshrl.u32 %v8878, 7
        %v8880 = vsub.s32 %v8877, %v8879
        %v8881 = vrot.slane %v8871, %v8880
        %v8883 = vunpack.c.l.s4 1966171168
        %v8884 = vunpack.c.0.s8 %v8883
        %v8885 = vlaneseq
        %v8886 = vshrl.u32 %v8885, 7
        %v8887 = vsub.s32 %v8884, %v8886
        %v8888 = vrot.slane %v8872, %v8887
        %v8890 = vunpack.c.l.s4 1966171168
        %v8891 = vunpack.c.0.s8 %v8890
        %v8892 = vlaneseq
        %v8893 = vshrl.u32 %v8892, 7
        %v8894 = vsub.s32 %v8891, %v8893
        %v8895 = vrot.slane %v8873, %v8894
        %v8897 = vunpack.c.l.s4 1966171168
        %v8898 = vunpack.c.0.s8 %v8897
        %v8899 = vlaneseq
        %v8900 = vshrl.u32 %v8899, 7
        %v8901 = vsub.s32 %v8898, %v8900
        %v8902 = vrot.slane %v8874, %v8901
        %v8903 = vcombine.low %v8881, %v8888
        %v8904 = vcombine.low %v8895, %v8902
        %v8906 = vunpack.c.l.s4 1966171168
        %v8907 = vunpack.c.0.s8 %v8906
        %v8908 = vlaneseq
        %v8909 = vshrl.u32 %v8908, 7
        %v8910 = vsub.s32 %v8907, %v8909
        %v8911 = vrot.slane %v8903, %v8910
        %v8913 = vunpack.c.l.s4 1966171168
        %v8914 = vunpack.c.0.s8 %v8913
        %v8915 = vlaneseq
        %v8916 = vshrl.u32 %v8915, 7
        %v8917 = vsub.s32 %v8914, %v8916
        %v8918 = vrot.slane %v8904, %v8917
        %v8919 = vcombine.low %v8911, %v8918
        %8924 = vst [vmem:[%s11] ss:$2 sm:$0xff] %v8772
        %s8925 = scalar_lea.vmem %s11, 16
        %8926 = vst [vmem:[%s8925] ss:$2 sm:$0xff] %v8821
        %s8927 = scalar_lea.vmem %s11, 32
        %8928 = vst [vmem:[%s8927] ss:$2 sm:$0xff] %v8870
        %s8929 = scalar_lea.vmem %s11, 48
        %8930 = vst [vmem:[%s8929] ss:$2 sm:$0xff] %v8919
        %v8931 = vsub.f32 %v7292, %v8557
        %v8932 = vsub.f32 %v7294, %v8557
        %v8933 = vsub.f32 %v7363, %v8557
        %v8934 = vsub.f32 %v7365, %v8557
        %v8935 = vsub.f32 %v7434, %v8557
        %v8936 = vsub.f32 %v7436, %v8557
        %v8937 = vsub.f32 %v7505, %v8557
        %v8938 = vsub.f32 %v7507, %v8557
        %v8939 = vsub.f32 %v7576, %v8557
        %v8940 = vsub.f32 %v7578, %v8557
        %v8941 = vsub.f32 %v7647, %v8557
        %v8942 = vsub.f32 %v7649, %v8557
        %v8943 = vsub.f32 %v7718, %v8557
        %v8944 = vsub.f32 %v7720, %v8557
        %v8945 = vsub.f32 %v7789, %v8557
        %v8946 = vsub.f32 %v7791, %v8557
        %v8947 = vsub.f32 %v7860, %v8557
        %v8948 = vsub.f32 %v7862, %v8557
        %v8949 = vsub.f32 %v7931, %v8557
        %v8950 = vsub.f32 %v7933, %v8557
        %v8951 = vsub.f32 %v8002, %v8557
        %v8952 = vsub.f32 %v8004, %v8557
        %v8953 = vsub.f32 %v8073, %v8557
        %v8954 = vsub.f32 %v8075, %v8557
        %v8955 = vsub.f32 %v8144, %v8557
        %v8956 = vsub.f32 %v8146, %v8557
        %v8957 = vsub.f32 %v8215, %v8557
        %v8958 = vsub.f32 %v8217, %v8557
        %v8959 = vsub.f32 %v8286, %v8557
        %v8960 = vsub.f32 %v8288, %v8557
        %v8961 = vsub.f32 %v8357, %v8557
        %v8962 = vsub.f32 %v8359, %v8557
        %v8963 = vmul.f32 %v8931, %v8627
        %v8964 = vmul.f32 %v8932, %v8627
        %v8965 = vmul.f32 %v8933, %v8627
        %v8966 = vmul.f32 %v8934, %v8627
        %v8967 = vmul.f32 %v8935, %v8627
        %v8968 = vmul.f32 %v8936, %v8627
        %v8969 = vmul.f32 %v8937, %v8627
        %v8970 = vmul.f32 %v8938, %v8627
        %v8971 = vmul.f32 %v8939, %v8627
        %v8972 = vmul.f32 %v8940, %v8627
        %v8973 = vmul.f32 %v8941, %v8627
        %v8974 = vmul.f32 %v8942, %v8627
        %v8975 = vmul.f32 %v8943, %v8627
        %v8976 = vmul.f32 %v8944, %v8627
        %v8977 = vmul.f32 %v8945, %v8627
        %v8978 = vmul.f32 %v8946, %v8627
        %v8979 = vmul.f32 %v8947, %v8627
        %v8980 = vmul.f32 %v8948, %v8627
        %v8981 = vmul.f32 %v8949, %v8627
        %v8982 = vmul.f32 %v8950, %v8627
        %v8983 = vmul.f32 %v8951, %v8627
        %v8984 = vmul.f32 %v8952, %v8627
        %v8985 = vmul.f32 %v8953, %v8627
        %v8986 = vmul.f32 %v8954, %v8627
        %v8987 = vmul.f32 %v8955, %v8627
        %v8988 = vmul.f32 %v8956, %v8627
        %v8989 = vmul.f32 %v8957, %v8627
        %v8990 = vmul.f32 %v8958, %v8627
        %v8991 = vmul.f32 %v8959, %v8627
        %v8992 = vmul.f32 %v8960, %v8627
        %v8993 = vmul.f32 %v8961, %v8627
        %v8994 = vmul.f32 %v8962, %v8627
        %v9027 = vcombine.low %v8963, %v8964
        %v9028 = vcombine.low %v8965, %v8966
        %v9029 = vcombine.low %v8967, %v8968
        %v9030 = vcombine.low %v8969, %v8970
        %v9032 = vunpack.c.l.s4 1966171168
        %v9033 = vunpack.c.0.s8 %v9032
        %v9034 = vlaneseq
        %v9035 = vshrl.u32 %v9034, 7
        %v9036 = vsub.s32 %v9033, %v9035
        %v9037 = vrot.slane %v9027, %v9036
        %v9039 = vunpack.c.l.s4 1966171168
        %v9040 = vunpack.c.0.s8 %v9039
        %v9041 = vlaneseq
        %v9042 = vshrl.u32 %v9041, 7
        %v9043 = vsub.s32 %v9040, %v9042
        %v9044 = vrot.slane %v9028, %v9043
        %v9046 = vunpack.c.l.s4 1966171168
        %v9047 = vunpack.c.0.s8 %v9046
        %v9048 = vlaneseq
        %v9049 = vshrl.u32 %v9048, 7
        %v9050 = vsub.s32 %v9047, %v9049
        %v9051 = vrot.slane %v9029, %v9050
        %v9053 = vunpack.c.l.s4 1966171168
        %v9054 = vunpack.c.0.s8 %v9053
        %v9055 = vlaneseq
        %v9056 = vshrl.u32 %v9055, 7
        %v9057 = vsub.s32 %v9054, %v9056
        %v9058 = vrot.slane %v9030, %v9057
        %v9059 = vcombine.low %v9037, %v9044
        %v9060 = vcombine.low %v9051, %v9058
        %v9062 = vunpack.c.l.s4 1966171168
        %v9063 = vunpack.c.0.s8 %v9062
        %v9064 = vlaneseq
        %v9065 = vshrl.u32 %v9064, 7
        %v9066 = vsub.s32 %v9063, %v9065
        %v9067 = vrot.slane %v9059, %v9066
        %v9069 = vunpack.c.l.s4 1966171168
        %v9070 = vunpack.c.0.s8 %v9069
        %v9071 = vlaneseq
        %v9072 = vshrl.u32 %v9071, 7
        %v9073 = vsub.s32 %v9070, %v9072
        %v9074 = vrot.slane %v9060, %v9073
        %v9075 = vcombine.low %v9067, %v9074
        %v9076 = vcombine.low %v8971, %v8972
        %v9077 = vcombine.low %v8973, %v8974
        %v9078 = vcombine.low %v8975, %v8976
        %v9079 = vcombine.low %v8977, %v8978
        %v9081 = vunpack.c.l.s4 1966171168
        %v9082 = vunpack.c.0.s8 %v9081
        %v9083 = vlaneseq
        %v9084 = vshrl.u32 %v9083, 7
        %v9085 = vsub.s32 %v9082, %v9084
        %v9086 = vrot.slane %v9076, %v9085
        %v9088 = vunpack.c.l.s4 1966171168
        %v9089 = vunpack.c.0.s8 %v9088
        %v9090 = vlaneseq
        %v9091 = vshrl.u32 %v9090, 7
        %v9092 = vsub.s32 %v9089, %v9091
        %v9093 = vrot.slane %v9077, %v9092
        %v9095 = vunpack.c.l.s4 1966171168
        %v9096 = vunpack.c.0.s8 %v9095
        %v9097 = vlaneseq
        %v9098 = vshrl.u32 %v9097, 7
        %v9099 = vsub.s32 %v9096, %v9098
        %v9100 = vrot.slane %v9078, %v9099
        %v9102 = vunpack.c.l.s4 1966171168
        %v9103 = vunpack.c.0.s8 %v9102
        %v9104 = vlaneseq
        %v9105 = vshrl.u32 %v9104, 7
        %v9106 = vsub.s32 %v9103, %v9105
        %v9107 = vrot.slane %v9079, %v9106
        %v9108 = vcombine.low %v9086, %v9093
        %v9109 = vcombine.low %v9100, %v9107
        %v9111 = vunpack.c.l.s4 1966171168
        %v9112 = vunpack.c.0.s8 %v9111
        %v9113 = vlaneseq
        %v9114 = vshrl.u32 %v9113, 7
        %v9115 = vsub.s32 %v9112, %v9114
        %v9116 = vrot.slane %v9108, %v9115
        %v9118 = vunpack.c.l.s4 1966171168
        %v9119 = vunpack.c.0.s8 %v9118
        %v9120 = vlaneseq
        %v9121 = vshrl.u32 %v9120, 7
        %v9122 = vsub.s32 %v9119, %v9121
        %v9123 = vrot.slane %v9109, %v9122
        %v9124 = vcombine.low %v9116, %v9123
        %v9125 = vcombine.low %v8979, %v8980
        %v9126 = vcombine.low %v8981, %v8982
        %v9127 = vcombine.low %v8983, %v8984
        %v9128 = vcombine.low %v8985, %v8986
        %v9130 = vunpack.c.l.s4 1966171168
        %v9131 = vunpack.c.0.s8 %v9130
        %v9132 = vlaneseq
        %v9133 = vshrl.u32 %v9132, 7
        %v9134 = vsub.s32 %v9131, %v9133
        %v9135 = vrot.slane %v9125, %v9134
        %v9137 = vunpack.c.l.s4 1966171168
        %v9138 = vunpack.c.0.s8 %v9137
        %v9139 = vlaneseq
        %v9140 = vshrl.u32 %v9139, 7
        %v9141 = vsub.s32 %v9138, %v9140
        %v9142 = vrot.slane %v9126, %v9141
        %v9144 = vunpack.c.l.s4 1966171168
        %v9145 = vunpack.c.0.s8 %v9144
        %v9146 = vlaneseq
        %v9147 = vshrl.u32 %v9146, 7
        %v9148 = vsub.s32 %v9145, %v9147
        %v9149 = vrot.slane %v9127, %v9148
        %v9151 = vunpack.c.l.s4 1966171168
        %v9152 = vunpack.c.0.s8 %v9151
        %v9153 = vlaneseq
        %v9154 = vshrl.u32 %v9153, 7
        %v9155 = vsub.s32 %v9152, %v9154
        %v9156 = vrot.slane %v9128, %v9155
        %v9157 = vcombine.low %v9135, %v9142
        %v9158 = vcombine.low %v9149, %v9156
        %v9160 = vunpack.c.l.s4 1966171168
        %v9161 = vunpack.c.0.s8 %v9160
        %v9162 = vlaneseq
        %v9163 = vshrl.u32 %v9162, 7
        %v9164 = vsub.s32 %v9161, %v9163
        %v9165 = vrot.slane %v9157, %v9164
        %v9167 = vunpack.c.l.s4 1966171168
        %v9168 = vunpack.c.0.s8 %v9167
        %v9169 = vlaneseq
        %v9170 = vshrl.u32 %v9169, 7
        %v9171 = vsub.s32 %v9168, %v9170
        %v9172 = vrot.slane %v9158, %v9171
        %v9173 = vcombine.low %v9165, %v9172
        %v9174 = vcombine.low %v8987, %v8988
        %v9175 = vcombine.low %v8989, %v8990
        %v9176 = vcombine.low %v8991, %v8992
        %v9177 = vcombine.low %v8993, %v8994
        %v9179 = vunpack.c.l.s4 1966171168
        %v9180 = vunpack.c.0.s8 %v9179
        %v9181 = vlaneseq
        %v9182 = vshrl.u32 %v9181, 7
        %v9183 = vsub.s32 %v9180, %v9182
        %v9184 = vrot.slane %v9174, %v9183
        %v9186 = vunpack.c.l.s4 1966171168
        %v9187 = vunpack.c.0.s8 %v9186
        %v9188 = vlaneseq
        %v9189 = vshrl.u32 %v9188, 7
        %v9190 = vsub.s32 %v9187, %v9189
        %v9191 = vrot.slane %v9175, %v9190
        %v9193 = vunpack.c.l.s4 1966171168
        %v9194 = vunpack.c.0.s8 %v9193
        %v9195 = vlaneseq
        %v9196 = vshrl.u32 %v9195, 7
        %v9197 = vsub.s32 %v9194, %v9196
        %v9198 = vrot.slane %v9176, %v9197
        %v9200 = vunpack.c.l.s4 1966171168
        %v9201 = vunpack.c.0.s8 %v9200
        %v9202 = vlaneseq
        %v9203 = vshrl.u32 %v9202, 7
        %v9204 = vsub.s32 %v9201, %v9203
        %v9205 = vrot.slane %v9177, %v9204
        %v9206 = vcombine.low %v9184, %v9191
        %v9207 = vcombine.low %v9198, %v9205
        %v9209 = vunpack.c.l.s4 1966171168
        %v9210 = vunpack.c.0.s8 %v9209
        %v9211 = vlaneseq
        %v9212 = vshrl.u32 %v9211, 7
        %v9213 = vsub.s32 %v9210, %v9212
        %v9214 = vrot.slane %v9206, %v9213
        %v9216 = vunpack.c.l.s4 1966171168
        %v9217 = vunpack.c.0.s8 %v9216
        %v9218 = vlaneseq
        %v9219 = vshrl.u32 %v9218, 7
        %v9220 = vsub.s32 %v9217, %v9219
        %v9221 = vrot.slane %v9207, %v9220
        %v9222 = vcombine.low %v9214, %v9221
        %s9227 = scalar_lea.vmem %s11, 1
        %9228 = vst [vmem:[%s9227] ss:$2 sm:$0xff] %v9075
        %s9229 = scalar_lea.vmem %s11, 17
        %9230 = vst [vmem:[%s9229] ss:$2 sm:$0xff] %v9124
        %s9231 = scalar_lea.vmem %s11, 33
        %9232 = vst [vmem:[%s9231] ss:$2 sm:$0xff] %v9173
        %s9233 = scalar_lea.vmem %s11, 49
        %9234 = vst [vmem:[%s9233] ss:$2 sm:$0xff] %v9222
      $region72: #{_lambda_.1} parent=63 // pred_fallthru
        _
      // Predicated region
      $region73: #{_lambda_.1} parent=63 // pred_check
        %p9235 = pneg %p296
      $region74: #{_lambda_.1} parent=63 // pred_check_branch
        %9237 = sbr.rel (%p9235) target = $region76
      $region75: #{_lambda_.1} parent=63 // pred_region
        _
      $region76: #{_lambda_.1} parent=63 // pred_fallthru
        _
      // Predicated region
      $region77: #{_lambda_.1} parent=63 // pred_check
        %p9238 = pneg %p296
      $region78: #{_lambda_.1} parent=63 // pred_check_branch
        %9240 = sbr.rel (%p9238) target = $region80
      $region79: #{_lambda_.1} parent=63 // pred_region
        _
      $region80: #{_lambda_.1} parent=63 // pred_fallthru
        _
    $region64: #{_lambda_.1} parent=5 // pred_fallthru
      _
    %p9241 = scmp.le.s32.totalorder 2, %s17
    // Predicated region
    $region81: #{_lambda_.1} parent=5 // pred_check
      %p9242 = pneg %p9241
    $region82: #{_lambda_.1} parent=5 // pred_check_branch
      %9244 = sbr.rel (%p9242) target = $region84
    $region83: #{_lambda_.1} parent=5 // pred_region
      %s9245 = ssub.s32 %s17, 2
    $region84: #{_lambda_.1} parent=5 // pred_fallthru
      _
  $region6: #{_lambda_.1} parent=0 // loop_footer
    %s21 = sadd.s32 1, %s17
  $region7: #{_lambda_.1} parent=0 // loop_footer_branch
    %16 = sbr.rel target = $region3
  $region8: #{_lambda_.1} parent=0 // loop_exit
    _

</llo_original>
